<compile_context>
chip_gen: v6e
topology: v6e:2x2x1
jax: 0.10.0
libtpu: 0.0.40
codegen_flags: <defaults>
</compile_context>

<pallas_src>
import functools

import jax
import jax.numpy as jnp
from jax.experimental import pallas as pl
from jax.experimental.pallas import tpu as pltpu


# ----------------------------- Pallas kernel ------------------------------ #

def _width_block_kernel(x_ref, ln1_ref, wqkv_ref, wproj_ref, ln2_ref,
                        wfc_ref, wproj2_ref, o_ref, *, n_head: int,
                        width: int):
    """One grid step = T (b, l) positions fused into an (M=T*W, C) tile."""
    x = x_ref[...]                                   # (M, C) native dtype
    M, C = x.shape
    T = M // width
    hd = C // n_head
    eps = 1e-5
    adt = wqkv_ref.dtype                             # MXU operand dtype

    def rmsnorm(v, w_ref):
        # RMSNorm math in f32 (matches x.float() in the reference), result
        # back in the activation dtype so bf16 runs stay bf16 on the MXU path.
        vf = v.astype(jnp.float32)
        ms = jnp.mean(vf * vf, axis=-1, keepdims=True)
        return ((vf * jax.lax.rsqrt(ms + eps)).astype(v.dtype)
                * w_ref[...].astype(v.dtype))

    def mm(a, w_ref):
        # Feed the MXU in the weight's native dtype; accumulate in f32.
        return jnp.dot(a.astype(w_ref.dtype), w_ref[...],
                       preferred_element_type=jnp.float32)

    # ---- attention branch (grouped over width, batched over T groups) ----
    ln1 = rmsnorm(x, ln1_ref)                                    # (M, C)
    qkv = mm(ln1, wqkv_ref)                                      # (M, 3C) f32
    scale = jnp.float32(8.0 / C)       # softmax_scale = 8 / n_embd (reference)

    head_outs = []
    for h in range(n_head):            # static, small head count
        # (M, hd) -> (T, W, hd): W == 8 aligns with the sublane tile, so the
        # leading-dim split is a pure reinterpretation (no relayout).
        q = (qkv[:, h * hd:(h + 1) * hd] * scale).astype(adt)
        q = q.reshape(T, width, hd)
        k = qkv[:, C + h * hd: C + (h + 1) * hd].astype(adt)
        k = k.reshape(T, width, hd)
        v = qkv[:, 2 * C + h * hd: 2 * C + (h + 1) * hd]
        v = v.reshape(T, width, hd)

        s = jnp.einsum("twd,tvd->twv", q, k,
                       preferred_element_type=jnp.float32)       # (T, W, W)
        m = jnp.max(s, axis=-1, keepdims=True)
        p = jnp.exp(s - m)
        denom = jnp.sum(p, axis=-1, keepdims=True)
        p = p * pl.reciprocal(denom, approx=True)
        o_h = jnp.einsum("twv,tvd->twd", p.astype(adt), v.astype(adt),
                         preferred_element_type=jnp.float32)     # (T, W, hd)
        head_outs.append(o_h.reshape(M, hd))
    y = jnp.concatenate(head_outs, axis=-1)                      # (M, C) f32

    x = x + mm(y, wproj_ref).astype(x.dtype)                     # residual

    # ---- MLP branch (SwiGLU) ----------------------------------------------
    ln2 = rmsnorm(x, ln2_ref)                                    # (M, C)
    hidden = mm(ln2, wfc_ref)                                    # (M, 4C) f32
    h_a = hidden[:, : 2 * C]
    gate = hidden[:, 2 * C:]
    swiglu = h_a * (gate * jax.nn.sigmoid(gate))                 # (M, 2C)
    x = x + mm(swiglu, wproj2_ref).astype(x.dtype)               # residual

    o_ref[...] = x.astype(o_ref.dtype)


# ------------------------------ wrapper ----------------------------------- #

def _rows_per_step(rows, width, target_m=128, min_steps=4):
    """Pick T ((b,l) positions per grid step) so M = T*W is sublane/MXU
    friendly while keeping >= min_steps grid iterations when possible
    (>= 2 per v7x TensorCore, >= 3 for v6e pipelining)."""
    t = max(1, target_m // width)
    if rows >= min_steps:
        t = min(t, rows // min_steps)
    t = max(1, min(t, rows))
    while (t * width) % 8 != 0:        # sublane alignment of the (M, C) block
        t += 1
    return t


def width_block2d(x, params, n_head):
    """x: (B, L, W, C) -> (B, L, W, C); width-wise transformer block."""
    B, L, W, C = x.shape
    rows = B * L
    x2 = x.reshape(rows * W, C)

    T = _rows_per_step(rows, W)
    n_steps = pl.cdiv(rows, T)
    pad_rows = n_steps * T - rows
    if pad_rows:
        # Zero padding is inert: pad rows form their own width-groups, stay
        # zero through RMSNorm/attention/MLP, and are sliced off at the end.
        x2 = jnp.pad(x2, ((0, pad_rows * W), (0, 0)))
    M = T * W

    full2d = lambda i: (0, 0)
    kernel = functools.partial(_width_block_kernel, n_head=n_head, width=W)

    weight_bytes = sum(int(p.size) * p.dtype.itemsize for p in params.values())
    io_bytes = 2 * int(x2.size) * x2.dtype.itemsize
    # Cost estimate for the grouped-attention formulation.
    cost = pl.CostEstimate(
        flops=int(rows * W * (20 * C * C + 4 * W * C)),
        transcendentals=int(rows * (n_head * W * W + W * 2 * C + 2 * W)),
        bytes_accessed=int(io_bytes + weight_bytes),
    )

    # Explicit VMEM budget: double-buffered x/out tiles, double-buffered
    # weight blocks, plus f32 intermediate headroom; clamped to v7x's 64 MiB.
    tile_bytes = M * C * x2.dtype.itemsize
    interm_bytes = 8 * M * 4 * C * 4
    vmem_bytes = 4 * tile_bytes + 2 * weight_bytes + interm_bytes
    vmem_bytes = int(min(max(vmem_bytes, 16 << 20), 64 << 20))

    out = pl.pallas_call(
        kernel,
        out_shape=jax.ShapeDtypeStruct((n_steps * M, C), x.dtype),
        grid=(n_steps,),
        in_specs=[
            pl.BlockSpec((M, C), lambda i: (i, 0)),        # x tile
            pl.BlockSpec((1, C), full2d),                  # ln1 weight
            pl.BlockSpec((C, 3 * C), full2d),              # W_qkv^T
            pl.BlockSpec((C, C), full2d),                  # W_attn_proj^T
            pl.BlockSpec((1, C), full2d),                  # ln2 weight
            pl.BlockSpec((C, 4 * C), full2d),              # W_fc^T
            pl.BlockSpec((2 * C, C), full2d),              # W_mlp_proj^T
        ],
        out_specs=pl.BlockSpec((M, C), lambda i: (i, 0)),
        compiler_params=pltpu.CompilerParams(
            dimension_semantics=("parallel",),
            vmem_limit_bytes=vmem_bytes),
        cost_estimate=cost,
    )(x2, params["ln1"], params["wqkv"], params["wproj"],
      params["ln2"], params["wfc"], params["wproj2"])

    out = out[: rows * W]
    return out.reshape(B, L, W, C)


# ---------------------------- reference (JAX) ------------------------------ #

def width_block2d_ref(x, params, n_head):
    B, L, W, C = x.shape
    hd = C // n_head
    xr = x.reshape(B * L, W, C).astype(jnp.float32)
    eps = 1e-5

    def rmsnorm(v, w):
        return v * jax.lax.rsqrt(jnp.mean(v * v, -1, keepdims=True) + eps) * w

    ln1 = rmsnorm(xr, params["ln1"][0])
    qkv = ln1 @ params["wqkv"]
    q, k, v = jnp.split(qkv, 3, axis=-1)
    q = q.reshape(B * L, W, n_head, hd).transpose(0, 2, 1, 3)
    k = k.reshape(B * L, W, n_head, hd).transpose(0, 2, 1, 3)
    v = v.reshape(B * L, W, n_head, hd).transpose(0, 2, 1, 3)
    s = jnp.einsum("bhqd,bhkd->bhqk", q, k) * (8.0 / C)
    p = jax.nn.softmax(s, axis=-1)
    y = jnp.einsum("bhqk,bhkd->bhqd", p, v).transpose(0, 2, 1, 3).reshape(
        B * L, W, C)
    xr = xr + y @ params["wproj"]
    ln2 = rmsnorm(xr, params["ln2"][0])
    h = ln2 @ params["wfc"]
    h_a, gate = h[..., : 2 * C], h[..., 2 * C:]
    xr = xr + (h_a * jax.nn.silu(gate)) @ params["wproj2"]
    return xr.reshape(B, L, W, C)


# ------------------------------- main -------------------------------------- #

if __name__ == "__main__":
    # Small shapes consistent with the module: B=2, L=16, width W=8,
    # n_embd C=64, n_head=4 (head_dim=16).  B*L=32 -> T=8 rows per step,
    # M=T*W=64, grid of 4 steps (>= 2 per v7x TensorCore).
    B, L, W, C, n_head = 2, 16, 8, 64, 4
    param_std = 0.02

    key = jax.random.PRNGKey(0)
    kx, k1, k2, k3, k4 = jax.random.split(key, 5)

    x = jax.random.normal(kx, (B, L, W, C), dtype=jnp.float32)

    # Deterministic synthetic parameters (stored already transposed: (in, out)).
    # Kept f32 here so the check against the f32 reference is tight; pass
    # bf16 weights (and a bf16 activation slab) in production for native MXU
    # rate and half the weight DMA / VMEM footprint.
    params = {
        "ln1": jnp.ones((1, C), jnp.float32),
        "wqkv": param_std * jax.random.normal(k1, (C, 3 * C), jnp.float32),
        "wproj": param_std * jax.random.normal(k2, (C, C), jnp.float32),
        "ln2": jnp.ones((1, C), jnp.float32),
        "wfc": param_std * jax.random.normal(k3, (C, 4 * C), jnp.float32),
        "wproj2": (param_std / jnp.sqrt(2.0))
        * jax.random.normal(k4, (2 * C, C), jnp.float32),
    }

    out = jax.block_until_ready(width_block2d(x, params, n_head))

    ref = width_block2d_ref(x, params, n_head)
    assert out.shape == (B, L, W, C)
    assert jnp.allclose(out, ref, atol=2e-3, rtol=2e-3), "mismatch vs reference"

    # TODO(synk): dropout is identity at inference; attn_mask/freqs_cis are
    # unused by the reference SelfAttention.forward, so they are omitted.
    print("KERNEL_OK")
</pallas_src>

<mosaic_0001>
module attributes {stable_mosaic.version = 11 : i64} {
  func.func @_width_block_kernel(%arg0: i32, %arg1: memref<64x64xf32, #tpu.memory_space<vmem>>, %arg2: memref<1x64xf32, #tpu.memory_space<vmem>>, %arg3: memref<64x192xf32, #tpu.memory_space<vmem>>, %arg4: memref<64x64xf32, #tpu.memory_space<vmem>>, %arg5: memref<1x64xf32, #tpu.memory_space<vmem>>, %arg6: memref<64x256xf32, #tpu.memory_space<vmem>>, %arg7: memref<128x64xf32, #tpu.memory_space<vmem>>, %arg8: memref<64x64xf32, #tpu.memory_space<vmem>>) attributes {dimension_semantics = [#tpu.dimension_semantics<parallel>], iteration_bounds = array<i64: 4>, scalar_prefetch = 0 : i64, scratch_operands = 0 : i64, tpu.core_type = #tpu.core_type<tc>, window_params = [{transform_indices = @transform_0, window_bounds = array<i64: 64, 64>}, {pipeline_mode = #tpu.pipeline_mode<synchronous>, transform_indices = @transform_1, window_bounds = array<i64: 1, 64>}, {pipeline_mode = #tpu.pipeline_mode<synchronous>, transform_indices = @transform_2, window_bounds = array<i64: 64, 192>}, {pipeline_mode = #tpu.pipeline_mode<synchronous>, transform_indices = @transform_3, window_bounds = array<i64: 64, 64>}, {pipeline_mode = #tpu.pipeline_mode<synchronous>, transform_indices = @transform_4, window_bounds = array<i64: 1, 64>}, {pipeline_mode = #tpu.pipeline_mode<synchronous>, transform_indices = @transform_5, window_bounds = array<i64: 64, 256>}, {pipeline_mode = #tpu.pipeline_mode<synchronous>, transform_indices = @transform_6, window_bounds = array<i64: 128, 64>}, {transform_indices = @transform_7, window_bounds = array<i64: 64, 64>}]} {
    %c0 = arith.constant 0 : index
    %c0_0 = arith.constant 0 : index
    %0 = vector.load %arg1[%c0, %c0_0] : memref<64x64xf32, #tpu.memory_space<vmem>>, vector<64x64xf32>
    %1 = arith.mulf %0, %0 : vector<64x64xf32>
    %cst = arith.constant dense<0.000000e+00> : vector<64xf32>
    %2 = vector.multi_reduction <add>, %1, %cst [1] : vector<64x64xf32> to vector<64xf32>
    %3 = vector.shape_cast %2 : vector<64xf32> to vector<64x1xf32>
    %cst_1 = arith.constant 6.400000e+01 : f32
    %4 = vector.broadcast %cst_1 : f32 to vector<64x1xf32>
    %5 = arith.divf %3, %4 : vector<64x1xf32>
    %cst_2 = arith.constant 9.99999974E-6 : f32
    %6 = vector.broadcast %cst_2 : f32 to vector<64x1xf32>
    %7 = arith.addf %5, %6 : vector<64x1xf32>
    %8 = math.rsqrt %7 : vector<64x1xf32>
    %9 = vector.broadcast %8 : vector<64x1xf32> to vector<64x64xf32>
    %10 = arith.mulf %0, %9 : vector<64x64xf32>
    %c0_3 = arith.constant 0 : index
    %c0_4 = arith.constant 0 : index
    %11 = vector.load %arg2[%c0_3, %c0_4] : memref<1x64xf32, #tpu.memory_space<vmem>>, vector<1x64xf32>
    %12 = vector.broadcast %11 : vector<1x64xf32> to vector<64x64xf32>
    %13 = arith.mulf %10, %12 : vector<64x64xf32>
    %c0_5 = arith.constant 0 : index
    %c0_6 = arith.constant 0 : index
    %14 = vector.load %arg3[%c0_5, %c0_6] : memref<64x192xf32, #tpu.memory_space<vmem>>, vector<64x192xf32>
    %cst_7 = arith.constant dense<0.000000e+00> : vector<64x192xf32>
    %15 = tpu.matmul %13, %14, %cst_7 {dimension_numbers = #tpu.dot_dimension_numbers<[1], [0], [0], [1], [0, 0, 1, 1], [], []>} : vector<64x64xf32>, vector<64x192xf32>, vector<64x192xf32> -> vector<64x192xf32>
    %16 = vector.extract_strided_slice %15 {offsets = [0, 0], sizes = [64, 16], strides = [1, 1]} : vector<64x192xf32> to vector<64x16xf32>
    %cst_8 = arith.constant 1.250000e-01 : f32
    %17 = vector.broadcast %cst_8 : f32 to vector<64x16xf32>
    %18 = arith.mulf %16, %17 : vector<64x16xf32>
    %19 = vector.shape_cast %18 : vector<64x16xf32> to vector<8x8x16xf32>
    %20 = vector.extract_strided_slice %15 {offsets = [0, 64], sizes = [64, 16], strides = [1, 1]} : vector<64x192xf32> to vector<64x16xf32>
    %21 = vector.shape_cast %20 : vector<64x16xf32> to vector<8x8x16xf32>
    %22 = vector.extract_strided_slice %15 {offsets = [0, 128], sizes = [64, 16], strides = [1, 1]} : vector<64x192xf32> to vector<64x16xf32>
    %23 = vector.shape_cast %22 : vector<64x16xf32> to vector<8x8x16xf32>
    "tpu.trace_start"() <{level = 10 : i32, message = "twd,tvd->twv"}> : () -> ()
    %cst_9 = arith.constant dense<0.000000e+00> : vector<8x8x8xf32>
    %24 = tpu.matmul %19, %21, %cst_9 {dimension_numbers = #tpu.dot_dimension_numbers<[2], [2], [1], [1], [0, 0, 0, 1, 1, 1], [0], [0]>} : vector<8x8x16xf32>, vector<8x8x16xf32>, vector<8x8x8xf32> -> vector<8x8x8xf32>
    "tpu.trace_stop"() : () -> ()
    %cst_10 = arith.constant dense<0xFF800000> : vector<8x8xf32>
    %25 = vector.multi_reduction <maximumf>, %24, %cst_10 [2] : vector<8x8x8xf32> to vector<8x8xf32>
    %26 = vector.shape_cast %25 : vector<8x8xf32> to vector<8x8x1xf32>
    %27 = vector.broadcast %26 : vector<8x8x1xf32> to vector<8x8x8xf32>
    %28 = arith.subf %24, %27 : vector<8x8x8xf32>
    %29 = math.exp %28 : vector<8x8x8xf32>
    %cst_11 = arith.constant dense<0.000000e+00> : vector<8x8xf32>
    %30 = vector.multi_reduction <add>, %29, %cst_11 [2] : vector<8x8x8xf32> to vector<8x8xf32>
    %31 = vector.shape_cast %30 : vector<8x8xf32> to vector<8x8x1xf32>
    %32 = tpu.reciprocal %31 {approx = true} : vector<8x8x1xf32> -> vector<8x8x1xf32>
    %33 = vector.broadcast %32 : vector<8x8x1xf32> to vector<8x8x8xf32>
    %34 = arith.mulf %29, %33 : vector<8x8x8xf32>
    "tpu.trace_start"() <{level = 10 : i32, message = "twv,tvd->twd"}> : () -> ()
    %cst_12 = arith.constant dense<0.000000e+00> : vector<8x8x16xf32>
    %35 = tpu.matmul %34, %23, %cst_12 {dimension_numbers = #tpu.dot_dimension_numbers<[2], [1], [1], [2], [0, 0, 0, 1, 1, 2], [0], [0]>} : vector<8x8x8xf32>, vector<8x8x16xf32>, vector<8x8x16xf32> -> vector<8x8x16xf32>
    "tpu.trace_stop"() : () -> ()
    %36 = vector.shape_cast %35 : vector<8x8x16xf32> to vector<64x16xf32>
    %37 = vector.extract_strided_slice %15 {offsets = [0, 16], sizes = [64, 16], strides = [1, 1]} : vector<64x192xf32> to vector<64x16xf32>
    %cst_13 = arith.constant 1.250000e-01 : f32
    %38 = vector.broadcast %cst_13 : f32 to vector<64x16xf32>
    %39 = arith.mulf %37, %38 : vector<64x16xf32>
    %40 = vector.shape_cast %39 : vector<64x16xf32> to vector<8x8x16xf32>
    %41 = vector.extract_strided_slice %15 {offsets = [0, 80], sizes = [64, 16], strides = [1, 1]} : vector<64x192xf32> to vector<64x16xf32>
    %42 = vector.shape_cast %41 : vector<64x16xf32> to vector<8x8x16xf32>
    %43 = vector.extract_strided_slice %15 {offsets = [0, 144], sizes = [64, 16], strides = [1, 1]} : vector<64x192xf32> to vector<64x16xf32>
    %44 = vector.shape_cast %43 : vector<64x16xf32> to vector<8x8x16xf32>
    "tpu.trace_start"() <{level = 10 : i32, message = "twd,tvd->twv"}> : () -> ()
    %cst_14 = arith.constant dense<0.000000e+00> : vector<8x8x8xf32>
    %45 = tpu.matmul %40, %42, %cst_14 {dimension_numbers = #tpu.dot_dimension_numbers<[2], [2], [1], [1], [0, 0, 0, 1, 1, 1], [0], [0]>} : vector<8x8x16xf32>, vector<8x8x16xf32>, vector<8x8x8xf32> -> vector<8x8x8xf32>
    "tpu.trace_stop"() : () -> ()
    %cst_15 = arith.constant dense<0xFF800000> : vector<8x8xf32>
    %46 = vector.multi_reduction <maximumf>, %45, %cst_15 [2] : vector<8x8x8xf32> to vector<8x8xf32>
    %47 = vector.shape_cast %46 : vector<8x8xf32> to vector<8x8x1xf32>
    %48 = vector.broadcast %47 : vector<8x8x1xf32> to vector<8x8x8xf32>
    %49 = arith.subf %45, %48 : vector<8x8x8xf32>
    %50 = math.exp %49 : vector<8x8x8xf32>
    %cst_16 = arith.constant dense<0.000000e+00> : vector<8x8xf32>
    %51 = vector.multi_reduction <add>, %50, %cst_16 [2] : vector<8x8x8xf32> to vector<8x8xf32>
    %52 = vector.shape_cast %51 : vector<8x8xf32> to vector<8x8x1xf32>
    %53 = tpu.reciprocal %52 {approx = true} : vector<8x8x1xf32> -> vector<8x8x1xf32>
    %54 = vector.broadcast %53 : vector<8x8x1xf32> to vector<8x8x8xf32>
    %55 = arith.mulf %50, %54 : vector<8x8x8xf32>
    "tpu.trace_start"() <{level = 10 : i32, message = "twv,tvd->twd"}> : () -> ()
    %cst_17 = arith.constant dense<0.000000e+00> : vector<8x8x16xf32>
    %56 = tpu.matmul %55, %44, %cst_17 {dimension_numbers = #tpu.dot_dimension_numbers<[2], [1], [1], [2], [0, 0, 0, 1, 1, 2], [0], [0]>} : vector<8x8x8xf32>, vector<8x8x16xf32>, vector<8x8x16xf32> -> vector<8x8x16xf32>
    "tpu.trace_stop"() : () -> ()
    %57 = vector.shape_cast %56 : vector<8x8x16xf32> to vector<64x16xf32>
    %58 = vector.extract_strided_slice %15 {offsets = [0, 32], sizes = [64, 16], strides = [1, 1]} : vector<64x192xf32> to vector<64x16xf32>
    %cst_18 = arith.constant 1.250000e-01 : f32
    %59 = vector.broadcast %cst_18 : f32 to vector<64x16xf32>
    %60 = arith.mulf %58, %59 : vector<64x16xf32>
    %61 = vector.shape_cast %60 : vector<64x16xf32> to vector<8x8x16xf32>
    %62 = vector.extract_strided_slice %15 {offsets = [0, 96], sizes = [64, 16], strides = [1, 1]} : vector<64x192xf32> to vector<64x16xf32>
    %63 = vector.shape_cast %62 : vector<64x16xf32> to vector<8x8x16xf32>
    %64 = vector.extract_strided_slice %15 {offsets = [0, 160], sizes = [64, 16], strides = [1, 1]} : vector<64x192xf32> to vector<64x16xf32>
    %65 = vector.shape_cast %64 : vector<64x16xf32> to vector<8x8x16xf32>
    "tpu.trace_start"() <{level = 10 : i32, message = "twd,tvd->twv"}> : () -> ()
    %cst_19 = arith.constant dense<0.000000e+00> : vector<8x8x8xf32>
    %66 = tpu.matmul %61, %63, %cst_19 {dimension_numbers = #tpu.dot_dimension_numbers<[2], [2], [1], [1], [0, 0, 0, 1, 1, 1], [0], [0]>} : vector<8x8x16xf32>, vector<8x8x16xf32>, vector<8x8x8xf32> -> vector<8x8x8xf32>
    "tpu.trace_stop"() : () -> ()
    %cst_20 = arith.constant dense<0xFF800000> : vector<8x8xf32>
    %67 = vector.multi_reduction <maximumf>, %66, %cst_20 [2] : vector<8x8x8xf32> to vector<8x8xf32>
    %68 = vector.shape_cast %67 : vector<8x8xf32> to vector<8x8x1xf32>
    %69 = vector.broadcast %68 : vector<8x8x1xf32> to vector<8x8x8xf32>
    %70 = arith.subf %66, %69 : vector<8x8x8xf32>
    %71 = math.exp %70 : vector<8x8x8xf32>
    %cst_21 = arith.constant dense<0.000000e+00> : vector<8x8xf32>
    %72 = vector.multi_reduction <add>, %71, %cst_21 [2] : vector<8x8x8xf32> to vector<8x8xf32>
    %73 = vector.shape_cast %72 : vector<8x8xf32> to vector<8x8x1xf32>
    %74 = tpu.reciprocal %73 {approx = true} : vector<8x8x1xf32> -> vector<8x8x1xf32>
    %75 = vector.broadcast %74 : vector<8x8x1xf32> to vector<8x8x8xf32>
    %76 = arith.mulf %71, %75 : vector<8x8x8xf32>
    "tpu.trace_start"() <{level = 10 : i32, message = "twv,tvd->twd"}> : () -> ()
    %cst_22 = arith.constant dense<0.000000e+00> : vector<8x8x16xf32>
    %77 = tpu.matmul %76, %65, %cst_22 {dimension_numbers = #tpu.dot_dimension_numbers<[2], [1], [1], [2], [0, 0, 0, 1, 1, 2], [0], [0]>} : vector<8x8x8xf32>, vector<8x8x16xf32>, vector<8x8x16xf32> -> vector<8x8x16xf32>
    "tpu.trace_stop"() : () -> ()
    %78 = vector.shape_cast %77 : vector<8x8x16xf32> to vector<64x16xf32>
    %79 = vector.extract_strided_slice %15 {offsets = [0, 48], sizes = [64, 16], strides = [1, 1]} : vector<64x192xf32> to vector<64x16xf32>
    %cst_23 = arith.constant 1.250000e-01 : f32
    %80 = vector.broadcast %cst_23 : f32 to vector<64x16xf32>
    %81 = arith.mulf %79, %80 : vector<64x16xf32>
    %82 = vector.shape_cast %81 : vector<64x16xf32> to vector<8x8x16xf32>
    %83 = vector.extract_strided_slice %15 {offsets = [0, 112], sizes = [64, 16], strides = [1, 1]} : vector<64x192xf32> to vector<64x16xf32>
    %84 = vector.shape_cast %83 : vector<64x16xf32> to vector<8x8x16xf32>
    %85 = vector.extract_strided_slice %15 {offsets = [0, 176], sizes = [64, 16], strides = [1, 1]} : vector<64x192xf32> to vector<64x16xf32>
    %86 = vector.shape_cast %85 : vector<64x16xf32> to vector<8x8x16xf32>
    "tpu.trace_start"() <{level = 10 : i32, message = "twd,tvd->twv"}> : () -> ()
    %cst_24 = arith.constant dense<0.000000e+00> : vector<8x8x8xf32>
    %87 = tpu.matmul %82, %84, %cst_24 {dimension_numbers = #tpu.dot_dimension_numbers<[2], [2], [1], [1], [0, 0, 0, 1, 1, 1], [0], [0]>} : vector<8x8x16xf32>, vector<8x8x16xf32>, vector<8x8x8xf32> -> vector<8x8x8xf32>
    "tpu.trace_stop"() : () -> ()
    %cst_25 = arith.constant dense<0xFF800000> : vector<8x8xf32>
    %88 = vector.multi_reduction <maximumf>, %87, %cst_25 [2] : vector<8x8x8xf32> to vector<8x8xf32>
    %89 = vector.shape_cast %88 : vector<8x8xf32> to vector<8x8x1xf32>
    %90 = vector.broadcast %89 : vector<8x8x1xf32> to vector<8x8x8xf32>
    %91 = arith.subf %87, %90 : vector<8x8x8xf32>
    %92 = math.exp %91 : vector<8x8x8xf32>
    %cst_26 = arith.constant dense<0.000000e+00> : vector<8x8xf32>
    %93 = vector.multi_reduction <add>, %92, %cst_26 [2] : vector<8x8x8xf32> to vector<8x8xf32>
    %94 = vector.shape_cast %93 : vector<8x8xf32> to vector<8x8x1xf32>
    %95 = tpu.reciprocal %94 {approx = true} : vector<8x8x1xf32> -> vector<8x8x1xf32>
    %96 = vector.broadcast %95 : vector<8x8x1xf32> to vector<8x8x8xf32>
    %97 = arith.mulf %92, %96 : vector<8x8x8xf32>
    "tpu.trace_start"() <{level = 10 : i32, message = "twv,tvd->twd"}> : () -> ()
    %cst_27 = arith.constant dense<0.000000e+00> : vector<8x8x16xf32>
    %98 = tpu.matmul %97, %86, %cst_27 {dimension_numbers = #tpu.dot_dimension_numbers<[2], [1], [1], [2], [0, 0, 0, 1, 1, 2], [0], [0]>} : vector<8x8x8xf32>, vector<8x8x16xf32>, vector<8x8x16xf32> -> vector<8x8x16xf32>
    "tpu.trace_stop"() : () -> ()
    %99 = vector.shape_cast %98 : vector<8x8x16xf32> to vector<64x16xf32>
    %100 = tpu.concatenate %36, %57, %78, %99 in 1 : vector<64x16xf32>, vector<64x16xf32>, vector<64x16xf32>, vector<64x16xf32> -> vector<64x64xf32>
    %c0_28 = arith.constant 0 : index
    %c0_29 = arith.constant 0 : index
    %101 = vector.load %arg4[%c0_28, %c0_29] : memref<64x64xf32, #tpu.memory_space<vmem>>, vector<64x64xf32>
    %cst_30 = arith.constant dense<0.000000e+00> : vector<64x64xf32>
    %102 = tpu.matmul %100, %101, %cst_30 {dimension_numbers = #tpu.dot_dimension_numbers<[1], [0], [0], [1], [0, 0, 1, 1], [], []>} : vector<64x64xf32>, vector<64x64xf32>, vector<64x64xf32> -> vector<64x64xf32>
    %103 = arith.addf %0, %102 : vector<64x64xf32>
    %104 = arith.mulf %103, %103 : vector<64x64xf32>
    %cst_31 = arith.constant dense<0.000000e+00> : vector<64xf32>
    %105 = vector.multi_reduction <add>, %104, %cst_31 [1] : vector<64x64xf32> to vector<64xf32>
    %106 = vector.shape_cast %105 : vector<64xf32> to vector<64x1xf32>
    %cst_32 = arith.constant 6.400000e+01 : f32
    %107 = vector.broadcast %cst_32 : f32 to vector<64x1xf32>
    %108 = arith.divf %106, %107 : vector<64x1xf32>
    %cst_33 = arith.constant 9.99999974E-6 : f32
    %109 = vector.broadcast %cst_33 : f32 to vector<64x1xf32>
    %110 = arith.addf %108, %109 : vector<64x1xf32>
    %111 = math.rsqrt %110 : vector<64x1xf32>
    %112 = vector.broadcast %111 : vector<64x1xf32> to vector<64x64xf32>
    %113 = arith.mulf %103, %112 : vector<64x64xf32>
    %c0_34 = arith.constant 0 : index
    %c0_35 = arith.constant 0 : index
    %114 = vector.load %arg5[%c0_34, %c0_35] : memref<1x64xf32, #tpu.memory_space<vmem>>, vector<1x64xf32>
    %115 = vector.broadcast %114 : vector<1x64xf32> to vector<64x64xf32>
    %116 = arith.mulf %113, %115 : vector<64x64xf32>
    %c0_36 = arith.constant 0 : index
    %c0_37 = arith.constant 0 : index
    %117 = vector.load %arg6[%c0_36, %c0_37] : memref<64x256xf32, #tpu.memory_space<vmem>>, vector<64x256xf32>
    %cst_38 = arith.constant dense<0.000000e+00> : vector<64x256xf32>
    %118 = tpu.matmul %116, %117, %cst_38 {dimension_numbers = #tpu.dot_dimension_numbers<[1], [0], [0], [1], [0, 0, 1, 1], [], []>} : vector<64x64xf32>, vector<64x256xf32>, vector<64x256xf32> -> vector<64x256xf32>
    %119 = vector.extract_strided_slice %118 {offsets = [0, 0], sizes = [64, 128], strides = [1, 1]} : vector<64x256xf32> to vector<64x128xf32>
    %120 = vector.extract_strided_slice %118 {offsets = [0, 128], sizes = [64, 128], strides = [1, 1]} : vector<64x256xf32> to vector<64x128xf32>
    %121 = arith.negf %120 : vector<64x128xf32>
    %122 = math.exp %121 : vector<64x128xf32>
    %cst_39 = arith.constant 1.000000e+00 : f32
    %123 = vector.broadcast %cst_39 : f32 to vector<64x128xf32>
    %124 = arith.addf %123, %122 : vector<64x128xf32>
    %125 = arith.divf %123, %124 : vector<64x128xf32>
    %126 = arith.mulf %120, %125 : vector<64x128xf32>
    %127 = arith.mulf %119, %126 : vector<64x128xf32>
    %c0_40 = arith.constant 0 : index
    %c0_41 = arith.constant 0 : index
    %128 = vector.load %arg7[%c0_40, %c0_41] : memref<128x64xf32, #tpu.memory_space<vmem>>, vector<128x64xf32>
    %cst_42 = arith.constant dense<0.000000e+00> : vector<64x64xf32>
    %129 = tpu.matmul %127, %128, %cst_42 {dimension_numbers = #tpu.dot_dimension_numbers<[1], [0], [0], [1], [0, 0, 1, 1], [], []>} : vector<64x128xf32>, vector<128x64xf32>, vector<64x64xf32> -> vector<64x64xf32>
    %130 = arith.addf %103, %129 : vector<64x64xf32>
    %c0_43 = arith.constant 0 : index
    %c0_44 = arith.constant 0 : index
    %131 = vector.load %arg8[%c0_43, %c0_44] : memref<64x64xf32, #tpu.memory_space<vmem>>, vector<64x64xf32>
    tpu.vector_store %arg8[%c0_43, %c0_44], %130 {strides = array<i32>} : memref<64x64xf32, #tpu.memory_space<vmem>>, vector<64x64xf32>,
    return
  }
  func.func @transform_0(%arg0: i32) -> (i32, i32) {
    %c0_i32 = arith.constant 0 : i32
    %c0_i32_0 = arith.constant 0 : i32
    return %arg0, %c0_i32 : i32, i32
  }
  func.func @transform_1(%arg0: i32) -> (i32, i32) {
    %c0_i32 = arith.constant 0 : i32
    %c0_i32_0 = arith.constant 0 : i32
    %c0_i32_1 = arith.constant 0 : i32
    return %c0_i32, %c0_i32_0 : i32, i32
  }
  func.func @transform_2(%arg0: i32) -> (i32, i32) {
    %c0_i32 = arith.constant 0 : i32
    %c0_i32_0 = arith.constant 0 : i32
    %c0_i32_1 = arith.constant 0 : i32
    return %c0_i32, %c0_i32_0 : i32, i32
  }
  func.func @transform_3(%arg0: i32) -> (i32, i32) {
    %c0_i32 = arith.constant 0 : i32
    %c0_i32_0 = arith.constant 0 : i32
    %c0_i32_1 = arith.constant 0 : i32
    return %c0_i32, %c0_i32_0 : i32, i32
  }
  func.func @transform_4(%arg0: i32) -> (i32, i32) {
    %c0_i32 = arith.constant 0 : i32
    %c0_i32_0 = arith.constant 0 : i32
    %c0_i32_1 = arith.constant 0 : i32
    return %c0_i32, %c0_i32_0 : i32, i32
  }
  func.func @transform_5(%arg0: i32) -> (i32, i32) {
    %c0_i32 = arith.constant 0 : i32
    %c0_i32_0 = arith.constant 0 : i32
    %c0_i32_1 = arith.constant 0 : i32
    return %c0_i32, %c0_i32_0 : i32, i32
  }
  func.func @transform_6(%arg0: i32) -> (i32, i32) {
    %c0_i32 = arith.constant 0 : i32
    %c0_i32_0 = arith.constant 0 : i32
    %c0_i32_1 = arith.constant 0 : i32
    return %c0_i32, %c0_i32_0 : i32, i32
  }
  func.func @transform_7(%arg0: i32) -> (i32, i32) {
    %c0_i32 = arith.constant 0 : i32
    %c0_i32_0 = arith.constant 0 : i32
    return %arg0, %c0_i32 : i32, i32
  }
}

</mosaic_0001>

<llo_original>
// kernel: tpu_custom_call.1
$region0: #{tpu_custom_call.1}
  #allocation0 [shape = 'u32[]', space=smem, size = 0x4, offset = 0x4, fixed_abs, tag = 'smem constant byte address 0x4 - core index']
  #allocation1 [shape = 'u32[144,128]{1,0:T(1,128)}', space=vmem, size = 0x12000, scoped, tag = 'internal scratch']
  %s0 = inlined_call_operand.vmem [shape: f32[256,64], index: 0, kind: input, shape index: {}]
  %s1 = inlined_call_operand.vmem [shape: f32[1,64], index: 1, kind: input, shape index: {}]
  %s2 = inlined_call_operand.vmem [shape: f32[64,192], index: 2, kind: input, shape index: {}]
  %s3 = inlined_call_operand.vmem [shape: f32[64,64], index: 3, kind: input, shape index: {}]
  %s4 = inlined_call_operand.vmem [shape: f32[1,64], index: 4, kind: input, shape index: {}]
  %s5 = inlined_call_operand.vmem [shape: f32[64,256], index: 5, kind: input, shape index: {}]
  %s6 = inlined_call_operand.vmem [shape: f32[128,64], index: 6, kind: input, shape index: {}]
  %s7 = inlined_call_operand.vmem [shape: f32[256,64], index: 7, kind: output, shape index: {}]
  %s8 = sld [smem:[#allocation0]]
  $region61: #{tpu_custom_call.1} parent=0
    _
  %s10 = ssub.s32 1, %s8
  %s11 = scalar_select 0, %s10, %s8
  loop: start=0, step=1, limit=6
  $region2: #{tpu_custom_call.1} parent=0 // loop_pre_header
    _
  $region3: #{tpu_custom_call.1} parent=0 // loop_header
    %s13 = sphi 0, %s17
    %p14 = scmp.ge.s32.totalorder %s13, 6
    %s23 = sphi 0, %s25
    %s26 = sphi 0, %s23
    %s27 = sphi 0, %s26
    %s43 = sphi 0, %s27
    %s47 = sphi 0, %s47
    %s49 = sphi 0, %s47
    %s50 = sphi 0, %s49
    %s64 = sphi 0, %s50
    %s68 = sphi 0, %s68
    %s70 = sphi 0, %s68
    %s71 = sphi 0, %s70
    %s85 = sphi 0, %s71
    %s89 = sphi 0, %s89
    %s91 = sphi 0, %s89
    %s92 = sphi 0, %s91
    %s106 = sphi 0, %s92
    %s110 = sphi 0, %s110
    %s112 = sphi 0, %s110
    %s113 = sphi 0, %s112
    %s127 = sphi 0, %s113
    %s131 = sphi 0, %s131
    %s133 = sphi 0, %s131
    %s134 = sphi 0, %s133
    %s148 = sphi 0, %s134
    %s152 = sphi 0, %s152
    %s154 = sphi 0, %s152
    %s155 = sphi 0, %s154
    %s169 = sphi 0, %s155
    %s175 = sphi 0, %s177
    %s178 = sphi 0, %s175
    %s179 = sphi 0, %s178
    %s195 = sphi 0, %s179
  $region4: #{tpu_custom_call.1} parent=0 // loop_header_branch
    %16 = sbr.rel (%p14) target = $region8
  $region5: #{tpu_custom_call.1} parent=0 // loop_body
    %s18 = ssub.s32 %s13, 1
    %s19 = ssub.s32 %s13, 2
    %s20 = sadd.s32 %s13, 1
    %s21 = ssub.s32 %s13, %s20
    %p22 = scmp.eq.s32.totalorder %s21, 0
    %s24 = sadd.s32 %s23, 1
    %s25 = scalar_select %p22, %s23, %s24
    %p28 = pneg %p22
    %p29 = scmp.eq.s32.totalorder %s13, 3
    %p30 = por %p28, %p29
    %p31 = scmp.ne.s32.totalorder %s23, %s26
    %p32 = scmp.eq.s32.totalorder %s13, 0
    %p33 = por %p31, %p32
    %p34 = scmp.ne.s32.totalorder %s23, %s26
    %p35 = scmp.eq.s32.totalorder %s18, 3
    %p36 = por %p34, %p35
    %p37 = scmp.ne.s32.totalorder %s26, %s27
    %p38 = scmp.eq.s32.totalorder %s18, 0
    %p39 = por %p37, %p38
    %p40 = scmp.ne.s32.totalorder %s26, %s27
    %p41 = scmp.eq.s32.totalorder %s19, 3
    %p42 = por %p40, %p41
    %p44 = scmp.ne.s32.totalorder %s27, %s43
    %p45 = scmp.eq.s32.totalorder %s19, 0
    %p46 = por %p44, %p45
    %s48 = sadd.s32 %s47, 1
    %p51 = scmp.eq.s32.totalorder %s13, 3
    %p52 = scmp.ne.s32.totalorder %s47, %s49
    %p53 = scmp.eq.s32.totalorder %s13, 0
    %p54 = por %p52, %p53
    %p55 = scmp.ne.s32.totalorder %s47, %s49
    %p56 = scmp.eq.s32.totalorder %s18, 3
    %p57 = por %p55, %p56
    %p58 = scmp.ne.s32.totalorder %s49, %s50
    %p59 = scmp.eq.s32.totalorder %s18, 0
    %p60 = por %p58, %p59
    %p61 = scmp.ne.s32.totalorder %s49, %s50
    %p62 = scmp.eq.s32.totalorder %s19, 3
    %p63 = por %p61, %p62
    %p65 = scmp.ne.s32.totalorder %s50, %s64
    %p66 = scmp.eq.s32.totalorder %s19, 0
    %p67 = por %p65, %p66
    %s69 = sadd.s32 %s68, 1
    %p72 = scmp.eq.s32.totalorder %s13, 3
    %p73 = scmp.ne.s32.totalorder %s68, %s70
    %p74 = scmp.eq.s32.totalorder %s13, 0
    %p75 = por %p73, %p74
    %p76 = scmp.ne.s32.totalorder %s68, %s70
    %p77 = scmp.eq.s32.totalorder %s18, 3
    %p78 = por %p76, %p77
    %p79 = scmp.ne.s32.totalorder %s70, %s71
    %p80 = scmp.eq.s32.totalorder %s18, 0
    %p81 = por %p79, %p80
    %p82 = scmp.ne.s32.totalorder %s70, %s71
    %p83 = scmp.eq.s32.totalorder %s19, 3
    %p84 = por %p82, %p83
    %p86 = scmp.ne.s32.totalorder %s71, %s85
    %p87 = scmp.eq.s32.totalorder %s19, 0
    %p88 = por %p86, %p87
    %s90 = sadd.s32 %s89, 1
    %p93 = scmp.eq.s32.totalorder %s13, 3
    %p94 = scmp.ne.s32.totalorder %s89, %s91
    %p95 = scmp.eq.s32.totalorder %s13, 0
    %p96 = por %p94, %p95
    %p97 = scmp.ne.s32.totalorder %s89, %s91
    %p98 = scmp.eq.s32.totalorder %s18, 3
    %p99 = por %p97, %p98
    %p100 = scmp.ne.s32.totalorder %s91, %s92
    %p101 = scmp.eq.s32.totalorder %s18, 0
    %p102 = por %p100, %p101
    %p103 = scmp.ne.s32.totalorder %s91, %s92
    %p104 = scmp.eq.s32.totalorder %s19, 3
    %p105 = por %p103, %p104
    %p107 = scmp.ne.s32.totalorder %s92, %s106
    %p108 = scmp.eq.s32.totalorder %s19, 0
    %p109 = por %p107, %p108
    %s111 = sadd.s32 %s110, 1
    %p114 = scmp.eq.s32.totalorder %s13, 3
    %p115 = scmp.ne.s32.totalorder %s110, %s112
    %p116 = scmp.eq.s32.totalorder %s13, 0
    %p117 = por %p115, %p116
    %p118 = scmp.ne.s32.totalorder %s110, %s112
    %p119 = scmp.eq.s32.totalorder %s18, 3
    %p120 = por %p118, %p119
    %p121 = scmp.ne.s32.totalorder %s112, %s113
    %p122 = scmp.eq.s32.totalorder %s18, 0
    %p123 = por %p121, %p122
    %p124 = scmp.ne.s32.totalorder %s112, %s113
    %p125 = scmp.eq.s32.totalorder %s19, 3
    %p126 = por %p124, %p125
    %p128 = scmp.ne.s32.totalorder %s113, %s127
    %p129 = scmp.eq.s32.totalorder %s19, 0
    %p130 = por %p128, %p129
    %s132 = sadd.s32 %s131, 1
    %p135 = scmp.eq.s32.totalorder %s13, 3
    %p136 = scmp.ne.s32.totalorder %s131, %s133
    %p137 = scmp.eq.s32.totalorder %s13, 0
    %p138 = por %p136, %p137
    %p139 = scmp.ne.s32.totalorder %s131, %s133
    %p140 = scmp.eq.s32.totalorder %s18, 3
    %p141 = por %p139, %p140
    %p142 = scmp.ne.s32.totalorder %s133, %s134
    %p143 = scmp.eq.s32.totalorder %s18, 0
    %p144 = por %p142, %p143
    %p145 = scmp.ne.s32.totalorder %s133, %s134
    %p146 = scmp.eq.s32.totalorder %s19, 3
    %p147 = por %p145, %p146
    %p149 = scmp.ne.s32.totalorder %s134, %s148
    %p150 = scmp.eq.s32.totalorder %s19, 0
    %p151 = por %p149, %p150
    %s153 = sadd.s32 %s152, 1
    %p156 = scmp.eq.s32.totalorder %s13, 3
    %p157 = scmp.ne.s32.totalorder %s152, %s154
    %p158 = scmp.eq.s32.totalorder %s13, 0
    %p159 = por %p157, %p158
    %p160 = scmp.ne.s32.totalorder %s152, %s154
    %p161 = scmp.eq.s32.totalorder %s18, 3
    %p162 = por %p160, %p161
    %p163 = scmp.ne.s32.totalorder %s154, %s155
    %p164 = scmp.eq.s32.totalorder %s18, 0
    %p165 = por %p163, %p164
    %p166 = scmp.ne.s32.totalorder %s154, %s155
    %p167 = scmp.eq.s32.totalorder %s19, 3
    %p168 = por %p166, %p167
    %p170 = scmp.ne.s32.totalorder %s155, %s169
    %p171 = scmp.eq.s32.totalorder %s19, 0
    %p172 = por %p170, %p171
    %s173 = ssub.s32 %s13, %s20
    %p174 = scmp.eq.s32.totalorder %s173, 0
    %s176 = sadd.s32 %s175, 1
    %s177 = scalar_select %p174, %s175, %s176
    %p180 = pneg %p174
    %p181 = scmp.eq.s32.totalorder %s13, 3
    %p182 = por %p180, %p181
    %p183 = scmp.ne.s32.totalorder %s175, %s178
    %p184 = scmp.eq.s32.totalorder %s13, 0
    %p185 = por %p183, %p184
    %p186 = scmp.ne.s32.totalorder %s175, %s178
    %p187 = scmp.eq.s32.totalorder %s18, 3
    %p188 = por %p186, %p187
    %p189 = scmp.ne.s32.totalorder %s178, %s179
    %p190 = scmp.eq.s32.totalorder %s18, 0
    %p191 = por %p189, %p190
    %p192 = scmp.ne.s32.totalorder %s178, %s179
    %p193 = scmp.eq.s32.totalorder %s19, 3
    %p194 = por %p192, %p193
    %p196 = scmp.ne.s32.totalorder %s179, %s195
    %p197 = scmp.eq.s32.totalorder %s19, 0
    %p198 = por %p196, %p197
    %p199 = scmp.le.s32.totalorder 1, %s13
    %p200 = scmp.lt.s32.totalorder %s13, 5
    %p201 = pnand %p199, %p200
    %p202 = pneg %p201
    // Predicated region
    $region9: #{tpu_custom_call.1} parent=5 // pred_check
      _
    $region10: #{tpu_custom_call.1} parent=5 // pred_check_branch
      %204 = sbr.rel (%p201) target = $region12
    $region11: #{tpu_custom_call.1} parent=5 // pred_region
      %s205 = ssub.s32 %s13, 1
      // Predicated region
      $region13: #{tpu_custom_call.1} parent=11 // pred_check
        %p206 = pneg %p60
      $region14: #{tpu_custom_call.1} parent=11 // pred_check_branch
        %208 = sbr.rel (%p206) target = $region16
      $region15: #{tpu_custom_call.1} parent=11 // pred_region
        _
      $region16: #{tpu_custom_call.1} parent=11 // pred_fallthru
        _
      // Predicated region
      $region17: #{tpu_custom_call.1} parent=11 // pred_check
        %p209 = pneg %p81
      $region18: #{tpu_custom_call.1} parent=11 // pred_check_branch
        %211 = sbr.rel (%p209) target = $region20
      $region19: #{tpu_custom_call.1} parent=11 // pred_region
        _
      $region20: #{tpu_custom_call.1} parent=11 // pred_fallthru
        _
      // Predicated region
      $region21: #{tpu_custom_call.1} parent=11 // pred_check
        %p212 = pneg %p102
      $region22: #{tpu_custom_call.1} parent=11 // pred_check_branch
        %214 = sbr.rel (%p212) target = $region24
      $region23: #{tpu_custom_call.1} parent=11 // pred_region
        _
      $region24: #{tpu_custom_call.1} parent=11 // pred_fallthru
        _
      // Predicated region
      $region25: #{tpu_custom_call.1} parent=11 // pred_check
        %p215 = pneg %p123
      $region26: #{tpu_custom_call.1} parent=11 // pred_check_branch
        %217 = sbr.rel (%p215) target = $region28
      $region27: #{tpu_custom_call.1} parent=11 // pred_region
        _
      $region28: #{tpu_custom_call.1} parent=11 // pred_fallthru
        _
      // Predicated region
      $region29: #{tpu_custom_call.1} parent=11 // pred_check
        %p218 = pneg %p144
      $region30: #{tpu_custom_call.1} parent=11 // pred_check_branch
        %220 = sbr.rel (%p218) target = $region32
      $region31: #{tpu_custom_call.1} parent=11 // pred_region
        _
      $region32: #{tpu_custom_call.1} parent=11 // pred_fallthru
        _
      // Predicated region
      $region33: #{tpu_custom_call.1} parent=11 // pred_check
        %p221 = pneg %p165
      $region34: #{tpu_custom_call.1} parent=11 // pred_check_branch
        %223 = sbr.rel (%p221) target = $region36
      $region35: #{tpu_custom_call.1} parent=11 // pred_region
        _
      $region36: #{tpu_custom_call.1} parent=11 // pred_fallthru
        _
    $region12: #{tpu_custom_call.1} parent=5 // pred_fallthru
      _
    %p224 = scmp.lt.s32.totalorder %s13, 4
    // Predicated region
    $region37: #{tpu_custom_call.1} parent=5 // pred_check
      %p225 = pneg %p224
    $region38: #{tpu_custom_call.1} parent=5 // pred_check_branch
      %227 = sbr.rel (%p225) target = $region40
    $region39: #{tpu_custom_call.1} parent=5 // pred_region
      // Predicated region
      $region41: #{tpu_custom_call.1} parent=39 // pred_check
        %p228 = pneg %p33
      $region42: #{tpu_custom_call.1} parent=39 // pred_check_branch
        %230 = sbr.rel (%p228) target = $region44
      $region43: #{tpu_custom_call.1} parent=39 // pred_region
        %s231 = smul.u32 8, %s13
        %p232 = scmp.lt.s32.totalorder %s231, 31
        %s233 = scalar_select %p232, %s231, 31
        %s234 = smul.addr %s233, 8
        %s235 = scalar_lea.vmem %s0, %s234
        %s236 = smul.u32 8, %s13
      $region44: #{tpu_custom_call.1} parent=39 // pred_fallthru
        _
    $region40: #{tpu_custom_call.1} parent=5 // pred_fallthru
      _
    %p237 = scmp.le.s32.totalorder 1, %s13
    %p238 = scmp.lt.s32.totalorder %s13, 5
    %p239 = pnand %p237, %p238
    %p240 = pneg %p239
    // Predicated region
    $region45: #{tpu_custom_call.1} parent=5 // pred_check
      _
    $region46: #{tpu_custom_call.1} parent=5 // pred_check_branch
      %242 = sbr.rel (%p239) target = $region48
    $region47: #{tpu_custom_call.1} parent=5 // pred_region
      %s243 = ssub.s32 %s13, 1
      %s244 = smul.u32 8, %s18
      %p245 = scmp.lt.s32.totalorder %s244, 31
      %s246 = scalar_select %p245, %s244, 31
      %s247 = smul.addr %s246, 8
      %s248 = scalar_lea.vmem %s0, %s247
      %p249 = pneg %p39
      %p250 = pneg %p36
      %p251 = pneg %p60
      %p252 = pneg %p57
      %p253 = pneg %p81
      %p254 = pneg %p78
      %p255 = pneg %p102
      %p256 = pneg %p99
      %p257 = pneg %p123
      %p258 = pneg %p120
      %p259 = pneg %p144
      %p260 = pneg %p141
      %p261 = pneg %p165
      %p262 = pneg %p162
      %p263 = pneg %p191
      %p264 = pneg %p188
      %s265 = smul.u32 8, %s18
      %p266 = scmp.lt.s32.totalorder %s265, 31
      %s267 = scalar_select %p266, %s265, 31
      %s268 = smul.addr %s267, 8
      %s269 = scalar_lea.vmem %s7, %s268
      %s270 = smul.u32 8, %s18
      %p271 = scmp.lt.s32.totalorder %s270, 31
      %s272 = scalar_select %p271, %s270, 31
      %s273 = smul.addr %s272, 8
      %s274 = scalar_lea.vmem %s0, %s273
      %s275 = smul.u32 8, %s18
      %s276 = smul.u32 8, %s18
      %p277 = scmp.lt.s32.totalorder %s276, 31
      %s278 = scalar_select %p277, %s276, 31
      %s279 = smul.addr %s278, 8
      %s280 = scalar_lea.vmem %s7, %s279
      %s281 = smul.u32 8, %s18
      %v282 = vld [vmem:[%s274] sm:$0xff]
      %v283 = vld [vmem:[%s274 + $0x8] sm:$0xff]
      %v284 = vld [vmem:[%s274 + $0x10] sm:$0xff]
      %v285 = vld [vmem:[%s274 + $0x18] sm:$0xff]
      %v286 = vld [vmem:[%s274 + $0x20] sm:$0xff]
      %v287 = vld [vmem:[%s274 + $0x28] sm:$0xff]
      %v288 = vld [vmem:[%s274 + $0x30] sm:$0xff]
      %v289 = vld [vmem:[%s274 + $0x38] sm:$0xff]
      %v290 = vmul.f32 %v282, %v282
      %v291 = vmul.f32 %v283, %v283
      %v292 = vmul.f32 %v284, %v284
      %v293 = vmul.f32 %v285, %v285
      %v294 = vmul.f32 %v286, %v286
      %v295 = vmul.f32 %v287, %v287
      %v296 = vmul.f32 %v288, %v288
      %v297 = vmul.f32 %v289, %v289
      %vm298 = vcmask 523264
      %v299 = vsel %vm298, %v290, 0.0
      %300 = vadd.xlane.f32.xlu0 %v299
      %v301 = vpop.xlane.xlu0 %300
      %v302 = vsel %vm298, %v291, 0.0
      %303 = vadd.xlane.f32.xlu0 %v302
      %v304 = vpop.xlane.xlu0 %303
      %v305 = vsel %vm298, %v292, 0.0
      %306 = vadd.xlane.f32.xlu0 %v305
      %v307 = vpop.xlane.xlu0 %306
      %v308 = vsel %vm298, %v293, 0.0
      %309 = vadd.xlane.f32.xlu0 %v308
      %v310 = vpop.xlane.xlu0 %309
      %v311 = vsel %vm298, %v294, 0.0
      %312 = vadd.xlane.f32.xlu0 %v311
      %v313 = vpop.xlane.xlu0 %312
      %v314 = vsel %vm298, %v295, 0.0
      %315 = vadd.xlane.f32.xlu0 %v314
      %v316 = vpop.xlane.xlu0 %315
      %v317 = vsel %vm298, %v296, 0.0
      %318 = vadd.xlane.f32.xlu0 %v317
      %v319 = vpop.xlane.xlu0 %318
      %v320 = vsel %vm298, %v297, 0.0
      %321 = vadd.xlane.f32.xlu0 %v320
      %v322 = vpop.xlane.xlu0 %321
      %v323 = vrcp.pop 64.0
      %v324 = vmul.f32 %v301, %v323
      %v325 = vmul.f32 %v304, %v323
      %v326 = vmul.f32 %v307, %v323
      %v327 = vmul.f32 %v310, %v323
      %v328 = vmul.f32 %v313, %v323
      %v329 = vmul.f32 %v316, %v323
      %v330 = vmul.f32 %v319, %v323
      %v331 = vmul.f32 %v322, %v323
      %v332 = vadd.f32 %v324, 1e-05
      %v333 = vadd.f32 %v325, 1e-05
      %v334 = vadd.f32 %v326, 1e-05
      %v335 = vadd.f32 %v327, 1e-05
      %v336 = vadd.f32 %v328, 1e-05
      %v337 = vadd.f32 %v329, 1e-05
      %v338 = vadd.f32 %v330, 1e-05
      %v339 = vadd.f32 %v331, 1e-05
      %v340 = vrsqrt.pop %v332
      %v341 = vrsqrt.pop %v333
      %v342 = vrsqrt.pop %v334
      %v343 = vrsqrt.pop %v335
      %v344 = vrsqrt.pop %v336
      %v345 = vrsqrt.pop %v337
      %v346 = vrsqrt.pop %v338
      %v347 = vrsqrt.pop %v339
      %v348 = vmul.f32 %v282, %v340
      %v349 = vmul.f32 %v283, %v341
      %v350 = vmul.f32 %v284, %v342
      %v351 = vmul.f32 %v285, %v343
      %v352 = vmul.f32 %v286, %v344
      %v353 = vmul.f32 %v287, %v345
      %v354 = vmul.f32 %v288, %v346
      %v355 = vmul.f32 %v289, %v347
      %v356 = vld [vmem:[%s1] sm:$0x1]
      %v358 = vlaneseq
      %v359 = vshrl.u32 %v358, 7
      %v360 = vsub.s32 0, %v359
      %v361 = vrot.slane %v356, %v360
      %v363 = vmul.f32 %v348, %v361
      %v364 = vmul.f32 %v349, %v361
      %v365 = vmul.f32 %v350, %v361
      %v366 = vmul.f32 %v351, %v361
      %v367 = vmul.f32 %v352, %v361
      %v368 = vmul.f32 %v353, %v361
      %v369 = vmul.f32 %v354, %v361
      %v370 = vmul.f32 %v355, %v361
      %v371 = vld [vmem:[%s2] sm:$0xff]
      %v372 = vld [vmem:[%s2 + $0x8] sm:$0xff]
      %v373 = vld [vmem:[%s2 + $0x10] sm:$0xff]
      %v374 = vld [vmem:[%s2 + $0x18] sm:$0xff]
      %v375 = vld [vmem:[%s2 + $0x20] sm:$0xff]
      %v376 = vld [vmem:[%s2 + $0x28] sm:$0xff]
      %v377 = vld [vmem:[%s2 + $0x30] sm:$0xff]
      %v378 = vld [vmem:[%s2 + $0x38] sm:$0xff]
      %v379 = vld [vmem:[%s2 + $0x40] sm:$0xff]
      %v380 = vld [vmem:[%s2 + $0x48] sm:$0xff]
      %v381 = vld [vmem:[%s2 + $0x50] sm:$0xff]
      %v382 = vld [vmem:[%s2 + $0x58] sm:$0xff]
      %v383 = vld [vmem:[%s2 + $0x60] sm:$0xff]
      %v384 = vld [vmem:[%s2 + $0x68] sm:$0xff]
      %v385 = vld [vmem:[%s2 + $0x70] sm:$0xff]
      %v386 = vld [vmem:[%s2 + $0x78] sm:$0xff]
      %v388 = vsel %vm298, %v363, 0
      %v391 = vsel %vm298, %v364, 0
      %v394 = vsel %vm298, %v365, 0
      %v397 = vsel %vm298, %v366, 0
      %v400 = vsel %vm298, %v367, 0
      %v403 = vsel %vm298, %v368, 0
      %v406 = vsel %vm298, %v369, 0
      %v409 = vsel %vm298, %v370, 0
      %411 = vmatprep.subr.mxu0 0.0
      %412 = vmatpush1.msra.mxu0 0.0
      %413 = vmatprep.subr.mxu0 0.0
      %414 = vmatpush1.msra.mxu0 0.0
      %415 = vmatprep.subr.mxu0 0.0
      %416 = vmatpush1.msra.mxu0 0.0
      %417 = vmatprep.subr.mxu0 0.0
      %418 = vmatpush1.msra.mxu0 0.0
      %419 = vmatprep.subr.mxu0 0.0
      %420 = vmatpush1.msra.mxu0 0.0
      %421 = vmatprep.subr.mxu0 0.0
      %422 = vmatpush1.msra.mxu0 0.0
      %423 = vmatprep.subr.mxu0 0.0
      %424 = vmatpush1.msra.mxu0 0.0
      %425 = vmatprep.subr.mxu0 0.0
      %426 = vmatpush1.msra.mxu0 0.0
      %427 = vmatprep.subr.mxu0 %v386
      %428 = vmatpush1.msra.mxu0 %v385
      %429 = vmatprep.subr.mxu0 %v384
      %430 = vmatpush1.msra.mxu0 %v383
      %431 = vmatprep.subr.mxu0 %v382
      %432 = vmatpush1.msra.mxu0 %v381
      %433 = vmatprep.subr.mxu0 %v380
      %434 = vmatpush1.msra.mxu0 %v379
      %435 = vmatprep.subr.mxu0 %v378
      %436 = vmatpush1.msra.mxu0 %v377
      %437 = vmatprep.subr.mxu0 %v376
      %438 = vmatpush1.msra.mxu0 %v375
      %439 = vmatprep.subr.mxu0 %v374
      %440 = vmatpush1.msra.mxu0 %v373
      %441 = vmatprep.subr.mxu0 %v372
      %442 = vmatpush1.msra.mxu0 %v371
      %443 = vmatprep.subr.mxu0 0.0
      %444 = vmatpush2.msra.mxu0 0.0
      %445 = vmatprep.subr.mxu0 0.0
      %446 = vmatpush2.msra.mxu0 0.0
      %447 = vmatprep.subr.mxu0 0.0
      %448 = vmatpush2.msra.mxu0 0.0
      %449 = vmatprep.subr.mxu0 0.0
      %450 = vmatpush2.msra.mxu0 0.0
      %451 = vmatprep.subr.mxu0 0.0
      %452 = vmatpush2.msra.mxu0 0.0
      %453 = vmatprep.subr.mxu0 0.0
      %454 = vmatpush2.msra.mxu0 0.0
      %455 = vmatprep.subr.mxu0 0.0
      %456 = vmatpush2.msra.mxu0 0.0
      %457 = vmatprep.subr.mxu0 0.0
      %458 = vmatpush2.msra.mxu0 0.0
      %459 = vmatprep.subr.mxu0 0.0
      %460 = vmatpush2.msra.mxu0 0.0
      %461 = vmatprep.subr.mxu0 0.0
      %462 = vmatpush2.msra.mxu0 0.0
      %463 = vmatprep.subr.mxu0 0.0
      %464 = vmatpush2.msra.mxu0 0.0
      %465 = vmatprep.subr.mxu0 0.0
      %466 = vmatpush2.msra.mxu0 0.0
      %467 = vmatprep.subr.mxu0 0.0
      %468 = vmatpush2.msra.mxu0 0.0
      %469 = vmatprep.subr.mxu0 0.0
      %470 = vmatpush2.msra.mxu0 0.0
      %471 = vmatprep.subr.mxu0 0.0
      %472 = vmatpush2.msra.mxu0 0.0
      %473 = vmatprep.subr.mxu0 0.0
      %474 = vmatpush2.msra.mxu0 0.0
      %475 = vmatprep.mubr.f32.mxu0 0.0
      %476 = vmatmul.mubr.f32.gmra.mxu0 %v388
      %v477 = vpop.f32.mrf.mxu0
      %v478 = vadd.f32 0.0, %v477
      %v479 = vpop.f32.mrf.mxu0
      %v480 = vadd.f32 0.0, %v479
      %481 = vmatprep.mubr.f32.mxu0 0.0
      %482 = vmatmul.mubr.f32.gmra.mxu0 %v391
      %v483 = vpop.f32.mrf.mxu0
      %v484 = vadd.f32 0.0, %v483
      %v485 = vpop.f32.mrf.mxu0
      %v486 = vadd.f32 0.0, %v485
      %487 = vmatprep.mubr.f32.mxu0 0.0
      %488 = vmatmul.mubr.f32.gmra.mxu0 %v394
      %v489 = vpop.f32.mrf.mxu0
      %v490 = vadd.f32 0.0, %v489
      %v491 = vpop.f32.mrf.mxu0
      %v492 = vadd.f32 0.0, %v491
      %493 = vmatprep.mubr.f32.mxu0 0.0
      %494 = vmatmul.mubr.f32.gmra.mxu0 %v397
      %v495 = vpop.f32.mrf.mxu0
      %v496 = vadd.f32 0.0, %v495
      %v497 = vpop.f32.mrf.mxu0
      %v498 = vadd.f32 0.0, %v497
      %499 = vmatprep.mubr.f32.mxu0 0.0
      %500 = vmatmul.mubr.f32.gmra.mxu0 %v400
      %v501 = vpop.f32.mrf.mxu0
      %v502 = vadd.f32 0.0, %v501
      %v503 = vpop.f32.mrf.mxu0
      %v504 = vadd.f32 0.0, %v503
      %505 = vmatprep.mubr.f32.mxu0 0.0
      %506 = vmatmul.mubr.f32.gmra.mxu0 %v403
      %v507 = vpop.f32.mrf.mxu0
      %v508 = vadd.f32 0.0, %v507
      %v509 = vpop.f32.mrf.mxu0
      %v510 = vadd.f32 0.0, %v509
      %511 = vmatprep.mubr.f32.mxu0 0.0
      %512 = vmatmul.mubr.f32.gmra.mxu0 %v406
      %v513 = vpop.f32.mrf.mxu0
      %v514 = vadd.f32 0.0, %v513
      %v515 = vpop.f32.mrf.mxu0
      %v516 = vadd.f32 0.0, %v515
      %517 = vmatprep.mubr.f32.mxu0 0.0
      %518 = vmatmul.mubr.f32.gmra.mxu0 %v409
      %v519 = vpop.f32.mrf.mxu0
      %v520 = vadd.f32 0.0, %v519
      %v521 = vpop.f32.mrf.mxu0
      %v522 = vadd.f32 0.0, %v521
      %523 = vdwg.mxu0
      %v524 = vmul.f32 %v478, 0.125
      %v525 = vmul.f32 %v484, 0.125
      %v526 = vmul.f32 %v490, 0.125
      %v527 = vmul.f32 %v496, 0.125
      %v528 = vmul.f32 %v502, 0.125
      %v529 = vmul.f32 %v508, 0.125
      %v530 = vmul.f32 %v514, 0.125
      %v531 = vmul.f32 %v520, 0.125
      %533 = vrot.lane.b32.xlu0 %v478, 64
      %v534 = vpop.permute.xlu0 %533
      %vm535 = vcmask 130048
      %v537 = vsel %vm535, %v524, 0
      %v539 = vsel %vm535, %v534, 0
      %541 = vmatprep.subr.mxu0 0.0
      %542 = vmatpush1.xpose.msra.mxu0 0.0
      %543 = vmatprep.subr.mxu0 0.0
      %544 = vmatpush1.xpose.msra.mxu0 0.0
      %545 = vmatprep.subr.mxu0 0.0
      %546 = vmatpush1.xpose.msra.mxu0 0.0
      %547 = vmatprep.subr.mxu0 0.0
      %548 = vmatpush1.xpose.msra.mxu0 0.0
      %549 = vmatprep.subr.mxu0 0.0
      %550 = vmatpush1.xpose.msra.mxu0 0.0
      %551 = vmatprep.subr.mxu0 0.0
      %552 = vmatpush1.xpose.msra.mxu0 0.0
      %553 = vmatprep.subr.mxu0 0.0
      %554 = vmatpush1.xpose.msra.mxu0 0.0
      %555 = vmatprep.subr.mxu0 0.0
      %556 = vmatpush1.xpose.msra.mxu0 0.0
      %557 = vmatprep.subr.mxu0 0.0
      %558 = vmatpush1.xpose.msra.mxu0 0.0
      %559 = vmatprep.subr.mxu0 0.0
      %560 = vmatpush1.xpose.msra.mxu0 0.0
      %561 = vmatprep.subr.mxu0 0.0
      %562 = vmatpush1.xpose.msra.mxu0 0.0
      %563 = vmatprep.subr.mxu0 0.0
      %564 = vmatpush1.xpose.msra.mxu0 0.0
      %565 = vmatprep.subr.mxu0 0.0
      %566 = vmatpush1.xpose.msra.mxu0 0.0
      %567 = vmatprep.subr.mxu0 0.0
      %568 = vmatpush1.xpose.msra.mxu0 0.0
      %569 = vmatprep.subr.mxu0 0.0
      %570 = vmatpush1.xpose.msra.mxu0 0.0
      %571 = vmatprep.subr.mxu0 0.0
      %572 = vmatpush1.xpose.msra.mxu0 %v539
      %573 = vmatprep.subr.mxu0 0.0
      %574 = vmatpush2.xpose.msra.mxu0 0.0
      %575 = vmatprep.subr.mxu0 0.0
      %576 = vmatpush2.xpose.msra.mxu0 0.0
      %577 = vmatprep.subr.mxu0 0.0
      %578 = vmatpush2.xpose.msra.mxu0 0.0
      %579 = vmatprep.subr.mxu0 0.0
      %580 = vmatpush2.xpose.msra.mxu0 0.0
      %581 = vmatprep.subr.mxu0 0.0
      %582 = vmatpush2.xpose.msra.mxu0 0.0
      %583 = vmatprep.subr.mxu0 0.0
      %584 = vmatpush2.xpose.msra.mxu0 0.0
      %585 = vmatprep.subr.mxu0 0.0
      %586 = vmatpush2.xpose.msra.mxu0 0.0
      %587 = vmatprep.subr.mxu0 0.0
      %588 = vmatpush2.xpose.msra.mxu0 0.0
      %589 = vmatprep.subr.mxu0 0.0
      %590 = vmatpush2.xpose.msra.mxu0 0.0
      %591 = vmatprep.subr.mxu0 0.0
      %592 = vmatpush2.xpose.msra.mxu0 0.0
      %593 = vmatprep.subr.mxu0 0.0
      %594 = vmatpush2.xpose.msra.mxu0 0.0
      %595 = vmatprep.subr.mxu0 0.0
      %596 = vmatpush2.xpose.msra.mxu0 0.0
      %597 = vmatprep.subr.mxu0 0.0
      %598 = vmatpush2.xpose.msra.mxu0 0.0
      %599 = vmatprep.subr.mxu0 0.0
      %600 = vmatpush2.xpose.msra.mxu0 0.0
      %601 = vmatprep.subr.mxu0 0.0
      %602 = vmatpush2.xpose.msra.mxu0 0.0
      %603 = vmatprep.subr.mxu0 0.0
      %604 = vmatpush2.xpose.msra.mxu0 0.0
      %605 = vmatprep.mubr.f32.mxu0 0.0
      %606 = vmatmul.mubr.f32.gmra.mxu0 %v537
      %v607 = vpop.f32.mrf.mxu0
      %v608 = vadd.f32 0.0, %v607
      %v609 = vpop.f32.mrf.mxu0
      %610 = vdwg.mxu0
      %612 = vrot.lane.b32.xlu0 %v484, 64
      %v613 = vpop.permute.xlu0 %612
      %v615 = vsel %vm535, %v525, 0
      %v617 = vsel %vm535, %v613, 0
      %619 = vmatprep.subr.mxu0 0.0
      %620 = vmatpush1.xpose.msra.mxu0 0.0
      %621 = vmatprep.subr.mxu0 0.0
      %622 = vmatpush1.xpose.msra.mxu0 0.0
      %623 = vmatprep.subr.mxu0 0.0
      %624 = vmatpush1.xpose.msra.mxu0 0.0
      %625 = vmatprep.subr.mxu0 0.0
      %626 = vmatpush1.xpose.msra.mxu0 0.0
      %627 = vmatprep.subr.mxu0 0.0
      %628 = vmatpush1.xpose.msra.mxu0 0.0
      %629 = vmatprep.subr.mxu0 0.0
      %630 = vmatpush1.xpose.msra.mxu0 0.0
      %631 = vmatprep.subr.mxu0 0.0
      %632 = vmatpush1.xpose.msra.mxu0 0.0
      %633 = vmatprep.subr.mxu0 0.0
      %634 = vmatpush1.xpose.msra.mxu0 0.0
      %635 = vmatprep.subr.mxu0 0.0
      %636 = vmatpush1.xpose.msra.mxu0 0.0
      %637 = vmatprep.subr.mxu0 0.0
      %638 = vmatpush1.xpose.msra.mxu0 0.0
      %639 = vmatprep.subr.mxu0 0.0
      %640 = vmatpush1.xpose.msra.mxu0 0.0
      %641 = vmatprep.subr.mxu0 0.0
      %642 = vmatpush1.xpose.msra.mxu0 0.0
      %643 = vmatprep.subr.mxu0 0.0
      %644 = vmatpush1.xpose.msra.mxu0 0.0
      %645 = vmatprep.subr.mxu0 0.0
      %646 = vmatpush1.xpose.msra.mxu0 0.0
      %647 = vmatprep.subr.mxu0 0.0
      %648 = vmatpush1.xpose.msra.mxu0 0.0
      %649 = vmatprep.subr.mxu0 0.0
      %650 = vmatpush1.xpose.msra.mxu0 %v617
      %651 = vmatprep.subr.mxu0 0.0
      %652 = vmatpush2.xpose.msra.mxu0 0.0
      %653 = vmatprep.subr.mxu0 0.0
      %654 = vmatpush2.xpose.msra.mxu0 0.0
      %655 = vmatprep.subr.mxu0 0.0
      %656 = vmatpush2.xpose.msra.mxu0 0.0
      %657 = vmatprep.subr.mxu0 0.0
      %658 = vmatpush2.xpose.msra.mxu0 0.0
      %659 = vmatprep.subr.mxu0 0.0
      %660 = vmatpush2.xpose.msra.mxu0 0.0
      %661 = vmatprep.subr.mxu0 0.0
      %662 = vmatpush2.xpose.msra.mxu0 0.0
      %663 = vmatprep.subr.mxu0 0.0
      %664 = vmatpush2.xpose.msra.mxu0 0.0
      %665 = vmatprep.subr.mxu0 0.0
      %666 = vmatpush2.xpose.msra.mxu0 0.0
      %667 = vmatprep.subr.mxu0 0.0
      %668 = vmatpush2.xpose.msra.mxu0 0.0
      %669 = vmatprep.subr.mxu0 0.0
      %670 = vmatpush2.xpose.msra.mxu0 0.0
      %671 = vmatprep.subr.mxu0 0.0
      %672 = vmatpush2.xpose.msra.mxu0 0.0
      %673 = vmatprep.subr.mxu0 0.0
      %674 = vmatpush2.xpose.msra.mxu0 0.0
      %675 = vmatprep.subr.mxu0 0.0
      %676 = vmatpush2.xpose.msra.mxu0 0.0
      %677 = vmatprep.subr.mxu0 0.0
      %678 = vmatpush2.xpose.msra.mxu0 0.0
      %679 = vmatprep.subr.mxu0 0.0
      %680 = vmatpush2.xpose.msra.mxu0 0.0
      %681 = vmatprep.subr.mxu0 0.0
      %682 = vmatpush2.xpose.msra.mxu0 0.0
      %683 = vmatprep.mubr.f32.mxu0 0.0
      %684 = vmatmul.mubr.f32.gmra.mxu0 %v615
      %v685 = vpop.f32.mrf.mxu0
      %v686 = vadd.f32 0.0, %v685
      %v687 = vpop.f32.mrf.mxu0
      %688 = vdwg.mxu0
      %690 = vrot.lane.b32.xlu0 %v490, 64
      %v691 = vpop.permute.xlu0 %690
      %v693 = vsel %vm535, %v526, 0
      %v695 = vsel %vm535, %v691, 0
      %697 = vmatprep.subr.mxu0 0.0
      %698 = vmatpush1.xpose.msra.mxu0 0.0
      %699 = vmatprep.subr.mxu0 0.0
      %700 = vmatpush1.xpose.msra.mxu0 0.0
      %701 = vmatprep.subr.mxu0 0.0
      %702 = vmatpush1.xpose.msra.mxu0 0.0
      %703 = vmatprep.subr.mxu0 0.0
      %704 = vmatpush1.xpose.msra.mxu0 0.0
      %705 = vmatprep.subr.mxu0 0.0
      %706 = vmatpush1.xpose.msra.mxu0 0.0
      %707 = vmatprep.subr.mxu0 0.0
      %708 = vmatpush1.xpose.msra.mxu0 0.0
      %709 = vmatprep.subr.mxu0 0.0
      %710 = vmatpush1.xpose.msra.mxu0 0.0
      %711 = vmatprep.subr.mxu0 0.0
      %712 = vmatpush1.xpose.msra.mxu0 0.0
      %713 = vmatprep.subr.mxu0 0.0
      %714 = vmatpush1.xpose.msra.mxu0 0.0
      %715 = vmatprep.subr.mxu0 0.0
      %716 = vmatpush1.xpose.msra.mxu0 0.0
      %717 = vmatprep.subr.mxu0 0.0
      %718 = vmatpush1.xpose.msra.mxu0 0.0
      %719 = vmatprep.subr.mxu0 0.0
      %720 = vmatpush1.xpose.msra.mxu0 0.0
      %721 = vmatprep.subr.mxu0 0.0
      %722 = vmatpush1.xpose.msra.mxu0 0.0
      %723 = vmatprep.subr.mxu0 0.0
      %724 = vmatpush1.xpose.msra.mxu0 0.0
      %725 = vmatprep.subr.mxu0 0.0
      %726 = vmatpush1.xpose.msra.mxu0 0.0
      %727 = vmatprep.subr.mxu0 0.0
      %728 = vmatpush1.xpose.msra.mxu0 %v695
      %729 = vmatprep.subr.mxu0 0.0
      %730 = vmatpush2.xpose.msra.mxu0 0.0
      %731 = vmatprep.subr.mxu0 0.0
      %732 = vmatpush2.xpose.msra.mxu0 0.0
      %733 = vmatprep.subr.mxu0 0.0
      %734 = vmatpush2.xpose.msra.mxu0 0.0
      %735 = vmatprep.subr.mxu0 0.0
      %736 = vmatpush2.xpose.msra.mxu0 0.0
      %737 = vmatprep.subr.mxu0 0.0
      %738 = vmatpush2.xpose.msra.mxu0 0.0
      %739 = vmatprep.subr.mxu0 0.0
      %740 = vmatpush2.xpose.msra.mxu0 0.0
      %741 = vmatprep.subr.mxu0 0.0
      %742 = vmatpush2.xpose.msra.mxu0 0.0
      %743 = vmatprep.subr.mxu0 0.0
      %744 = vmatpush2.xpose.msra.mxu0 0.0
      %745 = vmatprep.subr.mxu0 0.0
      %746 = vmatpush2.xpose.msra.mxu0 0.0
      %747 = vmatprep.subr.mxu0 0.0
      %748 = vmatpush2.xpose.msra.mxu0 0.0
      %749 = vmatprep.subr.mxu0 0.0
      %750 = vmatpush2.xpose.msra.mxu0 0.0
      %751 = vmatprep.subr.mxu0 0.0
      %752 = vmatpush2.xpose.msra.mxu0 0.0
      %753 = vmatprep.subr.mxu0 0.0
      %754 = vmatpush2.xpose.msra.mxu0 0.0
      %755 = vmatprep.subr.mxu0 0.0
      %756 = vmatpush2.xpose.msra.mxu0 0.0
      %757 = vmatprep.subr.mxu0 0.0
      %758 = vmatpush2.xpose.msra.mxu0 0.0
      %759 = vmatprep.subr.mxu0 0.0
      %760 = vmatpush2.xpose.msra.mxu0 0.0
      %761 = vmatprep.mubr.f32.mxu0 0.0
      %762 = vmatmul.mubr.f32.gmra.mxu0 %v693
      %v763 = vpop.f32.mrf.mxu0
      %v764 = vadd.f32 0.0, %v763
      %v765 = vpop.f32.mrf.mxu0
      %766 = vdwg.mxu0
      %768 = vrot.lane.b32.xlu0 %v496, 64
      %v769 = vpop.permute.xlu0 %768
      %v771 = vsel %vm535, %v527, 0
      %v773 = vsel %vm535, %v769, 0
      %775 = vmatprep.subr.mxu0 0.0
      %776 = vmatpush1.xpose.msra.mxu0 0.0
      %777 = vmatprep.subr.mxu0 0.0
      %778 = vmatpush1.xpose.msra.mxu0 0.0
      %779 = vmatprep.subr.mxu0 0.0
      %780 = vmatpush1.xpose.msra.mxu0 0.0
      %781 = vmatprep.subr.mxu0 0.0
      %782 = vmatpush1.xpose.msra.mxu0 0.0
      %783 = vmatprep.subr.mxu0 0.0
      %784 = vmatpush1.xpose.msra.mxu0 0.0
      %785 = vmatprep.subr.mxu0 0.0
      %786 = vmatpush1.xpose.msra.mxu0 0.0
      %787 = vmatprep.subr.mxu0 0.0
      %788 = vmatpush1.xpose.msra.mxu0 0.0
      %789 = vmatprep.subr.mxu0 0.0
      %790 = vmatpush1.xpose.msra.mxu0 0.0
      %791 = vmatprep.subr.mxu0 0.0
      %792 = vmatpush1.xpose.msra.mxu0 0.0
      %793 = vmatprep.subr.mxu0 0.0
      %794 = vmatpush1.xpose.msra.mxu0 0.0
      %795 = vmatprep.subr.mxu0 0.0
      %796 = vmatpush1.xpose.msra.mxu0 0.0
      %797 = vmatprep.subr.mxu0 0.0
      %798 = vmatpush1.xpose.msra.mxu0 0.0
      %799 = vmatprep.subr.mxu0 0.0
      %800 = vmatpush1.xpose.msra.mxu0 0.0
      %801 = vmatprep.subr.mxu0 0.0
      %802 = vmatpush1.xpose.msra.mxu0 0.0
      %803 = vmatprep.subr.mxu0 0.0
      %804 = vmatpush1.xpose.msra.mxu0 0.0
      %805 = vmatprep.subr.mxu0 0.0
      %806 = vmatpush1.xpose.msra.mxu0 %v773
      %807 = vmatprep.subr.mxu0 0.0
      %808 = vmatpush2.xpose.msra.mxu0 0.0
      %809 = vmatprep.subr.mxu0 0.0
      %810 = vmatpush2.xpose.msra.mxu0 0.0
      %811 = vmatprep.subr.mxu0 0.0
      %812 = vmatpush2.xpose.msra.mxu0 0.0
      %813 = vmatprep.subr.mxu0 0.0
      %814 = vmatpush2.xpose.msra.mxu0 0.0
      %815 = vmatprep.subr.mxu0 0.0
      %816 = vmatpush2.xpose.msra.mxu0 0.0
      %817 = vmatprep.subr.mxu0 0.0
      %818 = vmatpush2.xpose.msra.mxu0 0.0
      %819 = vmatprep.subr.mxu0 0.0
      %820 = vmatpush2.xpose.msra.mxu0 0.0
      %821 = vmatprep.subr.mxu0 0.0
      %822 = vmatpush2.xpose.msra.mxu0 0.0
      %823 = vmatprep.subr.mxu0 0.0
      %824 = vmatpush2.xpose.msra.mxu0 0.0
      %825 = vmatprep.subr.mxu0 0.0
      %826 = vmatpush2.xpose.msra.mxu0 0.0
      %827 = vmatprep.subr.mxu0 0.0
      %828 = vmatpush2.xpose.msra.mxu0 0.0
      %829 = vmatprep.subr.mxu0 0.0
      %830 = vmatpush2.xpose.msra.mxu0 0.0
      %831 = vmatprep.subr.mxu0 0.0
      %832 = vmatpush2.xpose.msra.mxu0 0.0
      %833 = vmatprep.subr.mxu0 0.0
      %834 = vmatpush2.xpose.msra.mxu0 0.0
      %835 = vmatprep.subr.mxu0 0.0
      %836 = vmatpush2.xpose.msra.mxu0 0.0
      %837 = vmatprep.subr.mxu0 0.0
      %838 = vmatpush2.xpose.msra.mxu0 0.0
      %839 = vmatprep.mubr.f32.mxu0 0.0
      %840 = vmatmul.mubr.f32.gmra.mxu0 %v771
      %v841 = vpop.f32.mrf.mxu0
      %v842 = vadd.f32 0.0, %v841
      %v843 = vpop.f32.mrf.mxu0
      %844 = vdwg.mxu0
      %846 = vrot.lane.b32.xlu0 %v502, 64
      %v847 = vpop.permute.xlu0 %846
      %v849 = vsel %vm535, %v528, 0
      %v851 = vsel %vm535, %v847, 0
      %853 = vmatprep.subr.mxu0 0.0
      %854 = vmatpush1.xpose.msra.mxu0 0.0
      %855 = vmatprep.subr.mxu0 0.0
      %856 = vmatpush1.xpose.msra.mxu0 0.0
      %857 = vmatprep.subr.mxu0 0.0
      %858 = vmatpush1.xpose.msra.mxu0 0.0
      %859 = vmatprep.subr.mxu0 0.0
      %860 = vmatpush1.xpose.msra.mxu0 0.0
      %861 = vmatprep.subr.mxu0 0.0
      %862 = vmatpush1.xpose.msra.mxu0 0.0
      %863 = vmatprep.subr.mxu0 0.0
      %864 = vmatpush1.xpose.msra.mxu0 0.0
      %865 = vmatprep.subr.mxu0 0.0
      %866 = vmatpush1.xpose.msra.mxu0 0.0
      %867 = vmatprep.subr.mxu0 0.0
      %868 = vmatpush1.xpose.msra.mxu0 0.0
      %869 = vmatprep.subr.mxu0 0.0
      %870 = vmatpush1.xpose.msra.mxu0 0.0
      %871 = vmatprep.subr.mxu0 0.0
      %872 = vmatpush1.xpose.msra.mxu0 0.0
      %873 = vmatprep.subr.mxu0 0.0
      %874 = vmatpush1.xpose.msra.mxu0 0.0
      %875 = vmatprep.subr.mxu0 0.0
      %876 = vmatpush1.xpose.msra.mxu0 0.0
      %877 = vmatprep.subr.mxu0 0.0
      %878 = vmatpush1.xpose.msra.mxu0 0.0
      %879 = vmatprep.subr.mxu0 0.0
      %880 = vmatpush1.xpose.msra.mxu0 0.0
      %881 = vmatprep.subr.mxu0 0.0
      %882 = vmatpush1.xpose.msra.mxu0 0.0
      %883 = vmatprep.subr.mxu0 0.0
      %884 = vmatpush1.xpose.msra.mxu0 %v851
      %885 = vmatprep.subr.mxu0 0.0
      %886 = vmatpush2.xpose.msra.mxu0 0.0
      %887 = vmatprep.subr.mxu0 0.0
      %888 = vmatpush2.xpose.msra.mxu0 0.0
      %889 = vmatprep.subr.mxu0 0.0
      %890 = vmatpush2.xpose.msra.mxu0 0.0
      %891 = vmatprep.subr.mxu0 0.0
      %892 = vmatpush2.xpose.msra.mxu0 0.0
      %893 = vmatprep.subr.mxu0 0.0
      %894 = vmatpush2.xpose.msra.mxu0 0.0
      %895 = vmatprep.subr.mxu0 0.0
      %896 = vmatpush2.xpose.msra.mxu0 0.0
      %897 = vmatprep.subr.mxu0 0.0
      %898 = vmatpush2.xpose.msra.mxu0 0.0
      %899 = vmatprep.subr.mxu0 0.0
      %900 = vmatpush2.xpose.msra.mxu0 0.0
      %901 = vmatprep.subr.mxu0 0.0
      %902 = vmatpush2.xpose.msra.mxu0 0.0
      %903 = vmatprep.subr.mxu0 0.0
      %904 = vmatpush2.xpose.msra.mxu0 0.0
      %905 = vmatprep.subr.mxu0 0.0
      %906 = vmatpush2.xpose.msra.mxu0 0.0
      %907 = vmatprep.subr.mxu0 0.0
      %908 = vmatpush2.xpose.msra.mxu0 0.0
      %909 = vmatprep.subr.mxu0 0.0
      %910 = vmatpush2.xpose.msra.mxu0 0.0
      %911 = vmatprep.subr.mxu0 0.0
      %912 = vmatpush2.xpose.msra.mxu0 0.0
      %913 = vmatprep.subr.mxu0 0.0
      %914 = vmatpush2.xpose.msra.mxu0 0.0
      %915 = vmatprep.subr.mxu0 0.0
      %916 = vmatpush2.xpose.msra.mxu0 0.0
      %917 = vmatprep.mubr.f32.mxu0 0.0
      %918 = vmatmul.mubr.f32.gmra.mxu0 %v849
      %v919 = vpop.f32.mrf.mxu0
      %v920 = vadd.f32 0.0, %v919
      %v921 = vpop.f32.mrf.mxu0
      %922 = vdwg.mxu0
      %924 = vrot.lane.b32.xlu0 %v508, 64
      %v925 = vpop.permute.xlu0 %924
      %v927 = vsel %vm535, %v529, 0
      %v929 = vsel %vm535, %v925, 0
      %931 = vmatprep.subr.mxu0 0.0
      %932 = vmatpush1.xpose.msra.mxu0 0.0
      %933 = vmatprep.subr.mxu0 0.0
      %934 = vmatpush1.xpose.msra.mxu0 0.0
      %935 = vmatprep.subr.mxu0 0.0
      %936 = vmatpush1.xpose.msra.mxu0 0.0
      %937 = vmatprep.subr.mxu0 0.0
      %938 = vmatpush1.xpose.msra.mxu0 0.0
      %939 = vmatprep.subr.mxu0 0.0
      %940 = vmatpush1.xpose.msra.mxu0 0.0
      %941 = vmatprep.subr.mxu0 0.0
      %942 = vmatpush1.xpose.msra.mxu0 0.0
      %943 = vmatprep.subr.mxu0 0.0
      %944 = vmatpush1.xpose.msra.mxu0 0.0
      %945 = vmatprep.subr.mxu0 0.0
      %946 = vmatpush1.xpose.msra.mxu0 0.0
      %947 = vmatprep.subr.mxu0 0.0
      %948 = vmatpush1.xpose.msra.mxu0 0.0
      %949 = vmatprep.subr.mxu0 0.0
      %950 = vmatpush1.xpose.msra.mxu0 0.0
      %951 = vmatprep.subr.mxu0 0.0
      %952 = vmatpush1.xpose.msra.mxu0 0.0
      %953 = vmatprep.subr.mxu0 0.0
      %954 = vmatpush1.xpose.msra.mxu0 0.0
      %955 = vmatprep.subr.mxu0 0.0
      %956 = vmatpush1.xpose.msra.mxu0 0.0
      %957 = vmatprep.subr.mxu0 0.0
      %958 = vmatpush1.xpose.msra.mxu0 0.0
      %959 = vmatprep.subr.mxu0 0.0
      %960 = vmatpush1.xpose.msra.mxu0 0.0
      %961 = vmatprep.subr.mxu0 0.0
      %962 = vmatpush1.xpose.msra.mxu0 %v929
      %963 = vmatprep.subr.mxu0 0.0
      %964 = vmatpush2.xpose.msra.mxu0 0.0
      %965 = vmatprep.subr.mxu0 0.0
      %966 = vmatpush2.xpose.msra.mxu0 0.0
      %967 = vmatprep.subr.mxu0 0.0
      %968 = vmatpush2.xpose.msra.mxu0 0.0
      %969 = vmatprep.subr.mxu0 0.0
      %970 = vmatpush2.xpose.msra.mxu0 0.0
      %971 = vmatprep.subr.mxu0 0.0
      %972 = vmatpush2.xpose.msra.mxu0 0.0
      %973 = vmatprep.subr.mxu0 0.0
      %974 = vmatpush2.xpose.msra.mxu0 0.0
      %975 = vmatprep.subr.mxu0 0.0
      %976 = vmatpush2.xpose.msra.mxu0 0.0
      %977 = vmatprep.subr.mxu0 0.0
      %978 = vmatpush2.xpose.msra.mxu0 0.0
      %979 = vmatprep.subr.mxu0 0.0
      %980 = vmatpush2.xpose.msra.mxu0 0.0
      %981 = vmatprep.subr.mxu0 0.0
      %982 = vmatpush2.xpose.msra.mxu0 0.0
      %983 = vmatprep.subr.mxu0 0.0
      %984 = vmatpush2.xpose.msra.mxu0 0.0
      %985 = vmatprep.subr.mxu0 0.0
      %986 = vmatpush2.xpose.msra.mxu0 0.0
      %987 = vmatprep.subr.mxu0 0.0
      %988 = vmatpush2.xpose.msra.mxu0 0.0
      %989 = vmatprep.subr.mxu0 0.0
      %990 = vmatpush2.xpose.msra.mxu0 0.0
      %991 = vmatprep.subr.mxu0 0.0
      %992 = vmatpush2.xpose.msra.mxu0 0.0
      %993 = vmatprep.subr.mxu0 0.0
      %994 = vmatpush2.xpose.msra.mxu0 0.0
      %995 = vmatprep.mubr.f32.mxu0 0.0
      %996 = vmatmul.mubr.f32.gmra.mxu0 %v927
      %v997 = vpop.f32.mrf.mxu0
      %v998 = vadd.f32 0.0, %v997
      %v999 = vpop.f32.mrf.mxu0
      %1000 = vdwg.mxu0
      %1002 = vrot.lane.b32.xlu0 %v514, 64
      %v1003 = vpop.permute.xlu0 %1002
      %v1005 = vsel %vm535, %v530, 0
      %v1007 = vsel %vm535, %v1003, 0
      %1009 = vmatprep.subr.mxu0 0.0
      %1010 = vmatpush1.xpose.msra.mxu0 0.0
      %1011 = vmatprep.subr.mxu0 0.0
      %1012 = vmatpush1.xpose.msra.mxu0 0.0
      %1013 = vmatprep.subr.mxu0 0.0
      %1014 = vmatpush1.xpose.msra.mxu0 0.0
      %1015 = vmatprep.subr.mxu0 0.0
      %1016 = vmatpush1.xpose.msra.mxu0 0.0
      %1017 = vmatprep.subr.mxu0 0.0
      %1018 = vmatpush1.xpose.msra.mxu0 0.0
      %1019 = vmatprep.subr.mxu0 0.0
      %1020 = vmatpush1.xpose.msra.mxu0 0.0
      %1021 = vmatprep.subr.mxu0 0.0
      %1022 = vmatpush1.xpose.msra.mxu0 0.0
      %1023 = vmatprep.subr.mxu0 0.0
      %1024 = vmatpush1.xpose.msra.mxu0 0.0
      %1025 = vmatprep.subr.mxu0 0.0
      %1026 = vmatpush1.xpose.msra.mxu0 0.0
      %1027 = vmatprep.subr.mxu0 0.0
      %1028 = vmatpush1.xpose.msra.mxu0 0.0
      %1029 = vmatprep.subr.mxu0 0.0
      %1030 = vmatpush1.xpose.msra.mxu0 0.0
      %1031 = vmatprep.subr.mxu0 0.0
      %1032 = vmatpush1.xpose.msra.mxu0 0.0
      %1033 = vmatprep.subr.mxu0 0.0
      %1034 = vmatpush1.xpose.msra.mxu0 0.0
      %1035 = vmatprep.subr.mxu0 0.0
      %1036 = vmatpush1.xpose.msra.mxu0 0.0
      %1037 = vmatprep.subr.mxu0 0.0
      %1038 = vmatpush1.xpose.msra.mxu0 0.0
      %1039 = vmatprep.subr.mxu0 0.0
      %1040 = vmatpush1.xpose.msra.mxu0 %v1007
      %1041 = vmatprep.subr.mxu0 0.0
      %1042 = vmatpush2.xpose.msra.mxu0 0.0
      %1043 = vmatprep.subr.mxu0 0.0
      %1044 = vmatpush2.xpose.msra.mxu0 0.0
      %1045 = vmatprep.subr.mxu0 0.0
      %1046 = vmatpush2.xpose.msra.mxu0 0.0
      %1047 = vmatprep.subr.mxu0 0.0
      %1048 = vmatpush2.xpose.msra.mxu0 0.0
      %1049 = vmatprep.subr.mxu0 0.0
      %1050 = vmatpush2.xpose.msra.mxu0 0.0
      %1051 = vmatprep.subr.mxu0 0.0
      %1052 = vmatpush2.xpose.msra.mxu0 0.0
      %1053 = vmatprep.subr.mxu0 0.0
      %1054 = vmatpush2.xpose.msra.mxu0 0.0
      %1055 = vmatprep.subr.mxu0 0.0
      %1056 = vmatpush2.xpose.msra.mxu0 0.0
      %1057 = vmatprep.subr.mxu0 0.0
      %1058 = vmatpush2.xpose.msra.mxu0 0.0
      %1059 = vmatprep.subr.mxu0 0.0
      %1060 = vmatpush2.xpose.msra.mxu0 0.0
      %1061 = vmatprep.subr.mxu0 0.0
      %1062 = vmatpush2.xpose.msra.mxu0 0.0
      %1063 = vmatprep.subr.mxu0 0.0
      %1064 = vmatpush2.xpose.msra.mxu0 0.0
      %1065 = vmatprep.subr.mxu0 0.0
      %1066 = vmatpush2.xpose.msra.mxu0 0.0
      %1067 = vmatprep.subr.mxu0 0.0
      %1068 = vmatpush2.xpose.msra.mxu0 0.0
      %1069 = vmatprep.subr.mxu0 0.0
      %1070 = vmatpush2.xpose.msra.mxu0 0.0
      %1071 = vmatprep.subr.mxu0 0.0
      %1072 = vmatpush2.xpose.msra.mxu0 0.0
      %1073 = vmatprep.mubr.f32.mxu0 0.0
      %1074 = vmatmul.mubr.f32.gmra.mxu0 %v1005
      %v1075 = vpop.f32.mrf.mxu0
      %v1076 = vadd.f32 0.0, %v1075
      %v1077 = vpop.f32.mrf.mxu0
      %1078 = vdwg.mxu0
      %1080 = vrot.lane.b32.xlu0 %v520, 64
      %v1081 = vpop.permute.xlu0 %1080
      %v1083 = vsel %vm535, %v531, 0
      %v1085 = vsel %vm535, %v1081, 0
      %1087 = vmatprep.subr.mxu0 0.0
      %1088 = vmatpush1.xpose.msra.mxu0 0.0
      %1089 = vmatprep.subr.mxu0 0.0
      %1090 = vmatpush1.xpose.msra.mxu0 0.0
      %1091 = vmatprep.subr.mxu0 0.0
      %1092 = vmatpush1.xpose.msra.mxu0 0.0
      %1093 = vmatprep.subr.mxu0 0.0
      %1094 = vmatpush1.xpose.msra.mxu0 0.0
      %1095 = vmatprep.subr.mxu0 0.0
      %1096 = vmatpush1.xpose.msra.mxu0 0.0
      %1097 = vmatprep.subr.mxu0 0.0
      %1098 = vmatpush1.xpose.msra.mxu0 0.0
      %1099 = vmatprep.subr.mxu0 0.0
      %1100 = vmatpush1.xpose.msra.mxu0 0.0
      %1101 = vmatprep.subr.mxu0 0.0
      %1102 = vmatpush1.xpose.msra.mxu0 0.0
      %1103 = vmatprep.subr.mxu0 0.0
      %1104 = vmatpush1.xpose.msra.mxu0 0.0
      %1105 = vmatprep.subr.mxu0 0.0
      %1106 = vmatpush1.xpose.msra.mxu0 0.0
      %1107 = vmatprep.subr.mxu0 0.0
      %1108 = vmatpush1.xpose.msra.mxu0 0.0
      %1109 = vmatprep.subr.mxu0 0.0
      %1110 = vmatpush1.xpose.msra.mxu0 0.0
      %1111 = vmatprep.subr.mxu0 0.0
      %1112 = vmatpush1.xpose.msra.mxu0 0.0
      %1113 = vmatprep.subr.mxu0 0.0
      %1114 = vmatpush1.xpose.msra.mxu0 0.0
      %1115 = vmatprep.subr.mxu0 0.0
      %1116 = vmatpush1.xpose.msra.mxu0 0.0
      %1117 = vmatprep.subr.mxu0 0.0
      %1118 = vmatpush1.xpose.msra.mxu0 %v1085
      %1119 = vmatprep.subr.mxu0 0.0
      %1120 = vmatpush2.xpose.msra.mxu0 0.0
      %1121 = vmatprep.subr.mxu0 0.0
      %1122 = vmatpush2.xpose.msra.mxu0 0.0
      %1123 = vmatprep.subr.mxu0 0.0
      %1124 = vmatpush2.xpose.msra.mxu0 0.0
      %1125 = vmatprep.subr.mxu0 0.0
      %1126 = vmatpush2.xpose.msra.mxu0 0.0
      %1127 = vmatprep.subr.mxu0 0.0
      %1128 = vmatpush2.xpose.msra.mxu0 0.0
      %1129 = vmatprep.subr.mxu0 0.0
      %1130 = vmatpush2.xpose.msra.mxu0 0.0
      %1131 = vmatprep.subr.mxu0 0.0
      %1132 = vmatpush2.xpose.msra.mxu0 0.0
      %1133 = vmatprep.subr.mxu0 0.0
      %1134 = vmatpush2.xpose.msra.mxu0 0.0
      %1135 = vmatprep.subr.mxu0 0.0
      %1136 = vmatpush2.xpose.msra.mxu0 0.0
      %1137 = vmatprep.subr.mxu0 0.0
      %1138 = vmatpush2.xpose.msra.mxu0 0.0
      %1139 = vmatprep.subr.mxu0 0.0
      %1140 = vmatpush2.xpose.msra.mxu0 0.0
      %1141 = vmatprep.subr.mxu0 0.0
      %1142 = vmatpush2.xpose.msra.mxu0 0.0
      %1143 = vmatprep.subr.mxu0 0.0
      %1144 = vmatpush2.xpose.msra.mxu0 0.0
      %1145 = vmatprep.subr.mxu0 0.0
      %1146 = vmatpush2.xpose.msra.mxu0 0.0
      %1147 = vmatprep.subr.mxu0 0.0
      %1148 = vmatpush2.xpose.msra.mxu0 0.0
      %1149 = vmatprep.subr.mxu0 0.0
      %1150 = vmatpush2.xpose.msra.mxu0 0.0
      %1151 = vmatprep.mubr.f32.mxu0 0.0
      %1152 = vmatmul.mubr.f32.gmra.mxu0 %v1083
      %v1153 = vpop.f32.mrf.mxu0
      %v1154 = vadd.f32 0.0, %v1153
      %v1155 = vpop.f32.mrf.mxu0
      %1156 = vdwg.mxu0
      %vm1157 = vcmask 64512
      %v1158 = vsel %vm1157, %v608, -inf
      %1159 = vmax.xlane.f32.xlu0 %v1158
      %v1160 = vpop.xlane.xlu0 %1159
      %v1161 = vsel %vm1157, %v686, -inf
      %1162 = vmax.xlane.f32.xlu0 %v1161
      %v1163 = vpop.xlane.xlu0 %1162
      %v1164 = vsel %vm1157, %v764, -inf
      %1165 = vmax.xlane.f32.xlu0 %v1164
      %v1166 = vpop.xlane.xlu0 %1165
      %v1167 = vsel %vm1157, %v842, -inf
      %1168 = vmax.xlane.f32.xlu0 %v1167
      %v1169 = vpop.xlane.xlu0 %1168
      %v1170 = vsel %vm1157, %v920, -inf
      %1171 = vmax.xlane.f32.xlu0 %v1170
      %v1172 = vpop.xlane.xlu0 %1171
      %v1173 = vsel %vm1157, %v998, -inf
      %1174 = vmax.xlane.f32.xlu0 %v1173
      %v1175 = vpop.xlane.xlu0 %1174
      %v1176 = vsel %vm1157, %v1076, -inf
      %1177 = vmax.xlane.f32.xlu0 %v1176
      %v1178 = vpop.xlane.xlu0 %1177
      %v1179 = vsel %vm1157, %v1154, -inf
      %1180 = vmax.xlane.f32.xlu0 %v1179
      %v1181 = vpop.xlane.xlu0 %1180
      %v1182 = vsub.f32 %v608, %v1160
      %v1183 = vsub.f32 %v686, %v1163
      %v1184 = vsub.f32 %v764, %v1166
      %v1185 = vsub.f32 %v842, %v1169
      %v1186 = vsub.f32 %v920, %v1172
      %v1187 = vsub.f32 %v998, %v1175
      %v1188 = vsub.f32 %v1076, %v1178
      %v1189 = vsub.f32 %v1154, %v1181
      %v1190 = vmul.f32 %v1182, 1.442695
      %v1191 = vpow.pop %v1190
      %v1192 = vmul.f32 %v1183, 1.442695
      %v1193 = vpow.pop %v1192
      %v1194 = vmul.f32 %v1184, 1.442695
      %v1195 = vpow.pop %v1194
      %v1196 = vmul.f32 %v1185, 1.442695
      %v1197 = vpow.pop %v1196
      %v1198 = vmul.f32 %v1186, 1.442695
      %v1199 = vpow.pop %v1198
      %v1200 = vmul.f32 %v1187, 1.442695
      %v1201 = vpow.pop %v1200
      %v1202 = vmul.f32 %v1188, 1.442695
      %v1203 = vpow.pop %v1202
      %v1204 = vmul.f32 %v1189, 1.442695
      %v1205 = vpow.pop %v1204
      %v1206 = vsel %vm1157, %v1191, 0.0
      %1207 = vadd.xlane.f32.xlu0 %v1206
      %v1208 = vpop.xlane.xlu0 %1207
      %v1209 = vsel %vm1157, %v1193, 0.0
      %1210 = vadd.xlane.f32.xlu0 %v1209
      %v1211 = vpop.xlane.xlu0 %1210
      %v1212 = vsel %vm1157, %v1195, 0.0
      %1213 = vadd.xlane.f32.xlu0 %v1212
      %v1214 = vpop.xlane.xlu0 %1213
      %v1215 = vsel %vm1157, %v1197, 0.0
      %1216 = vadd.xlane.f32.xlu0 %v1215
      %v1217 = vpop.xlane.xlu0 %1216
      %v1218 = vsel %vm1157, %v1199, 0.0
      %1219 = vadd.xlane.f32.xlu0 %v1218
      %v1220 = vpop.xlane.xlu0 %1219
      %v1221 = vsel %vm1157, %v1201, 0.0
      %1222 = vadd.xlane.f32.xlu0 %v1221
      %v1223 = vpop.xlane.xlu0 %1222
      %v1224 = vsel %vm1157, %v1203, 0.0
      %1225 = vadd.xlane.f32.xlu0 %v1224
      %v1226 = vpop.xlane.xlu0 %1225
      %v1227 = vsel %vm1157, %v1205, 0.0
      %1228 = vadd.xlane.f32.xlu0 %v1227
      %v1229 = vpop.xlane.xlu0 %1228
      %v1230 = vrcp.pop %v1208
      %v1231 = vrcp.pop %v1211
      %v1232 = vrcp.pop %v1214
      %v1233 = vrcp.pop %v1217
      %v1234 = vrcp.pop %v1220
      %v1235 = vrcp.pop %v1223
      %v1236 = vrcp.pop %v1226
      %v1237 = vrcp.pop %v1229
      %v1238 = vmul.f32 %v1191, %v1230
      %v1239 = vmul.f32 %v1193, %v1231
      %v1240 = vmul.f32 %v1195, %v1232
      %v1241 = vmul.f32 %v1197, %v1233
      %v1242 = vmul.f32 %v1199, %v1234
      %v1243 = vmul.f32 %v1201, %v1235
      %v1244 = vmul.f32 %v1203, %v1236
      %v1245 = vmul.f32 %v1205, %v1237
      %v1247 = vsel %vm1157, %v1238, 0
      %1249 = vmatprep.subr.mxu0 0.0
      %1250 = vmatpush1.msra.mxu0 0.0
      %1251 = vmatprep.subr.mxu0 0.0
      %1252 = vmatpush1.msra.mxu0 0.0
      %1253 = vmatprep.subr.mxu0 0.0
      %1254 = vmatpush1.msra.mxu0 0.0
      %1255 = vmatprep.subr.mxu0 0.0
      %1256 = vmatpush1.msra.mxu0 0.0
      %1257 = vmatprep.subr.mxu0 0.0
      %1258 = vmatpush1.msra.mxu0 0.0
      %1259 = vmatprep.subr.mxu0 0.0
      %1260 = vmatpush1.msra.mxu0 0.0
      %1261 = vmatprep.subr.mxu0 0.0
      %1262 = vmatpush1.msra.mxu0 0.0
      %1263 = vmatprep.subr.mxu0 0.0
      %1264 = vmatpush1.msra.mxu0 0.0
      %1265 = vmatprep.subr.mxu0 0.0
      %1266 = vmatpush1.msra.mxu0 0.0
      %1267 = vmatprep.subr.mxu0 0.0
      %1268 = vmatpush1.msra.mxu0 0.0
      %1269 = vmatprep.subr.mxu0 0.0
      %1270 = vmatpush1.msra.mxu0 0.0
      %1271 = vmatprep.subr.mxu0 0.0
      %1272 = vmatpush1.msra.mxu0 0.0
      %1273 = vmatprep.subr.mxu0 0.0
      %1274 = vmatpush1.msra.mxu0 0.0
      %1275 = vmatprep.subr.mxu0 0.0
      %1276 = vmatpush1.msra.mxu0 0.0
      %1277 = vmatprep.subr.mxu0 0.0
      %1278 = vmatpush1.msra.mxu0 0.0
      %1279 = vmatprep.subr.mxu0 0.0
      %1280 = vmatpush1.msra.mxu0 %v480
      %1281 = vmatprep.subr.mxu0 0.0
      %1282 = vmatpush2.msra.mxu0 0.0
      %1283 = vmatprep.subr.mxu0 0.0
      %1284 = vmatpush2.msra.mxu0 0.0
      %1285 = vmatprep.subr.mxu0 0.0
      %1286 = vmatpush2.msra.mxu0 0.0
      %1287 = vmatprep.subr.mxu0 0.0
      %1288 = vmatpush2.msra.mxu0 0.0
      %1289 = vmatprep.subr.mxu0 0.0
      %1290 = vmatpush2.msra.mxu0 0.0
      %1291 = vmatprep.subr.mxu0 0.0
      %1292 = vmatpush2.msra.mxu0 0.0
      %1293 = vmatprep.subr.mxu0 0.0
      %1294 = vmatpush2.msra.mxu0 0.0
      %1295 = vmatprep.subr.mxu0 0.0
      %1296 = vmatpush2.msra.mxu0 0.0
      %1297 = vmatprep.subr.mxu0 0.0
      %1298 = vmatpush2.msra.mxu0 0.0
      %1299 = vmatprep.subr.mxu0 0.0
      %1300 = vmatpush2.msra.mxu0 0.0
      %1301 = vmatprep.subr.mxu0 0.0
      %1302 = vmatpush2.msra.mxu0 0.0
      %1303 = vmatprep.subr.mxu0 0.0
      %1304 = vmatpush2.msra.mxu0 0.0
      %1305 = vmatprep.subr.mxu0 0.0
      %1306 = vmatpush2.msra.mxu0 0.0
      %1307 = vmatprep.subr.mxu0 0.0
      %1308 = vmatpush2.msra.mxu0 0.0
      %1309 = vmatprep.subr.mxu0 0.0
      %1310 = vmatpush2.msra.mxu0 0.0
      %1311 = vmatprep.subr.mxu0 0.0
      %1312 = vmatpush2.msra.mxu0 0.0
      %1313 = vmatprep.mubr.f32.mxu0 0.0
      %1314 = vmatmul.mubr.f32.gmra.mxu0 %v1247
      %v1315 = vpop.f32.mrf.mxu0
      %v1316 = vadd.f32 0.0, %v1315
      %v1317 = vpop.f32.mrf.mxu0
      %1318 = vdwg.mxu0
      %v1320 = vsel %vm1157, %v1239, 0
      %1322 = vmatprep.subr.mxu0 0.0
      %1323 = vmatpush1.msra.mxu0 0.0
      %1324 = vmatprep.subr.mxu0 0.0
      %1325 = vmatpush1.msra.mxu0 0.0
      %1326 = vmatprep.subr.mxu0 0.0
      %1327 = vmatpush1.msra.mxu0 0.0
      %1328 = vmatprep.subr.mxu0 0.0
      %1329 = vmatpush1.msra.mxu0 0.0
      %1330 = vmatprep.subr.mxu0 0.0
      %1331 = vmatpush1.msra.mxu0 0.0
      %1332 = vmatprep.subr.mxu0 0.0
      %1333 = vmatpush1.msra.mxu0 0.0
      %1334 = vmatprep.subr.mxu0 0.0
      %1335 = vmatpush1.msra.mxu0 0.0
      %1336 = vmatprep.subr.mxu0 0.0
      %1337 = vmatpush1.msra.mxu0 0.0
      %1338 = vmatprep.subr.mxu0 0.0
      %1339 = vmatpush1.msra.mxu0 0.0
      %1340 = vmatprep.subr.mxu0 0.0
      %1341 = vmatpush1.msra.mxu0 0.0
      %1342 = vmatprep.subr.mxu0 0.0
      %1343 = vmatpush1.msra.mxu0 0.0
      %1344 = vmatprep.subr.mxu0 0.0
      %1345 = vmatpush1.msra.mxu0 0.0
      %1346 = vmatprep.subr.mxu0 0.0
      %1347 = vmatpush1.msra.mxu0 0.0
      %1348 = vmatprep.subr.mxu0 0.0
      %1349 = vmatpush1.msra.mxu0 0.0
      %1350 = vmatprep.subr.mxu0 0.0
      %1351 = vmatpush1.msra.mxu0 0.0
      %1352 = vmatprep.subr.mxu0 0.0
      %1353 = vmatpush1.msra.mxu0 %v486
      %1354 = vmatprep.subr.mxu0 0.0
      %1355 = vmatpush2.msra.mxu0 0.0
      %1356 = vmatprep.subr.mxu0 0.0
      %1357 = vmatpush2.msra.mxu0 0.0
      %1358 = vmatprep.subr.mxu0 0.0
      %1359 = vmatpush2.msra.mxu0 0.0
      %1360 = vmatprep.subr.mxu0 0.0
      %1361 = vmatpush2.msra.mxu0 0.0
      %1362 = vmatprep.subr.mxu0 0.0
      %1363 = vmatpush2.msra.mxu0 0.0
      %1364 = vmatprep.subr.mxu0 0.0
      %1365 = vmatpush2.msra.mxu0 0.0
      %1366 = vmatprep.subr.mxu0 0.0
      %1367 = vmatpush2.msra.mxu0 0.0
      %1368 = vmatprep.subr.mxu0 0.0
      %1369 = vmatpush2.msra.mxu0 0.0
      %1370 = vmatprep.subr.mxu0 0.0
      %1371 = vmatpush2.msra.mxu0 0.0
      %1372 = vmatprep.subr.mxu0 0.0
      %1373 = vmatpush2.msra.mxu0 0.0
      %1374 = vmatprep.subr.mxu0 0.0
      %1375 = vmatpush2.msra.mxu0 0.0
      %1376 = vmatprep.subr.mxu0 0.0
      %1377 = vmatpush2.msra.mxu0 0.0
      %1378 = vmatprep.subr.mxu0 0.0
      %1379 = vmatpush2.msra.mxu0 0.0
      %1380 = vmatprep.subr.mxu0 0.0
      %1381 = vmatpush2.msra.mxu0 0.0
      %1382 = vmatprep.subr.mxu0 0.0
      %1383 = vmatpush2.msra.mxu0 0.0
      %1384 = vmatprep.subr.mxu0 0.0
      %1385 = vmatpush2.msra.mxu0 0.0
      %1386 = vmatprep.mubr.f32.mxu0 0.0
      %1387 = vmatmul.mubr.f32.gmra.mxu0 %v1320
      %v1388 = vpop.f32.mrf.mxu0
      %v1389 = vadd.f32 0.0, %v1388
      %v1390 = vpop.f32.mrf.mxu0
      %1391 = vdwg.mxu0
      %v1393 = vsel %vm1157, %v1240, 0
      %1395 = vmatprep.subr.mxu0 0.0
      %1396 = vmatpush1.msra.mxu0 0.0
      %1397 = vmatprep.subr.mxu0 0.0
      %1398 = vmatpush1.msra.mxu0 0.0
      %1399 = vmatprep.subr.mxu0 0.0
      %1400 = vmatpush1.msra.mxu0 0.0
      %1401 = vmatprep.subr.mxu0 0.0
      %1402 = vmatpush1.msra.mxu0 0.0
      %1403 = vmatprep.subr.mxu0 0.0
      %1404 = vmatpush1.msra.mxu0 0.0
      %1405 = vmatprep.subr.mxu0 0.0
      %1406 = vmatpush1.msra.mxu0 0.0
      %1407 = vmatprep.subr.mxu0 0.0
      %1408 = vmatpush1.msra.mxu0 0.0
      %1409 = vmatprep.subr.mxu0 0.0
      %1410 = vmatpush1.msra.mxu0 0.0
      %1411 = vmatprep.subr.mxu0 0.0
      %1412 = vmatpush1.msra.mxu0 0.0
      %1413 = vmatprep.subr.mxu0 0.0
      %1414 = vmatpush1.msra.mxu0 0.0
      %1415 = vmatprep.subr.mxu0 0.0
      %1416 = vmatpush1.msra.mxu0 0.0
      %1417 = vmatprep.subr.mxu0 0.0
      %1418 = vmatpush1.msra.mxu0 0.0
      %1419 = vmatprep.subr.mxu0 0.0
      %1420 = vmatpush1.msra.mxu0 0.0
      %1421 = vmatprep.subr.mxu0 0.0
      %1422 = vmatpush1.msra.mxu0 0.0
      %1423 = vmatprep.subr.mxu0 0.0
      %1424 = vmatpush1.msra.mxu0 0.0
      %1425 = vmatprep.subr.mxu0 0.0
      %1426 = vmatpush1.msra.mxu0 %v492
      %1427 = vmatprep.subr.mxu0 0.0
      %1428 = vmatpush2.msra.mxu0 0.0
      %1429 = vmatprep.subr.mxu0 0.0
      %1430 = vmatpush2.msra.mxu0 0.0
      %1431 = vmatprep.subr.mxu0 0.0
      %1432 = vmatpush2.msra.mxu0 0.0
      %1433 = vmatprep.subr.mxu0 0.0
      %1434 = vmatpush2.msra.mxu0 0.0
      %1435 = vmatprep.subr.mxu0 0.0
      %1436 = vmatpush2.msra.mxu0 0.0
      %1437 = vmatprep.subr.mxu0 0.0
      %1438 = vmatpush2.msra.mxu0 0.0
      %1439 = vmatprep.subr.mxu0 0.0
      %1440 = vmatpush2.msra.mxu0 0.0
      %1441 = vmatprep.subr.mxu0 0.0
      %1442 = vmatpush2.msra.mxu0 0.0
      %1443 = vmatprep.subr.mxu0 0.0
      %1444 = vmatpush2.msra.mxu0 0.0
      %1445 = vmatprep.subr.mxu0 0.0
      %1446 = vmatpush2.msra.mxu0 0.0
      %1447 = vmatprep.subr.mxu0 0.0
      %1448 = vmatpush2.msra.mxu0 0.0
      %1449 = vmatprep.subr.mxu0 0.0
      %1450 = vmatpush2.msra.mxu0 0.0
      %1451 = vmatprep.subr.mxu0 0.0
      %1452 = vmatpush2.msra.mxu0 0.0
      %1453 = vmatprep.subr.mxu0 0.0
      %1454 = vmatpush2.msra.mxu0 0.0
      %1455 = vmatprep.subr.mxu0 0.0
      %1456 = vmatpush2.msra.mxu0 0.0
      %1457 = vmatprep.subr.mxu0 0.0
      %1458 = vmatpush2.msra.mxu0 0.0
      %1459 = vmatprep.mubr.f32.mxu0 0.0
      %1460 = vmatmul.mubr.f32.gmra.mxu0 %v1393
      %v1461 = vpop.f32.mrf.mxu0
      %v1462 = vadd.f32 0.0, %v1461
      %v1463 = vpop.f32.mrf.mxu0
      %1464 = vdwg.mxu0
      %v1466 = vsel %vm1157, %v1241, 0
      %1468 = vmatprep.subr.mxu0 0.0
      %1469 = vmatpush1.msra.mxu0 0.0
      %1470 = vmatprep.subr.mxu0 0.0
      %1471 = vmatpush1.msra.mxu0 0.0
      %1472 = vmatprep.subr.mxu0 0.0
      %1473 = vmatpush1.msra.mxu0 0.0
      %1474 = vmatprep.subr.mxu0 0.0
      %1475 = vmatpush1.msra.mxu0 0.0
      %1476 = vmatprep.subr.mxu0 0.0
      %1477 = vmatpush1.msra.mxu0 0.0
      %1478 = vmatprep.subr.mxu0 0.0
      %1479 = vmatpush1.msra.mxu0 0.0
      %1480 = vmatprep.subr.mxu0 0.0
      %1481 = vmatpush1.msra.mxu0 0.0
      %1482 = vmatprep.subr.mxu0 0.0
      %1483 = vmatpush1.msra.mxu0 0.0
      %1484 = vmatprep.subr.mxu0 0.0
      %1485 = vmatpush1.msra.mxu0 0.0
      %1486 = vmatprep.subr.mxu0 0.0
      %1487 = vmatpush1.msra.mxu0 0.0
      %1488 = vmatprep.subr.mxu0 0.0
      %1489 = vmatpush1.msra.mxu0 0.0
      %1490 = vmatprep.subr.mxu0 0.0
      %1491 = vmatpush1.msra.mxu0 0.0
      %1492 = vmatprep.subr.mxu0 0.0
      %1493 = vmatpush1.msra.mxu0 0.0
      %1494 = vmatprep.subr.mxu0 0.0
      %1495 = vmatpush1.msra.mxu0 0.0
      %1496 = vmatprep.subr.mxu0 0.0
      %1497 = vmatpush1.msra.mxu0 0.0
      %1498 = vmatprep.subr.mxu0 0.0
      %1499 = vmatpush1.msra.mxu0 %v498
      %1500 = vmatprep.subr.mxu0 0.0
      %1501 = vmatpush2.msra.mxu0 0.0
      %1502 = vmatprep.subr.mxu0 0.0
      %1503 = vmatpush2.msra.mxu0 0.0
      %1504 = vmatprep.subr.mxu0 0.0
      %1505 = vmatpush2.msra.mxu0 0.0
      %1506 = vmatprep.subr.mxu0 0.0
      %1507 = vmatpush2.msra.mxu0 0.0
      %1508 = vmatprep.subr.mxu0 0.0
      %1509 = vmatpush2.msra.mxu0 0.0
      %1510 = vmatprep.subr.mxu0 0.0
      %1511 = vmatpush2.msra.mxu0 0.0
      %1512 = vmatprep.subr.mxu0 0.0
      %1513 = vmatpush2.msra.mxu0 0.0
      %1514 = vmatprep.subr.mxu0 0.0
      %1515 = vmatpush2.msra.mxu0 0.0
      %1516 = vmatprep.subr.mxu0 0.0
      %1517 = vmatpush2.msra.mxu0 0.0
      %1518 = vmatprep.subr.mxu0 0.0
      %1519 = vmatpush2.msra.mxu0 0.0
      %1520 = vmatprep.subr.mxu0 0.0
      %1521 = vmatpush2.msra.mxu0 0.0
      %1522 = vmatprep.subr.mxu0 0.0
      %1523 = vmatpush2.msra.mxu0 0.0
      %1524 = vmatprep.subr.mxu0 0.0
      %1525 = vmatpush2.msra.mxu0 0.0
      %1526 = vmatprep.subr.mxu0 0.0
      %1527 = vmatpush2.msra.mxu0 0.0
      %1528 = vmatprep.subr.mxu0 0.0
      %1529 = vmatpush2.msra.mxu0 0.0
      %1530 = vmatprep.subr.mxu0 0.0
      %1531 = vmatpush2.msra.mxu0 0.0
      %1532 = vmatprep.mubr.f32.mxu0 0.0
      %1533 = vmatmul.mubr.f32.gmra.mxu0 %v1466
      %v1534 = vpop.f32.mrf.mxu0
      %v1535 = vadd.f32 0.0, %v1534
      %v1536 = vpop.f32.mrf.mxu0
      %1537 = vdwg.mxu0
      %v1539 = vsel %vm1157, %v1242, 0
      %1541 = vmatprep.subr.mxu0 0.0
      %1542 = vmatpush1.msra.mxu0 0.0
      %1543 = vmatprep.subr.mxu0 0.0
      %1544 = vmatpush1.msra.mxu0 0.0
      %1545 = vmatprep.subr.mxu0 0.0
      %1546 = vmatpush1.msra.mxu0 0.0
      %1547 = vmatprep.subr.mxu0 0.0
      %1548 = vmatpush1.msra.mxu0 0.0
      %1549 = vmatprep.subr.mxu0 0.0
      %1550 = vmatpush1.msra.mxu0 0.0
      %1551 = vmatprep.subr.mxu0 0.0
      %1552 = vmatpush1.msra.mxu0 0.0
      %1553 = vmatprep.subr.mxu0 0.0
      %1554 = vmatpush1.msra.mxu0 0.0
      %1555 = vmatprep.subr.mxu0 0.0
      %1556 = vmatpush1.msra.mxu0 0.0
      %1557 = vmatprep.subr.mxu0 0.0
      %1558 = vmatpush1.msra.mxu0 0.0
      %1559 = vmatprep.subr.mxu0 0.0
      %1560 = vmatpush1.msra.mxu0 0.0
      %1561 = vmatprep.subr.mxu0 0.0
      %1562 = vmatpush1.msra.mxu0 0.0
      %1563 = vmatprep.subr.mxu0 0.0
      %1564 = vmatpush1.msra.mxu0 0.0
      %1565 = vmatprep.subr.mxu0 0.0
      %1566 = vmatpush1.msra.mxu0 0.0
      %1567 = vmatprep.subr.mxu0 0.0
      %1568 = vmatpush1.msra.mxu0 0.0
      %1569 = vmatprep.subr.mxu0 0.0
      %1570 = vmatpush1.msra.mxu0 0.0
      %1571 = vmatprep.subr.mxu0 0.0
      %1572 = vmatpush1.msra.mxu0 %v504
      %1573 = vmatprep.subr.mxu0 0.0
      %1574 = vmatpush2.msra.mxu0 0.0
      %1575 = vmatprep.subr.mxu0 0.0
      %1576 = vmatpush2.msra.mxu0 0.0
      %1577 = vmatprep.subr.mxu0 0.0
      %1578 = vmatpush2.msra.mxu0 0.0
      %1579 = vmatprep.subr.mxu0 0.0
      %1580 = vmatpush2.msra.mxu0 0.0
      %1581 = vmatprep.subr.mxu0 0.0
      %1582 = vmatpush2.msra.mxu0 0.0
      %1583 = vmatprep.subr.mxu0 0.0
      %1584 = vmatpush2.msra.mxu0 0.0
      %1585 = vmatprep.subr.mxu0 0.0
      %1586 = vmatpush2.msra.mxu0 0.0
      %1587 = vmatprep.subr.mxu0 0.0
      %1588 = vmatpush2.msra.mxu0 0.0
      %1589 = vmatprep.subr.mxu0 0.0
      %1590 = vmatpush2.msra.mxu0 0.0
      %1591 = vmatprep.subr.mxu0 0.0
      %1592 = vmatpush2.msra.mxu0 0.0
      %1593 = vmatprep.subr.mxu0 0.0
      %1594 = vmatpush2.msra.mxu0 0.0
      %1595 = vmatprep.subr.mxu0 0.0
      %1596 = vmatpush2.msra.mxu0 0.0
      %1597 = vmatprep.subr.mxu0 0.0
      %1598 = vmatpush2.msra.mxu0 0.0
      %1599 = vmatprep.subr.mxu0 0.0
      %1600 = vmatpush2.msra.mxu0 0.0
      %1601 = vmatprep.subr.mxu0 0.0
      %1602 = vmatpush2.msra.mxu0 0.0
      %1603 = vmatprep.subr.mxu0 0.0
      %1604 = vmatpush2.msra.mxu0 0.0
      %1605 = vmatprep.mubr.f32.mxu0 0.0
      %1606 = vmatmul.mubr.f32.gmra.mxu0 %v1539
      %v1607 = vpop.f32.mrf.mxu0
      %v1608 = vadd.f32 0.0, %v1607
      %v1609 = vpop.f32.mrf.mxu0
      %1610 = vdwg.mxu0
      %v1612 = vsel %vm1157, %v1243, 0
      %1614 = vmatprep.subr.mxu0 0.0
      %1615 = vmatpush1.msra.mxu0 0.0
      %1616 = vmatprep.subr.mxu0 0.0
      %1617 = vmatpush1.msra.mxu0 0.0
      %1618 = vmatprep.subr.mxu0 0.0
      %1619 = vmatpush1.msra.mxu0 0.0
      %1620 = vmatprep.subr.mxu0 0.0
      %1621 = vmatpush1.msra.mxu0 0.0
      %1622 = vmatprep.subr.mxu0 0.0
      %1623 = vmatpush1.msra.mxu0 0.0
      %1624 = vmatprep.subr.mxu0 0.0
      %1625 = vmatpush1.msra.mxu0 0.0
      %1626 = vmatprep.subr.mxu0 0.0
      %1627 = vmatpush1.msra.mxu0 0.0
      %1628 = vmatprep.subr.mxu0 0.0
      %1629 = vmatpush1.msra.mxu0 0.0
      %1630 = vmatprep.subr.mxu0 0.0
      %1631 = vmatpush1.msra.mxu0 0.0
      %1632 = vmatprep.subr.mxu0 0.0
      %1633 = vmatpush1.msra.mxu0 0.0
      %1634 = vmatprep.subr.mxu0 0.0
      %1635 = vmatpush1.msra.mxu0 0.0
      %1636 = vmatprep.subr.mxu0 0.0
      %1637 = vmatpush1.msra.mxu0 0.0
      %1638 = vmatprep.subr.mxu0 0.0
      %1639 = vmatpush1.msra.mxu0 0.0
      %1640 = vmatprep.subr.mxu0 0.0
      %1641 = vmatpush1.msra.mxu0 0.0
      %1642 = vmatprep.subr.mxu0 0.0
      %1643 = vmatpush1.msra.mxu0 0.0
      %1644 = vmatprep.subr.mxu0 0.0
      %1645 = vmatpush1.msra.mxu0 %v510
      %1646 = vmatprep.subr.mxu0 0.0
      %1647 = vmatpush2.msra.mxu0 0.0
      %1648 = vmatprep.subr.mxu0 0.0
      %1649 = vmatpush2.msra.mxu0 0.0
      %1650 = vmatprep.subr.mxu0 0.0
      %1651 = vmatpush2.msra.mxu0 0.0
      %1652 = vmatprep.subr.mxu0 0.0
      %1653 = vmatpush2.msra.mxu0 0.0
      %1654 = vmatprep.subr.mxu0 0.0
      %1655 = vmatpush2.msra.mxu0 0.0
      %1656 = vmatprep.subr.mxu0 0.0
      %1657 = vmatpush2.msra.mxu0 0.0
      %1658 = vmatprep.subr.mxu0 0.0
      %1659 = vmatpush2.msra.mxu0 0.0
      %1660 = vmatprep.subr.mxu0 0.0
      %1661 = vmatpush2.msra.mxu0 0.0
      %1662 = vmatprep.subr.mxu0 0.0
      %1663 = vmatpush2.msra.mxu0 0.0
      %1664 = vmatprep.subr.mxu0 0.0
      %1665 = vmatpush2.msra.mxu0 0.0
      %1666 = vmatprep.subr.mxu0 0.0
      %1667 = vmatpush2.msra.mxu0 0.0
      %1668 = vmatprep.subr.mxu0 0.0
      %1669 = vmatpush2.msra.mxu0 0.0
      %1670 = vmatprep.subr.mxu0 0.0
      %1671 = vmatpush2.msra.mxu0 0.0
      %1672 = vmatprep.subr.mxu0 0.0
      %1673 = vmatpush2.msra.mxu0 0.0
      %1674 = vmatprep.subr.mxu0 0.0
      %1675 = vmatpush2.msra.mxu0 0.0
      %1676 = vmatprep.subr.mxu0 0.0
      %1677 = vmatpush2.msra.mxu0 0.0
      %1678 = vmatprep.mubr.f32.mxu0 0.0
      %1679 = vmatmul.mubr.f32.gmra.mxu0 %v1612
      %v1680 = vpop.f32.mrf.mxu0
      %v1681 = vadd.f32 0.0, %v1680
      %v1682 = vpop.f32.mrf.mxu0
      %1683 = vdwg.mxu0
      %v1685 = vsel %vm1157, %v1244, 0
      %1687 = vmatprep.subr.mxu0 0.0
      %1688 = vmatpush1.msra.mxu0 0.0
      %1689 = vmatprep.subr.mxu0 0.0
      %1690 = vmatpush1.msra.mxu0 0.0
      %1691 = vmatprep.subr.mxu0 0.0
      %1692 = vmatpush1.msra.mxu0 0.0
      %1693 = vmatprep.subr.mxu0 0.0
      %1694 = vmatpush1.msra.mxu0 0.0
      %1695 = vmatprep.subr.mxu0 0.0
      %1696 = vmatpush1.msra.mxu0 0.0
      %1697 = vmatprep.subr.mxu0 0.0
      %1698 = vmatpush1.msra.mxu0 0.0
      %1699 = vmatprep.subr.mxu0 0.0
      %1700 = vmatpush1.msra.mxu0 0.0
      %1701 = vmatprep.subr.mxu0 0.0
      %1702 = vmatpush1.msra.mxu0 0.0
      %1703 = vmatprep.subr.mxu0 0.0
      %1704 = vmatpush1.msra.mxu0 0.0
      %1705 = vmatprep.subr.mxu0 0.0
      %1706 = vmatpush1.msra.mxu0 0.0
      %1707 = vmatprep.subr.mxu0 0.0
      %1708 = vmatpush1.msra.mxu0 0.0
      %1709 = vmatprep.subr.mxu0 0.0
      %1710 = vmatpush1.msra.mxu0 0.0
      %1711 = vmatprep.subr.mxu0 0.0
      %1712 = vmatpush1.msra.mxu0 0.0
      %1713 = vmatprep.subr.mxu0 0.0
      %1714 = vmatpush1.msra.mxu0 0.0
      %1715 = vmatprep.subr.mxu0 0.0
      %1716 = vmatpush1.msra.mxu0 0.0
      %1717 = vmatprep.subr.mxu0 0.0
      %1718 = vmatpush1.msra.mxu0 %v516
      %1719 = vmatprep.subr.mxu0 0.0
      %1720 = vmatpush2.msra.mxu0 0.0
      %1721 = vmatprep.subr.mxu0 0.0
      %1722 = vmatpush2.msra.mxu0 0.0
      %1723 = vmatprep.subr.mxu0 0.0
      %1724 = vmatpush2.msra.mxu0 0.0
      %1725 = vmatprep.subr.mxu0 0.0
      %1726 = vmatpush2.msra.mxu0 0.0
      %1727 = vmatprep.subr.mxu0 0.0
      %1728 = vmatpush2.msra.mxu0 0.0
      %1729 = vmatprep.subr.mxu0 0.0
      %1730 = vmatpush2.msra.mxu0 0.0
      %1731 = vmatprep.subr.mxu0 0.0
      %1732 = vmatpush2.msra.mxu0 0.0
      %1733 = vmatprep.subr.mxu0 0.0
      %1734 = vmatpush2.msra.mxu0 0.0
      %1735 = vmatprep.subr.mxu0 0.0
      %1736 = vmatpush2.msra.mxu0 0.0
      %1737 = vmatprep.subr.mxu0 0.0
      %1738 = vmatpush2.msra.mxu0 0.0
      %1739 = vmatprep.subr.mxu0 0.0
      %1740 = vmatpush2.msra.mxu0 0.0
      %1741 = vmatprep.subr.mxu0 0.0
      %1742 = vmatpush2.msra.mxu0 0.0
      %1743 = vmatprep.subr.mxu0 0.0
      %1744 = vmatpush2.msra.mxu0 0.0
      %1745 = vmatprep.subr.mxu0 0.0
      %1746 = vmatpush2.msra.mxu0 0.0
      %1747 = vmatprep.subr.mxu0 0.0
      %1748 = vmatpush2.msra.mxu0 0.0
      %1749 = vmatprep.subr.mxu0 0.0
      %1750 = vmatpush2.msra.mxu0 0.0
      %1751 = vmatprep.mubr.f32.mxu0 0.0
      %1752 = vmatmul.mubr.f32.gmra.mxu0 %v1685
      %v1753 = vpop.f32.mrf.mxu0
      %v1754 = vadd.f32 0.0, %v1753
      %v1755 = vpop.f32.mrf.mxu0
      %1756 = vdwg.mxu0
      %v1758 = vsel %vm1157, %v1245, 0
      %1760 = vmatprep.subr.mxu0 0.0
      %1761 = vmatpush1.msra.mxu0 0.0
      %1762 = vmatprep.subr.mxu0 0.0
      %1763 = vmatpush1.msra.mxu0 0.0
      %1764 = vmatprep.subr.mxu0 0.0
      %1765 = vmatpush1.msra.mxu0 0.0
      %1766 = vmatprep.subr.mxu0 0.0
      %1767 = vmatpush1.msra.mxu0 0.0
      %1768 = vmatprep.subr.mxu0 0.0
      %1769 = vmatpush1.msra.mxu0 0.0
      %1770 = vmatprep.subr.mxu0 0.0
      %1771 = vmatpush1.msra.mxu0 0.0
      %1772 = vmatprep.subr.mxu0 0.0
      %1773 = vmatpush1.msra.mxu0 0.0
      %1774 = vmatprep.subr.mxu0 0.0
      %1775 = vmatpush1.msra.mxu0 0.0
      %1776 = vmatprep.subr.mxu0 0.0
      %1777 = vmatpush1.msra.mxu0 0.0
      %1778 = vmatprep.subr.mxu0 0.0
      %1779 = vmatpush1.msra.mxu0 0.0
      %1780 = vmatprep.subr.mxu0 0.0
      %1781 = vmatpush1.msra.mxu0 0.0
      %1782 = vmatprep.subr.mxu0 0.0
      %1783 = vmatpush1.msra.mxu0 0.0
      %1784 = vmatprep.subr.mxu0 0.0
      %1785 = vmatpush1.msra.mxu0 0.0
      %1786 = vmatprep.subr.mxu0 0.0
      %1787 = vmatpush1.msra.mxu0 0.0
      %1788 = vmatprep.subr.mxu0 0.0
      %1789 = vmatpush1.msra.mxu0 0.0
      %1790 = vmatprep.subr.mxu0 0.0
      %1791 = vmatpush1.msra.mxu0 %v522
      %1792 = vmatprep.subr.mxu0 0.0
      %1793 = vmatpush2.msra.mxu0 0.0
      %1794 = vmatprep.subr.mxu0 0.0
      %1795 = vmatpush2.msra.mxu0 0.0
      %1796 = vmatprep.subr.mxu0 0.0
      %1797 = vmatpush2.msra.mxu0 0.0
      %1798 = vmatprep.subr.mxu0 0.0
      %1799 = vmatpush2.msra.mxu0 0.0
      %1800 = vmatprep.subr.mxu0 0.0
      %1801 = vmatpush2.msra.mxu0 0.0
      %1802 = vmatprep.subr.mxu0 0.0
      %1803 = vmatpush2.msra.mxu0 0.0
      %1804 = vmatprep.subr.mxu0 0.0
      %1805 = vmatpush2.msra.mxu0 0.0
      %1806 = vmatprep.subr.mxu0 0.0
      %1807 = vmatpush2.msra.mxu0 0.0
      %1808 = vmatprep.subr.mxu0 0.0
      %1809 = vmatpush2.msra.mxu0 0.0
      %1810 = vmatprep.subr.mxu0 0.0
      %1811 = vmatpush2.msra.mxu0 0.0
      %1812 = vmatprep.subr.mxu0 0.0
      %1813 = vmatpush2.msra.mxu0 0.0
      %1814 = vmatprep.subr.mxu0 0.0
      %1815 = vmatpush2.msra.mxu0 0.0
      %1816 = vmatprep.subr.mxu0 0.0
      %1817 = vmatpush2.msra.mxu0 0.0
      %1818 = vmatprep.subr.mxu0 0.0
      %1819 = vmatpush2.msra.mxu0 0.0
      %1820 = vmatprep.subr.mxu0 0.0
      %1821 = vmatpush2.msra.mxu0 0.0
      %1822 = vmatprep.subr.mxu0 0.0
      %1823 = vmatpush2.msra.mxu0 0.0
      %1824 = vmatprep.mubr.f32.mxu0 0.0
      %1825 = vmatmul.mubr.f32.gmra.mxu0 %v1758
      %v1826 = vpop.f32.mrf.mxu0
      %v1827 = vadd.f32 0.0, %v1826
      %v1828 = vpop.f32.mrf.mxu0
      %1829 = vdwg.mxu0
      %1830 = vrot.lane.b32.xlu0 %v524, 112
      %v1831 = vpop.permute.xlu0 %1830
      %1832 = vrot.lane.b32.xlu0 %v478, 48
      %v1833 = vpop.permute.xlu0 %1832
      %v1834 = vsel %vm535, %v1831, 0
      %v1836 = vsel %vm535, %v1833, 0
      %1838 = vmatprep.subr.mxu0 0.0
      %1839 = vmatpush1.xpose.msra.mxu0 0.0
      %1840 = vmatprep.subr.mxu0 0.0
      %1841 = vmatpush1.xpose.msra.mxu0 0.0
      %1842 = vmatprep.subr.mxu0 0.0
      %1843 = vmatpush1.xpose.msra.mxu0 0.0
      %1844 = vmatprep.subr.mxu0 0.0
      %1845 = vmatpush1.xpose.msra.mxu0 0.0
      %1846 = vmatprep.subr.mxu0 0.0
      %1847 = vmatpush1.xpose.msra.mxu0 0.0
      %1848 = vmatprep.subr.mxu0 0.0
      %1849 = vmatpush1.xpose.msra.mxu0 0.0
      %1850 = vmatprep.subr.mxu0 0.0
      %1851 = vmatpush1.xpose.msra.mxu0 0.0
      %1852 = vmatprep.subr.mxu0 0.0
      %1853 = vmatpush1.xpose.msra.mxu0 0.0
      %1854 = vmatprep.subr.mxu0 0.0
      %1855 = vmatpush1.xpose.msra.mxu0 0.0
      %1856 = vmatprep.subr.mxu0 0.0
      %1857 = vmatpush1.xpose.msra.mxu0 0.0
      %1858 = vmatprep.subr.mxu0 0.0
      %1859 = vmatpush1.xpose.msra.mxu0 0.0
      %1860 = vmatprep.subr.mxu0 0.0
      %1861 = vmatpush1.xpose.msra.mxu0 0.0
      %1862 = vmatprep.subr.mxu0 0.0
      %1863 = vmatpush1.xpose.msra.mxu0 0.0
      %1864 = vmatprep.subr.mxu0 0.0
      %1865 = vmatpush1.xpose.msra.mxu0 0.0
      %1866 = vmatprep.subr.mxu0 0.0
      %1867 = vmatpush1.xpose.msra.mxu0 0.0
      %1868 = vmatprep.subr.mxu0 0.0
      %1869 = vmatpush1.xpose.msra.mxu0 %v1836
      %1870 = vmatprep.subr.mxu0 0.0
      %1871 = vmatpush2.xpose.msra.mxu0 0.0
      %1872 = vmatprep.subr.mxu0 0.0
      %1873 = vmatpush2.xpose.msra.mxu0 0.0
      %1874 = vmatprep.subr.mxu0 0.0
      %1875 = vmatpush2.xpose.msra.mxu0 0.0
      %1876 = vmatprep.subr.mxu0 0.0
      %1877 = vmatpush2.xpose.msra.mxu0 0.0
      %1878 = vmatprep.subr.mxu0 0.0
      %1879 = vmatpush2.xpose.msra.mxu0 0.0
      %1880 = vmatprep.subr.mxu0 0.0
      %1881 = vmatpush2.xpose.msra.mxu0 0.0
      %1882 = vmatprep.subr.mxu0 0.0
      %1883 = vmatpush2.xpose.msra.mxu0 0.0
      %1884 = vmatprep.subr.mxu0 0.0
      %1885 = vmatpush2.xpose.msra.mxu0 0.0
      %1886 = vmatprep.subr.mxu0 0.0
      %1887 = vmatpush2.xpose.msra.mxu0 0.0
      %1888 = vmatprep.subr.mxu0 0.0
      %1889 = vmatpush2.xpose.msra.mxu0 0.0
      %1890 = vmatprep.subr.mxu0 0.0
      %1891 = vmatpush2.xpose.msra.mxu0 0.0
      %1892 = vmatprep.subr.mxu0 0.0
      %1893 = vmatpush2.xpose.msra.mxu0 0.0
      %1894 = vmatprep.subr.mxu0 0.0
      %1895 = vmatpush2.xpose.msra.mxu0 0.0
      %1896 = vmatprep.subr.mxu0 0.0
      %1897 = vmatpush2.xpose.msra.mxu0 0.0
      %1898 = vmatprep.subr.mxu0 0.0
      %1899 = vmatpush2.xpose.msra.mxu0 0.0
      %1900 = vmatprep.subr.mxu0 0.0
      %1901 = vmatpush2.xpose.msra.mxu0 0.0
      %1902 = vmatprep.mubr.f32.mxu0 0.0
      %1903 = vmatmul.mubr.f32.gmra.mxu0 %v1834
      %v1904 = vpop.f32.mrf.mxu0
      %v1905 = vadd.f32 0.0, %v1904
      %v1906 = vpop.f32.mrf.mxu0
      %1907 = vdwg.mxu0
      %1908 = vrot.lane.b32.xlu0 %v525, 112
      %v1909 = vpop.permute.xlu0 %1908
      %1910 = vrot.lane.b32.xlu0 %v484, 48
      %v1911 = vpop.permute.xlu0 %1910
      %v1912 = vsel %vm535, %v1909, 0
      %v1914 = vsel %vm535, %v1911, 0
      %1916 = vmatprep.subr.mxu0 0.0
      %1917 = vmatpush1.xpose.msra.mxu0 0.0
      %1918 = vmatprep.subr.mxu0 0.0
      %1919 = vmatpush1.xpose.msra.mxu0 0.0
      %1920 = vmatprep.subr.mxu0 0.0
      %1921 = vmatpush1.xpose.msra.mxu0 0.0
      %1922 = vmatprep.subr.mxu0 0.0
      %1923 = vmatpush1.xpose.msra.mxu0 0.0
      %1924 = vmatprep.subr.mxu0 0.0
      %1925 = vmatpush1.xpose.msra.mxu0 0.0
      %1926 = vmatprep.subr.mxu0 0.0
      %1927 = vmatpush1.xpose.msra.mxu0 0.0
      %1928 = vmatprep.subr.mxu0 0.0
      %1929 = vmatpush1.xpose.msra.mxu0 0.0
      %1930 = vmatprep.subr.mxu0 0.0
      %1931 = vmatpush1.xpose.msra.mxu0 0.0
      %1932 = vmatprep.subr.mxu0 0.0
      %1933 = vmatpush1.xpose.msra.mxu0 0.0
      %1934 = vmatprep.subr.mxu0 0.0
      %1935 = vmatpush1.xpose.msra.mxu0 0.0
      %1936 = vmatprep.subr.mxu0 0.0
      %1937 = vmatpush1.xpose.msra.mxu0 0.0
      %1938 = vmatprep.subr.mxu0 0.0
      %1939 = vmatpush1.xpose.msra.mxu0 0.0
      %1940 = vmatprep.subr.mxu0 0.0
      %1941 = vmatpush1.xpose.msra.mxu0 0.0
      %1942 = vmatprep.subr.mxu0 0.0
      %1943 = vmatpush1.xpose.msra.mxu0 0.0
      %1944 = vmatprep.subr.mxu0 0.0
      %1945 = vmatpush1.xpose.msra.mxu0 0.0
      %1946 = vmatprep.subr.mxu0 0.0
      %1947 = vmatpush1.xpose.msra.mxu0 %v1914
      %1948 = vmatprep.subr.mxu0 0.0
      %1949 = vmatpush2.xpose.msra.mxu0 0.0
      %1950 = vmatprep.subr.mxu0 0.0
      %1951 = vmatpush2.xpose.msra.mxu0 0.0
      %1952 = vmatprep.subr.mxu0 0.0
      %1953 = vmatpush2.xpose.msra.mxu0 0.0
      %1954 = vmatprep.subr.mxu0 0.0
      %1955 = vmatpush2.xpose.msra.mxu0 0.0
      %1956 = vmatprep.subr.mxu0 0.0
      %1957 = vmatpush2.xpose.msra.mxu0 0.0
      %1958 = vmatprep.subr.mxu0 0.0
      %1959 = vmatpush2.xpose.msra.mxu0 0.0
      %1960 = vmatprep.subr.mxu0 0.0
      %1961 = vmatpush2.xpose.msra.mxu0 0.0
      %1962 = vmatprep.subr.mxu0 0.0
      %1963 = vmatpush2.xpose.msra.mxu0 0.0
      %1964 = vmatprep.subr.mxu0 0.0
      %1965 = vmatpush2.xpose.msra.mxu0 0.0
      %1966 = vmatprep.subr.mxu0 0.0
      %1967 = vmatpush2.xpose.msra.mxu0 0.0
      %1968 = vmatprep.subr.mxu0 0.0
      %1969 = vmatpush2.xpose.msra.mxu0 0.0
      %1970 = vmatprep.subr.mxu0 0.0
      %1971 = vmatpush2.xpose.msra.mxu0 0.0
      %1972 = vmatprep.subr.mxu0 0.0
      %1973 = vmatpush2.xpose.msra.mxu0 0.0
      %1974 = vmatprep.subr.mxu0 0.0
      %1975 = vmatpush2.xpose.msra.mxu0 0.0
      %1976 = vmatprep.subr.mxu0 0.0
      %1977 = vmatpush2.xpose.msra.mxu0 0.0
      %1978 = vmatprep.subr.mxu0 0.0
      %1979 = vmatpush2.xpose.msra.mxu0 0.0
      %1980 = vmatprep.mubr.f32.mxu0 0.0
      %1981 = vmatmul.mubr.f32.gmra.mxu0 %v1912
      %v1982 = vpop.f32.mrf.mxu0
      %v1983 = vadd.f32 0.0, %v1982
      %v1984 = vpop.f32.mrf.mxu0
      %1985 = vdwg.mxu0
      %1986 = vrot.lane.b32.xlu0 %v526, 112
      %v1987 = vpop.permute.xlu0 %1986
      %1988 = vrot.lane.b32.xlu0 %v490, 48
      %v1989 = vpop.permute.xlu0 %1988
      %v1990 = vsel %vm535, %v1987, 0
      %v1992 = vsel %vm535, %v1989, 0
      %1994 = vmatprep.subr.mxu0 0.0
      %1995 = vmatpush1.xpose.msra.mxu0 0.0
      %1996 = vmatprep.subr.mxu0 0.0
      %1997 = vmatpush1.xpose.msra.mxu0 0.0
      %1998 = vmatprep.subr.mxu0 0.0
      %1999 = vmatpush1.xpose.msra.mxu0 0.0
      %2000 = vmatprep.subr.mxu0 0.0
      %2001 = vmatpush1.xpose.msra.mxu0 0.0
      %2002 = vmatprep.subr.mxu0 0.0
      %2003 = vmatpush1.xpose.msra.mxu0 0.0
      %2004 = vmatprep.subr.mxu0 0.0
      %2005 = vmatpush1.xpose.msra.mxu0 0.0
      %2006 = vmatprep.subr.mxu0 0.0
      %2007 = vmatpush1.xpose.msra.mxu0 0.0
      %2008 = vmatprep.subr.mxu0 0.0
      %2009 = vmatpush1.xpose.msra.mxu0 0.0
      %2010 = vmatprep.subr.mxu0 0.0
      %2011 = vmatpush1.xpose.msra.mxu0 0.0
      %2012 = vmatprep.subr.mxu0 0.0
      %2013 = vmatpush1.xpose.msra.mxu0 0.0
      %2014 = vmatprep.subr.mxu0 0.0
      %2015 = vmatpush1.xpose.msra.mxu0 0.0
      %2016 = vmatprep.subr.mxu0 0.0
      %2017 = vmatpush1.xpose.msra.mxu0 0.0
      %2018 = vmatprep.subr.mxu0 0.0
      %2019 = vmatpush1.xpose.msra.mxu0 0.0
      %2020 = vmatprep.subr.mxu0 0.0
      %2021 = vmatpush1.xpose.msra.mxu0 0.0
      %2022 = vmatprep.subr.mxu0 0.0
      %2023 = vmatpush1.xpose.msra.mxu0 0.0
      %2024 = vmatprep.subr.mxu0 0.0
      %2025 = vmatpush1.xpose.msra.mxu0 %v1992
      %2026 = vmatprep.subr.mxu0 0.0
      %2027 = vmatpush2.xpose.msra.mxu0 0.0
      %2028 = vmatprep.subr.mxu0 0.0
      %2029 = vmatpush2.xpose.msra.mxu0 0.0
      %2030 = vmatprep.subr.mxu0 0.0
      %2031 = vmatpush2.xpose.msra.mxu0 0.0
      %2032 = vmatprep.subr.mxu0 0.0
      %2033 = vmatpush2.xpose.msra.mxu0 0.0
      %2034 = vmatprep.subr.mxu0 0.0
      %2035 = vmatpush2.xpose.msra.mxu0 0.0
      %2036 = vmatprep.subr.mxu0 0.0
      %2037 = vmatpush2.xpose.msra.mxu0 0.0
      %2038 = vmatprep.subr.mxu0 0.0
      %2039 = vmatpush2.xpose.msra.mxu0 0.0
      %2040 = vmatprep.subr.mxu0 0.0
      %2041 = vmatpush2.xpose.msra.mxu0 0.0
      %2042 = vmatprep.subr.mxu0 0.0
      %2043 = vmatpush2.xpose.msra.mxu0 0.0
      %2044 = vmatprep.subr.mxu0 0.0
      %2045 = vmatpush2.xpose.msra.mxu0 0.0
      %2046 = vmatprep.subr.mxu0 0.0
      %2047 = vmatpush2.xpose.msra.mxu0 0.0
      %2048 = vmatprep.subr.mxu0 0.0
      %2049 = vmatpush2.xpose.msra.mxu0 0.0
      %2050 = vmatprep.subr.mxu0 0.0
      %2051 = vmatpush2.xpose.msra.mxu0 0.0
      %2052 = vmatprep.subr.mxu0 0.0
      %2053 = vmatpush2.xpose.msra.mxu0 0.0
      %2054 = vmatprep.subr.mxu0 0.0
      %2055 = vmatpush2.xpose.msra.mxu0 0.0
      %2056 = vmatprep.subr.mxu0 0.0
      %2057 = vmatpush2.xpose.msra.mxu0 0.0
      %2058 = vmatprep.mubr.f32.mxu0 0.0
      %2059 = vmatmul.mubr.f32.gmra.mxu0 %v1990
      %v2060 = vpop.f32.mrf.mxu0
      %v2061 = vadd.f32 0.0, %v2060
      %v2062 = vpop.f32.mrf.mxu0
      %2063 = vdwg.mxu0
      %2064 = vrot.lane.b32.xlu0 %v527, 112
      %v2065 = vpop.permute.xlu0 %2064
      %2066 = vrot.lane.b32.xlu0 %v496, 48
      %v2067 = vpop.permute.xlu0 %2066
      %v2068 = vsel %vm535, %v2065, 0
      %v2070 = vsel %vm535, %v2067, 0
      %2072 = vmatprep.subr.mxu0 0.0
      %2073 = vmatpush1.xpose.msra.mxu0 0.0
      %2074 = vmatprep.subr.mxu0 0.0
      %2075 = vmatpush1.xpose.msra.mxu0 0.0
      %2076 = vmatprep.subr.mxu0 0.0
      %2077 = vmatpush1.xpose.msra.mxu0 0.0
      %2078 = vmatprep.subr.mxu0 0.0
      %2079 = vmatpush1.xpose.msra.mxu0 0.0
      %2080 = vmatprep.subr.mxu0 0.0
      %2081 = vmatpush1.xpose.msra.mxu0 0.0
      %2082 = vmatprep.subr.mxu0 0.0
      %2083 = vmatpush1.xpose.msra.mxu0 0.0
      %2084 = vmatprep.subr.mxu0 0.0
      %2085 = vmatpush1.xpose.msra.mxu0 0.0
      %2086 = vmatprep.subr.mxu0 0.0
      %2087 = vmatpush1.xpose.msra.mxu0 0.0
      %2088 = vmatprep.subr.mxu0 0.0
      %2089 = vmatpush1.xpose.msra.mxu0 0.0
      %2090 = vmatprep.subr.mxu0 0.0
      %2091 = vmatpush1.xpose.msra.mxu0 0.0
      %2092 = vmatprep.subr.mxu0 0.0
      %2093 = vmatpush1.xpose.msra.mxu0 0.0
      %2094 = vmatprep.subr.mxu0 0.0
      %2095 = vmatpush1.xpose.msra.mxu0 0.0
      %2096 = vmatprep.subr.mxu0 0.0
      %2097 = vmatpush1.xpose.msra.mxu0 0.0
      %2098 = vmatprep.subr.mxu0 0.0
      %2099 = vmatpush1.xpose.msra.mxu0 0.0
      %2100 = vmatprep.subr.mxu0 0.0
      %2101 = vmatpush1.xpose.msra.mxu0 0.0
      %2102 = vmatprep.subr.mxu0 0.0
      %2103 = vmatpush1.xpose.msra.mxu0 %v2070
      %2104 = vmatprep.subr.mxu0 0.0
      %2105 = vmatpush2.xpose.msra.mxu0 0.0
      %2106 = vmatprep.subr.mxu0 0.0
      %2107 = vmatpush2.xpose.msra.mxu0 0.0
      %2108 = vmatprep.subr.mxu0 0.0
      %2109 = vmatpush2.xpose.msra.mxu0 0.0
      %2110 = vmatprep.subr.mxu0 0.0
      %2111 = vmatpush2.xpose.msra.mxu0 0.0
      %2112 = vmatprep.subr.mxu0 0.0
      %2113 = vmatpush2.xpose.msra.mxu0 0.0
      %2114 = vmatprep.subr.mxu0 0.0
      %2115 = vmatpush2.xpose.msra.mxu0 0.0
      %2116 = vmatprep.subr.mxu0 0.0
      %2117 = vmatpush2.xpose.msra.mxu0 0.0
      %2118 = vmatprep.subr.mxu0 0.0
      %2119 = vmatpush2.xpose.msra.mxu0 0.0
      %2120 = vmatprep.subr.mxu0 0.0
      %2121 = vmatpush2.xpose.msra.mxu0 0.0
      %2122 = vmatprep.subr.mxu0 0.0
      %2123 = vmatpush2.xpose.msra.mxu0 0.0
      %2124 = vmatprep.subr.mxu0 0.0
      %2125 = vmatpush2.xpose.msra.mxu0 0.0
      %2126 = vmatprep.subr.mxu0 0.0
      %2127 = vmatpush2.xpose.msra.mxu0 0.0
      %2128 = vmatprep.subr.mxu0 0.0
      %2129 = vmatpush2.xpose.msra.mxu0 0.0
      %2130 = vmatprep.subr.mxu0 0.0
      %2131 = vmatpush2.xpose.msra.mxu0 0.0
      %2132 = vmatprep.subr.mxu0 0.0
      %2133 = vmatpush2.xpose.msra.mxu0 0.0
      %2134 = vmatprep.subr.mxu0 0.0
      %2135 = vmatpush2.xpose.msra.mxu0 0.0
      %2136 = vmatprep.mubr.f32.mxu0 0.0
      %2137 = vmatmul.mubr.f32.gmra.mxu0 %v2068
      %v2138 = vpop.f32.mrf.mxu0
      %v2139 = vadd.f32 0.0, %v2138
      %v2140 = vpop.f32.mrf.mxu0
      %2141 = vdwg.mxu0
      %2142 = vrot.lane.b32.xlu0 %v528, 112
      %v2143 = vpop.permute.xlu0 %2142
      %2144 = vrot.lane.b32.xlu0 %v502, 48
      %v2145 = vpop.permute.xlu0 %2144
      %v2146 = vsel %vm535, %v2143, 0
      %v2148 = vsel %vm535, %v2145, 0
      %2150 = vmatprep.subr.mxu0 0.0
      %2151 = vmatpush1.xpose.msra.mxu0 0.0
      %2152 = vmatprep.subr.mxu0 0.0
      %2153 = vmatpush1.xpose.msra.mxu0 0.0
      %2154 = vmatprep.subr.mxu0 0.0
      %2155 = vmatpush1.xpose.msra.mxu0 0.0
      %2156 = vmatprep.subr.mxu0 0.0
      %2157 = vmatpush1.xpose.msra.mxu0 0.0
      %2158 = vmatprep.subr.mxu0 0.0
      %2159 = vmatpush1.xpose.msra.mxu0 0.0
      %2160 = vmatprep.subr.mxu0 0.0
      %2161 = vmatpush1.xpose.msra.mxu0 0.0
      %2162 = vmatprep.subr.mxu0 0.0
      %2163 = vmatpush1.xpose.msra.mxu0 0.0
      %2164 = vmatprep.subr.mxu0 0.0
      %2165 = vmatpush1.xpose.msra.mxu0 0.0
      %2166 = vmatprep.subr.mxu0 0.0
      %2167 = vmatpush1.xpose.msra.mxu0 0.0
      %2168 = vmatprep.subr.mxu0 0.0
      %2169 = vmatpush1.xpose.msra.mxu0 0.0
      %2170 = vmatprep.subr.mxu0 0.0
      %2171 = vmatpush1.xpose.msra.mxu0 0.0
      %2172 = vmatprep.subr.mxu0 0.0
      %2173 = vmatpush1.xpose.msra.mxu0 0.0
      %2174 = vmatprep.subr.mxu0 0.0
      %2175 = vmatpush1.xpose.msra.mxu0 0.0
      %2176 = vmatprep.subr.mxu0 0.0
      %2177 = vmatpush1.xpose.msra.mxu0 0.0
      %2178 = vmatprep.subr.mxu0 0.0
      %2179 = vmatpush1.xpose.msra.mxu0 0.0
      %2180 = vmatprep.subr.mxu0 0.0
      %2181 = vmatpush1.xpose.msra.mxu0 %v2148
      %2182 = vmatprep.subr.mxu0 0.0
      %2183 = vmatpush2.xpose.msra.mxu0 0.0
      %2184 = vmatprep.subr.mxu0 0.0
      %2185 = vmatpush2.xpose.msra.mxu0 0.0
      %2186 = vmatprep.subr.mxu0 0.0
      %2187 = vmatpush2.xpose.msra.mxu0 0.0
      %2188 = vmatprep.subr.mxu0 0.0
      %2189 = vmatpush2.xpose.msra.mxu0 0.0
      %2190 = vmatprep.subr.mxu0 0.0
      %2191 = vmatpush2.xpose.msra.mxu0 0.0
      %2192 = vmatprep.subr.mxu0 0.0
      %2193 = vmatpush2.xpose.msra.mxu0 0.0
      %2194 = vmatprep.subr.mxu0 0.0
      %2195 = vmatpush2.xpose.msra.mxu0 0.0
      %2196 = vmatprep.subr.mxu0 0.0
      %2197 = vmatpush2.xpose.msra.mxu0 0.0
      %2198 = vmatprep.subr.mxu0 0.0
      %2199 = vmatpush2.xpose.msra.mxu0 0.0
      %2200 = vmatprep.subr.mxu0 0.0
      %2201 = vmatpush2.xpose.msra.mxu0 0.0
      %2202 = vmatprep.subr.mxu0 0.0
      %2203 = vmatpush2.xpose.msra.mxu0 0.0
      %2204 = vmatprep.subr.mxu0 0.0
      %2205 = vmatpush2.xpose.msra.mxu0 0.0
      %2206 = vmatprep.subr.mxu0 0.0
      %2207 = vmatpush2.xpose.msra.mxu0 0.0
      %2208 = vmatprep.subr.mxu0 0.0
      %2209 = vmatpush2.xpose.msra.mxu0 0.0
      %2210 = vmatprep.subr.mxu0 0.0
      %2211 = vmatpush2.xpose.msra.mxu0 0.0
      %2212 = vmatprep.subr.mxu0 0.0
      %2213 = vmatpush2.xpose.msra.mxu0 0.0
      %2214 = vmatprep.mubr.f32.mxu0 0.0
      %2215 = vmatmul.mubr.f32.gmra.mxu0 %v2146
      %v2216 = vpop.f32.mrf.mxu0
      %v2217 = vadd.f32 0.0, %v2216
      %v2218 = vpop.f32.mrf.mxu0
      %2219 = vdwg.mxu0
      %2220 = vrot.lane.b32.xlu0 %v529, 112
      %v2221 = vpop.permute.xlu0 %2220
      %2222 = vrot.lane.b32.xlu0 %v508, 48
      %v2223 = vpop.permute.xlu0 %2222
      %v2224 = vsel %vm535, %v2221, 0
      %v2226 = vsel %vm535, %v2223, 0
      %2228 = vmatprep.subr.mxu0 0.0
      %2229 = vmatpush1.xpose.msra.mxu0 0.0
      %2230 = vmatprep.subr.mxu0 0.0
      %2231 = vmatpush1.xpose.msra.mxu0 0.0
      %2232 = vmatprep.subr.mxu0 0.0
      %2233 = vmatpush1.xpose.msra.mxu0 0.0
      %2234 = vmatprep.subr.mxu0 0.0
      %2235 = vmatpush1.xpose.msra.mxu0 0.0
      %2236 = vmatprep.subr.mxu0 0.0
      %2237 = vmatpush1.xpose.msra.mxu0 0.0
      %2238 = vmatprep.subr.mxu0 0.0
      %2239 = vmatpush1.xpose.msra.mxu0 0.0
      %2240 = vmatprep.subr.mxu0 0.0
      %2241 = vmatpush1.xpose.msra.mxu0 0.0
      %2242 = vmatprep.subr.mxu0 0.0
      %2243 = vmatpush1.xpose.msra.mxu0 0.0
      %2244 = vmatprep.subr.mxu0 0.0
      %2245 = vmatpush1.xpose.msra.mxu0 0.0
      %2246 = vmatprep.subr.mxu0 0.0
      %2247 = vmatpush1.xpose.msra.mxu0 0.0
      %2248 = vmatprep.subr.mxu0 0.0
      %2249 = vmatpush1.xpose.msra.mxu0 0.0
      %2250 = vmatprep.subr.mxu0 0.0
      %2251 = vmatpush1.xpose.msra.mxu0 0.0
      %2252 = vmatprep.subr.mxu0 0.0
      %2253 = vmatpush1.xpose.msra.mxu0 0.0
      %2254 = vmatprep.subr.mxu0 0.0
      %2255 = vmatpush1.xpose.msra.mxu0 0.0
      %2256 = vmatprep.subr.mxu0 0.0
      %2257 = vmatpush1.xpose.msra.mxu0 0.0
      %2258 = vmatprep.subr.mxu0 0.0
      %2259 = vmatpush1.xpose.msra.mxu0 %v2226
      %2260 = vmatprep.subr.mxu0 0.0
      %2261 = vmatpush2.xpose.msra.mxu0 0.0
      %2262 = vmatprep.subr.mxu0 0.0
      %2263 = vmatpush2.xpose.msra.mxu0 0.0
      %2264 = vmatprep.subr.mxu0 0.0
      %2265 = vmatpush2.xpose.msra.mxu0 0.0
      %2266 = vmatprep.subr.mxu0 0.0
      %2267 = vmatpush2.xpose.msra.mxu0 0.0
      %2268 = vmatprep.subr.mxu0 0.0
      %2269 = vmatpush2.xpose.msra.mxu0 0.0
      %2270 = vmatprep.subr.mxu0 0.0
      %2271 = vmatpush2.xpose.msra.mxu0 0.0
      %2272 = vmatprep.subr.mxu0 0.0
      %2273 = vmatpush2.xpose.msra.mxu0 0.0
      %2274 = vmatprep.subr.mxu0 0.0
      %2275 = vmatpush2.xpose.msra.mxu0 0.0
      %2276 = vmatprep.subr.mxu0 0.0
      %2277 = vmatpush2.xpose.msra.mxu0 0.0
      %2278 = vmatprep.subr.mxu0 0.0
      %2279 = vmatpush2.xpose.msra.mxu0 0.0
      %2280 = vmatprep.subr.mxu0 0.0
      %2281 = vmatpush2.xpose.msra.mxu0 0.0
      %2282 = vmatprep.subr.mxu0 0.0
      %2283 = vmatpush2.xpose.msra.mxu0 0.0
      %2284 = vmatprep.subr.mxu0 0.0
      %2285 = vmatpush2.xpose.msra.mxu0 0.0
      %2286 = vmatprep.subr.mxu0 0.0
      %2287 = vmatpush2.xpose.msra.mxu0 0.0
      %2288 = vmatprep.subr.mxu0 0.0
      %2289 = vmatpush2.xpose.msra.mxu0 0.0
      %2290 = vmatprep.subr.mxu0 0.0
      %2291 = vmatpush2.xpose.msra.mxu0 0.0
      %2292 = vmatprep.mubr.f32.mxu0 0.0
      %2293 = vmatmul.mubr.f32.gmra.mxu0 %v2224
      %v2294 = vpop.f32.mrf.mxu0
      %v2295 = vadd.f32 0.0, %v2294
      %v2296 = vpop.f32.mrf.mxu0
      %2297 = vdwg.mxu0
      %2298 = vrot.lane.b32.xlu0 %v530, 112
      %v2299 = vpop.permute.xlu0 %2298
      %2300 = vrot.lane.b32.xlu0 %v514, 48
      %v2301 = vpop.permute.xlu0 %2300
      %v2302 = vsel %vm535, %v2299, 0
      %v2304 = vsel %vm535, %v2301, 0
      %2306 = vmatprep.subr.mxu0 0.0
      %2307 = vmatpush1.xpose.msra.mxu0 0.0
      %2308 = vmatprep.subr.mxu0 0.0
      %2309 = vmatpush1.xpose.msra.mxu0 0.0
      %2310 = vmatprep.subr.mxu0 0.0
      %2311 = vmatpush1.xpose.msra.mxu0 0.0
      %2312 = vmatprep.subr.mxu0 0.0
      %2313 = vmatpush1.xpose.msra.mxu0 0.0
      %2314 = vmatprep.subr.mxu0 0.0
      %2315 = vmatpush1.xpose.msra.mxu0 0.0
      %2316 = vmatprep.subr.mxu0 0.0
      %2317 = vmatpush1.xpose.msra.mxu0 0.0
      %2318 = vmatprep.subr.mxu0 0.0
      %2319 = vmatpush1.xpose.msra.mxu0 0.0
      %2320 = vmatprep.subr.mxu0 0.0
      %2321 = vmatpush1.xpose.msra.mxu0 0.0
      %2322 = vmatprep.subr.mxu0 0.0
      %2323 = vmatpush1.xpose.msra.mxu0 0.0
      %2324 = vmatprep.subr.mxu0 0.0
      %2325 = vmatpush1.xpose.msra.mxu0 0.0
      %2326 = vmatprep.subr.mxu0 0.0
      %2327 = vmatpush1.xpose.msra.mxu0 0.0
      %2328 = vmatprep.subr.mxu0 0.0
      %2329 = vmatpush1.xpose.msra.mxu0 0.0
      %2330 = vmatprep.subr.mxu0 0.0
      %2331 = vmatpush1.xpose.msra.mxu0 0.0
      %2332 = vmatprep.subr.mxu0 0.0
      %2333 = vmatpush1.xpose.msra.mxu0 0.0
      %2334 = vmatprep.subr.mxu0 0.0
      %2335 = vmatpush1.xpose.msra.mxu0 0.0
      %2336 = vmatprep.subr.mxu0 0.0
      %2337 = vmatpush1.xpose.msra.mxu0 %v2304
      %2338 = vmatprep.subr.mxu0 0.0
      %2339 = vmatpush2.xpose.msra.mxu0 0.0
      %2340 = vmatprep.subr.mxu0 0.0
      %2341 = vmatpush2.xpose.msra.mxu0 0.0
      %2342 = vmatprep.subr.mxu0 0.0
      %2343 = vmatpush2.xpose.msra.mxu0 0.0
      %2344 = vmatprep.subr.mxu0 0.0
      %2345 = vmatpush2.xpose.msra.mxu0 0.0
      %2346 = vmatprep.subr.mxu0 0.0
      %2347 = vmatpush2.xpose.msra.mxu0 0.0
      %2348 = vmatprep.subr.mxu0 0.0
      %2349 = vmatpush2.xpose.msra.mxu0 0.0
      %2350 = vmatprep.subr.mxu0 0.0
      %2351 = vmatpush2.xpose.msra.mxu0 0.0
      %2352 = vmatprep.subr.mxu0 0.0
      %2353 = vmatpush2.xpose.msra.mxu0 0.0
      %2354 = vmatprep.subr.mxu0 0.0
      %2355 = vmatpush2.xpose.msra.mxu0 0.0
      %2356 = vmatprep.subr.mxu0 0.0
      %2357 = vmatpush2.xpose.msra.mxu0 0.0
      %2358 = vmatprep.subr.mxu0 0.0
      %2359 = vmatpush2.xpose.msra.mxu0 0.0
      %2360 = vmatprep.subr.mxu0 0.0
      %2361 = vmatpush2.xpose.msra.mxu0 0.0
      %2362 = vmatprep.subr.mxu0 0.0
      %2363 = vmatpush2.xpose.msra.mxu0 0.0
      %2364 = vmatprep.subr.mxu0 0.0
      %2365 = vmatpush2.xpose.msra.mxu0 0.0
      %2366 = vmatprep.subr.mxu0 0.0
      %2367 = vmatpush2.xpose.msra.mxu0 0.0
      %2368 = vmatprep.subr.mxu0 0.0
      %2369 = vmatpush2.xpose.msra.mxu0 0.0
      %2370 = vmatprep.mubr.f32.mxu0 0.0
      %2371 = vmatmul.mubr.f32.gmra.mxu0 %v2302
      %v2372 = vpop.f32.mrf.mxu0
      %v2373 = vadd.f32 0.0, %v2372
      %v2374 = vpop.f32.mrf.mxu0
      %2375 = vdwg.mxu0
      %2376 = vrot.lane.b32.xlu0 %v531, 112
      %v2377 = vpop.permute.xlu0 %2376
      %2378 = vrot.lane.b32.xlu0 %v520, 48
      %v2379 = vpop.permute.xlu0 %2378
      %v2380 = vsel %vm535, %v2377, 0
      %v2382 = vsel %vm535, %v2379, 0
      %2384 = vmatprep.subr.mxu0 0.0
      %2385 = vmatpush1.xpose.msra.mxu0 0.0
      %2386 = vmatprep.subr.mxu0 0.0
      %2387 = vmatpush1.xpose.msra.mxu0 0.0
      %2388 = vmatprep.subr.mxu0 0.0
      %2389 = vmatpush1.xpose.msra.mxu0 0.0
      %2390 = vmatprep.subr.mxu0 0.0
      %2391 = vmatpush1.xpose.msra.mxu0 0.0
      %2392 = vmatprep.subr.mxu0 0.0
      %2393 = vmatpush1.xpose.msra.mxu0 0.0
      %2394 = vmatprep.subr.mxu0 0.0
      %2395 = vmatpush1.xpose.msra.mxu0 0.0
      %2396 = vmatprep.subr.mxu0 0.0
      %2397 = vmatpush1.xpose.msra.mxu0 0.0
      %2398 = vmatprep.subr.mxu0 0.0
      %2399 = vmatpush1.xpose.msra.mxu0 0.0
      %2400 = vmatprep.subr.mxu0 0.0
      %2401 = vmatpush1.xpose.msra.mxu0 0.0
      %2402 = vmatprep.subr.mxu0 0.0
      %2403 = vmatpush1.xpose.msra.mxu0 0.0
      %2404 = vmatprep.subr.mxu0 0.0
      %2405 = vmatpush1.xpose.msra.mxu0 0.0
      %2406 = vmatprep.subr.mxu0 0.0
      %2407 = vmatpush1.xpose.msra.mxu0 0.0
      %2408 = vmatprep.subr.mxu0 0.0
      %2409 = vmatpush1.xpose.msra.mxu0 0.0
      %2410 = vmatprep.subr.mxu0 0.0
      %2411 = vmatpush1.xpose.msra.mxu0 0.0
      %2412 = vmatprep.subr.mxu0 0.0
      %2413 = vmatpush1.xpose.msra.mxu0 0.0
      %2414 = vmatprep.subr.mxu0 0.0
      %2415 = vmatpush1.xpose.msra.mxu0 %v2382
      %2416 = vmatprep.subr.mxu0 0.0
      %2417 = vmatpush2.xpose.msra.mxu0 0.0
      %2418 = vmatprep.subr.mxu0 0.0
      %2419 = vmatpush2.xpose.msra.mxu0 0.0
      %2420 = vmatprep.subr.mxu0 0.0
      %2421 = vmatpush2.xpose.msra.mxu0 0.0
      %2422 = vmatprep.subr.mxu0 0.0
      %2423 = vmatpush2.xpose.msra.mxu0 0.0
      %2424 = vmatprep.subr.mxu0 0.0
      %2425 = vmatpush2.xpose.msra.mxu0 0.0
      %2426 = vmatprep.subr.mxu0 0.0
      %2427 = vmatpush2.xpose.msra.mxu0 0.0
      %2428 = vmatprep.subr.mxu0 0.0
      %2429 = vmatpush2.xpose.msra.mxu0 0.0
      %2430 = vmatprep.subr.mxu0 0.0
      %2431 = vmatpush2.xpose.msra.mxu0 0.0
      %2432 = vmatprep.subr.mxu0 0.0
      %2433 = vmatpush2.xpose.msra.mxu0 0.0
      %2434 = vmatprep.subr.mxu0 0.0
      %2435 = vmatpush2.xpose.msra.mxu0 0.0
      %2436 = vmatprep.subr.mxu0 0.0
      %2437 = vmatpush2.xpose.msra.mxu0 0.0
      %2438 = vmatprep.subr.mxu0 0.0
      %2439 = vmatpush2.xpose.msra.mxu0 0.0
      %2440 = vmatprep.subr.mxu0 0.0
      %2441 = vmatpush2.xpose.msra.mxu0 0.0
      %2442 = vmatprep.subr.mxu0 0.0
      %2443 = vmatpush2.xpose.msra.mxu0 0.0
      %2444 = vmatprep.subr.mxu0 0.0
      %2445 = vmatpush2.xpose.msra.mxu0 0.0
      %2446 = vmatprep.subr.mxu0 0.0
      %2447 = vmatpush2.xpose.msra.mxu0 0.0
      %2448 = vmatprep.mubr.f32.mxu0 0.0
      %2449 = vmatmul.mubr.f32.gmra.mxu0 %v2380
      %v2450 = vpop.f32.mrf.mxu0
      %v2451 = vadd.f32 0.0, %v2450
      %v2452 = vpop.f32.mrf.mxu0
      %2453 = vdwg.mxu0
      %v2454 = vsel %vm1157, %v1905, -inf
      %2455 = vmax.xlane.f32.xlu0 %v2454
      %v2456 = vpop.xlane.xlu0 %2455
      %v2457 = vsel %vm1157, %v1983, -inf
      %2458 = vmax.xlane.f32.xlu0 %v2457
      %v2459 = vpop.xlane.xlu0 %2458
      %v2460 = vsel %vm1157, %v2061, -inf
      %2461 = vmax.xlane.f32.xlu0 %v2460
      %v2462 = vpop.xlane.xlu0 %2461
      %v2463 = vsel %vm1157, %v2139, -inf
      %2464 = vmax.xlane.f32.xlu0 %v2463
      %v2465 = vpop.xlane.xlu0 %2464
      %v2466 = vsel %vm1157, %v2217, -inf
      %2467 = vmax.xlane.f32.xlu0 %v2466
      %v2468 = vpop.xlane.xlu0 %2467
      %v2469 = vsel %vm1157, %v2295, -inf
      %2470 = vmax.xlane.f32.xlu0 %v2469
      %v2471 = vpop.xlane.xlu0 %2470
      %v2472 = vsel %vm1157, %v2373, -inf
      %2473 = vmax.xlane.f32.xlu0 %v2472
      %v2474 = vpop.xlane.xlu0 %2473
      %v2475 = vsel %vm1157, %v2451, -inf
      %2476 = vmax.xlane.f32.xlu0 %v2475
      %v2477 = vpop.xlane.xlu0 %2476
      %v2478 = vsub.f32 %v1905, %v2456
      %v2479 = vsub.f32 %v1983, %v2459
      %v2480 = vsub.f32 %v2061, %v2462
      %v2481 = vsub.f32 %v2139, %v2465
      %v2482 = vsub.f32 %v2217, %v2468
      %v2483 = vsub.f32 %v2295, %v2471
      %v2484 = vsub.f32 %v2373, %v2474
      %v2485 = vsub.f32 %v2451, %v2477
      %v2486 = vmul.f32 %v2478, 1.442695
      %v2487 = vpow.pop %v2486
      %v2488 = vmul.f32 %v2479, 1.442695
      %v2489 = vpow.pop %v2488
      %v2490 = vmul.f32 %v2480, 1.442695
      %v2491 = vpow.pop %v2490
      %v2492 = vmul.f32 %v2481, 1.442695
      %v2493 = vpow.pop %v2492
      %v2494 = vmul.f32 %v2482, 1.442695
      %v2495 = vpow.pop %v2494
      %v2496 = vmul.f32 %v2483, 1.442695
      %v2497 = vpow.pop %v2496
      %v2498 = vmul.f32 %v2484, 1.442695
      %v2499 = vpow.pop %v2498
      %v2500 = vmul.f32 %v2485, 1.442695
      %v2501 = vpow.pop %v2500
      %v2502 = vsel %vm1157, %v2487, 0.0
      %2503 = vadd.xlane.f32.xlu0 %v2502
      %v2504 = vpop.xlane.xlu0 %2503
      %v2505 = vsel %vm1157, %v2489, 0.0
      %2506 = vadd.xlane.f32.xlu0 %v2505
      %v2507 = vpop.xlane.xlu0 %2506
      %v2508 = vsel %vm1157, %v2491, 0.0
      %2509 = vadd.xlane.f32.xlu0 %v2508
      %v2510 = vpop.xlane.xlu0 %2509
      %v2511 = vsel %vm1157, %v2493, 0.0
      %2512 = vadd.xlane.f32.xlu0 %v2511
      %v2513 = vpop.xlane.xlu0 %2512
      %v2514 = vsel %vm1157, %v2495, 0.0
      %2515 = vadd.xlane.f32.xlu0 %v2514
      %v2516 = vpop.xlane.xlu0 %2515
      %v2517 = vsel %vm1157, %v2497, 0.0
      %2518 = vadd.xlane.f32.xlu0 %v2517
      %v2519 = vpop.xlane.xlu0 %2518
      %v2520 = vsel %vm1157, %v2499, 0.0
      %2521 = vadd.xlane.f32.xlu0 %v2520
      %v2522 = vpop.xlane.xlu0 %2521
      %v2523 = vsel %vm1157, %v2501, 0.0
      %2524 = vadd.xlane.f32.xlu0 %v2523
      %v2525 = vpop.xlane.xlu0 %2524
      %v2526 = vrcp.pop %v2504
      %v2527 = vrcp.pop %v2507
      %v2528 = vrcp.pop %v2510
      %v2529 = vrcp.pop %v2513
      %v2530 = vrcp.pop %v2516
      %v2531 = vrcp.pop %v2519
      %v2532 = vrcp.pop %v2522
      %v2533 = vrcp.pop %v2525
      %v2534 = vmul.f32 %v2487, %v2526
      %v2535 = vmul.f32 %v2489, %v2527
      %v2536 = vmul.f32 %v2491, %v2528
      %v2537 = vmul.f32 %v2493, %v2529
      %v2538 = vmul.f32 %v2495, %v2530
      %v2539 = vmul.f32 %v2497, %v2531
      %v2540 = vmul.f32 %v2499, %v2532
      %v2541 = vmul.f32 %v2501, %v2533
      %2543 = vrot.lane.b32.xlu0 %v480, 112
      %v2544 = vpop.permute.xlu0 %2543
      %v2547 = vsel %vm1157, %v2534, 0
      %2549 = vmatprep.subr.mxu0 0.0
      %2550 = vmatpush1.msra.mxu0 0.0
      %2551 = vmatprep.subr.mxu0 0.0
      %2552 = vmatpush1.msra.mxu0 0.0
      %2553 = vmatprep.subr.mxu0 0.0
      %2554 = vmatpush1.msra.mxu0 0.0
      %2555 = vmatprep.subr.mxu0 0.0
      %2556 = vmatpush1.msra.mxu0 0.0
      %2557 = vmatprep.subr.mxu0 0.0
      %2558 = vmatpush1.msra.mxu0 0.0
      %2559 = vmatprep.subr.mxu0 0.0
      %2560 = vmatpush1.msra.mxu0 0.0
      %2561 = vmatprep.subr.mxu0 0.0
      %2562 = vmatpush1.msra.mxu0 0.0
      %2563 = vmatprep.subr.mxu0 0.0
      %2564 = vmatpush1.msra.mxu0 0.0
      %2565 = vmatprep.subr.mxu0 0.0
      %2566 = vmatpush1.msra.mxu0 0.0
      %2567 = vmatprep.subr.mxu0 0.0
      %2568 = vmatpush1.msra.mxu0 0.0
      %2569 = vmatprep.subr.mxu0 0.0
      %2570 = vmatpush1.msra.mxu0 0.0
      %2571 = vmatprep.subr.mxu0 0.0
      %2572 = vmatpush1.msra.mxu0 0.0
      %2573 = vmatprep.subr.mxu0 0.0
      %2574 = vmatpush1.msra.mxu0 0.0
      %2575 = vmatprep.subr.mxu0 0.0
      %2576 = vmatpush1.msra.mxu0 0.0
      %2577 = vmatprep.subr.mxu0 0.0
      %2578 = vmatpush1.msra.mxu0 0.0
      %2579 = vmatprep.subr.mxu0 0.0
      %2580 = vmatpush1.msra.mxu0 %v2544
      %2581 = vmatprep.subr.mxu0 0.0
      %2582 = vmatpush2.msra.mxu0 0.0
      %2583 = vmatprep.subr.mxu0 0.0
      %2584 = vmatpush2.msra.mxu0 0.0
      %2585 = vmatprep.subr.mxu0 0.0
      %2586 = vmatpush2.msra.mxu0 0.0
      %2587 = vmatprep.subr.mxu0 0.0
      %2588 = vmatpush2.msra.mxu0 0.0
      %2589 = vmatprep.subr.mxu0 0.0
      %2590 = vmatpush2.msra.mxu0 0.0
      %2591 = vmatprep.subr.mxu0 0.0
      %2592 = vmatpush2.msra.mxu0 0.0
      %2593 = vmatprep.subr.mxu0 0.0
      %2594 = vmatpush2.msra.mxu0 0.0
      %2595 = vmatprep.subr.mxu0 0.0
      %2596 = vmatpush2.msra.mxu0 0.0
      %2597 = vmatprep.subr.mxu0 0.0
      %2598 = vmatpush2.msra.mxu0 0.0
      %2599 = vmatprep.subr.mxu0 0.0
      %2600 = vmatpush2.msra.mxu0 0.0
      %2601 = vmatprep.subr.mxu0 0.0
      %2602 = vmatpush2.msra.mxu0 0.0
      %2603 = vmatprep.subr.mxu0 0.0
      %2604 = vmatpush2.msra.mxu0 0.0
      %2605 = vmatprep.subr.mxu0 0.0
      %2606 = vmatpush2.msra.mxu0 0.0
      %2607 = vmatprep.subr.mxu0 0.0
      %2608 = vmatpush2.msra.mxu0 0.0
      %2609 = vmatprep.subr.mxu0 0.0
      %2610 = vmatpush2.msra.mxu0 0.0
      %2611 = vmatprep.subr.mxu0 0.0
      %2612 = vmatpush2.msra.mxu0 0.0
      %2613 = vmatprep.mubr.f32.mxu0 0.0
      %2614 = vmatmul.mubr.f32.gmra.mxu0 %v2547
      %v2615 = vpop.f32.mrf.mxu0
      %v2616 = vadd.f32 0.0, %v2615
      %v2617 = vpop.f32.mrf.mxu0
      %2618 = vdwg.mxu0
      %2620 = vrot.lane.b32.xlu0 %v486, 112
      %v2621 = vpop.permute.xlu0 %2620
      %v2624 = vsel %vm1157, %v2535, 0
      %2626 = vmatprep.subr.mxu0 0.0
      %2627 = vmatpush1.msra.mxu0 0.0
      %2628 = vmatprep.subr.mxu0 0.0
      %2629 = vmatpush1.msra.mxu0 0.0
      %2630 = vmatprep.subr.mxu0 0.0
      %2631 = vmatpush1.msra.mxu0 0.0
      %2632 = vmatprep.subr.mxu0 0.0
      %2633 = vmatpush1.msra.mxu0 0.0
      %2634 = vmatprep.subr.mxu0 0.0
      %2635 = vmatpush1.msra.mxu0 0.0
      %2636 = vmatprep.subr.mxu0 0.0
      %2637 = vmatpush1.msra.mxu0 0.0
      %2638 = vmatprep.subr.mxu0 0.0
      %2639 = vmatpush1.msra.mxu0 0.0
      %2640 = vmatprep.subr.mxu0 0.0
      %2641 = vmatpush1.msra.mxu0 0.0
      %2642 = vmatprep.subr.mxu0 0.0
      %2643 = vmatpush1.msra.mxu0 0.0
      %2644 = vmatprep.subr.mxu0 0.0
      %2645 = vmatpush1.msra.mxu0 0.0
      %2646 = vmatprep.subr.mxu0 0.0
      %2647 = vmatpush1.msra.mxu0 0.0
      %2648 = vmatprep.subr.mxu0 0.0
      %2649 = vmatpush1.msra.mxu0 0.0
      %2650 = vmatprep.subr.mxu0 0.0
      %2651 = vmatpush1.msra.mxu0 0.0
      %2652 = vmatprep.subr.mxu0 0.0
      %2653 = vmatpush1.msra.mxu0 0.0
      %2654 = vmatprep.subr.mxu0 0.0
      %2655 = vmatpush1.msra.mxu0 0.0
      %2656 = vmatprep.subr.mxu0 0.0
      %2657 = vmatpush1.msra.mxu0 %v2621
      %2658 = vmatprep.subr.mxu0 0.0
      %2659 = vmatpush2.msra.mxu0 0.0
      %2660 = vmatprep.subr.mxu0 0.0
      %2661 = vmatpush2.msra.mxu0 0.0
      %2662 = vmatprep.subr.mxu0 0.0
      %2663 = vmatpush2.msra.mxu0 0.0
      %2664 = vmatprep.subr.mxu0 0.0
      %2665 = vmatpush2.msra.mxu0 0.0
      %2666 = vmatprep.subr.mxu0 0.0
      %2667 = vmatpush2.msra.mxu0 0.0
      %2668 = vmatprep.subr.mxu0 0.0
      %2669 = vmatpush2.msra.mxu0 0.0
      %2670 = vmatprep.subr.mxu0 0.0
      %2671 = vmatpush2.msra.mxu0 0.0
      %2672 = vmatprep.subr.mxu0 0.0
      %2673 = vmatpush2.msra.mxu0 0.0
      %2674 = vmatprep.subr.mxu0 0.0
      %2675 = vmatpush2.msra.mxu0 0.0
      %2676 = vmatprep.subr.mxu0 0.0
      %2677 = vmatpush2.msra.mxu0 0.0
      %2678 = vmatprep.subr.mxu0 0.0
      %2679 = vmatpush2.msra.mxu0 0.0
      %2680 = vmatprep.subr.mxu0 0.0
      %2681 = vmatpush2.msra.mxu0 0.0
      %2682 = vmatprep.subr.mxu0 0.0
      %2683 = vmatpush2.msra.mxu0 0.0
      %2684 = vmatprep.subr.mxu0 0.0
      %2685 = vmatpush2.msra.mxu0 0.0
      %2686 = vmatprep.subr.mxu0 0.0
      %2687 = vmatpush2.msra.mxu0 0.0
      %2688 = vmatprep.subr.mxu0 0.0
      %2689 = vmatpush2.msra.mxu0 0.0
      %2690 = vmatprep.mubr.f32.mxu0 0.0
      %2691 = vmatmul.mubr.f32.gmra.mxu0 %v2624
      %v2692 = vpop.f32.mrf.mxu0
      %v2693 = vadd.f32 0.0, %v2692
      %v2694 = vpop.f32.mrf.mxu0
      %2695 = vdwg.mxu0
      %2697 = vrot.lane.b32.xlu0 %v492, 112
      %v2698 = vpop.permute.xlu0 %2697
      %v2701 = vsel %vm1157, %v2536, 0
      %2703 = vmatprep.subr.mxu0 0.0
      %2704 = vmatpush1.msra.mxu0 0.0
      %2705 = vmatprep.subr.mxu0 0.0
      %2706 = vmatpush1.msra.mxu0 0.0
      %2707 = vmatprep.subr.mxu0 0.0
      %2708 = vmatpush1.msra.mxu0 0.0
      %2709 = vmatprep.subr.mxu0 0.0
      %2710 = vmatpush1.msra.mxu0 0.0
      %2711 = vmatprep.subr.mxu0 0.0
      %2712 = vmatpush1.msra.mxu0 0.0
      %2713 = vmatprep.subr.mxu0 0.0
      %2714 = vmatpush1.msra.mxu0 0.0
      %2715 = vmatprep.subr.mxu0 0.0
      %2716 = vmatpush1.msra.mxu0 0.0
      %2717 = vmatprep.subr.mxu0 0.0
      %2718 = vmatpush1.msra.mxu0 0.0
      %2719 = vmatprep.subr.mxu0 0.0
      %2720 = vmatpush1.msra.mxu0 0.0
      %2721 = vmatprep.subr.mxu0 0.0
      %2722 = vmatpush1.msra.mxu0 0.0
      %2723 = vmatprep.subr.mxu0 0.0
      %2724 = vmatpush1.msra.mxu0 0.0
      %2725 = vmatprep.subr.mxu0 0.0
      %2726 = vmatpush1.msra.mxu0 0.0
      %2727 = vmatprep.subr.mxu0 0.0
      %2728 = vmatpush1.msra.mxu0 0.0
      %2729 = vmatprep.subr.mxu0 0.0
      %2730 = vmatpush1.msra.mxu0 0.0
      %2731 = vmatprep.subr.mxu0 0.0
      %2732 = vmatpush1.msra.mxu0 0.0
      %2733 = vmatprep.subr.mxu0 0.0
      %2734 = vmatpush1.msra.mxu0 %v2698
      %2735 = vmatprep.subr.mxu0 0.0
      %2736 = vmatpush2.msra.mxu0 0.0
      %2737 = vmatprep.subr.mxu0 0.0
      %2738 = vmatpush2.msra.mxu0 0.0
      %2739 = vmatprep.subr.mxu0 0.0
      %2740 = vmatpush2.msra.mxu0 0.0
      %2741 = vmatprep.subr.mxu0 0.0
      %2742 = vmatpush2.msra.mxu0 0.0
      %2743 = vmatprep.subr.mxu0 0.0
      %2744 = vmatpush2.msra.mxu0 0.0
      %2745 = vmatprep.subr.mxu0 0.0
      %2746 = vmatpush2.msra.mxu0 0.0
      %2747 = vmatprep.subr.mxu0 0.0
      %2748 = vmatpush2.msra.mxu0 0.0
      %2749 = vmatprep.subr.mxu0 0.0
      %2750 = vmatpush2.msra.mxu0 0.0
      %2751 = vmatprep.subr.mxu0 0.0
      %2752 = vmatpush2.msra.mxu0 0.0
      %2753 = vmatprep.subr.mxu0 0.0
      %2754 = vmatpush2.msra.mxu0 0.0
      %2755 = vmatprep.subr.mxu0 0.0
      %2756 = vmatpush2.msra.mxu0 0.0
      %2757 = vmatprep.subr.mxu0 0.0
      %2758 = vmatpush2.msra.mxu0 0.0
      %2759 = vmatprep.subr.mxu0 0.0
      %2760 = vmatpush2.msra.mxu0 0.0
      %2761 = vmatprep.subr.mxu0 0.0
      %2762 = vmatpush2.msra.mxu0 0.0
      %2763 = vmatprep.subr.mxu0 0.0
      %2764 = vmatpush2.msra.mxu0 0.0
      %2765 = vmatprep.subr.mxu0 0.0
      %2766 = vmatpush2.msra.mxu0 0.0
      %2767 = vmatprep.mubr.f32.mxu0 0.0
      %2768 = vmatmul.mubr.f32.gmra.mxu0 %v2701
      %v2769 = vpop.f32.mrf.mxu0
      %v2770 = vadd.f32 0.0, %v2769
      %v2771 = vpop.f32.mrf.mxu0
      %2772 = vdwg.mxu0
      %2774 = vrot.lane.b32.xlu0 %v498, 112
      %v2775 = vpop.permute.xlu0 %2774
      %v2778 = vsel %vm1157, %v2537, 0
      %2780 = vmatprep.subr.mxu0 0.0
      %2781 = vmatpush1.msra.mxu0 0.0
      %2782 = vmatprep.subr.mxu0 0.0
      %2783 = vmatpush1.msra.mxu0 0.0
      %2784 = vmatprep.subr.mxu0 0.0
      %2785 = vmatpush1.msra.mxu0 0.0
      %2786 = vmatprep.subr.mxu0 0.0
      %2787 = vmatpush1.msra.mxu0 0.0
      %2788 = vmatprep.subr.mxu0 0.0
      %2789 = vmatpush1.msra.mxu0 0.0
      %2790 = vmatprep.subr.mxu0 0.0
      %2791 = vmatpush1.msra.mxu0 0.0
      %2792 = vmatprep.subr.mxu0 0.0
      %2793 = vmatpush1.msra.mxu0 0.0
      %2794 = vmatprep.subr.mxu0 0.0
      %2795 = vmatpush1.msra.mxu0 0.0
      %2796 = vmatprep.subr.mxu0 0.0
      %2797 = vmatpush1.msra.mxu0 0.0
      %2798 = vmatprep.subr.mxu0 0.0
      %2799 = vmatpush1.msra.mxu0 0.0
      %2800 = vmatprep.subr.mxu0 0.0
      %2801 = vmatpush1.msra.mxu0 0.0
      %2802 = vmatprep.subr.mxu0 0.0
      %2803 = vmatpush1.msra.mxu0 0.0
      %2804 = vmatprep.subr.mxu0 0.0
      %2805 = vmatpush1.msra.mxu0 0.0
      %2806 = vmatprep.subr.mxu0 0.0
      %2807 = vmatpush1.msra.mxu0 0.0
      %2808 = vmatprep.subr.mxu0 0.0
      %2809 = vmatpush1.msra.mxu0 0.0
      %2810 = vmatprep.subr.mxu0 0.0
      %2811 = vmatpush1.msra.mxu0 %v2775
      %2812 = vmatprep.subr.mxu0 0.0
      %2813 = vmatpush2.msra.mxu0 0.0
      %2814 = vmatprep.subr.mxu0 0.0
      %2815 = vmatpush2.msra.mxu0 0.0
      %2816 = vmatprep.subr.mxu0 0.0
      %2817 = vmatpush2.msra.mxu0 0.0
      %2818 = vmatprep.subr.mxu0 0.0
      %2819 = vmatpush2.msra.mxu0 0.0
      %2820 = vmatprep.subr.mxu0 0.0
      %2821 = vmatpush2.msra.mxu0 0.0
      %2822 = vmatprep.subr.mxu0 0.0
      %2823 = vmatpush2.msra.mxu0 0.0
      %2824 = vmatprep.subr.mxu0 0.0
      %2825 = vmatpush2.msra.mxu0 0.0
      %2826 = vmatprep.subr.mxu0 0.0
      %2827 = vmatpush2.msra.mxu0 0.0
      %2828 = vmatprep.subr.mxu0 0.0
      %2829 = vmatpush2.msra.mxu0 0.0
      %2830 = vmatprep.subr.mxu0 0.0
      %2831 = vmatpush2.msra.mxu0 0.0
      %2832 = vmatprep.subr.mxu0 0.0
      %2833 = vmatpush2.msra.mxu0 0.0
      %2834 = vmatprep.subr.mxu0 0.0
      %2835 = vmatpush2.msra.mxu0 0.0
      %2836 = vmatprep.subr.mxu0 0.0
      %2837 = vmatpush2.msra.mxu0 0.0
      %2838 = vmatprep.subr.mxu0 0.0
      %2839 = vmatpush2.msra.mxu0 0.0
      %2840 = vmatprep.subr.mxu0 0.0
      %2841 = vmatpush2.msra.mxu0 0.0
      %2842 = vmatprep.subr.mxu0 0.0
      %2843 = vmatpush2.msra.mxu0 0.0
      %2844 = vmatprep.mubr.f32.mxu0 0.0
      %2845 = vmatmul.mubr.f32.gmra.mxu0 %v2778
      %v2846 = vpop.f32.mrf.mxu0
      %v2847 = vadd.f32 0.0, %v2846
      %v2848 = vpop.f32.mrf.mxu0
      %2849 = vdwg.mxu0
      %2851 = vrot.lane.b32.xlu0 %v504, 112
      %v2852 = vpop.permute.xlu0 %2851
      %v2855 = vsel %vm1157, %v2538, 0
      %2857 = vmatprep.subr.mxu0 0.0
      %2858 = vmatpush1.msra.mxu0 0.0
      %2859 = vmatprep.subr.mxu0 0.0
      %2860 = vmatpush1.msra.mxu0 0.0
      %2861 = vmatprep.subr.mxu0 0.0
      %2862 = vmatpush1.msra.mxu0 0.0
      %2863 = vmatprep.subr.mxu0 0.0
      %2864 = vmatpush1.msra.mxu0 0.0
      %2865 = vmatprep.subr.mxu0 0.0
      %2866 = vmatpush1.msra.mxu0 0.0
      %2867 = vmatprep.subr.mxu0 0.0
      %2868 = vmatpush1.msra.mxu0 0.0
      %2869 = vmatprep.subr.mxu0 0.0
      %2870 = vmatpush1.msra.mxu0 0.0
      %2871 = vmatprep.subr.mxu0 0.0
      %2872 = vmatpush1.msra.mxu0 0.0
      %2873 = vmatprep.subr.mxu0 0.0
      %2874 = vmatpush1.msra.mxu0 0.0
      %2875 = vmatprep.subr.mxu0 0.0
      %2876 = vmatpush1.msra.mxu0 0.0
      %2877 = vmatprep.subr.mxu0 0.0
      %2878 = vmatpush1.msra.mxu0 0.0
      %2879 = vmatprep.subr.mxu0 0.0
      %2880 = vmatpush1.msra.mxu0 0.0
      %2881 = vmatprep.subr.mxu0 0.0
      %2882 = vmatpush1.msra.mxu0 0.0
      %2883 = vmatprep.subr.mxu0 0.0
      %2884 = vmatpush1.msra.mxu0 0.0
      %2885 = vmatprep.subr.mxu0 0.0
      %2886 = vmatpush1.msra.mxu0 0.0
      %2887 = vmatprep.subr.mxu0 0.0
      %2888 = vmatpush1.msra.mxu0 %v2852
      %2889 = vmatprep.subr.mxu0 0.0
      %2890 = vmatpush2.msra.mxu0 0.0
      %2891 = vmatprep.subr.mxu0 0.0
      %2892 = vmatpush2.msra.mxu0 0.0
      %2893 = vmatprep.subr.mxu0 0.0
      %2894 = vmatpush2.msra.mxu0 0.0
      %2895 = vmatprep.subr.mxu0 0.0
      %2896 = vmatpush2.msra.mxu0 0.0
      %2897 = vmatprep.subr.mxu0 0.0
      %2898 = vmatpush2.msra.mxu0 0.0
      %2899 = vmatprep.subr.mxu0 0.0
      %2900 = vmatpush2.msra.mxu0 0.0
      %2901 = vmatprep.subr.mxu0 0.0
      %2902 = vmatpush2.msra.mxu0 0.0
      %2903 = vmatprep.subr.mxu0 0.0
      %2904 = vmatpush2.msra.mxu0 0.0
      %2905 = vmatprep.subr.mxu0 0.0
      %2906 = vmatpush2.msra.mxu0 0.0
      %2907 = vmatprep.subr.mxu0 0.0
      %2908 = vmatpush2.msra.mxu0 0.0
      %2909 = vmatprep.subr.mxu0 0.0
      %2910 = vmatpush2.msra.mxu0 0.0
      %2911 = vmatprep.subr.mxu0 0.0
      %2912 = vmatpush2.msra.mxu0 0.0
      %2913 = vmatprep.subr.mxu0 0.0
      %2914 = vmatpush2.msra.mxu0 0.0
      %2915 = vmatprep.subr.mxu0 0.0
      %2916 = vmatpush2.msra.mxu0 0.0
      %2917 = vmatprep.subr.mxu0 0.0
      %2918 = vmatpush2.msra.mxu0 0.0
      %2919 = vmatprep.subr.mxu0 0.0
      %2920 = vmatpush2.msra.mxu0 0.0
      %2921 = vmatprep.mubr.f32.mxu0 0.0
      %2922 = vmatmul.mubr.f32.gmra.mxu0 %v2855
      %v2923 = vpop.f32.mrf.mxu0
      %v2924 = vadd.f32 0.0, %v2923
      %v2925 = vpop.f32.mrf.mxu0
      %2926 = vdwg.mxu0
      %2928 = vrot.lane.b32.xlu0 %v510, 112
      %v2929 = vpop.permute.xlu0 %2928
      %v2932 = vsel %vm1157, %v2539, 0
      %2934 = vmatprep.subr.mxu0 0.0
      %2935 = vmatpush1.msra.mxu0 0.0
      %2936 = vmatprep.subr.mxu0 0.0
      %2937 = vmatpush1.msra.mxu0 0.0
      %2938 = vmatprep.subr.mxu0 0.0
      %2939 = vmatpush1.msra.mxu0 0.0
      %2940 = vmatprep.subr.mxu0 0.0
      %2941 = vmatpush1.msra.mxu0 0.0
      %2942 = vmatprep.subr.mxu0 0.0
      %2943 = vmatpush1.msra.mxu0 0.0
      %2944 = vmatprep.subr.mxu0 0.0
      %2945 = vmatpush1.msra.mxu0 0.0
      %2946 = vmatprep.subr.mxu0 0.0
      %2947 = vmatpush1.msra.mxu0 0.0
      %2948 = vmatprep.subr.mxu0 0.0
      %2949 = vmatpush1.msra.mxu0 0.0
      %2950 = vmatprep.subr.mxu0 0.0
      %2951 = vmatpush1.msra.mxu0 0.0
      %2952 = vmatprep.subr.mxu0 0.0
      %2953 = vmatpush1.msra.mxu0 0.0
      %2954 = vmatprep.subr.mxu0 0.0
      %2955 = vmatpush1.msra.mxu0 0.0
      %2956 = vmatprep.subr.mxu0 0.0
      %2957 = vmatpush1.msra.mxu0 0.0
      %2958 = vmatprep.subr.mxu0 0.0
      %2959 = vmatpush1.msra.mxu0 0.0
      %2960 = vmatprep.subr.mxu0 0.0
      %2961 = vmatpush1.msra.mxu0 0.0
      %2962 = vmatprep.subr.mxu0 0.0
      %2963 = vmatpush1.msra.mxu0 0.0
      %2964 = vmatprep.subr.mxu0 0.0
      %2965 = vmatpush1.msra.mxu0 %v2929
      %2966 = vmatprep.subr.mxu0 0.0
      %2967 = vmatpush2.msra.mxu0 0.0
      %2968 = vmatprep.subr.mxu0 0.0
      %2969 = vmatpush2.msra.mxu0 0.0
      %2970 = vmatprep.subr.mxu0 0.0
      %2971 = vmatpush2.msra.mxu0 0.0
      %2972 = vmatprep.subr.mxu0 0.0
      %2973 = vmatpush2.msra.mxu0 0.0
      %2974 = vmatprep.subr.mxu0 0.0
      %2975 = vmatpush2.msra.mxu0 0.0
      %2976 = vmatprep.subr.mxu0 0.0
      %2977 = vmatpush2.msra.mxu0 0.0
      %2978 = vmatprep.subr.mxu0 0.0
      %2979 = vmatpush2.msra.mxu0 0.0
      %2980 = vmatprep.subr.mxu0 0.0
      %2981 = vmatpush2.msra.mxu0 0.0
      %2982 = vmatprep.subr.mxu0 0.0
      %2983 = vmatpush2.msra.mxu0 0.0
      %2984 = vmatprep.subr.mxu0 0.0
      %2985 = vmatpush2.msra.mxu0 0.0
      %2986 = vmatprep.subr.mxu0 0.0
      %2987 = vmatpush2.msra.mxu0 0.0
      %2988 = vmatprep.subr.mxu0 0.0
      %2989 = vmatpush2.msra.mxu0 0.0
      %2990 = vmatprep.subr.mxu0 0.0
      %2991 = vmatpush2.msra.mxu0 0.0
      %2992 = vmatprep.subr.mxu0 0.0
      %2993 = vmatpush2.msra.mxu0 0.0
      %2994 = vmatprep.subr.mxu0 0.0
      %2995 = vmatpush2.msra.mxu0 0.0
      %2996 = vmatprep.subr.mxu0 0.0
      %2997 = vmatpush2.msra.mxu0 0.0
      %2998 = vmatprep.mubr.f32.mxu0 0.0
      %2999 = vmatmul.mubr.f32.gmra.mxu0 %v2932
      %v3000 = vpop.f32.mrf.mxu0
      %v3001 = vadd.f32 0.0, %v3000
      %v3002 = vpop.f32.mrf.mxu0
      %3003 = vdwg.mxu0
      %3005 = vrot.lane.b32.xlu0 %v516, 112
      %v3006 = vpop.permute.xlu0 %3005
      %v3009 = vsel %vm1157, %v2540, 0
      %3011 = vmatprep.subr.mxu0 0.0
      %3012 = vmatpush1.msra.mxu0 0.0
      %3013 = vmatprep.subr.mxu0 0.0
      %3014 = vmatpush1.msra.mxu0 0.0
      %3015 = vmatprep.subr.mxu0 0.0
      %3016 = vmatpush1.msra.mxu0 0.0
      %3017 = vmatprep.subr.mxu0 0.0
      %3018 = vmatpush1.msra.mxu0 0.0
      %3019 = vmatprep.subr.mxu0 0.0
      %3020 = vmatpush1.msra.mxu0 0.0
      %3021 = vmatprep.subr.mxu0 0.0
      %3022 = vmatpush1.msra.mxu0 0.0
      %3023 = vmatprep.subr.mxu0 0.0
      %3024 = vmatpush1.msra.mxu0 0.0
      %3025 = vmatprep.subr.mxu0 0.0
      %3026 = vmatpush1.msra.mxu0 0.0
      %3027 = vmatprep.subr.mxu0 0.0
      %3028 = vmatpush1.msra.mxu0 0.0
      %3029 = vmatprep.subr.mxu0 0.0
      %3030 = vmatpush1.msra.mxu0 0.0
      %3031 = vmatprep.subr.mxu0 0.0
      %3032 = vmatpush1.msra.mxu0 0.0
      %3033 = vmatprep.subr.mxu0 0.0
      %3034 = vmatpush1.msra.mxu0 0.0
      %3035 = vmatprep.subr.mxu0 0.0
      %3036 = vmatpush1.msra.mxu0 0.0
      %3037 = vmatprep.subr.mxu0 0.0
      %3038 = vmatpush1.msra.mxu0 0.0
      %3039 = vmatprep.subr.mxu0 0.0
      %3040 = vmatpush1.msra.mxu0 0.0
      %3041 = vmatprep.subr.mxu0 0.0
      %3042 = vmatpush1.msra.mxu0 %v3006
      %3043 = vmatprep.subr.mxu0 0.0
      %3044 = vmatpush2.msra.mxu0 0.0
      %3045 = vmatprep.subr.mxu0 0.0
      %3046 = vmatpush2.msra.mxu0 0.0
      %3047 = vmatprep.subr.mxu0 0.0
      %3048 = vmatpush2.msra.mxu0 0.0
      %3049 = vmatprep.subr.mxu0 0.0
      %3050 = vmatpush2.msra.mxu0 0.0
      %3051 = vmatprep.subr.mxu0 0.0
      %3052 = vmatpush2.msra.mxu0 0.0
      %3053 = vmatprep.subr.mxu0 0.0
      %3054 = vmatpush2.msra.mxu0 0.0
      %3055 = vmatprep.subr.mxu0 0.0
      %3056 = vmatpush2.msra.mxu0 0.0
      %3057 = vmatprep.subr.mxu0 0.0
      %3058 = vmatpush2.msra.mxu0 0.0
      %3059 = vmatprep.subr.mxu0 0.0
      %3060 = vmatpush2.msra.mxu0 0.0
      %3061 = vmatprep.subr.mxu0 0.0
      %3062 = vmatpush2.msra.mxu0 0.0
      %3063 = vmatprep.subr.mxu0 0.0
      %3064 = vmatpush2.msra.mxu0 0.0
      %3065 = vmatprep.subr.mxu0 0.0
      %3066 = vmatpush2.msra.mxu0 0.0
      %3067 = vmatprep.subr.mxu0 0.0
      %3068 = vmatpush2.msra.mxu0 0.0
      %3069 = vmatprep.subr.mxu0 0.0
      %3070 = vmatpush2.msra.mxu0 0.0
      %3071 = vmatprep.subr.mxu0 0.0
      %3072 = vmatpush2.msra.mxu0 0.0
      %3073 = vmatprep.subr.mxu0 0.0
      %3074 = vmatpush2.msra.mxu0 0.0
      %3075 = vmatprep.mubr.f32.mxu0 0.0
      %3076 = vmatmul.mubr.f32.gmra.mxu0 %v3009
      %v3077 = vpop.f32.mrf.mxu0
      %v3078 = vadd.f32 0.0, %v3077
      %v3079 = vpop.f32.mrf.mxu0
      %3080 = vdwg.mxu0
      %3082 = vrot.lane.b32.xlu0 %v522, 112
      %v3083 = vpop.permute.xlu0 %3082
      %v3086 = vsel %vm1157, %v2541, 0
      %3088 = vmatprep.subr.mxu0 0.0
      %3089 = vmatpush1.msra.mxu0 0.0
      %3090 = vmatprep.subr.mxu0 0.0
      %3091 = vmatpush1.msra.mxu0 0.0
      %3092 = vmatprep.subr.mxu0 0.0
      %3093 = vmatpush1.msra.mxu0 0.0
      %3094 = vmatprep.subr.mxu0 0.0
      %3095 = vmatpush1.msra.mxu0 0.0
      %3096 = vmatprep.subr.mxu0 0.0
      %3097 = vmatpush1.msra.mxu0 0.0
      %3098 = vmatprep.subr.mxu0 0.0
      %3099 = vmatpush1.msra.mxu0 0.0
      %3100 = vmatprep.subr.mxu0 0.0
      %3101 = vmatpush1.msra.mxu0 0.0
      %3102 = vmatprep.subr.mxu0 0.0
      %3103 = vmatpush1.msra.mxu0 0.0
      %3104 = vmatprep.subr.mxu0 0.0
      %3105 = vmatpush1.msra.mxu0 0.0
      %3106 = vmatprep.subr.mxu0 0.0
      %3107 = vmatpush1.msra.mxu0 0.0
      %3108 = vmatprep.subr.mxu0 0.0
      %3109 = vmatpush1.msra.mxu0 0.0
      %3110 = vmatprep.subr.mxu0 0.0
      %3111 = vmatpush1.msra.mxu0 0.0
      %3112 = vmatprep.subr.mxu0 0.0
      %3113 = vmatpush1.msra.mxu0 0.0
      %3114 = vmatprep.subr.mxu0 0.0
      %3115 = vmatpush1.msra.mxu0 0.0
      %3116 = vmatprep.subr.mxu0 0.0
      %3117 = vmatpush1.msra.mxu0 0.0
      %3118 = vmatprep.subr.mxu0 0.0
      %3119 = vmatpush1.msra.mxu0 %v3083
      %3120 = vmatprep.subr.mxu0 0.0
      %3121 = vmatpush2.msra.mxu0 0.0
      %3122 = vmatprep.subr.mxu0 0.0
      %3123 = vmatpush2.msra.mxu0 0.0
      %3124 = vmatprep.subr.mxu0 0.0
      %3125 = vmatpush2.msra.mxu0 0.0
      %3126 = vmatprep.subr.mxu0 0.0
      %3127 = vmatpush2.msra.mxu0 0.0
      %3128 = vmatprep.subr.mxu0 0.0
      %3129 = vmatpush2.msra.mxu0 0.0
      %3130 = vmatprep.subr.mxu0 0.0
      %3131 = vmatpush2.msra.mxu0 0.0
      %3132 = vmatprep.subr.mxu0 0.0
      %3133 = vmatpush2.msra.mxu0 0.0
      %3134 = vmatprep.subr.mxu0 0.0
      %3135 = vmatpush2.msra.mxu0 0.0
      %3136 = vmatprep.subr.mxu0 0.0
      %3137 = vmatpush2.msra.mxu0 0.0
      %3138 = vmatprep.subr.mxu0 0.0
      %3139 = vmatpush2.msra.mxu0 0.0
      %3140 = vmatprep.subr.mxu0 0.0
      %3141 = vmatpush2.msra.mxu0 0.0
      %3142 = vmatprep.subr.mxu0 0.0
      %3143 = vmatpush2.msra.mxu0 0.0
      %3144 = vmatprep.subr.mxu0 0.0
      %3145 = vmatpush2.msra.mxu0 0.0
      %3146 = vmatprep.subr.mxu0 0.0
      %3147 = vmatpush2.msra.mxu0 0.0
      %3148 = vmatprep.subr.mxu0 0.0
      %3149 = vmatpush2.msra.mxu0 0.0
      %3150 = vmatprep.subr.mxu0 0.0
      %3151 = vmatpush2.msra.mxu0 0.0
      %3152 = vmatprep.mubr.f32.mxu0 0.0
      %3153 = vmatmul.mubr.f32.gmra.mxu0 %v3086
      %v3154 = vpop.f32.mrf.mxu0
      %v3155 = vadd.f32 0.0, %v3154
      %v3156 = vpop.f32.mrf.mxu0
      %3157 = vdwg.mxu0
      %3158 = vrot.lane.b32.xlu0 %v524, 96
      %v3159 = vpop.permute.xlu0 %3158
      %3160 = vrot.lane.b32.xlu0 %v478, 32
      %v3161 = vpop.permute.xlu0 %3160
      %v3162 = vsel %vm535, %v3159, 0
      %v3164 = vsel %vm535, %v3161, 0
      %3166 = vmatprep.subr.mxu0 0.0
      %3167 = vmatpush1.xpose.msra.mxu0 0.0
      %3168 = vmatprep.subr.mxu0 0.0
      %3169 = vmatpush1.xpose.msra.mxu0 0.0
      %3170 = vmatprep.subr.mxu0 0.0
      %3171 = vmatpush1.xpose.msra.mxu0 0.0
      %3172 = vmatprep.subr.mxu0 0.0
      %3173 = vmatpush1.xpose.msra.mxu0 0.0
      %3174 = vmatprep.subr.mxu0 0.0
      %3175 = vmatpush1.xpose.msra.mxu0 0.0
      %3176 = vmatprep.subr.mxu0 0.0
      %3177 = vmatpush1.xpose.msra.mxu0 0.0
      %3178 = vmatprep.subr.mxu0 0.0
      %3179 = vmatpush1.xpose.msra.mxu0 0.0
      %3180 = vmatprep.subr.mxu0 0.0
      %3181 = vmatpush1.xpose.msra.mxu0 0.0
      %3182 = vmatprep.subr.mxu0 0.0
      %3183 = vmatpush1.xpose.msra.mxu0 0.0
      %3184 = vmatprep.subr.mxu0 0.0
      %3185 = vmatpush1.xpose.msra.mxu0 0.0
      %3186 = vmatprep.subr.mxu0 0.0
      %3187 = vmatpush1.xpose.msra.mxu0 0.0
      %3188 = vmatprep.subr.mxu0 0.0
      %3189 = vmatpush1.xpose.msra.mxu0 0.0
      %3190 = vmatprep.subr.mxu0 0.0
      %3191 = vmatpush1.xpose.msra.mxu0 0.0
      %3192 = vmatprep.subr.mxu0 0.0
      %3193 = vmatpush1.xpose.msra.mxu0 0.0
      %3194 = vmatprep.subr.mxu0 0.0
      %3195 = vmatpush1.xpose.msra.mxu0 0.0
      %3196 = vmatprep.subr.mxu0 0.0
      %3197 = vmatpush1.xpose.msra.mxu0 %v3164
      %3198 = vmatprep.subr.mxu0 0.0
      %3199 = vmatpush2.xpose.msra.mxu0 0.0
      %3200 = vmatprep.subr.mxu0 0.0
      %3201 = vmatpush2.xpose.msra.mxu0 0.0
      %3202 = vmatprep.subr.mxu0 0.0
      %3203 = vmatpush2.xpose.msra.mxu0 0.0
      %3204 = vmatprep.subr.mxu0 0.0
      %3205 = vmatpush2.xpose.msra.mxu0 0.0
      %3206 = vmatprep.subr.mxu0 0.0
      %3207 = vmatpush2.xpose.msra.mxu0 0.0
      %3208 = vmatprep.subr.mxu0 0.0
      %3209 = vmatpush2.xpose.msra.mxu0 0.0
      %3210 = vmatprep.subr.mxu0 0.0
      %3211 = vmatpush2.xpose.msra.mxu0 0.0
      %3212 = vmatprep.subr.mxu0 0.0
      %3213 = vmatpush2.xpose.msra.mxu0 0.0
      %3214 = vmatprep.subr.mxu0 0.0
      %3215 = vmatpush2.xpose.msra.mxu0 0.0
      %3216 = vmatprep.subr.mxu0 0.0
      %3217 = vmatpush2.xpose.msra.mxu0 0.0
      %3218 = vmatprep.subr.mxu0 0.0
      %3219 = vmatpush2.xpose.msra.mxu0 0.0
      %3220 = vmatprep.subr.mxu0 0.0
      %3221 = vmatpush2.xpose.msra.mxu0 0.0
      %3222 = vmatprep.subr.mxu0 0.0
      %3223 = vmatpush2.xpose.msra.mxu0 0.0
      %3224 = vmatprep.subr.mxu0 0.0
      %3225 = vmatpush2.xpose.msra.mxu0 0.0
      %3226 = vmatprep.subr.mxu0 0.0
      %3227 = vmatpush2.xpose.msra.mxu0 0.0
      %3228 = vmatprep.subr.mxu0 0.0
      %3229 = vmatpush2.xpose.msra.mxu0 0.0
      %3230 = vmatprep.mubr.f32.mxu0 0.0
      %3231 = vmatmul.mubr.f32.gmra.mxu0 %v3162
      %v3232 = vpop.f32.mrf.mxu0
      %v3233 = vadd.f32 0.0, %v3232
      %v3234 = vpop.f32.mrf.mxu0
      %3235 = vdwg.mxu0
      %3236 = vrot.lane.b32.xlu0 %v525, 96
      %v3237 = vpop.permute.xlu0 %3236
      %3238 = vrot.lane.b32.xlu0 %v484, 32
      %v3239 = vpop.permute.xlu0 %3238
      %v3240 = vsel %vm535, %v3237, 0
      %v3242 = vsel %vm535, %v3239, 0
      %3244 = vmatprep.subr.mxu0 0.0
      %3245 = vmatpush1.xpose.msra.mxu0 0.0
      %3246 = vmatprep.subr.mxu0 0.0
      %3247 = vmatpush1.xpose.msra.mxu0 0.0
      %3248 = vmatprep.subr.mxu0 0.0
      %3249 = vmatpush1.xpose.msra.mxu0 0.0
      %3250 = vmatprep.subr.mxu0 0.0
      %3251 = vmatpush1.xpose.msra.mxu0 0.0
      %3252 = vmatprep.subr.mxu0 0.0
      %3253 = vmatpush1.xpose.msra.mxu0 0.0
      %3254 = vmatprep.subr.mxu0 0.0
      %3255 = vmatpush1.xpose.msra.mxu0 0.0
      %3256 = vmatprep.subr.mxu0 0.0
      %3257 = vmatpush1.xpose.msra.mxu0 0.0
      %3258 = vmatprep.subr.mxu0 0.0
      %3259 = vmatpush1.xpose.msra.mxu0 0.0
      %3260 = vmatprep.subr.mxu0 0.0
      %3261 = vmatpush1.xpose.msra.mxu0 0.0
      %3262 = vmatprep.subr.mxu0 0.0
      %3263 = vmatpush1.xpose.msra.mxu0 0.0
      %3264 = vmatprep.subr.mxu0 0.0
      %3265 = vmatpush1.xpose.msra.mxu0 0.0
      %3266 = vmatprep.subr.mxu0 0.0
      %3267 = vmatpush1.xpose.msra.mxu0 0.0
      %3268 = vmatprep.subr.mxu0 0.0
      %3269 = vmatpush1.xpose.msra.mxu0 0.0
      %3270 = vmatprep.subr.mxu0 0.0
      %3271 = vmatpush1.xpose.msra.mxu0 0.0
      %3272 = vmatprep.subr.mxu0 0.0
      %3273 = vmatpush1.xpose.msra.mxu0 0.0
      %3274 = vmatprep.subr.mxu0 0.0
      %3275 = vmatpush1.xpose.msra.mxu0 %v3242
      %3276 = vmatprep.subr.mxu0 0.0
      %3277 = vmatpush2.xpose.msra.mxu0 0.0
      %3278 = vmatprep.subr.mxu0 0.0
      %3279 = vmatpush2.xpose.msra.mxu0 0.0
      %3280 = vmatprep.subr.mxu0 0.0
      %3281 = vmatpush2.xpose.msra.mxu0 0.0
      %3282 = vmatprep.subr.mxu0 0.0
      %3283 = vmatpush2.xpose.msra.mxu0 0.0
      %3284 = vmatprep.subr.mxu0 0.0
      %3285 = vmatpush2.xpose.msra.mxu0 0.0
      %3286 = vmatprep.subr.mxu0 0.0
      %3287 = vmatpush2.xpose.msra.mxu0 0.0
      %3288 = vmatprep.subr.mxu0 0.0
      %3289 = vmatpush2.xpose.msra.mxu0 0.0
      %3290 = vmatprep.subr.mxu0 0.0
      %3291 = vmatpush2.xpose.msra.mxu0 0.0
      %3292 = vmatprep.subr.mxu0 0.0
      %3293 = vmatpush2.xpose.msra.mxu0 0.0
      %3294 = vmatprep.subr.mxu0 0.0
      %3295 = vmatpush2.xpose.msra.mxu0 0.0
      %3296 = vmatprep.subr.mxu0 0.0
      %3297 = vmatpush2.xpose.msra.mxu0 0.0
      %3298 = vmatprep.subr.mxu0 0.0
      %3299 = vmatpush2.xpose.msra.mxu0 0.0
      %3300 = vmatprep.subr.mxu0 0.0
      %3301 = vmatpush2.xpose.msra.mxu0 0.0
      %3302 = vmatprep.subr.mxu0 0.0
      %3303 = vmatpush2.xpose.msra.mxu0 0.0
      %3304 = vmatprep.subr.mxu0 0.0
      %3305 = vmatpush2.xpose.msra.mxu0 0.0
      %3306 = vmatprep.subr.mxu0 0.0
      %3307 = vmatpush2.xpose.msra.mxu0 0.0
      %3308 = vmatprep.mubr.f32.mxu0 0.0
      %3309 = vmatmul.mubr.f32.gmra.mxu0 %v3240
      %v3310 = vpop.f32.mrf.mxu0
      %v3311 = vadd.f32 0.0, %v3310
      %v3312 = vpop.f32.mrf.mxu0
      %3313 = vdwg.mxu0
      %3314 = vrot.lane.b32.xlu0 %v526, 96
      %v3315 = vpop.permute.xlu0 %3314
      %3316 = vrot.lane.b32.xlu0 %v490, 32
      %v3317 = vpop.permute.xlu0 %3316
      %v3318 = vsel %vm535, %v3315, 0
      %v3320 = vsel %vm535, %v3317, 0
      %3322 = vmatprep.subr.mxu0 0.0
      %3323 = vmatpush1.xpose.msra.mxu0 0.0
      %3324 = vmatprep.subr.mxu0 0.0
      %3325 = vmatpush1.xpose.msra.mxu0 0.0
      %3326 = vmatprep.subr.mxu0 0.0
      %3327 = vmatpush1.xpose.msra.mxu0 0.0
      %3328 = vmatprep.subr.mxu0 0.0
      %3329 = vmatpush1.xpose.msra.mxu0 0.0
      %3330 = vmatprep.subr.mxu0 0.0
      %3331 = vmatpush1.xpose.msra.mxu0 0.0
      %3332 = vmatprep.subr.mxu0 0.0
      %3333 = vmatpush1.xpose.msra.mxu0 0.0
      %3334 = vmatprep.subr.mxu0 0.0
      %3335 = vmatpush1.xpose.msra.mxu0 0.0
      %3336 = vmatprep.subr.mxu0 0.0
      %3337 = vmatpush1.xpose.msra.mxu0 0.0
      %3338 = vmatprep.subr.mxu0 0.0
      %3339 = vmatpush1.xpose.msra.mxu0 0.0
      %3340 = vmatprep.subr.mxu0 0.0
      %3341 = vmatpush1.xpose.msra.mxu0 0.0
      %3342 = vmatprep.subr.mxu0 0.0
      %3343 = vmatpush1.xpose.msra.mxu0 0.0
      %3344 = vmatprep.subr.mxu0 0.0
      %3345 = vmatpush1.xpose.msra.mxu0 0.0
      %3346 = vmatprep.subr.mxu0 0.0
      %3347 = vmatpush1.xpose.msra.mxu0 0.0
      %3348 = vmatprep.subr.mxu0 0.0
      %3349 = vmatpush1.xpose.msra.mxu0 0.0
      %3350 = vmatprep.subr.mxu0 0.0
      %3351 = vmatpush1.xpose.msra.mxu0 0.0
      %3352 = vmatprep.subr.mxu0 0.0
      %3353 = vmatpush1.xpose.msra.mxu0 %v3320
      %3354 = vmatprep.subr.mxu0 0.0
      %3355 = vmatpush2.xpose.msra.mxu0 0.0
      %3356 = vmatprep.subr.mxu0 0.0
      %3357 = vmatpush2.xpose.msra.mxu0 0.0
      %3358 = vmatprep.subr.mxu0 0.0
      %3359 = vmatpush2.xpose.msra.mxu0 0.0
      %3360 = vmatprep.subr.mxu0 0.0
      %3361 = vmatpush2.xpose.msra.mxu0 0.0
      %3362 = vmatprep.subr.mxu0 0.0
      %3363 = vmatpush2.xpose.msra.mxu0 0.0
      %3364 = vmatprep.subr.mxu0 0.0
      %3365 = vmatpush2.xpose.msra.mxu0 0.0
      %3366 = vmatprep.subr.mxu0 0.0
      %3367 = vmatpush2.xpose.msra.mxu0 0.0
      %3368 = vmatprep.subr.mxu0 0.0
      %3369 = vmatpush2.xpose.msra.mxu0 0.0
      %3370 = vmatprep.subr.mxu0 0.0
      %3371 = vmatpush2.xpose.msra.mxu0 0.0
      %3372 = vmatprep.subr.mxu0 0.0
      %3373 = vmatpush2.xpose.msra.mxu0 0.0
      %3374 = vmatprep.subr.mxu0 0.0
      %3375 = vmatpush2.xpose.msra.mxu0 0.0
      %3376 = vmatprep.subr.mxu0 0.0
      %3377 = vmatpush2.xpose.msra.mxu0 0.0
      %3378 = vmatprep.subr.mxu0 0.0
      %3379 = vmatpush2.xpose.msra.mxu0 0.0
      %3380 = vmatprep.subr.mxu0 0.0
      %3381 = vmatpush2.xpose.msra.mxu0 0.0
      %3382 = vmatprep.subr.mxu0 0.0
      %3383 = vmatpush2.xpose.msra.mxu0 0.0
      %3384 = vmatprep.subr.mxu0 0.0
      %3385 = vmatpush2.xpose.msra.mxu0 0.0
      %3386 = vmatprep.mubr.f32.mxu0 0.0
      %3387 = vmatmul.mubr.f32.gmra.mxu0 %v3318
      %v3388 = vpop.f32.mrf.mxu0
      %v3389 = vadd.f32 0.0, %v3388
      %v3390 = vpop.f32.mrf.mxu0
      %3391 = vdwg.mxu0
      %3392 = vrot.lane.b32.xlu0 %v527, 96
      %v3393 = vpop.permute.xlu0 %3392
      %3394 = vrot.lane.b32.xlu0 %v496, 32
      %v3395 = vpop.permute.xlu0 %3394
      %v3396 = vsel %vm535, %v3393, 0
      %v3398 = vsel %vm535, %v3395, 0
      %3400 = vmatprep.subr.mxu0 0.0
      %3401 = vmatpush1.xpose.msra.mxu0 0.0
      %3402 = vmatprep.subr.mxu0 0.0
      %3403 = vmatpush1.xpose.msra.mxu0 0.0
      %3404 = vmatprep.subr.mxu0 0.0
      %3405 = vmatpush1.xpose.msra.mxu0 0.0
      %3406 = vmatprep.subr.mxu0 0.0
      %3407 = vmatpush1.xpose.msra.mxu0 0.0
      %3408 = vmatprep.subr.mxu0 0.0
      %3409 = vmatpush1.xpose.msra.mxu0 0.0
      %3410 = vmatprep.subr.mxu0 0.0
      %3411 = vmatpush1.xpose.msra.mxu0 0.0
      %3412 = vmatprep.subr.mxu0 0.0
      %3413 = vmatpush1.xpose.msra.mxu0 0.0
      %3414 = vmatprep.subr.mxu0 0.0
      %3415 = vmatpush1.xpose.msra.mxu0 0.0
      %3416 = vmatprep.subr.mxu0 0.0
      %3417 = vmatpush1.xpose.msra.mxu0 0.0
      %3418 = vmatprep.subr.mxu0 0.0
      %3419 = vmatpush1.xpose.msra.mxu0 0.0
      %3420 = vmatprep.subr.mxu0 0.0
      %3421 = vmatpush1.xpose.msra.mxu0 0.0
      %3422 = vmatprep.subr.mxu0 0.0
      %3423 = vmatpush1.xpose.msra.mxu0 0.0
      %3424 = vmatprep.subr.mxu0 0.0
      %3425 = vmatpush1.xpose.msra.mxu0 0.0
      %3426 = vmatprep.subr.mxu0 0.0
      %3427 = vmatpush1.xpose.msra.mxu0 0.0
      %3428 = vmatprep.subr.mxu0 0.0
      %3429 = vmatpush1.xpose.msra.mxu0 0.0
      %3430 = vmatprep.subr.mxu0 0.0
      %3431 = vmatpush1.xpose.msra.mxu0 %v3398
      %3432 = vmatprep.subr.mxu0 0.0
      %3433 = vmatpush2.xpose.msra.mxu0 0.0
      %3434 = vmatprep.subr.mxu0 0.0
      %3435 = vmatpush2.xpose.msra.mxu0 0.0
      %3436 = vmatprep.subr.mxu0 0.0
      %3437 = vmatpush2.xpose.msra.mxu0 0.0
      %3438 = vmatprep.subr.mxu0 0.0
      %3439 = vmatpush2.xpose.msra.mxu0 0.0
      %3440 = vmatprep.subr.mxu0 0.0
      %3441 = vmatpush2.xpose.msra.mxu0 0.0
      %3442 = vmatprep.subr.mxu0 0.0
      %3443 = vmatpush2.xpose.msra.mxu0 0.0
      %3444 = vmatprep.subr.mxu0 0.0
      %3445 = vmatpush2.xpose.msra.mxu0 0.0
      %3446 = vmatprep.subr.mxu0 0.0
      %3447 = vmatpush2.xpose.msra.mxu0 0.0
      %3448 = vmatprep.subr.mxu0 0.0
      %3449 = vmatpush2.xpose.msra.mxu0 0.0
      %3450 = vmatprep.subr.mxu0 0.0
      %3451 = vmatpush2.xpose.msra.mxu0 0.0
      %3452 = vmatprep.subr.mxu0 0.0
      %3453 = vmatpush2.xpose.msra.mxu0 0.0
      %3454 = vmatprep.subr.mxu0 0.0
      %3455 = vmatpush2.xpose.msra.mxu0 0.0
      %3456 = vmatprep.subr.mxu0 0.0
      %3457 = vmatpush2.xpose.msra.mxu0 0.0
      %3458 = vmatprep.subr.mxu0 0.0
      %3459 = vmatpush2.xpose.msra.mxu0 0.0
      %3460 = vmatprep.subr.mxu0 0.0
      %3461 = vmatpush2.xpose.msra.mxu0 0.0
      %3462 = vmatprep.subr.mxu0 0.0
      %3463 = vmatpush2.xpose.msra.mxu0 0.0
      %3464 = vmatprep.mubr.f32.mxu0 0.0
      %3465 = vmatmul.mubr.f32.gmra.mxu0 %v3396
      %v3466 = vpop.f32.mrf.mxu0
      %v3467 = vadd.f32 0.0, %v3466
      %v3468 = vpop.f32.mrf.mxu0
      %3469 = vdwg.mxu0
      %3470 = vrot.lane.b32.xlu0 %v528, 96
      %v3471 = vpop.permute.xlu0 %3470
      %3472 = vrot.lane.b32.xlu0 %v502, 32
      %v3473 = vpop.permute.xlu0 %3472
      %v3474 = vsel %vm535, %v3471, 0
      %v3476 = vsel %vm535, %v3473, 0
      %3478 = vmatprep.subr.mxu0 0.0
      %3479 = vmatpush1.xpose.msra.mxu0 0.0
      %3480 = vmatprep.subr.mxu0 0.0
      %3481 = vmatpush1.xpose.msra.mxu0 0.0
      %3482 = vmatprep.subr.mxu0 0.0
      %3483 = vmatpush1.xpose.msra.mxu0 0.0
      %3484 = vmatprep.subr.mxu0 0.0
      %3485 = vmatpush1.xpose.msra.mxu0 0.0
      %3486 = vmatprep.subr.mxu0 0.0
      %3487 = vmatpush1.xpose.msra.mxu0 0.0
      %3488 = vmatprep.subr.mxu0 0.0
      %3489 = vmatpush1.xpose.msra.mxu0 0.0
      %3490 = vmatprep.subr.mxu0 0.0
      %3491 = vmatpush1.xpose.msra.mxu0 0.0
      %3492 = vmatprep.subr.mxu0 0.0
      %3493 = vmatpush1.xpose.msra.mxu0 0.0
      %3494 = vmatprep.subr.mxu0 0.0
      %3495 = vmatpush1.xpose.msra.mxu0 0.0
      %3496 = vmatprep.subr.mxu0 0.0
      %3497 = vmatpush1.xpose.msra.mxu0 0.0
      %3498 = vmatprep.subr.mxu0 0.0
      %3499 = vmatpush1.xpose.msra.mxu0 0.0
      %3500 = vmatprep.subr.mxu0 0.0
      %3501 = vmatpush1.xpose.msra.mxu0 0.0
      %3502 = vmatprep.subr.mxu0 0.0
      %3503 = vmatpush1.xpose.msra.mxu0 0.0
      %3504 = vmatprep.subr.mxu0 0.0
      %3505 = vmatpush1.xpose.msra.mxu0 0.0
      %3506 = vmatprep.subr.mxu0 0.0
      %3507 = vmatpush1.xpose.msra.mxu0 0.0
      %3508 = vmatprep.subr.mxu0 0.0
      %3509 = vmatpush1.xpose.msra.mxu0 %v3476
      %3510 = vmatprep.subr.mxu0 0.0
      %3511 = vmatpush2.xpose.msra.mxu0 0.0
      %3512 = vmatprep.subr.mxu0 0.0
      %3513 = vmatpush2.xpose.msra.mxu0 0.0
      %3514 = vmatprep.subr.mxu0 0.0
      %3515 = vmatpush2.xpose.msra.mxu0 0.0
      %3516 = vmatprep.subr.mxu0 0.0
      %3517 = vmatpush2.xpose.msra.mxu0 0.0
      %3518 = vmatprep.subr.mxu0 0.0
      %3519 = vmatpush2.xpose.msra.mxu0 0.0
      %3520 = vmatprep.subr.mxu0 0.0
      %3521 = vmatpush2.xpose.msra.mxu0 0.0
      %3522 = vmatprep.subr.mxu0 0.0
      %3523 = vmatpush2.xpose.msra.mxu0 0.0
      %3524 = vmatprep.subr.mxu0 0.0
      %3525 = vmatpush2.xpose.msra.mxu0 0.0
      %3526 = vmatprep.subr.mxu0 0.0
      %3527 = vmatpush2.xpose.msra.mxu0 0.0
      %3528 = vmatprep.subr.mxu0 0.0
      %3529 = vmatpush2.xpose.msra.mxu0 0.0
      %3530 = vmatprep.subr.mxu0 0.0
      %3531 = vmatpush2.xpose.msra.mxu0 0.0
      %3532 = vmatprep.subr.mxu0 0.0
      %3533 = vmatpush2.xpose.msra.mxu0 0.0
      %3534 = vmatprep.subr.mxu0 0.0
      %3535 = vmatpush2.xpose.msra.mxu0 0.0
      %3536 = vmatprep.subr.mxu0 0.0
      %3537 = vmatpush2.xpose.msra.mxu0 0.0
      %3538 = vmatprep.subr.mxu0 0.0
      %3539 = vmatpush2.xpose.msra.mxu0 0.0
      %3540 = vmatprep.subr.mxu0 0.0
      %3541 = vmatpush2.xpose.msra.mxu0 0.0
      %3542 = vmatprep.mubr.f32.mxu0 0.0
      %3543 = vmatmul.mubr.f32.gmra.mxu0 %v3474
      %v3544 = vpop.f32.mrf.mxu0
      %v3545 = vadd.f32 0.0, %v3544
      %v3546 = vpop.f32.mrf.mxu0
      %3547 = vdwg.mxu0
      %3548 = vrot.lane.b32.xlu0 %v529, 96
      %v3549 = vpop.permute.xlu0 %3548
      %3550 = vrot.lane.b32.xlu0 %v508, 32
      %v3551 = vpop.permute.xlu0 %3550
      %v3552 = vsel %vm535, %v3549, 0
      %v3554 = vsel %vm535, %v3551, 0
      %3556 = vmatprep.subr.mxu0 0.0
      %3557 = vmatpush1.xpose.msra.mxu0 0.0
      %3558 = vmatprep.subr.mxu0 0.0
      %3559 = vmatpush1.xpose.msra.mxu0 0.0
      %3560 = vmatprep.subr.mxu0 0.0
      %3561 = vmatpush1.xpose.msra.mxu0 0.0
      %3562 = vmatprep.subr.mxu0 0.0
      %3563 = vmatpush1.xpose.msra.mxu0 0.0
      %3564 = vmatprep.subr.mxu0 0.0
      %3565 = vmatpush1.xpose.msra.mxu0 0.0
      %3566 = vmatprep.subr.mxu0 0.0
      %3567 = vmatpush1.xpose.msra.mxu0 0.0
      %3568 = vmatprep.subr.mxu0 0.0
      %3569 = vmatpush1.xpose.msra.mxu0 0.0
      %3570 = vmatprep.subr.mxu0 0.0
      %3571 = vmatpush1.xpose.msra.mxu0 0.0
      %3572 = vmatprep.subr.mxu0 0.0
      %3573 = vmatpush1.xpose.msra.mxu0 0.0
      %3574 = vmatprep.subr.mxu0 0.0
      %3575 = vmatpush1.xpose.msra.mxu0 0.0
      %3576 = vmatprep.subr.mxu0 0.0
      %3577 = vmatpush1.xpose.msra.mxu0 0.0
      %3578 = vmatprep.subr.mxu0 0.0
      %3579 = vmatpush1.xpose.msra.mxu0 0.0
      %3580 = vmatprep.subr.mxu0 0.0
      %3581 = vmatpush1.xpose.msra.mxu0 0.0
      %3582 = vmatprep.subr.mxu0 0.0
      %3583 = vmatpush1.xpose.msra.mxu0 0.0
      %3584 = vmatprep.subr.mxu0 0.0
      %3585 = vmatpush1.xpose.msra.mxu0 0.0
      %3586 = vmatprep.subr.mxu0 0.0
      %3587 = vmatpush1.xpose.msra.mxu0 %v3554
      %3588 = vmatprep.subr.mxu0 0.0
      %3589 = vmatpush2.xpose.msra.mxu0 0.0
      %3590 = vmatprep.subr.mxu0 0.0
      %3591 = vmatpush2.xpose.msra.mxu0 0.0
      %3592 = vmatprep.subr.mxu0 0.0
      %3593 = vmatpush2.xpose.msra.mxu0 0.0
      %3594 = vmatprep.subr.mxu0 0.0
      %3595 = vmatpush2.xpose.msra.mxu0 0.0
      %3596 = vmatprep.subr.mxu0 0.0
      %3597 = vmatpush2.xpose.msra.mxu0 0.0
      %3598 = vmatprep.subr.mxu0 0.0
      %3599 = vmatpush2.xpose.msra.mxu0 0.0
      %3600 = vmatprep.subr.mxu0 0.0
      %3601 = vmatpush2.xpose.msra.mxu0 0.0
      %3602 = vmatprep.subr.mxu0 0.0
      %3603 = vmatpush2.xpose.msra.mxu0 0.0
      %3604 = vmatprep.subr.mxu0 0.0
      %3605 = vmatpush2.xpose.msra.mxu0 0.0
      %3606 = vmatprep.subr.mxu0 0.0
      %3607 = vmatpush2.xpose.msra.mxu0 0.0
      %3608 = vmatprep.subr.mxu0 0.0
      %3609 = vmatpush2.xpose.msra.mxu0 0.0
      %3610 = vmatprep.subr.mxu0 0.0
      %3611 = vmatpush2.xpose.msra.mxu0 0.0
      %3612 = vmatprep.subr.mxu0 0.0
      %3613 = vmatpush2.xpose.msra.mxu0 0.0
      %3614 = vmatprep.subr.mxu0 0.0
      %3615 = vmatpush2.xpose.msra.mxu0 0.0
      %3616 = vmatprep.subr.mxu0 0.0
      %3617 = vmatpush2.xpose.msra.mxu0 0.0
      %3618 = vmatprep.subr.mxu0 0.0
      %3619 = vmatpush2.xpose.msra.mxu0 0.0
      %3620 = vmatprep.mubr.f32.mxu0 0.0
      %3621 = vmatmul.mubr.f32.gmra.mxu0 %v3552
      %v3622 = vpop.f32.mrf.mxu0
      %v3623 = vadd.f32 0.0, %v3622
      %v3624 = vpop.f32.mrf.mxu0
      %3625 = vdwg.mxu0
      %3626 = vrot.lane.b32.xlu0 %v530, 96
      %v3627 = vpop.permute.xlu0 %3626
      %3628 = vrot.lane.b32.xlu0 %v514, 32
      %v3629 = vpop.permute.xlu0 %3628
      %v3630 = vsel %vm535, %v3627, 0
      %v3632 = vsel %vm535, %v3629, 0
      %3634 = vmatprep.subr.mxu0 0.0
      %3635 = vmatpush1.xpose.msra.mxu0 0.0
      %3636 = vmatprep.subr.mxu0 0.0
      %3637 = vmatpush1.xpose.msra.mxu0 0.0
      %3638 = vmatprep.subr.mxu0 0.0
      %3639 = vmatpush1.xpose.msra.mxu0 0.0
      %3640 = vmatprep.subr.mxu0 0.0
      %3641 = vmatpush1.xpose.msra.mxu0 0.0
      %3642 = vmatprep.subr.mxu0 0.0
      %3643 = vmatpush1.xpose.msra.mxu0 0.0
      %3644 = vmatprep.subr.mxu0 0.0
      %3645 = vmatpush1.xpose.msra.mxu0 0.0
      %3646 = vmatprep.subr.mxu0 0.0
      %3647 = vmatpush1.xpose.msra.mxu0 0.0
      %3648 = vmatprep.subr.mxu0 0.0
      %3649 = vmatpush1.xpose.msra.mxu0 0.0
      %3650 = vmatprep.subr.mxu0 0.0
      %3651 = vmatpush1.xpose.msra.mxu0 0.0
      %3652 = vmatprep.subr.mxu0 0.0
      %3653 = vmatpush1.xpose.msra.mxu0 0.0
      %3654 = vmatprep.subr.mxu0 0.0
      %3655 = vmatpush1.xpose.msra.mxu0 0.0
      %3656 = vmatprep.subr.mxu0 0.0
      %3657 = vmatpush1.xpose.msra.mxu0 0.0
      %3658 = vmatprep.subr.mxu0 0.0
      %3659 = vmatpush1.xpose.msra.mxu0 0.0
      %3660 = vmatprep.subr.mxu0 0.0
      %3661 = vmatpush1.xpose.msra.mxu0 0.0
      %3662 = vmatprep.subr.mxu0 0.0
      %3663 = vmatpush1.xpose.msra.mxu0 0.0
      %3664 = vmatprep.subr.mxu0 0.0
      %3665 = vmatpush1.xpose.msra.mxu0 %v3632
      %3666 = vmatprep.subr.mxu0 0.0
      %3667 = vmatpush2.xpose.msra.mxu0 0.0
      %3668 = vmatprep.subr.mxu0 0.0
      %3669 = vmatpush2.xpose.msra.mxu0 0.0
      %3670 = vmatprep.subr.mxu0 0.0
      %3671 = vmatpush2.xpose.msra.mxu0 0.0
      %3672 = vmatprep.subr.mxu0 0.0
      %3673 = vmatpush2.xpose.msra.mxu0 0.0
      %3674 = vmatprep.subr.mxu0 0.0
      %3675 = vmatpush2.xpose.msra.mxu0 0.0
      %3676 = vmatprep.subr.mxu0 0.0
      %3677 = vmatpush2.xpose.msra.mxu0 0.0
      %3678 = vmatprep.subr.mxu0 0.0
      %3679 = vmatpush2.xpose.msra.mxu0 0.0
      %3680 = vmatprep.subr.mxu0 0.0
      %3681 = vmatpush2.xpose.msra.mxu0 0.0
      %3682 = vmatprep.subr.mxu0 0.0
      %3683 = vmatpush2.xpose.msra.mxu0 0.0
      %3684 = vmatprep.subr.mxu0 0.0
      %3685 = vmatpush2.xpose.msra.mxu0 0.0
      %3686 = vmatprep.subr.mxu0 0.0
      %3687 = vmatpush2.xpose.msra.mxu0 0.0
      %3688 = vmatprep.subr.mxu0 0.0
      %3689 = vmatpush2.xpose.msra.mxu0 0.0
      %3690 = vmatprep.subr.mxu0 0.0
      %3691 = vmatpush2.xpose.msra.mxu0 0.0
      %3692 = vmatprep.subr.mxu0 0.0
      %3693 = vmatpush2.xpose.msra.mxu0 0.0
      %3694 = vmatprep.subr.mxu0 0.0
      %3695 = vmatpush2.xpose.msra.mxu0 0.0
      %3696 = vmatprep.subr.mxu0 0.0
      %3697 = vmatpush2.xpose.msra.mxu0 0.0
      %3698 = vmatprep.mubr.f32.mxu0 0.0
      %3699 = vmatmul.mubr.f32.gmra.mxu0 %v3630
      %v3700 = vpop.f32.mrf.mxu0
      %v3701 = vadd.f32 0.0, %v3700
      %v3702 = vpop.f32.mrf.mxu0
      %3703 = vdwg.mxu0
      %3704 = vrot.lane.b32.xlu0 %v531, 96
      %v3705 = vpop.permute.xlu0 %3704
      %3706 = vrot.lane.b32.xlu0 %v520, 32
      %v3707 = vpop.permute.xlu0 %3706
      %v3708 = vsel %vm535, %v3705, 0
      %v3710 = vsel %vm535, %v3707, 0
      %3712 = vmatprep.subr.mxu0 0.0
      %3713 = vmatpush1.xpose.msra.mxu0 0.0
      %3714 = vmatprep.subr.mxu0 0.0
      %3715 = vmatpush1.xpose.msra.mxu0 0.0
      %3716 = vmatprep.subr.mxu0 0.0
      %3717 = vmatpush1.xpose.msra.mxu0 0.0
      %3718 = vmatprep.subr.mxu0 0.0
      %3719 = vmatpush1.xpose.msra.mxu0 0.0
      %3720 = vmatprep.subr.mxu0 0.0
      %3721 = vmatpush1.xpose.msra.mxu0 0.0
      %3722 = vmatprep.subr.mxu0 0.0
      %3723 = vmatpush1.xpose.msra.mxu0 0.0
      %3724 = vmatprep.subr.mxu0 0.0
      %3725 = vmatpush1.xpose.msra.mxu0 0.0
      %3726 = vmatprep.subr.mxu0 0.0
      %3727 = vmatpush1.xpose.msra.mxu0 0.0
      %3728 = vmatprep.subr.mxu0 0.0
      %3729 = vmatpush1.xpose.msra.mxu0 0.0
      %3730 = vmatprep.subr.mxu0 0.0
      %3731 = vmatpush1.xpose.msra.mxu0 0.0
      %3732 = vmatprep.subr.mxu0 0.0
      %3733 = vmatpush1.xpose.msra.mxu0 0.0
      %3734 = vmatprep.subr.mxu0 0.0
      %3735 = vmatpush1.xpose.msra.mxu0 0.0
      %3736 = vmatprep.subr.mxu0 0.0
      %3737 = vmatpush1.xpose.msra.mxu0 0.0
      %3738 = vmatprep.subr.mxu0 0.0
      %3739 = vmatpush1.xpose.msra.mxu0 0.0
      %3740 = vmatprep.subr.mxu0 0.0
      %3741 = vmatpush1.xpose.msra.mxu0 0.0
      %3742 = vmatprep.subr.mxu0 0.0
      %3743 = vmatpush1.xpose.msra.mxu0 %v3710
      %3744 = vmatprep.subr.mxu0 0.0
      %3745 = vmatpush2.xpose.msra.mxu0 0.0
      %3746 = vmatprep.subr.mxu0 0.0
      %3747 = vmatpush2.xpose.msra.mxu0 0.0
      %3748 = vmatprep.subr.mxu0 0.0
      %3749 = vmatpush2.xpose.msra.mxu0 0.0
      %3750 = vmatprep.subr.mxu0 0.0
      %3751 = vmatpush2.xpose.msra.mxu0 0.0
      %3752 = vmatprep.subr.mxu0 0.0
      %3753 = vmatpush2.xpose.msra.mxu0 0.0
      %3754 = vmatprep.subr.mxu0 0.0
      %3755 = vmatpush2.xpose.msra.mxu0 0.0
      %3756 = vmatprep.subr.mxu0 0.0
      %3757 = vmatpush2.xpose.msra.mxu0 0.0
      %3758 = vmatprep.subr.mxu0 0.0
      %3759 = vmatpush2.xpose.msra.mxu0 0.0
      %3760 = vmatprep.subr.mxu0 0.0
      %3761 = vmatpush2.xpose.msra.mxu0 0.0
      %3762 = vmatprep.subr.mxu0 0.0
      %3763 = vmatpush2.xpose.msra.mxu0 0.0
      %3764 = vmatprep.subr.mxu0 0.0
      %3765 = vmatpush2.xpose.msra.mxu0 0.0
      %3766 = vmatprep.subr.mxu0 0.0
      %3767 = vmatpush2.xpose.msra.mxu0 0.0
      %3768 = vmatprep.subr.mxu0 0.0
      %3769 = vmatpush2.xpose.msra.mxu0 0.0
      %3770 = vmatprep.subr.mxu0 0.0
      %3771 = vmatpush2.xpose.msra.mxu0 0.0
      %3772 = vmatprep.subr.mxu0 0.0
      %3773 = vmatpush2.xpose.msra.mxu0 0.0
      %3774 = vmatprep.subr.mxu0 0.0
      %3775 = vmatpush2.xpose.msra.mxu0 0.0
      %3776 = vmatprep.mubr.f32.mxu0 0.0
      %3777 = vmatmul.mubr.f32.gmra.mxu0 %v3708
      %v3778 = vpop.f32.mrf.mxu0
      %v3779 = vadd.f32 0.0, %v3778
      %v3780 = vpop.f32.mrf.mxu0
      %3781 = vdwg.mxu0
      %v3782 = vsel %vm1157, %v3233, -inf
      %3783 = vmax.xlane.f32.xlu0 %v3782
      %v3784 = vpop.xlane.xlu0 %3783
      %v3785 = vsel %vm1157, %v3311, -inf
      %3786 = vmax.xlane.f32.xlu0 %v3785
      %v3787 = vpop.xlane.xlu0 %3786
      %v3788 = vsel %vm1157, %v3389, -inf
      %3789 = vmax.xlane.f32.xlu0 %v3788
      %v3790 = vpop.xlane.xlu0 %3789
      %v3791 = vsel %vm1157, %v3467, -inf
      %3792 = vmax.xlane.f32.xlu0 %v3791
      %v3793 = vpop.xlane.xlu0 %3792
      %v3794 = vsel %vm1157, %v3545, -inf
      %3795 = vmax.xlane.f32.xlu0 %v3794
      %v3796 = vpop.xlane.xlu0 %3795
      %v3797 = vsel %vm1157, %v3623, -inf
      %3798 = vmax.xlane.f32.xlu0 %v3797
      %v3799 = vpop.xlane.xlu0 %3798
      %v3800 = vsel %vm1157, %v3701, -inf
      %3801 = vmax.xlane.f32.xlu0 %v3800
      %v3802 = vpop.xlane.xlu0 %3801
      %v3803 = vsel %vm1157, %v3779, -inf
      %3804 = vmax.xlane.f32.xlu0 %v3803
      %v3805 = vpop.xlane.xlu0 %3804
      %v3806 = vsub.f32 %v3233, %v3784
      %v3807 = vsub.f32 %v3311, %v3787
      %v3808 = vsub.f32 %v3389, %v3790
      %v3809 = vsub.f32 %v3467, %v3793
      %v3810 = vsub.f32 %v3545, %v3796
      %v3811 = vsub.f32 %v3623, %v3799
      %v3812 = vsub.f32 %v3701, %v3802
      %v3813 = vsub.f32 %v3779, %v3805
      %v3814 = vmul.f32 %v3806, 1.442695
      %v3815 = vpow.pop %v3814
      %v3816 = vmul.f32 %v3807, 1.442695
      %v3817 = vpow.pop %v3816
      %v3818 = vmul.f32 %v3808, 1.442695
      %v3819 = vpow.pop %v3818
      %v3820 = vmul.f32 %v3809, 1.442695
      %v3821 = vpow.pop %v3820
      %v3822 = vmul.f32 %v3810, 1.442695
      %v3823 = vpow.pop %v3822
      %v3824 = vmul.f32 %v3811, 1.442695
      %v3825 = vpow.pop %v3824
      %v3826 = vmul.f32 %v3812, 1.442695
      %v3827 = vpow.pop %v3826
      %v3828 = vmul.f32 %v3813, 1.442695
      %v3829 = vpow.pop %v3828
      %v3830 = vsel %vm1157, %v3815, 0.0
      %3831 = vadd.xlane.f32.xlu0 %v3830
      %v3832 = vpop.xlane.xlu0 %3831
      %v3833 = vsel %vm1157, %v3817, 0.0
      %3834 = vadd.xlane.f32.xlu0 %v3833
      %v3835 = vpop.xlane.xlu0 %3834
      %v3836 = vsel %vm1157, %v3819, 0.0
      %3837 = vadd.xlane.f32.xlu0 %v3836
      %v3838 = vpop.xlane.xlu0 %3837
      %v3839 = vsel %vm1157, %v3821, 0.0
      %3840 = vadd.xlane.f32.xlu0 %v3839
      %v3841 = vpop.xlane.xlu0 %3840
      %v3842 = vsel %vm1157, %v3823, 0.0
      %3843 = vadd.xlane.f32.xlu0 %v3842
      %v3844 = vpop.xlane.xlu0 %3843
      %v3845 = vsel %vm1157, %v3825, 0.0
      %3846 = vadd.xlane.f32.xlu0 %v3845
      %v3847 = vpop.xlane.xlu0 %3846
      %v3848 = vsel %vm1157, %v3827, 0.0
      %3849 = vadd.xlane.f32.xlu0 %v3848
      %v3850 = vpop.xlane.xlu0 %3849
      %v3851 = vsel %vm1157, %v3829, 0.0
      %3852 = vadd.xlane.f32.xlu0 %v3851
      %v3853 = vpop.xlane.xlu0 %3852
      %v3854 = vrcp.pop %v3832
      %v3855 = vrcp.pop %v3835
      %v3856 = vrcp.pop %v3838
      %v3857 = vrcp.pop %v3841
      %v3858 = vrcp.pop %v3844
      %v3859 = vrcp.pop %v3847
      %v3860 = vrcp.pop %v3850
      %v3861 = vrcp.pop %v3853
      %v3862 = vmul.f32 %v3815, %v3854
      %v3863 = vmul.f32 %v3817, %v3855
      %v3864 = vmul.f32 %v3819, %v3856
      %v3865 = vmul.f32 %v3821, %v3857
      %v3866 = vmul.f32 %v3823, %v3858
      %v3867 = vmul.f32 %v3825, %v3859
      %v3868 = vmul.f32 %v3827, %v3860
      %v3869 = vmul.f32 %v3829, %v3861
      %3870 = vrot.lane.b32.xlu0 %v480, 96
      %v3871 = vpop.permute.xlu0 %3870
      %v3874 = vsel %vm1157, %v3862, 0
      %3876 = vmatprep.subr.mxu0 0.0
      %3877 = vmatpush1.msra.mxu0 0.0
      %3878 = vmatprep.subr.mxu0 0.0
      %3879 = vmatpush1.msra.mxu0 0.0
      %3880 = vmatprep.subr.mxu0 0.0
      %3881 = vmatpush1.msra.mxu0 0.0
      %3882 = vmatprep.subr.mxu0 0.0
      %3883 = vmatpush1.msra.mxu0 0.0
      %3884 = vmatprep.subr.mxu0 0.0
      %3885 = vmatpush1.msra.mxu0 0.0
      %3886 = vmatprep.subr.mxu0 0.0
      %3887 = vmatpush1.msra.mxu0 0.0
      %3888 = vmatprep.subr.mxu0 0.0
      %3889 = vmatpush1.msra.mxu0 0.0
      %3890 = vmatprep.subr.mxu0 0.0
      %3891 = vmatpush1.msra.mxu0 0.0
      %3892 = vmatprep.subr.mxu0 0.0
      %3893 = vmatpush1.msra.mxu0 0.0
      %3894 = vmatprep.subr.mxu0 0.0
      %3895 = vmatpush1.msra.mxu0 0.0
      %3896 = vmatprep.subr.mxu0 0.0
      %3897 = vmatpush1.msra.mxu0 0.0
      %3898 = vmatprep.subr.mxu0 0.0
      %3899 = vmatpush1.msra.mxu0 0.0
      %3900 = vmatprep.subr.mxu0 0.0
      %3901 = vmatpush1.msra.mxu0 0.0
      %3902 = vmatprep.subr.mxu0 0.0
      %3903 = vmatpush1.msra.mxu0 0.0
      %3904 = vmatprep.subr.mxu0 0.0
      %3905 = vmatpush1.msra.mxu0 0.0
      %3906 = vmatprep.subr.mxu0 0.0
      %3907 = vmatpush1.msra.mxu0 %v3871
      %3908 = vmatprep.subr.mxu0 0.0
      %3909 = vmatpush2.msra.mxu0 0.0
      %3910 = vmatprep.subr.mxu0 0.0
      %3911 = vmatpush2.msra.mxu0 0.0
      %3912 = vmatprep.subr.mxu0 0.0
      %3913 = vmatpush2.msra.mxu0 0.0
      %3914 = vmatprep.subr.mxu0 0.0
      %3915 = vmatpush2.msra.mxu0 0.0
      %3916 = vmatprep.subr.mxu0 0.0
      %3917 = vmatpush2.msra.mxu0 0.0
      %3918 = vmatprep.subr.mxu0 0.0
      %3919 = vmatpush2.msra.mxu0 0.0
      %3920 = vmatprep.subr.mxu0 0.0
      %3921 = vmatpush2.msra.mxu0 0.0
      %3922 = vmatprep.subr.mxu0 0.0
      %3923 = vmatpush2.msra.mxu0 0.0
      %3924 = vmatprep.subr.mxu0 0.0
      %3925 = vmatpush2.msra.mxu0 0.0
      %3926 = vmatprep.subr.mxu0 0.0
      %3927 = vmatpush2.msra.mxu0 0.0
      %3928 = vmatprep.subr.mxu0 0.0
      %3929 = vmatpush2.msra.mxu0 0.0
      %3930 = vmatprep.subr.mxu0 0.0
      %3931 = vmatpush2.msra.mxu0 0.0
      %3932 = vmatprep.subr.mxu0 0.0
      %3933 = vmatpush2.msra.mxu0 0.0
      %3934 = vmatprep.subr.mxu0 0.0
      %3935 = vmatpush2.msra.mxu0 0.0
      %3936 = vmatprep.subr.mxu0 0.0
      %3937 = vmatpush2.msra.mxu0 0.0
      %3938 = vmatprep.subr.mxu0 0.0
      %3939 = vmatpush2.msra.mxu0 0.0
      %3940 = vmatprep.mubr.f32.mxu0 0.0
      %3941 = vmatmul.mubr.f32.gmra.mxu0 %v3874
      %v3942 = vpop.f32.mrf.mxu0
      %v3943 = vadd.f32 0.0, %v3942
      %v3944 = vpop.f32.mrf.mxu0
      %3945 = vdwg.mxu0
      %3946 = vrot.lane.b32.xlu0 %v486, 96
      %v3947 = vpop.permute.xlu0 %3946
      %v3950 = vsel %vm1157, %v3863, 0
      %3952 = vmatprep.subr.mxu0 0.0
      %3953 = vmatpush1.msra.mxu0 0.0
      %3954 = vmatprep.subr.mxu0 0.0
      %3955 = vmatpush1.msra.mxu0 0.0
      %3956 = vmatprep.subr.mxu0 0.0
      %3957 = vmatpush1.msra.mxu0 0.0
      %3958 = vmatprep.subr.mxu0 0.0
      %3959 = vmatpush1.msra.mxu0 0.0
      %3960 = vmatprep.subr.mxu0 0.0
      %3961 = vmatpush1.msra.mxu0 0.0
      %3962 = vmatprep.subr.mxu0 0.0
      %3963 = vmatpush1.msra.mxu0 0.0
      %3964 = vmatprep.subr.mxu0 0.0
      %3965 = vmatpush1.msra.mxu0 0.0
      %3966 = vmatprep.subr.mxu0 0.0
      %3967 = vmatpush1.msra.mxu0 0.0
      %3968 = vmatprep.subr.mxu0 0.0
      %3969 = vmatpush1.msra.mxu0 0.0
      %3970 = vmatprep.subr.mxu0 0.0
      %3971 = vmatpush1.msra.mxu0 0.0
      %3972 = vmatprep.subr.mxu0 0.0
      %3973 = vmatpush1.msra.mxu0 0.0
      %3974 = vmatprep.subr.mxu0 0.0
      %3975 = vmatpush1.msra.mxu0 0.0
      %3976 = vmatprep.subr.mxu0 0.0
      %3977 = vmatpush1.msra.mxu0 0.0
      %3978 = vmatprep.subr.mxu0 0.0
      %3979 = vmatpush1.msra.mxu0 0.0
      %3980 = vmatprep.subr.mxu0 0.0
      %3981 = vmatpush1.msra.mxu0 0.0
      %3982 = vmatprep.subr.mxu0 0.0
      %3983 = vmatpush1.msra.mxu0 %v3947
      %3984 = vmatprep.subr.mxu0 0.0
      %3985 = vmatpush2.msra.mxu0 0.0
      %3986 = vmatprep.subr.mxu0 0.0
      %3987 = vmatpush2.msra.mxu0 0.0
      %3988 = vmatprep.subr.mxu0 0.0
      %3989 = vmatpush2.msra.mxu0 0.0
      %3990 = vmatprep.subr.mxu0 0.0
      %3991 = vmatpush2.msra.mxu0 0.0
      %3992 = vmatprep.subr.mxu0 0.0
      %3993 = vmatpush2.msra.mxu0 0.0
      %3994 = vmatprep.subr.mxu0 0.0
      %3995 = vmatpush2.msra.mxu0 0.0
      %3996 = vmatprep.subr.mxu0 0.0
      %3997 = vmatpush2.msra.mxu0 0.0
      %3998 = vmatprep.subr.mxu0 0.0
      %3999 = vmatpush2.msra.mxu0 0.0
      %4000 = vmatprep.subr.mxu0 0.0
      %4001 = vmatpush2.msra.mxu0 0.0
      %4002 = vmatprep.subr.mxu0 0.0
      %4003 = vmatpush2.msra.mxu0 0.0
      %4004 = vmatprep.subr.mxu0 0.0
      %4005 = vmatpush2.msra.mxu0 0.0
      %4006 = vmatprep.subr.mxu0 0.0
      %4007 = vmatpush2.msra.mxu0 0.0
      %4008 = vmatprep.subr.mxu0 0.0
      %4009 = vmatpush2.msra.mxu0 0.0
      %4010 = vmatprep.subr.mxu0 0.0
      %4011 = vmatpush2.msra.mxu0 0.0
      %4012 = vmatprep.subr.mxu0 0.0
      %4013 = vmatpush2.msra.mxu0 0.0
      %4014 = vmatprep.subr.mxu0 0.0
      %4015 = vmatpush2.msra.mxu0 0.0
      %4016 = vmatprep.mubr.f32.mxu0 0.0
      %4017 = vmatmul.mubr.f32.gmra.mxu0 %v3950
      %v4018 = vpop.f32.mrf.mxu0
      %v4019 = vadd.f32 0.0, %v4018
      %v4020 = vpop.f32.mrf.mxu0
      %4021 = vdwg.mxu0
      %4022 = vrot.lane.b32.xlu0 %v492, 96
      %v4023 = vpop.permute.xlu0 %4022
      %v4026 = vsel %vm1157, %v3864, 0
      %4028 = vmatprep.subr.mxu0 0.0
      %4029 = vmatpush1.msra.mxu0 0.0
      %4030 = vmatprep.subr.mxu0 0.0
      %4031 = vmatpush1.msra.mxu0 0.0
      %4032 = vmatprep.subr.mxu0 0.0
      %4033 = vmatpush1.msra.mxu0 0.0
      %4034 = vmatprep.subr.mxu0 0.0
      %4035 = vmatpush1.msra.mxu0 0.0
      %4036 = vmatprep.subr.mxu0 0.0
      %4037 = vmatpush1.msra.mxu0 0.0
      %4038 = vmatprep.subr.mxu0 0.0
      %4039 = vmatpush1.msra.mxu0 0.0
      %4040 = vmatprep.subr.mxu0 0.0
      %4041 = vmatpush1.msra.mxu0 0.0
      %4042 = vmatprep.subr.mxu0 0.0
      %4043 = vmatpush1.msra.mxu0 0.0
      %4044 = vmatprep.subr.mxu0 0.0
      %4045 = vmatpush1.msra.mxu0 0.0
      %4046 = vmatprep.subr.mxu0 0.0
      %4047 = vmatpush1.msra.mxu0 0.0
      %4048 = vmatprep.subr.mxu0 0.0
      %4049 = vmatpush1.msra.mxu0 0.0
      %4050 = vmatprep.subr.mxu0 0.0
      %4051 = vmatpush1.msra.mxu0 0.0
      %4052 = vmatprep.subr.mxu0 0.0
      %4053 = vmatpush1.msra.mxu0 0.0
      %4054 = vmatprep.subr.mxu0 0.0
      %4055 = vmatpush1.msra.mxu0 0.0
      %4056 = vmatprep.subr.mxu0 0.0
      %4057 = vmatpush1.msra.mxu0 0.0
      %4058 = vmatprep.subr.mxu0 0.0
      %4059 = vmatpush1.msra.mxu0 %v4023
      %4060 = vmatprep.subr.mxu0 0.0
      %4061 = vmatpush2.msra.mxu0 0.0
      %4062 = vmatprep.subr.mxu0 0.0
      %4063 = vmatpush2.msra.mxu0 0.0
      %4064 = vmatprep.subr.mxu0 0.0
      %4065 = vmatpush2.msra.mxu0 0.0
      %4066 = vmatprep.subr.mxu0 0.0
      %4067 = vmatpush2.msra.mxu0 0.0
      %4068 = vmatprep.subr.mxu0 0.0
      %4069 = vmatpush2.msra.mxu0 0.0
      %4070 = vmatprep.subr.mxu0 0.0
      %4071 = vmatpush2.msra.mxu0 0.0
      %4072 = vmatprep.subr.mxu0 0.0
      %4073 = vmatpush2.msra.mxu0 0.0
      %4074 = vmatprep.subr.mxu0 0.0
      %4075 = vmatpush2.msra.mxu0 0.0
      %4076 = vmatprep.subr.mxu0 0.0
      %4077 = vmatpush2.msra.mxu0 0.0
      %4078 = vmatprep.subr.mxu0 0.0
      %4079 = vmatpush2.msra.mxu0 0.0
      %4080 = vmatprep.subr.mxu0 0.0
      %4081 = vmatpush2.msra.mxu0 0.0
      %4082 = vmatprep.subr.mxu0 0.0
      %4083 = vmatpush2.msra.mxu0 0.0
      %4084 = vmatprep.subr.mxu0 0.0
      %4085 = vmatpush2.msra.mxu0 0.0
      %4086 = vmatprep.subr.mxu0 0.0
      %4087 = vmatpush2.msra.mxu0 0.0
      %4088 = vmatprep.subr.mxu0 0.0
      %4089 = vmatpush2.msra.mxu0 0.0
      %4090 = vmatprep.subr.mxu0 0.0
      %4091 = vmatpush2.msra.mxu0 0.0
      %4092 = vmatprep.mubr.f32.mxu0 0.0
      %4093 = vmatmul.mubr.f32.gmra.mxu0 %v4026
      %v4094 = vpop.f32.mrf.mxu0
      %v4095 = vadd.f32 0.0, %v4094
      %v4096 = vpop.f32.mrf.mxu0
      %4097 = vdwg.mxu0
      %4098 = vrot.lane.b32.xlu0 %v498, 96
      %v4099 = vpop.permute.xlu0 %4098
      %v4102 = vsel %vm1157, %v3865, 0
      %4104 = vmatprep.subr.mxu0 0.0
      %4105 = vmatpush1.msra.mxu0 0.0
      %4106 = vmatprep.subr.mxu0 0.0
      %4107 = vmatpush1.msra.mxu0 0.0
      %4108 = vmatprep.subr.mxu0 0.0
      %4109 = vmatpush1.msra.mxu0 0.0
      %4110 = vmatprep.subr.mxu0 0.0
      %4111 = vmatpush1.msra.mxu0 0.0
      %4112 = vmatprep.subr.mxu0 0.0
      %4113 = vmatpush1.msra.mxu0 0.0
      %4114 = vmatprep.subr.mxu0 0.0
      %4115 = vmatpush1.msra.mxu0 0.0
      %4116 = vmatprep.subr.mxu0 0.0
      %4117 = vmatpush1.msra.mxu0 0.0
      %4118 = vmatprep.subr.mxu0 0.0
      %4119 = vmatpush1.msra.mxu0 0.0
      %4120 = vmatprep.subr.mxu0 0.0
      %4121 = vmatpush1.msra.mxu0 0.0
      %4122 = vmatprep.subr.mxu0 0.0
      %4123 = vmatpush1.msra.mxu0 0.0
      %4124 = vmatprep.subr.mxu0 0.0
      %4125 = vmatpush1.msra.mxu0 0.0
      %4126 = vmatprep.subr.mxu0 0.0
      %4127 = vmatpush1.msra.mxu0 0.0
      %4128 = vmatprep.subr.mxu0 0.0
      %4129 = vmatpush1.msra.mxu0 0.0
      %4130 = vmatprep.subr.mxu0 0.0
      %4131 = vmatpush1.msra.mxu0 0.0
      %4132 = vmatprep.subr.mxu0 0.0
      %4133 = vmatpush1.msra.mxu0 0.0
      %4134 = vmatprep.subr.mxu0 0.0
      %4135 = vmatpush1.msra.mxu0 %v4099
      %4136 = vmatprep.subr.mxu0 0.0
      %4137 = vmatpush2.msra.mxu0 0.0
      %4138 = vmatprep.subr.mxu0 0.0
      %4139 = vmatpush2.msra.mxu0 0.0
      %4140 = vmatprep.subr.mxu0 0.0
      %4141 = vmatpush2.msra.mxu0 0.0
      %4142 = vmatprep.subr.mxu0 0.0
      %4143 = vmatpush2.msra.mxu0 0.0
      %4144 = vmatprep.subr.mxu0 0.0
      %4145 = vmatpush2.msra.mxu0 0.0
      %4146 = vmatprep.subr.mxu0 0.0
      %4147 = vmatpush2.msra.mxu0 0.0
      %4148 = vmatprep.subr.mxu0 0.0
      %4149 = vmatpush2.msra.mxu0 0.0
      %4150 = vmatprep.subr.mxu0 0.0
      %4151 = vmatpush2.msra.mxu0 0.0
      %4152 = vmatprep.subr.mxu0 0.0
      %4153 = vmatpush2.msra.mxu0 0.0
      %4154 = vmatprep.subr.mxu0 0.0
      %4155 = vmatpush2.msra.mxu0 0.0
      %4156 = vmatprep.subr.mxu0 0.0
      %4157 = vmatpush2.msra.mxu0 0.0
      %4158 = vmatprep.subr.mxu0 0.0
      %4159 = vmatpush2.msra.mxu0 0.0
      %4160 = vmatprep.subr.mxu0 0.0
      %4161 = vmatpush2.msra.mxu0 0.0
      %4162 = vmatprep.subr.mxu0 0.0
      %4163 = vmatpush2.msra.mxu0 0.0
      %4164 = vmatprep.subr.mxu0 0.0
      %4165 = vmatpush2.msra.mxu0 0.0
      %4166 = vmatprep.subr.mxu0 0.0
      %4167 = vmatpush2.msra.mxu0 0.0
      %4168 = vmatprep.mubr.f32.mxu0 0.0
      %4169 = vmatmul.mubr.f32.gmra.mxu0 %v4102
      %v4170 = vpop.f32.mrf.mxu0
      %v4171 = vadd.f32 0.0, %v4170
      %v4172 = vpop.f32.mrf.mxu0
      %4173 = vdwg.mxu0
      %4174 = vrot.lane.b32.xlu0 %v504, 96
      %v4175 = vpop.permute.xlu0 %4174
      %v4178 = vsel %vm1157, %v3866, 0
      %4180 = vmatprep.subr.mxu0 0.0
      %4181 = vmatpush1.msra.mxu0 0.0
      %4182 = vmatprep.subr.mxu0 0.0
      %4183 = vmatpush1.msra.mxu0 0.0
      %4184 = vmatprep.subr.mxu0 0.0
      %4185 = vmatpush1.msra.mxu0 0.0
      %4186 = vmatprep.subr.mxu0 0.0
      %4187 = vmatpush1.msra.mxu0 0.0
      %4188 = vmatprep.subr.mxu0 0.0
      %4189 = vmatpush1.msra.mxu0 0.0
      %4190 = vmatprep.subr.mxu0 0.0
      %4191 = vmatpush1.msra.mxu0 0.0
      %4192 = vmatprep.subr.mxu0 0.0
      %4193 = vmatpush1.msra.mxu0 0.0
      %4194 = vmatprep.subr.mxu0 0.0
      %4195 = vmatpush1.msra.mxu0 0.0
      %4196 = vmatprep.subr.mxu0 0.0
      %4197 = vmatpush1.msra.mxu0 0.0
      %4198 = vmatprep.subr.mxu0 0.0
      %4199 = vmatpush1.msra.mxu0 0.0
      %4200 = vmatprep.subr.mxu0 0.0
      %4201 = vmatpush1.msra.mxu0 0.0
      %4202 = vmatprep.subr.mxu0 0.0
      %4203 = vmatpush1.msra.mxu0 0.0
      %4204 = vmatprep.subr.mxu0 0.0
      %4205 = vmatpush1.msra.mxu0 0.0
      %4206 = vmatprep.subr.mxu0 0.0
      %4207 = vmatpush1.msra.mxu0 0.0
      %4208 = vmatprep.subr.mxu0 0.0
      %4209 = vmatpush1.msra.mxu0 0.0
      %4210 = vmatprep.subr.mxu0 0.0
      %4211 = vmatpush1.msra.mxu0 %v4175
      %4212 = vmatprep.subr.mxu0 0.0
      %4213 = vmatpush2.msra.mxu0 0.0
      %4214 = vmatprep.subr.mxu0 0.0
      %4215 = vmatpush2.msra.mxu0 0.0
      %4216 = vmatprep.subr.mxu0 0.0
      %4217 = vmatpush2.msra.mxu0 0.0
      %4218 = vmatprep.subr.mxu0 0.0
      %4219 = vmatpush2.msra.mxu0 0.0
      %4220 = vmatprep.subr.mxu0 0.0
      %4221 = vmatpush2.msra.mxu0 0.0
      %4222 = vmatprep.subr.mxu0 0.0
      %4223 = vmatpush2.msra.mxu0 0.0
      %4224 = vmatprep.subr.mxu0 0.0
      %4225 = vmatpush2.msra.mxu0 0.0
      %4226 = vmatprep.subr.mxu0 0.0
      %4227 = vmatpush2.msra.mxu0 0.0
      %4228 = vmatprep.subr.mxu0 0.0
      %4229 = vmatpush2.msra.mxu0 0.0
      %4230 = vmatprep.subr.mxu0 0.0
      %4231 = vmatpush2.msra.mxu0 0.0
      %4232 = vmatprep.subr.mxu0 0.0
      %4233 = vmatpush2.msra.mxu0 0.0
      %4234 = vmatprep.subr.mxu0 0.0
      %4235 = vmatpush2.msra.mxu0 0.0
      %4236 = vmatprep.subr.mxu0 0.0
      %4237 = vmatpush2.msra.mxu0 0.0
      %4238 = vmatprep.subr.mxu0 0.0
      %4239 = vmatpush2.msra.mxu0 0.0
      %4240 = vmatprep.subr.mxu0 0.0
      %4241 = vmatpush2.msra.mxu0 0.0
      %4242 = vmatprep.subr.mxu0 0.0
      %4243 = vmatpush2.msra.mxu0 0.0
      %4244 = vmatprep.mubr.f32.mxu0 0.0
      %4245 = vmatmul.mubr.f32.gmra.mxu0 %v4178
      %v4246 = vpop.f32.mrf.mxu0
      %v4247 = vadd.f32 0.0, %v4246
      %v4248 = vpop.f32.mrf.mxu0
      %4249 = vdwg.mxu0
      %4250 = vrot.lane.b32.xlu0 %v510, 96
      %v4251 = vpop.permute.xlu0 %4250
      %v4254 = vsel %vm1157, %v3867, 0
      %4256 = vmatprep.subr.mxu0 0.0
      %4257 = vmatpush1.msra.mxu0 0.0
      %4258 = vmatprep.subr.mxu0 0.0
      %4259 = vmatpush1.msra.mxu0 0.0
      %4260 = vmatprep.subr.mxu0 0.0
      %4261 = vmatpush1.msra.mxu0 0.0
      %4262 = vmatprep.subr.mxu0 0.0
      %4263 = vmatpush1.msra.mxu0 0.0
      %4264 = vmatprep.subr.mxu0 0.0
      %4265 = vmatpush1.msra.mxu0 0.0
      %4266 = vmatprep.subr.mxu0 0.0
      %4267 = vmatpush1.msra.mxu0 0.0
      %4268 = vmatprep.subr.mxu0 0.0
      %4269 = vmatpush1.msra.mxu0 0.0
      %4270 = vmatprep.subr.mxu0 0.0
      %4271 = vmatpush1.msra.mxu0 0.0
      %4272 = vmatprep.subr.mxu0 0.0
      %4273 = vmatpush1.msra.mxu0 0.0
      %4274 = vmatprep.subr.mxu0 0.0
      %4275 = vmatpush1.msra.mxu0 0.0
      %4276 = vmatprep.subr.mxu0 0.0
      %4277 = vmatpush1.msra.mxu0 0.0
      %4278 = vmatprep.subr.mxu0 0.0
      %4279 = vmatpush1.msra.mxu0 0.0
      %4280 = vmatprep.subr.mxu0 0.0
      %4281 = vmatpush1.msra.mxu0 0.0
      %4282 = vmatprep.subr.mxu0 0.0
      %4283 = vmatpush1.msra.mxu0 0.0
      %4284 = vmatprep.subr.mxu0 0.0
      %4285 = vmatpush1.msra.mxu0 0.0
      %4286 = vmatprep.subr.mxu0 0.0
      %4287 = vmatpush1.msra.mxu0 %v4251
      %4288 = vmatprep.subr.mxu0 0.0
      %4289 = vmatpush2.msra.mxu0 0.0
      %4290 = vmatprep.subr.mxu0 0.0
      %4291 = vmatpush2.msra.mxu0 0.0
      %4292 = vmatprep.subr.mxu0 0.0
      %4293 = vmatpush2.msra.mxu0 0.0
      %4294 = vmatprep.subr.mxu0 0.0
      %4295 = vmatpush2.msra.mxu0 0.0
      %4296 = vmatprep.subr.mxu0 0.0
      %4297 = vmatpush2.msra.mxu0 0.0
      %4298 = vmatprep.subr.mxu0 0.0
      %4299 = vmatpush2.msra.mxu0 0.0
      %4300 = vmatprep.subr.mxu0 0.0
      %4301 = vmatpush2.msra.mxu0 0.0
      %4302 = vmatprep.subr.mxu0 0.0
      %4303 = vmatpush2.msra.mxu0 0.0
      %4304 = vmatprep.subr.mxu0 0.0
      %4305 = vmatpush2.msra.mxu0 0.0
      %4306 = vmatprep.subr.mxu0 0.0
      %4307 = vmatpush2.msra.mxu0 0.0
      %4308 = vmatprep.subr.mxu0 0.0
      %4309 = vmatpush2.msra.mxu0 0.0
      %4310 = vmatprep.subr.mxu0 0.0
      %4311 = vmatpush2.msra.mxu0 0.0
      %4312 = vmatprep.subr.mxu0 0.0
      %4313 = vmatpush2.msra.mxu0 0.0
      %4314 = vmatprep.subr.mxu0 0.0
      %4315 = vmatpush2.msra.mxu0 0.0
      %4316 = vmatprep.subr.mxu0 0.0
      %4317 = vmatpush2.msra.mxu0 0.0
      %4318 = vmatprep.subr.mxu0 0.0
      %4319 = vmatpush2.msra.mxu0 0.0
      %4320 = vmatprep.mubr.f32.mxu0 0.0
      %4321 = vmatmul.mubr.f32.gmra.mxu0 %v4254
      %v4322 = vpop.f32.mrf.mxu0
      %v4323 = vadd.f32 0.0, %v4322
      %v4324 = vpop.f32.mrf.mxu0
      %4325 = vdwg.mxu0
      %4326 = vrot.lane.b32.xlu0 %v516, 96
      %v4327 = vpop.permute.xlu0 %4326
      %v4330 = vsel %vm1157, %v3868, 0
      %4332 = vmatprep.subr.mxu0 0.0
      %4333 = vmatpush1.msra.mxu0 0.0
      %4334 = vmatprep.subr.mxu0 0.0
      %4335 = vmatpush1.msra.mxu0 0.0
      %4336 = vmatprep.subr.mxu0 0.0
      %4337 = vmatpush1.msra.mxu0 0.0
      %4338 = vmatprep.subr.mxu0 0.0
      %4339 = vmatpush1.msra.mxu0 0.0
      %4340 = vmatprep.subr.mxu0 0.0
      %4341 = vmatpush1.msra.mxu0 0.0
      %4342 = vmatprep.subr.mxu0 0.0
      %4343 = vmatpush1.msra.mxu0 0.0
      %4344 = vmatprep.subr.mxu0 0.0
      %4345 = vmatpush1.msra.mxu0 0.0
      %4346 = vmatprep.subr.mxu0 0.0
      %4347 = vmatpush1.msra.mxu0 0.0
      %4348 = vmatprep.subr.mxu0 0.0
      %4349 = vmatpush1.msra.mxu0 0.0
      %4350 = vmatprep.subr.mxu0 0.0
      %4351 = vmatpush1.msra.mxu0 0.0
      %4352 = vmatprep.subr.mxu0 0.0
      %4353 = vmatpush1.msra.mxu0 0.0
      %4354 = vmatprep.subr.mxu0 0.0
      %4355 = vmatpush1.msra.mxu0 0.0
      %4356 = vmatprep.subr.mxu0 0.0
      %4357 = vmatpush1.msra.mxu0 0.0
      %4358 = vmatprep.subr.mxu0 0.0
      %4359 = vmatpush1.msra.mxu0 0.0
      %4360 = vmatprep.subr.mxu0 0.0
      %4361 = vmatpush1.msra.mxu0 0.0
      %4362 = vmatprep.subr.mxu0 0.0
      %4363 = vmatpush1.msra.mxu0 %v4327
      %4364 = vmatprep.subr.mxu0 0.0
      %4365 = vmatpush2.msra.mxu0 0.0
      %4366 = vmatprep.subr.mxu0 0.0
      %4367 = vmatpush2.msra.mxu0 0.0
      %4368 = vmatprep.subr.mxu0 0.0
      %4369 = vmatpush2.msra.mxu0 0.0
      %4370 = vmatprep.subr.mxu0 0.0
      %4371 = vmatpush2.msra.mxu0 0.0
      %4372 = vmatprep.subr.mxu0 0.0
      %4373 = vmatpush2.msra.mxu0 0.0
      %4374 = vmatprep.subr.mxu0 0.0
      %4375 = vmatpush2.msra.mxu0 0.0
      %4376 = vmatprep.subr.mxu0 0.0
      %4377 = vmatpush2.msra.mxu0 0.0
      %4378 = vmatprep.subr.mxu0 0.0
      %4379 = vmatpush2.msra.mxu0 0.0
      %4380 = vmatprep.subr.mxu0 0.0
      %4381 = vmatpush2.msra.mxu0 0.0
      %4382 = vmatprep.subr.mxu0 0.0
      %4383 = vmatpush2.msra.mxu0 0.0
      %4384 = vmatprep.subr.mxu0 0.0
      %4385 = vmatpush2.msra.mxu0 0.0
      %4386 = vmatprep.subr.mxu0 0.0
      %4387 = vmatpush2.msra.mxu0 0.0
      %4388 = vmatprep.subr.mxu0 0.0
      %4389 = vmatpush2.msra.mxu0 0.0
      %4390 = vmatprep.subr.mxu0 0.0
      %4391 = vmatpush2.msra.mxu0 0.0
      %4392 = vmatprep.subr.mxu0 0.0
      %4393 = vmatpush2.msra.mxu0 0.0
      %4394 = vmatprep.subr.mxu0 0.0
      %4395 = vmatpush2.msra.mxu0 0.0
      %4396 = vmatprep.mubr.f32.mxu0 0.0
      %4397 = vmatmul.mubr.f32.gmra.mxu0 %v4330
      %v4398 = vpop.f32.mrf.mxu0
      %v4399 = vadd.f32 0.0, %v4398
      %v4400 = vpop.f32.mrf.mxu0
      %4401 = vdwg.mxu0
      %4402 = vrot.lane.b32.xlu0 %v522, 96
      %v4403 = vpop.permute.xlu0 %4402
      %v4406 = vsel %vm1157, %v3869, 0
      %4408 = vmatprep.subr.mxu0 0.0
      %4409 = vmatpush1.msra.mxu0 0.0
      %4410 = vmatprep.subr.mxu0 0.0
      %4411 = vmatpush1.msra.mxu0 0.0
      %4412 = vmatprep.subr.mxu0 0.0
      %4413 = vmatpush1.msra.mxu0 0.0
      %4414 = vmatprep.subr.mxu0 0.0
      %4415 = vmatpush1.msra.mxu0 0.0
      %4416 = vmatprep.subr.mxu0 0.0
      %4417 = vmatpush1.msra.mxu0 0.0
      %4418 = vmatprep.subr.mxu0 0.0
      %4419 = vmatpush1.msra.mxu0 0.0
      %4420 = vmatprep.subr.mxu0 0.0
      %4421 = vmatpush1.msra.mxu0 0.0
      %4422 = vmatprep.subr.mxu0 0.0
      %4423 = vmatpush1.msra.mxu0 0.0
      %4424 = vmatprep.subr.mxu0 0.0
      %4425 = vmatpush1.msra.mxu0 0.0
      %4426 = vmatprep.subr.mxu0 0.0
      %4427 = vmatpush1.msra.mxu0 0.0
      %4428 = vmatprep.subr.mxu0 0.0
      %4429 = vmatpush1.msra.mxu0 0.0
      %4430 = vmatprep.subr.mxu0 0.0
      %4431 = vmatpush1.msra.mxu0 0.0
      %4432 = vmatprep.subr.mxu0 0.0
      %4433 = vmatpush1.msra.mxu0 0.0
      %4434 = vmatprep.subr.mxu0 0.0
      %4435 = vmatpush1.msra.mxu0 0.0
      %4436 = vmatprep.subr.mxu0 0.0
      %4437 = vmatpush1.msra.mxu0 0.0
      %4438 = vmatprep.subr.mxu0 0.0
      %4439 = vmatpush1.msra.mxu0 %v4403
      %4440 = vmatprep.subr.mxu0 0.0
      %4441 = vmatpush2.msra.mxu0 0.0
      %4442 = vmatprep.subr.mxu0 0.0
      %4443 = vmatpush2.msra.mxu0 0.0
      %4444 = vmatprep.subr.mxu0 0.0
      %4445 = vmatpush2.msra.mxu0 0.0
      %4446 = vmatprep.subr.mxu0 0.0
      %4447 = vmatpush2.msra.mxu0 0.0
      %4448 = vmatprep.subr.mxu0 0.0
      %4449 = vmatpush2.msra.mxu0 0.0
      %4450 = vmatprep.subr.mxu0 0.0
      %4451 = vmatpush2.msra.mxu0 0.0
      %4452 = vmatprep.subr.mxu0 0.0
      %4453 = vmatpush2.msra.mxu0 0.0
      %4454 = vmatprep.subr.mxu0 0.0
      %4455 = vmatpush2.msra.mxu0 0.0
      %4456 = vmatprep.subr.mxu0 0.0
      %4457 = vmatpush2.msra.mxu0 0.0
      %4458 = vmatprep.subr.mxu0 0.0
      %4459 = vmatpush2.msra.mxu0 0.0
      %4460 = vmatprep.subr.mxu0 0.0
      %4461 = vmatpush2.msra.mxu0 0.0
      %4462 = vmatprep.subr.mxu0 0.0
      %4463 = vmatpush2.msra.mxu0 0.0
      %4464 = vmatprep.subr.mxu0 0.0
      %4465 = vmatpush2.msra.mxu0 0.0
      %4466 = vmatprep.subr.mxu0 0.0
      %4467 = vmatpush2.msra.mxu0 0.0
      %4468 = vmatprep.subr.mxu0 0.0
      %4469 = vmatpush2.msra.mxu0 0.0
      %4470 = vmatprep.subr.mxu0 0.0
      %4471 = vmatpush2.msra.mxu0 0.0
      %4472 = vmatprep.mubr.f32.mxu0 0.0
      %4473 = vmatmul.mubr.f32.gmra.mxu0 %v4406
      %v4474 = vpop.f32.mrf.mxu0
      %v4475 = vadd.f32 0.0, %v4474
      %v4476 = vpop.f32.mrf.mxu0
      %4477 = vdwg.mxu0
      %4478 = vrot.lane.b32.xlu0 %v524, 80
      %v4479 = vpop.permute.xlu0 %4478
      %4480 = vrot.lane.b32.xlu0 %v478, 16
      %v4481 = vpop.permute.xlu0 %4480
      %v4482 = vsel %vm535, %v4479, 0
      %v4484 = vsel %vm535, %v4481, 0
      %4486 = vmatprep.subr.mxu0 0.0
      %4487 = vmatpush1.xpose.msra.mxu0 0.0
      %4488 = vmatprep.subr.mxu0 0.0
      %4489 = vmatpush1.xpose.msra.mxu0 0.0
      %4490 = vmatprep.subr.mxu0 0.0
      %4491 = vmatpush1.xpose.msra.mxu0 0.0
      %4492 = vmatprep.subr.mxu0 0.0
      %4493 = vmatpush1.xpose.msra.mxu0 0.0
      %4494 = vmatprep.subr.mxu0 0.0
      %4495 = vmatpush1.xpose.msra.mxu0 0.0
      %4496 = vmatprep.subr.mxu0 0.0
      %4497 = vmatpush1.xpose.msra.mxu0 0.0
      %4498 = vmatprep.subr.mxu0 0.0
      %4499 = vmatpush1.xpose.msra.mxu0 0.0
      %4500 = vmatprep.subr.mxu0 0.0
      %4501 = vmatpush1.xpose.msra.mxu0 0.0
      %4502 = vmatprep.subr.mxu0 0.0
      %4503 = vmatpush1.xpose.msra.mxu0 0.0
      %4504 = vmatprep.subr.mxu0 0.0
      %4505 = vmatpush1.xpose.msra.mxu0 0.0
      %4506 = vmatprep.subr.mxu0 0.0
      %4507 = vmatpush1.xpose.msra.mxu0 0.0
      %4508 = vmatprep.subr.mxu0 0.0
      %4509 = vmatpush1.xpose.msra.mxu0 0.0
      %4510 = vmatprep.subr.mxu0 0.0
      %4511 = vmatpush1.xpose.msra.mxu0 0.0
      %4512 = vmatprep.subr.mxu0 0.0
      %4513 = vmatpush1.xpose.msra.mxu0 0.0
      %4514 = vmatprep.subr.mxu0 0.0
      %4515 = vmatpush1.xpose.msra.mxu0 0.0
      %4516 = vmatprep.subr.mxu0 0.0
      %4517 = vmatpush1.xpose.msra.mxu0 %v4484
      %4518 = vmatprep.subr.mxu0 0.0
      %4519 = vmatpush2.xpose.msra.mxu0 0.0
      %4520 = vmatprep.subr.mxu0 0.0
      %4521 = vmatpush2.xpose.msra.mxu0 0.0
      %4522 = vmatprep.subr.mxu0 0.0
      %4523 = vmatpush2.xpose.msra.mxu0 0.0
      %4524 = vmatprep.subr.mxu0 0.0
      %4525 = vmatpush2.xpose.msra.mxu0 0.0
      %4526 = vmatprep.subr.mxu0 0.0
      %4527 = vmatpush2.xpose.msra.mxu0 0.0
      %4528 = vmatprep.subr.mxu0 0.0
      %4529 = vmatpush2.xpose.msra.mxu0 0.0
      %4530 = vmatprep.subr.mxu0 0.0
      %4531 = vmatpush2.xpose.msra.mxu0 0.0
      %4532 = vmatprep.subr.mxu0 0.0
      %4533 = vmatpush2.xpose.msra.mxu0 0.0
      %4534 = vmatprep.subr.mxu0 0.0
      %4535 = vmatpush2.xpose.msra.mxu0 0.0
      %4536 = vmatprep.subr.mxu0 0.0
      %4537 = vmatpush2.xpose.msra.mxu0 0.0
      %4538 = vmatprep.subr.mxu0 0.0
      %4539 = vmatpush2.xpose.msra.mxu0 0.0
      %4540 = vmatprep.subr.mxu0 0.0
      %4541 = vmatpush2.xpose.msra.mxu0 0.0
      %4542 = vmatprep.subr.mxu0 0.0
      %4543 = vmatpush2.xpose.msra.mxu0 0.0
      %4544 = vmatprep.subr.mxu0 0.0
      %4545 = vmatpush2.xpose.msra.mxu0 0.0
      %4546 = vmatprep.subr.mxu0 0.0
      %4547 = vmatpush2.xpose.msra.mxu0 0.0
      %4548 = vmatprep.subr.mxu0 0.0
      %4549 = vmatpush2.xpose.msra.mxu0 0.0
      %4550 = vmatprep.mubr.f32.mxu0 0.0
      %4551 = vmatmul.mubr.f32.gmra.mxu0 %v4482
      %v4552 = vpop.f32.mrf.mxu0
      %v4553 = vadd.f32 0.0, %v4552
      %v4554 = vpop.f32.mrf.mxu0
      %4555 = vdwg.mxu0
      %4556 = vrot.lane.b32.xlu0 %v525, 80
      %v4557 = vpop.permute.xlu0 %4556
      %4558 = vrot.lane.b32.xlu0 %v484, 16
      %v4559 = vpop.permute.xlu0 %4558
      %v4560 = vsel %vm535, %v4557, 0
      %v4562 = vsel %vm535, %v4559, 0
      %4564 = vmatprep.subr.mxu0 0.0
      %4565 = vmatpush1.xpose.msra.mxu0 0.0
      %4566 = vmatprep.subr.mxu0 0.0
      %4567 = vmatpush1.xpose.msra.mxu0 0.0
      %4568 = vmatprep.subr.mxu0 0.0
      %4569 = vmatpush1.xpose.msra.mxu0 0.0
      %4570 = vmatprep.subr.mxu0 0.0
      %4571 = vmatpush1.xpose.msra.mxu0 0.0
      %4572 = vmatprep.subr.mxu0 0.0
      %4573 = vmatpush1.xpose.msra.mxu0 0.0
      %4574 = vmatprep.subr.mxu0 0.0
      %4575 = vmatpush1.xpose.msra.mxu0 0.0
      %4576 = vmatprep.subr.mxu0 0.0
      %4577 = vmatpush1.xpose.msra.mxu0 0.0
      %4578 = vmatprep.subr.mxu0 0.0
      %4579 = vmatpush1.xpose.msra.mxu0 0.0
      %4580 = vmatprep.subr.mxu0 0.0
      %4581 = vmatpush1.xpose.msra.mxu0 0.0
      %4582 = vmatprep.subr.mxu0 0.0
      %4583 = vmatpush1.xpose.msra.mxu0 0.0
      %4584 = vmatprep.subr.mxu0 0.0
      %4585 = vmatpush1.xpose.msra.mxu0 0.0
      %4586 = vmatprep.subr.mxu0 0.0
      %4587 = vmatpush1.xpose.msra.mxu0 0.0
      %4588 = vmatprep.subr.mxu0 0.0
      %4589 = vmatpush1.xpose.msra.mxu0 0.0
      %4590 = vmatprep.subr.mxu0 0.0
      %4591 = vmatpush1.xpose.msra.mxu0 0.0
      %4592 = vmatprep.subr.mxu0 0.0
      %4593 = vmatpush1.xpose.msra.mxu0 0.0
      %4594 = vmatprep.subr.mxu0 0.0
      %4595 = vmatpush1.xpose.msra.mxu0 %v4562
      %4596 = vmatprep.subr.mxu0 0.0
      %4597 = vmatpush2.xpose.msra.mxu0 0.0
      %4598 = vmatprep.subr.mxu0 0.0
      %4599 = vmatpush2.xpose.msra.mxu0 0.0
      %4600 = vmatprep.subr.mxu0 0.0
      %4601 = vmatpush2.xpose.msra.mxu0 0.0
      %4602 = vmatprep.subr.mxu0 0.0
      %4603 = vmatpush2.xpose.msra.mxu0 0.0
      %4604 = vmatprep.subr.mxu0 0.0
      %4605 = vmatpush2.xpose.msra.mxu0 0.0
      %4606 = vmatprep.subr.mxu0 0.0
      %4607 = vmatpush2.xpose.msra.mxu0 0.0
      %4608 = vmatprep.subr.mxu0 0.0
      %4609 = vmatpush2.xpose.msra.mxu0 0.0
      %4610 = vmatprep.subr.mxu0 0.0
      %4611 = vmatpush2.xpose.msra.mxu0 0.0
      %4612 = vmatprep.subr.mxu0 0.0
      %4613 = vmatpush2.xpose.msra.mxu0 0.0
      %4614 = vmatprep.subr.mxu0 0.0
      %4615 = vmatpush2.xpose.msra.mxu0 0.0
      %4616 = vmatprep.subr.mxu0 0.0
      %4617 = vmatpush2.xpose.msra.mxu0 0.0
      %4618 = vmatprep.subr.mxu0 0.0
      %4619 = vmatpush2.xpose.msra.mxu0 0.0
      %4620 = vmatprep.subr.mxu0 0.0
      %4621 = vmatpush2.xpose.msra.mxu0 0.0
      %4622 = vmatprep.subr.mxu0 0.0
      %4623 = vmatpush2.xpose.msra.mxu0 0.0
      %4624 = vmatprep.subr.mxu0 0.0
      %4625 = vmatpush2.xpose.msra.mxu0 0.0
      %4626 = vmatprep.subr.mxu0 0.0
      %4627 = vmatpush2.xpose.msra.mxu0 0.0
      %4628 = vmatprep.mubr.f32.mxu0 0.0
      %4629 = vmatmul.mubr.f32.gmra.mxu0 %v4560
      %v4630 = vpop.f32.mrf.mxu0
      %v4631 = vadd.f32 0.0, %v4630
      %v4632 = vpop.f32.mrf.mxu0
      %4633 = vdwg.mxu0
      %4634 = vrot.lane.b32.xlu0 %v526, 80
      %v4635 = vpop.permute.xlu0 %4634
      %4636 = vrot.lane.b32.xlu0 %v490, 16
      %v4637 = vpop.permute.xlu0 %4636
      %v4638 = vsel %vm535, %v4635, 0
      %v4640 = vsel %vm535, %v4637, 0
      %4642 = vmatprep.subr.mxu0 0.0
      %4643 = vmatpush1.xpose.msra.mxu0 0.0
      %4644 = vmatprep.subr.mxu0 0.0
      %4645 = vmatpush1.xpose.msra.mxu0 0.0
      %4646 = vmatprep.subr.mxu0 0.0
      %4647 = vmatpush1.xpose.msra.mxu0 0.0
      %4648 = vmatprep.subr.mxu0 0.0
      %4649 = vmatpush1.xpose.msra.mxu0 0.0
      %4650 = vmatprep.subr.mxu0 0.0
      %4651 = vmatpush1.xpose.msra.mxu0 0.0
      %4652 = vmatprep.subr.mxu0 0.0
      %4653 = vmatpush1.xpose.msra.mxu0 0.0
      %4654 = vmatprep.subr.mxu0 0.0
      %4655 = vmatpush1.xpose.msra.mxu0 0.0
      %4656 = vmatprep.subr.mxu0 0.0
      %4657 = vmatpush1.xpose.msra.mxu0 0.0
      %4658 = vmatprep.subr.mxu0 0.0
      %4659 = vmatpush1.xpose.msra.mxu0 0.0
      %4660 = vmatprep.subr.mxu0 0.0
      %4661 = vmatpush1.xpose.msra.mxu0 0.0
      %4662 = vmatprep.subr.mxu0 0.0
      %4663 = vmatpush1.xpose.msra.mxu0 0.0
      %4664 = vmatprep.subr.mxu0 0.0
      %4665 = vmatpush1.xpose.msra.mxu0 0.0
      %4666 = vmatprep.subr.mxu0 0.0
      %4667 = vmatpush1.xpose.msra.mxu0 0.0
      %4668 = vmatprep.subr.mxu0 0.0
      %4669 = vmatpush1.xpose.msra.mxu0 0.0
      %4670 = vmatprep.subr.mxu0 0.0
      %4671 = vmatpush1.xpose.msra.mxu0 0.0
      %4672 = vmatprep.subr.mxu0 0.0
      %4673 = vmatpush1.xpose.msra.mxu0 %v4640
      %4674 = vmatprep.subr.mxu0 0.0
      %4675 = vmatpush2.xpose.msra.mxu0 0.0
      %4676 = vmatprep.subr.mxu0 0.0
      %4677 = vmatpush2.xpose.msra.mxu0 0.0
      %4678 = vmatprep.subr.mxu0 0.0
      %4679 = vmatpush2.xpose.msra.mxu0 0.0
      %4680 = vmatprep.subr.mxu0 0.0
      %4681 = vmatpush2.xpose.msra.mxu0 0.0
      %4682 = vmatprep.subr.mxu0 0.0
      %4683 = vmatpush2.xpose.msra.mxu0 0.0
      %4684 = vmatprep.subr.mxu0 0.0
      %4685 = vmatpush2.xpose.msra.mxu0 0.0
      %4686 = vmatprep.subr.mxu0 0.0
      %4687 = vmatpush2.xpose.msra.mxu0 0.0
      %4688 = vmatprep.subr.mxu0 0.0
      %4689 = vmatpush2.xpose.msra.mxu0 0.0
      %4690 = vmatprep.subr.mxu0 0.0
      %4691 = vmatpush2.xpose.msra.mxu0 0.0
      %4692 = vmatprep.subr.mxu0 0.0
      %4693 = vmatpush2.xpose.msra.mxu0 0.0
      %4694 = vmatprep.subr.mxu0 0.0
      %4695 = vmatpush2.xpose.msra.mxu0 0.0
      %4696 = vmatprep.subr.mxu0 0.0
      %4697 = vmatpush2.xpose.msra.mxu0 0.0
      %4698 = vmatprep.subr.mxu0 0.0
      %4699 = vmatpush2.xpose.msra.mxu0 0.0
      %4700 = vmatprep.subr.mxu0 0.0
      %4701 = vmatpush2.xpose.msra.mxu0 0.0
      %4702 = vmatprep.subr.mxu0 0.0
      %4703 = vmatpush2.xpose.msra.mxu0 0.0
      %4704 = vmatprep.subr.mxu0 0.0
      %4705 = vmatpush2.xpose.msra.mxu0 0.0
      %4706 = vmatprep.mubr.f32.mxu0 0.0
      %4707 = vmatmul.mubr.f32.gmra.mxu0 %v4638
      %v4708 = vpop.f32.mrf.mxu0
      %v4709 = vadd.f32 0.0, %v4708
      %v4710 = vpop.f32.mrf.mxu0
      %4711 = vdwg.mxu0
      %4712 = vrot.lane.b32.xlu0 %v527, 80
      %v4713 = vpop.permute.xlu0 %4712
      %4714 = vrot.lane.b32.xlu0 %v496, 16
      %v4715 = vpop.permute.xlu0 %4714
      %v4716 = vsel %vm535, %v4713, 0
      %v4718 = vsel %vm535, %v4715, 0
      %4720 = vmatprep.subr.mxu0 0.0
      %4721 = vmatpush1.xpose.msra.mxu0 0.0
      %4722 = vmatprep.subr.mxu0 0.0
      %4723 = vmatpush1.xpose.msra.mxu0 0.0
      %4724 = vmatprep.subr.mxu0 0.0
      %4725 = vmatpush1.xpose.msra.mxu0 0.0
      %4726 = vmatprep.subr.mxu0 0.0
      %4727 = vmatpush1.xpose.msra.mxu0 0.0
      %4728 = vmatprep.subr.mxu0 0.0
      %4729 = vmatpush1.xpose.msra.mxu0 0.0
      %4730 = vmatprep.subr.mxu0 0.0
      %4731 = vmatpush1.xpose.msra.mxu0 0.0
      %4732 = vmatprep.subr.mxu0 0.0
      %4733 = vmatpush1.xpose.msra.mxu0 0.0
      %4734 = vmatprep.subr.mxu0 0.0
      %4735 = vmatpush1.xpose.msra.mxu0 0.0
      %4736 = vmatprep.subr.mxu0 0.0
      %4737 = vmatpush1.xpose.msra.mxu0 0.0
      %4738 = vmatprep.subr.mxu0 0.0
      %4739 = vmatpush1.xpose.msra.mxu0 0.0
      %4740 = vmatprep.subr.mxu0 0.0
      %4741 = vmatpush1.xpose.msra.mxu0 0.0
      %4742 = vmatprep.subr.mxu0 0.0
      %4743 = vmatpush1.xpose.msra.mxu0 0.0
      %4744 = vmatprep.subr.mxu0 0.0
      %4745 = vmatpush1.xpose.msra.mxu0 0.0
      %4746 = vmatprep.subr.mxu0 0.0
      %4747 = vmatpush1.xpose.msra.mxu0 0.0
      %4748 = vmatprep.subr.mxu0 0.0
      %4749 = vmatpush1.xpose.msra.mxu0 0.0
      %4750 = vmatprep.subr.mxu0 0.0
      %4751 = vmatpush1.xpose.msra.mxu0 %v4718
      %4752 = vmatprep.subr.mxu0 0.0
      %4753 = vmatpush2.xpose.msra.mxu0 0.0
      %4754 = vmatprep.subr.mxu0 0.0
      %4755 = vmatpush2.xpose.msra.mxu0 0.0
      %4756 = vmatprep.subr.mxu0 0.0
      %4757 = vmatpush2.xpose.msra.mxu0 0.0
      %4758 = vmatprep.subr.mxu0 0.0
      %4759 = vmatpush2.xpose.msra.mxu0 0.0
      %4760 = vmatprep.subr.mxu0 0.0
      %4761 = vmatpush2.xpose.msra.mxu0 0.0
      %4762 = vmatprep.subr.mxu0 0.0
      %4763 = vmatpush2.xpose.msra.mxu0 0.0
      %4764 = vmatprep.subr.mxu0 0.0
      %4765 = vmatpush2.xpose.msra.mxu0 0.0
      %4766 = vmatprep.subr.mxu0 0.0
      %4767 = vmatpush2.xpose.msra.mxu0 0.0
      %4768 = vmatprep.subr.mxu0 0.0
      %4769 = vmatpush2.xpose.msra.mxu0 0.0
      %4770 = vmatprep.subr.mxu0 0.0
      %4771 = vmatpush2.xpose.msra.mxu0 0.0
      %4772 = vmatprep.subr.mxu0 0.0
      %4773 = vmatpush2.xpose.msra.mxu0 0.0
      %4774 = vmatprep.subr.mxu0 0.0
      %4775 = vmatpush2.xpose.msra.mxu0 0.0
      %4776 = vmatprep.subr.mxu0 0.0
      %4777 = vmatpush2.xpose.msra.mxu0 0.0
      %4778 = vmatprep.subr.mxu0 0.0
      %4779 = vmatpush2.xpose.msra.mxu0 0.0
      %4780 = vmatprep.subr.mxu0 0.0
      %4781 = vmatpush2.xpose.msra.mxu0 0.0
      %4782 = vmatprep.subr.mxu0 0.0
      %4783 = vmatpush2.xpose.msra.mxu0 0.0
      %4784 = vmatprep.mubr.f32.mxu0 0.0
      %4785 = vmatmul.mubr.f32.gmra.mxu0 %v4716
      %v4786 = vpop.f32.mrf.mxu0
      %v4787 = vadd.f32 0.0, %v4786
      %v4788 = vpop.f32.mrf.mxu0
      %4789 = vdwg.mxu0
      %4790 = vrot.lane.b32.xlu0 %v528, 80
      %v4791 = vpop.permute.xlu0 %4790
      %4792 = vrot.lane.b32.xlu0 %v502, 16
      %v4793 = vpop.permute.xlu0 %4792
      %v4794 = vsel %vm535, %v4791, 0
      %v4796 = vsel %vm535, %v4793, 0
      %4798 = vmatprep.subr.mxu0 0.0
      %4799 = vmatpush1.xpose.msra.mxu0 0.0
      %4800 = vmatprep.subr.mxu0 0.0
      %4801 = vmatpush1.xpose.msra.mxu0 0.0
      %4802 = vmatprep.subr.mxu0 0.0
      %4803 = vmatpush1.xpose.msra.mxu0 0.0
      %4804 = vmatprep.subr.mxu0 0.0
      %4805 = vmatpush1.xpose.msra.mxu0 0.0
      %4806 = vmatprep.subr.mxu0 0.0
      %4807 = vmatpush1.xpose.msra.mxu0 0.0
      %4808 = vmatprep.subr.mxu0 0.0
      %4809 = vmatpush1.xpose.msra.mxu0 0.0
      %4810 = vmatprep.subr.mxu0 0.0
      %4811 = vmatpush1.xpose.msra.mxu0 0.0
      %4812 = vmatprep.subr.mxu0 0.0
      %4813 = vmatpush1.xpose.msra.mxu0 0.0
      %4814 = vmatprep.subr.mxu0 0.0
      %4815 = vmatpush1.xpose.msra.mxu0 0.0
      %4816 = vmatprep.subr.mxu0 0.0
      %4817 = vmatpush1.xpose.msra.mxu0 0.0
      %4818 = vmatprep.subr.mxu0 0.0
      %4819 = vmatpush1.xpose.msra.mxu0 0.0
      %4820 = vmatprep.subr.mxu0 0.0
      %4821 = vmatpush1.xpose.msra.mxu0 0.0
      %4822 = vmatprep.subr.mxu0 0.0
      %4823 = vmatpush1.xpose.msra.mxu0 0.0
      %4824 = vmatprep.subr.mxu0 0.0
      %4825 = vmatpush1.xpose.msra.mxu0 0.0
      %4826 = vmatprep.subr.mxu0 0.0
      %4827 = vmatpush1.xpose.msra.mxu0 0.0
      %4828 = vmatprep.subr.mxu0 0.0
      %4829 = vmatpush1.xpose.msra.mxu0 %v4796
      %4830 = vmatprep.subr.mxu0 0.0
      %4831 = vmatpush2.xpose.msra.mxu0 0.0
      %4832 = vmatprep.subr.mxu0 0.0
      %4833 = vmatpush2.xpose.msra.mxu0 0.0
      %4834 = vmatprep.subr.mxu0 0.0
      %4835 = vmatpush2.xpose.msra.mxu0 0.0
      %4836 = vmatprep.subr.mxu0 0.0
      %4837 = vmatpush2.xpose.msra.mxu0 0.0
      %4838 = vmatprep.subr.mxu0 0.0
      %4839 = vmatpush2.xpose.msra.mxu0 0.0
      %4840 = vmatprep.subr.mxu0 0.0
      %4841 = vmatpush2.xpose.msra.mxu0 0.0
      %4842 = vmatprep.subr.mxu0 0.0
      %4843 = vmatpush2.xpose.msra.mxu0 0.0
      %4844 = vmatprep.subr.mxu0 0.0
      %4845 = vmatpush2.xpose.msra.mxu0 0.0
      %4846 = vmatprep.subr.mxu0 0.0
      %4847 = vmatpush2.xpose.msra.mxu0 0.0
      %4848 = vmatprep.subr.mxu0 0.0
      %4849 = vmatpush2.xpose.msra.mxu0 0.0
      %4850 = vmatprep.subr.mxu0 0.0
      %4851 = vmatpush2.xpose.msra.mxu0 0.0
      %4852 = vmatprep.subr.mxu0 0.0
      %4853 = vmatpush2.xpose.msra.mxu0 0.0
      %4854 = vmatprep.subr.mxu0 0.0
      %4855 = vmatpush2.xpose.msra.mxu0 0.0
      %4856 = vmatprep.subr.mxu0 0.0
      %4857 = vmatpush2.xpose.msra.mxu0 0.0
      %4858 = vmatprep.subr.mxu0 0.0
      %4859 = vmatpush2.xpose.msra.mxu0 0.0
      %4860 = vmatprep.subr.mxu0 0.0
      %4861 = vmatpush2.xpose.msra.mxu0 0.0
      %4862 = vmatprep.mubr.f32.mxu0 0.0
      %4863 = vmatmul.mubr.f32.gmra.mxu0 %v4794
      %v4864 = vpop.f32.mrf.mxu0
      %v4865 = vadd.f32 0.0, %v4864
      %v4866 = vpop.f32.mrf.mxu0
      %4867 = vdwg.mxu0
      %4868 = vrot.lane.b32.xlu0 %v529, 80
      %v4869 = vpop.permute.xlu0 %4868
      %4870 = vrot.lane.b32.xlu0 %v508, 16
      %v4871 = vpop.permute.xlu0 %4870
      %v4872 = vsel %vm535, %v4869, 0
      %v4874 = vsel %vm535, %v4871, 0
      %4876 = vmatprep.subr.mxu0 0.0
      %4877 = vmatpush1.xpose.msra.mxu0 0.0
      %4878 = vmatprep.subr.mxu0 0.0
      %4879 = vmatpush1.xpose.msra.mxu0 0.0
      %4880 = vmatprep.subr.mxu0 0.0
      %4881 = vmatpush1.xpose.msra.mxu0 0.0
      %4882 = vmatprep.subr.mxu0 0.0
      %4883 = vmatpush1.xpose.msra.mxu0 0.0
      %4884 = vmatprep.subr.mxu0 0.0
      %4885 = vmatpush1.xpose.msra.mxu0 0.0
      %4886 = vmatprep.subr.mxu0 0.0
      %4887 = vmatpush1.xpose.msra.mxu0 0.0
      %4888 = vmatprep.subr.mxu0 0.0
      %4889 = vmatpush1.xpose.msra.mxu0 0.0
      %4890 = vmatprep.subr.mxu0 0.0
      %4891 = vmatpush1.xpose.msra.mxu0 0.0
      %4892 = vmatprep.subr.mxu0 0.0
      %4893 = vmatpush1.xpose.msra.mxu0 0.0
      %4894 = vmatprep.subr.mxu0 0.0
      %4895 = vmatpush1.xpose.msra.mxu0 0.0
      %4896 = vmatprep.subr.mxu0 0.0
      %4897 = vmatpush1.xpose.msra.mxu0 0.0
      %4898 = vmatprep.subr.mxu0 0.0
      %4899 = vmatpush1.xpose.msra.mxu0 0.0
      %4900 = vmatprep.subr.mxu0 0.0
      %4901 = vmatpush1.xpose.msra.mxu0 0.0
      %4902 = vmatprep.subr.mxu0 0.0
      %4903 = vmatpush1.xpose.msra.mxu0 0.0
      %4904 = vmatprep.subr.mxu0 0.0
      %4905 = vmatpush1.xpose.msra.mxu0 0.0
      %4906 = vmatprep.subr.mxu0 0.0
      %4907 = vmatpush1.xpose.msra.mxu0 %v4874
      %4908 = vmatprep.subr.mxu0 0.0
      %4909 = vmatpush2.xpose.msra.mxu0 0.0
      %4910 = vmatprep.subr.mxu0 0.0
      %4911 = vmatpush2.xpose.msra.mxu0 0.0
      %4912 = vmatprep.subr.mxu0 0.0
      %4913 = vmatpush2.xpose.msra.mxu0 0.0
      %4914 = vmatprep.subr.mxu0 0.0
      %4915 = vmatpush2.xpose.msra.mxu0 0.0
      %4916 = vmatprep.subr.mxu0 0.0
      %4917 = vmatpush2.xpose.msra.mxu0 0.0
      %4918 = vmatprep.subr.mxu0 0.0
      %4919 = vmatpush2.xpose.msra.mxu0 0.0
      %4920 = vmatprep.subr.mxu0 0.0
      %4921 = vmatpush2.xpose.msra.mxu0 0.0
      %4922 = vmatprep.subr.mxu0 0.0
      %4923 = vmatpush2.xpose.msra.mxu0 0.0
      %4924 = vmatprep.subr.mxu0 0.0
      %4925 = vmatpush2.xpose.msra.mxu0 0.0
      %4926 = vmatprep.subr.mxu0 0.0
      %4927 = vmatpush2.xpose.msra.mxu0 0.0
      %4928 = vmatprep.subr.mxu0 0.0
      %4929 = vmatpush2.xpose.msra.mxu0 0.0
      %4930 = vmatprep.subr.mxu0 0.0
      %4931 = vmatpush2.xpose.msra.mxu0 0.0
      %4932 = vmatprep.subr.mxu0 0.0
      %4933 = vmatpush2.xpose.msra.mxu0 0.0
      %4934 = vmatprep.subr.mxu0 0.0
      %4935 = vmatpush2.xpose.msra.mxu0 0.0
      %4936 = vmatprep.subr.mxu0 0.0
      %4937 = vmatpush2.xpose.msra.mxu0 0.0
      %4938 = vmatprep.subr.mxu0 0.0
      %4939 = vmatpush2.xpose.msra.mxu0 0.0
      %4940 = vmatprep.mubr.f32.mxu0 0.0
      %4941 = vmatmul.mubr.f32.gmra.mxu0 %v4872
      %v4942 = vpop.f32.mrf.mxu0
      %v4943 = vadd.f32 0.0, %v4942
      %v4944 = vpop.f32.mrf.mxu0
      %4945 = vdwg.mxu0
      %4946 = vrot.lane.b32.xlu0 %v530, 80
      %v4947 = vpop.permute.xlu0 %4946
      %4948 = vrot.lane.b32.xlu0 %v514, 16
      %v4949 = vpop.permute.xlu0 %4948
      %v4950 = vsel %vm535, %v4947, 0
      %v4952 = vsel %vm535, %v4949, 0
      %4954 = vmatprep.subr.mxu0 0.0
      %4955 = vmatpush1.xpose.msra.mxu0 0.0
      %4956 = vmatprep.subr.mxu0 0.0
      %4957 = vmatpush1.xpose.msra.mxu0 0.0
      %4958 = vmatprep.subr.mxu0 0.0
      %4959 = vmatpush1.xpose.msra.mxu0 0.0
      %4960 = vmatprep.subr.mxu0 0.0
      %4961 = vmatpush1.xpose.msra.mxu0 0.0
      %4962 = vmatprep.subr.mxu0 0.0
      %4963 = vmatpush1.xpose.msra.mxu0 0.0
      %4964 = vmatprep.subr.mxu0 0.0
      %4965 = vmatpush1.xpose.msra.mxu0 0.0
      %4966 = vmatprep.subr.mxu0 0.0
      %4967 = vmatpush1.xpose.msra.mxu0 0.0
      %4968 = vmatprep.subr.mxu0 0.0
      %4969 = vmatpush1.xpose.msra.mxu0 0.0
      %4970 = vmatprep.subr.mxu0 0.0
      %4971 = vmatpush1.xpose.msra.mxu0 0.0
      %4972 = vmatprep.subr.mxu0 0.0
      %4973 = vmatpush1.xpose.msra.mxu0 0.0
      %4974 = vmatprep.subr.mxu0 0.0
      %4975 = vmatpush1.xpose.msra.mxu0 0.0
      %4976 = vmatprep.subr.mxu0 0.0
      %4977 = vmatpush1.xpose.msra.mxu0 0.0
      %4978 = vmatprep.subr.mxu0 0.0
      %4979 = vmatpush1.xpose.msra.mxu0 0.0
      %4980 = vmatprep.subr.mxu0 0.0
      %4981 = vmatpush1.xpose.msra.mxu0 0.0
      %4982 = vmatprep.subr.mxu0 0.0
      %4983 = vmatpush1.xpose.msra.mxu0 0.0
      %4984 = vmatprep.subr.mxu0 0.0
      %4985 = vmatpush1.xpose.msra.mxu0 %v4952
      %4986 = vmatprep.subr.mxu0 0.0
      %4987 = vmatpush2.xpose.msra.mxu0 0.0
      %4988 = vmatprep.subr.mxu0 0.0
      %4989 = vmatpush2.xpose.msra.mxu0 0.0
      %4990 = vmatprep.subr.mxu0 0.0
      %4991 = vmatpush2.xpose.msra.mxu0 0.0
      %4992 = vmatprep.subr.mxu0 0.0
      %4993 = vmatpush2.xpose.msra.mxu0 0.0
      %4994 = vmatprep.subr.mxu0 0.0
      %4995 = vmatpush2.xpose.msra.mxu0 0.0
      %4996 = vmatprep.subr.mxu0 0.0
      %4997 = vmatpush2.xpose.msra.mxu0 0.0
      %4998 = vmatprep.subr.mxu0 0.0
      %4999 = vmatpush2.xpose.msra.mxu0 0.0
      %5000 = vmatprep.subr.mxu0 0.0
      %5001 = vmatpush2.xpose.msra.mxu0 0.0
      %5002 = vmatprep.subr.mxu0 0.0
      %5003 = vmatpush2.xpose.msra.mxu0 0.0
      %5004 = vmatprep.subr.mxu0 0.0
      %5005 = vmatpush2.xpose.msra.mxu0 0.0
      %5006 = vmatprep.subr.mxu0 0.0
      %5007 = vmatpush2.xpose.msra.mxu0 0.0
      %5008 = vmatprep.subr.mxu0 0.0
      %5009 = vmatpush2.xpose.msra.mxu0 0.0
      %5010 = vmatprep.subr.mxu0 0.0
      %5011 = vmatpush2.xpose.msra.mxu0 0.0
      %5012 = vmatprep.subr.mxu0 0.0
      %5013 = vmatpush2.xpose.msra.mxu0 0.0
      %5014 = vmatprep.subr.mxu0 0.0
      %5015 = vmatpush2.xpose.msra.mxu0 0.0
      %5016 = vmatprep.subr.mxu0 0.0
      %5017 = vmatpush2.xpose.msra.mxu0 0.0
      %5018 = vmatprep.mubr.f32.mxu0 0.0
      %5019 = vmatmul.mubr.f32.gmra.mxu0 %v4950
      %v5020 = vpop.f32.mrf.mxu0
      %v5021 = vadd.f32 0.0, %v5020
      %v5022 = vpop.f32.mrf.mxu0
      %5023 = vdwg.mxu0
      %5024 = vrot.lane.b32.xlu0 %v531, 80
      %v5025 = vpop.permute.xlu0 %5024
      %5026 = vrot.lane.b32.xlu0 %v520, 16
      %v5027 = vpop.permute.xlu0 %5026
      %v5028 = vsel %vm535, %v5025, 0
      %v5030 = vsel %vm535, %v5027, 0
      %5032 = vmatprep.subr.mxu0 0.0
      %5033 = vmatpush1.xpose.msra.mxu0 0.0
      %5034 = vmatprep.subr.mxu0 0.0
      %5035 = vmatpush1.xpose.msra.mxu0 0.0
      %5036 = vmatprep.subr.mxu0 0.0
      %5037 = vmatpush1.xpose.msra.mxu0 0.0
      %5038 = vmatprep.subr.mxu0 0.0
      %5039 = vmatpush1.xpose.msra.mxu0 0.0
      %5040 = vmatprep.subr.mxu0 0.0
      %5041 = vmatpush1.xpose.msra.mxu0 0.0
      %5042 = vmatprep.subr.mxu0 0.0
      %5043 = vmatpush1.xpose.msra.mxu0 0.0
      %5044 = vmatprep.subr.mxu0 0.0
      %5045 = vmatpush1.xpose.msra.mxu0 0.0
      %5046 = vmatprep.subr.mxu0 0.0
      %5047 = vmatpush1.xpose.msra.mxu0 0.0
      %5048 = vmatprep.subr.mxu0 0.0
      %5049 = vmatpush1.xpose.msra.mxu0 0.0
      %5050 = vmatprep.subr.mxu0 0.0
      %5051 = vmatpush1.xpose.msra.mxu0 0.0
      %5052 = vmatprep.subr.mxu0 0.0
      %5053 = vmatpush1.xpose.msra.mxu0 0.0
      %5054 = vmatprep.subr.mxu0 0.0
      %5055 = vmatpush1.xpose.msra.mxu0 0.0
      %5056 = vmatprep.subr.mxu0 0.0
      %5057 = vmatpush1.xpose.msra.mxu0 0.0
      %5058 = vmatprep.subr.mxu0 0.0
      %5059 = vmatpush1.xpose.msra.mxu0 0.0
      %5060 = vmatprep.subr.mxu0 0.0
      %5061 = vmatpush1.xpose.msra.mxu0 0.0
      %5062 = vmatprep.subr.mxu0 0.0
      %5063 = vmatpush1.xpose.msra.mxu0 %v5030
      %5064 = vmatprep.subr.mxu0 0.0
      %5065 = vmatpush2.xpose.msra.mxu0 0.0
      %5066 = vmatprep.subr.mxu0 0.0
      %5067 = vmatpush2.xpose.msra.mxu0 0.0
      %5068 = vmatprep.subr.mxu0 0.0
      %5069 = vmatpush2.xpose.msra.mxu0 0.0
      %5070 = vmatprep.subr.mxu0 0.0
      %5071 = vmatpush2.xpose.msra.mxu0 0.0
      %5072 = vmatprep.subr.mxu0 0.0
      %5073 = vmatpush2.xpose.msra.mxu0 0.0
      %5074 = vmatprep.subr.mxu0 0.0
      %5075 = vmatpush2.xpose.msra.mxu0 0.0
      %5076 = vmatprep.subr.mxu0 0.0
      %5077 = vmatpush2.xpose.msra.mxu0 0.0
      %5078 = vmatprep.subr.mxu0 0.0
      %5079 = vmatpush2.xpose.msra.mxu0 0.0
      %5080 = vmatprep.subr.mxu0 0.0
      %5081 = vmatpush2.xpose.msra.mxu0 0.0
      %5082 = vmatprep.subr.mxu0 0.0
      %5083 = vmatpush2.xpose.msra.mxu0 0.0
      %5084 = vmatprep.subr.mxu0 0.0
      %5085 = vmatpush2.xpose.msra.mxu0 0.0
      %5086 = vmatprep.subr.mxu0 0.0
      %5087 = vmatpush2.xpose.msra.mxu0 0.0
      %5088 = vmatprep.subr.mxu0 0.0
      %5089 = vmatpush2.xpose.msra.mxu0 0.0
      %5090 = vmatprep.subr.mxu0 0.0
      %5091 = vmatpush2.xpose.msra.mxu0 0.0
      %5092 = vmatprep.subr.mxu0 0.0
      %5093 = vmatpush2.xpose.msra.mxu0 0.0
      %5094 = vmatprep.subr.mxu0 0.0
      %5095 = vmatpush2.xpose.msra.mxu0 0.0
      %5096 = vmatprep.mubr.f32.mxu0 0.0
      %5097 = vmatmul.mubr.f32.gmra.mxu0 %v5028
      %v5098 = vpop.f32.mrf.mxu0
      %v5099 = vadd.f32 0.0, %v5098
      %v5100 = vpop.f32.mrf.mxu0
      %5101 = vdwg.mxu0
      %v5102 = vsel %vm1157, %v4553, -inf
      %5103 = vmax.xlane.f32.xlu0 %v5102
      %v5104 = vpop.xlane.xlu0 %5103
      %v5105 = vsel %vm1157, %v4631, -inf
      %5106 = vmax.xlane.f32.xlu0 %v5105
      %v5107 = vpop.xlane.xlu0 %5106
      %v5108 = vsel %vm1157, %v4709, -inf
      %5109 = vmax.xlane.f32.xlu0 %v5108
      %v5110 = vpop.xlane.xlu0 %5109
      %v5111 = vsel %vm1157, %v4787, -inf
      %5112 = vmax.xlane.f32.xlu0 %v5111
      %v5113 = vpop.xlane.xlu0 %5112
      %v5114 = vsel %vm1157, %v4865, -inf
      %5115 = vmax.xlane.f32.xlu0 %v5114
      %v5116 = vpop.xlane.xlu0 %5115
      %v5117 = vsel %vm1157, %v4943, -inf
      %5118 = vmax.xlane.f32.xlu0 %v5117
      %v5119 = vpop.xlane.xlu0 %5118
      %v5120 = vsel %vm1157, %v5021, -inf
      %5121 = vmax.xlane.f32.xlu0 %v5120
      %v5122 = vpop.xlane.xlu0 %5121
      %v5123 = vsel %vm1157, %v5099, -inf
      %5124 = vmax.xlane.f32.xlu0 %v5123
      %v5125 = vpop.xlane.xlu0 %5124
      %v5126 = vsub.f32 %v4553, %v5104
      %v5127 = vsub.f32 %v4631, %v5107
      %v5128 = vsub.f32 %v4709, %v5110
      %v5129 = vsub.f32 %v4787, %v5113
      %v5130 = vsub.f32 %v4865, %v5116
      %v5131 = vsub.f32 %v4943, %v5119
      %v5132 = vsub.f32 %v5021, %v5122
      %v5133 = vsub.f32 %v5099, %v5125
      %v5134 = vmul.f32 %v5126, 1.442695
      %v5135 = vpow.pop %v5134
      %v5136 = vmul.f32 %v5127, 1.442695
      %v5137 = vpow.pop %v5136
      %v5138 = vmul.f32 %v5128, 1.442695
      %v5139 = vpow.pop %v5138
      %v5140 = vmul.f32 %v5129, 1.442695
      %v5141 = vpow.pop %v5140
      %v5142 = vmul.f32 %v5130, 1.442695
      %v5143 = vpow.pop %v5142
      %v5144 = vmul.f32 %v5131, 1.442695
      %v5145 = vpow.pop %v5144
      %v5146 = vmul.f32 %v5132, 1.442695
      %v5147 = vpow.pop %v5146
      %v5148 = vmul.f32 %v5133, 1.442695
      %v5149 = vpow.pop %v5148
      %v5150 = vsel %vm1157, %v5135, 0.0
      %5151 = vadd.xlane.f32.xlu0 %v5150
      %v5152 = vpop.xlane.xlu0 %5151
      %v5153 = vsel %vm1157, %v5137, 0.0
      %5154 = vadd.xlane.f32.xlu0 %v5153
      %v5155 = vpop.xlane.xlu0 %5154
      %v5156 = vsel %vm1157, %v5139, 0.0
      %5157 = vadd.xlane.f32.xlu0 %v5156
      %v5158 = vpop.xlane.xlu0 %5157
      %v5159 = vsel %vm1157, %v5141, 0.0
      %5160 = vadd.xlane.f32.xlu0 %v5159
      %v5161 = vpop.xlane.xlu0 %5160
      %v5162 = vsel %vm1157, %v5143, 0.0
      %5163 = vadd.xlane.f32.xlu0 %v5162
      %v5164 = vpop.xlane.xlu0 %5163
      %v5165 = vsel %vm1157, %v5145, 0.0
      %5166 = vadd.xlane.f32.xlu0 %v5165
      %v5167 = vpop.xlane.xlu0 %5166
      %v5168 = vsel %vm1157, %v5147, 0.0
      %5169 = vadd.xlane.f32.xlu0 %v5168
      %v5170 = vpop.xlane.xlu0 %5169
      %v5171 = vsel %vm1157, %v5149, 0.0
      %5172 = vadd.xlane.f32.xlu0 %v5171
      %v5173 = vpop.xlane.xlu0 %5172
      %v5174 = vrcp.pop %v5152
      %v5175 = vrcp.pop %v5155
      %v5176 = vrcp.pop %v5158
      %v5177 = vrcp.pop %v5161
      %v5178 = vrcp.pop %v5164
      %v5179 = vrcp.pop %v5167
      %v5180 = vrcp.pop %v5170
      %v5181 = vrcp.pop %v5173
      %v5182 = vmul.f32 %v5135, %v5174
      %v5183 = vmul.f32 %v5137, %v5175
      %v5184 = vmul.f32 %v5139, %v5176
      %v5185 = vmul.f32 %v5141, %v5177
      %v5186 = vmul.f32 %v5143, %v5178
      %v5187 = vmul.f32 %v5145, %v5179
      %v5188 = vmul.f32 %v5147, %v5180
      %v5189 = vmul.f32 %v5149, %v5181
      %5190 = vrot.lane.b32.xlu0 %v480, 80
      %v5191 = vpop.permute.xlu0 %5190
      %v5194 = vsel %vm1157, %v5182, 0
      %5196 = vmatprep.subr.mxu0 0.0
      %5197 = vmatpush1.msra.mxu0 0.0
      %5198 = vmatprep.subr.mxu0 0.0
      %5199 = vmatpush1.msra.mxu0 0.0
      %5200 = vmatprep.subr.mxu0 0.0
      %5201 = vmatpush1.msra.mxu0 0.0
      %5202 = vmatprep.subr.mxu0 0.0
      %5203 = vmatpush1.msra.mxu0 0.0
      %5204 = vmatprep.subr.mxu0 0.0
      %5205 = vmatpush1.msra.mxu0 0.0
      %5206 = vmatprep.subr.mxu0 0.0
      %5207 = vmatpush1.msra.mxu0 0.0
      %5208 = vmatprep.subr.mxu0 0.0
      %5209 = vmatpush1.msra.mxu0 0.0
      %5210 = vmatprep.subr.mxu0 0.0
      %5211 = vmatpush1.msra.mxu0 0.0
      %5212 = vmatprep.subr.mxu0 0.0
      %5213 = vmatpush1.msra.mxu0 0.0
      %5214 = vmatprep.subr.mxu0 0.0
      %5215 = vmatpush1.msra.mxu0 0.0
      %5216 = vmatprep.subr.mxu0 0.0
      %5217 = vmatpush1.msra.mxu0 0.0
      %5218 = vmatprep.subr.mxu0 0.0
      %5219 = vmatpush1.msra.mxu0 0.0
      %5220 = vmatprep.subr.mxu0 0.0
      %5221 = vmatpush1.msra.mxu0 0.0
      %5222 = vmatprep.subr.mxu0 0.0
      %5223 = vmatpush1.msra.mxu0 0.0
      %5224 = vmatprep.subr.mxu0 0.0
      %5225 = vmatpush1.msra.mxu0 0.0
      %5226 = vmatprep.subr.mxu0 0.0
      %5227 = vmatpush1.msra.mxu0 %v5191
      %5228 = vmatprep.subr.mxu0 0.0
      %5229 = vmatpush2.msra.mxu0 0.0
      %5230 = vmatprep.subr.mxu0 0.0
      %5231 = vmatpush2.msra.mxu0 0.0
      %5232 = vmatprep.subr.mxu0 0.0
      %5233 = vmatpush2.msra.mxu0 0.0
      %5234 = vmatprep.subr.mxu0 0.0
      %5235 = vmatpush2.msra.mxu0 0.0
      %5236 = vmatprep.subr.mxu0 0.0
      %5237 = vmatpush2.msra.mxu0 0.0
      %5238 = vmatprep.subr.mxu0 0.0
      %5239 = vmatpush2.msra.mxu0 0.0
      %5240 = vmatprep.subr.mxu0 0.0
      %5241 = vmatpush2.msra.mxu0 0.0
      %5242 = vmatprep.subr.mxu0 0.0
      %5243 = vmatpush2.msra.mxu0 0.0
      %5244 = vmatprep.subr.mxu0 0.0
      %5245 = vmatpush2.msra.mxu0 0.0
      %5246 = vmatprep.subr.mxu0 0.0
      %5247 = vmatpush2.msra.mxu0 0.0
      %5248 = vmatprep.subr.mxu0 0.0
      %5249 = vmatpush2.msra.mxu0 0.0
      %5250 = vmatprep.subr.mxu0 0.0
      %5251 = vmatpush2.msra.mxu0 0.0
      %5252 = vmatprep.subr.mxu0 0.0
      %5253 = vmatpush2.msra.mxu0 0.0
      %5254 = vmatprep.subr.mxu0 0.0
      %5255 = vmatpush2.msra.mxu0 0.0
      %5256 = vmatprep.subr.mxu0 0.0
      %5257 = vmatpush2.msra.mxu0 0.0
      %5258 = vmatprep.subr.mxu0 0.0
      %5259 = vmatpush2.msra.mxu0 0.0
      %5260 = vmatprep.mubr.f32.mxu0 0.0
      %5261 = vmatmul.mubr.f32.gmra.mxu0 %v5194
      %v5262 = vpop.f32.mrf.mxu0
      %v5263 = vadd.f32 0.0, %v5262
      %v5264 = vpop.f32.mrf.mxu0
      %5265 = vdwg.mxu0
      %5266 = vrot.lane.b32.xlu0 %v486, 80
      %v5267 = vpop.permute.xlu0 %5266
      %v5270 = vsel %vm1157, %v5183, 0
      %5272 = vmatprep.subr.mxu0 0.0
      %5273 = vmatpush1.msra.mxu0 0.0
      %5274 = vmatprep.subr.mxu0 0.0
      %5275 = vmatpush1.msra.mxu0 0.0
      %5276 = vmatprep.subr.mxu0 0.0
      %5277 = vmatpush1.msra.mxu0 0.0
      %5278 = vmatprep.subr.mxu0 0.0
      %5279 = vmatpush1.msra.mxu0 0.0
      %5280 = vmatprep.subr.mxu0 0.0
      %5281 = vmatpush1.msra.mxu0 0.0
      %5282 = vmatprep.subr.mxu0 0.0
      %5283 = vmatpush1.msra.mxu0 0.0
      %5284 = vmatprep.subr.mxu0 0.0
      %5285 = vmatpush1.msra.mxu0 0.0
      %5286 = vmatprep.subr.mxu0 0.0
      %5287 = vmatpush1.msra.mxu0 0.0
      %5288 = vmatprep.subr.mxu0 0.0
      %5289 = vmatpush1.msra.mxu0 0.0
      %5290 = vmatprep.subr.mxu0 0.0
      %5291 = vmatpush1.msra.mxu0 0.0
      %5292 = vmatprep.subr.mxu0 0.0
      %5293 = vmatpush1.msra.mxu0 0.0
      %5294 = vmatprep.subr.mxu0 0.0
      %5295 = vmatpush1.msra.mxu0 0.0
      %5296 = vmatprep.subr.mxu0 0.0
      %5297 = vmatpush1.msra.mxu0 0.0
      %5298 = vmatprep.subr.mxu0 0.0
      %5299 = vmatpush1.msra.mxu0 0.0
      %5300 = vmatprep.subr.mxu0 0.0
      %5301 = vmatpush1.msra.mxu0 0.0
      %5302 = vmatprep.subr.mxu0 0.0
      %5303 = vmatpush1.msra.mxu0 %v5267
      %5304 = vmatprep.subr.mxu0 0.0
      %5305 = vmatpush2.msra.mxu0 0.0
      %5306 = vmatprep.subr.mxu0 0.0
      %5307 = vmatpush2.msra.mxu0 0.0
      %5308 = vmatprep.subr.mxu0 0.0
      %5309 = vmatpush2.msra.mxu0 0.0
      %5310 = vmatprep.subr.mxu0 0.0
      %5311 = vmatpush2.msra.mxu0 0.0
      %5312 = vmatprep.subr.mxu0 0.0
      %5313 = vmatpush2.msra.mxu0 0.0
      %5314 = vmatprep.subr.mxu0 0.0
      %5315 = vmatpush2.msra.mxu0 0.0
      %5316 = vmatprep.subr.mxu0 0.0
      %5317 = vmatpush2.msra.mxu0 0.0
      %5318 = vmatprep.subr.mxu0 0.0
      %5319 = vmatpush2.msra.mxu0 0.0
      %5320 = vmatprep.subr.mxu0 0.0
      %5321 = vmatpush2.msra.mxu0 0.0
      %5322 = vmatprep.subr.mxu0 0.0
      %5323 = vmatpush2.msra.mxu0 0.0
      %5324 = vmatprep.subr.mxu0 0.0
      %5325 = vmatpush2.msra.mxu0 0.0
      %5326 = vmatprep.subr.mxu0 0.0
      %5327 = vmatpush2.msra.mxu0 0.0
      %5328 = vmatprep.subr.mxu0 0.0
      %5329 = vmatpush2.msra.mxu0 0.0
      %5330 = vmatprep.subr.mxu0 0.0
      %5331 = vmatpush2.msra.mxu0 0.0
      %5332 = vmatprep.subr.mxu0 0.0
      %5333 = vmatpush2.msra.mxu0 0.0
      %5334 = vmatprep.subr.mxu0 0.0
      %5335 = vmatpush2.msra.mxu0 0.0
      %5336 = vmatprep.mubr.f32.mxu0 0.0
      %5337 = vmatmul.mubr.f32.gmra.mxu0 %v5270
      %v5338 = vpop.f32.mrf.mxu0
      %v5339 = vadd.f32 0.0, %v5338
      %v5340 = vpop.f32.mrf.mxu0
      %5341 = vdwg.mxu0
      %5342 = vrot.lane.b32.xlu0 %v492, 80
      %v5343 = vpop.permute.xlu0 %5342
      %v5346 = vsel %vm1157, %v5184, 0
      %5348 = vmatprep.subr.mxu0 0.0
      %5349 = vmatpush1.msra.mxu0 0.0
      %5350 = vmatprep.subr.mxu0 0.0
      %5351 = vmatpush1.msra.mxu0 0.0
      %5352 = vmatprep.subr.mxu0 0.0
      %5353 = vmatpush1.msra.mxu0 0.0
      %5354 = vmatprep.subr.mxu0 0.0
      %5355 = vmatpush1.msra.mxu0 0.0
      %5356 = vmatprep.subr.mxu0 0.0
      %5357 = vmatpush1.msra.mxu0 0.0
      %5358 = vmatprep.subr.mxu0 0.0
      %5359 = vmatpush1.msra.mxu0 0.0
      %5360 = vmatprep.subr.mxu0 0.0
      %5361 = vmatpush1.msra.mxu0 0.0
      %5362 = vmatprep.subr.mxu0 0.0
      %5363 = vmatpush1.msra.mxu0 0.0
      %5364 = vmatprep.subr.mxu0 0.0
      %5365 = vmatpush1.msra.mxu0 0.0
      %5366 = vmatprep.subr.mxu0 0.0
      %5367 = vmatpush1.msra.mxu0 0.0
      %5368 = vmatprep.subr.mxu0 0.0
      %5369 = vmatpush1.msra.mxu0 0.0
      %5370 = vmatprep.subr.mxu0 0.0
      %5371 = vmatpush1.msra.mxu0 0.0
      %5372 = vmatprep.subr.mxu0 0.0
      %5373 = vmatpush1.msra.mxu0 0.0
      %5374 = vmatprep.subr.mxu0 0.0
      %5375 = vmatpush1.msra.mxu0 0.0
      %5376 = vmatprep.subr.mxu0 0.0
      %5377 = vmatpush1.msra.mxu0 0.0
      %5378 = vmatprep.subr.mxu0 0.0
      %5379 = vmatpush1.msra.mxu0 %v5343
      %5380 = vmatprep.subr.mxu0 0.0
      %5381 = vmatpush2.msra.mxu0 0.0
      %5382 = vmatprep.subr.mxu0 0.0
      %5383 = vmatpush2.msra.mxu0 0.0
      %5384 = vmatprep.subr.mxu0 0.0
      %5385 = vmatpush2.msra.mxu0 0.0
      %5386 = vmatprep.subr.mxu0 0.0
      %5387 = vmatpush2.msra.mxu0 0.0
      %5388 = vmatprep.subr.mxu0 0.0
      %5389 = vmatpush2.msra.mxu0 0.0
      %5390 = vmatprep.subr.mxu0 0.0
      %5391 = vmatpush2.msra.mxu0 0.0
      %5392 = vmatprep.subr.mxu0 0.0
      %5393 = vmatpush2.msra.mxu0 0.0
      %5394 = vmatprep.subr.mxu0 0.0
      %5395 = vmatpush2.msra.mxu0 0.0
      %5396 = vmatprep.subr.mxu0 0.0
      %5397 = vmatpush2.msra.mxu0 0.0
      %5398 = vmatprep.subr.mxu0 0.0
      %5399 = vmatpush2.msra.mxu0 0.0
      %5400 = vmatprep.subr.mxu0 0.0
      %5401 = vmatpush2.msra.mxu0 0.0
      %5402 = vmatprep.subr.mxu0 0.0
      %5403 = vmatpush2.msra.mxu0 0.0
      %5404 = vmatprep.subr.mxu0 0.0
      %5405 = vmatpush2.msra.mxu0 0.0
      %5406 = vmatprep.subr.mxu0 0.0
      %5407 = vmatpush2.msra.mxu0 0.0
      %5408 = vmatprep.subr.mxu0 0.0
      %5409 = vmatpush2.msra.mxu0 0.0
      %5410 = vmatprep.subr.mxu0 0.0
      %5411 = vmatpush2.msra.mxu0 0.0
      %5412 = vmatprep.mubr.f32.mxu0 0.0
      %5413 = vmatmul.mubr.f32.gmra.mxu0 %v5346
      %v5414 = vpop.f32.mrf.mxu0
      %v5415 = vadd.f32 0.0, %v5414
      %v5416 = vpop.f32.mrf.mxu0
      %5417 = vdwg.mxu0
      %5418 = vrot.lane.b32.xlu0 %v498, 80
      %v5419 = vpop.permute.xlu0 %5418
      %v5422 = vsel %vm1157, %v5185, 0
      %5424 = vmatprep.subr.mxu0 0.0
      %5425 = vmatpush1.msra.mxu0 0.0
      %5426 = vmatprep.subr.mxu0 0.0
      %5427 = vmatpush1.msra.mxu0 0.0
      %5428 = vmatprep.subr.mxu0 0.0
      %5429 = vmatpush1.msra.mxu0 0.0
      %5430 = vmatprep.subr.mxu0 0.0
      %5431 = vmatpush1.msra.mxu0 0.0
      %5432 = vmatprep.subr.mxu0 0.0
      %5433 = vmatpush1.msra.mxu0 0.0
      %5434 = vmatprep.subr.mxu0 0.0
      %5435 = vmatpush1.msra.mxu0 0.0
      %5436 = vmatprep.subr.mxu0 0.0
      %5437 = vmatpush1.msra.mxu0 0.0
      %5438 = vmatprep.subr.mxu0 0.0
      %5439 = vmatpush1.msra.mxu0 0.0
      %5440 = vmatprep.subr.mxu0 0.0
      %5441 = vmatpush1.msra.mxu0 0.0
      %5442 = vmatprep.subr.mxu0 0.0
      %5443 = vmatpush1.msra.mxu0 0.0
      %5444 = vmatprep.subr.mxu0 0.0
      %5445 = vmatpush1.msra.mxu0 0.0
      %5446 = vmatprep.subr.mxu0 0.0
      %5447 = vmatpush1.msra.mxu0 0.0
      %5448 = vmatprep.subr.mxu0 0.0
      %5449 = vmatpush1.msra.mxu0 0.0
      %5450 = vmatprep.subr.mxu0 0.0
      %5451 = vmatpush1.msra.mxu0 0.0
      %5452 = vmatprep.subr.mxu0 0.0
      %5453 = vmatpush1.msra.mxu0 0.0
      %5454 = vmatprep.subr.mxu0 0.0
      %5455 = vmatpush1.msra.mxu0 %v5419
      %5456 = vmatprep.subr.mxu0 0.0
      %5457 = vmatpush2.msra.mxu0 0.0
      %5458 = vmatprep.subr.mxu0 0.0
      %5459 = vmatpush2.msra.mxu0 0.0
      %5460 = vmatprep.subr.mxu0 0.0
      %5461 = vmatpush2.msra.mxu0 0.0
      %5462 = vmatprep.subr.mxu0 0.0
      %5463 = vmatpush2.msra.mxu0 0.0
      %5464 = vmatprep.subr.mxu0 0.0
      %5465 = vmatpush2.msra.mxu0 0.0
      %5466 = vmatprep.subr.mxu0 0.0
      %5467 = vmatpush2.msra.mxu0 0.0
      %5468 = vmatprep.subr.mxu0 0.0
      %5469 = vmatpush2.msra.mxu0 0.0
      %5470 = vmatprep.subr.mxu0 0.0
      %5471 = vmatpush2.msra.mxu0 0.0
      %5472 = vmatprep.subr.mxu0 0.0
      %5473 = vmatpush2.msra.mxu0 0.0
      %5474 = vmatprep.subr.mxu0 0.0
      %5475 = vmatpush2.msra.mxu0 0.0
      %5476 = vmatprep.subr.mxu0 0.0
      %5477 = vmatpush2.msra.mxu0 0.0
      %5478 = vmatprep.subr.mxu0 0.0
      %5479 = vmatpush2.msra.mxu0 0.0
      %5480 = vmatprep.subr.mxu0 0.0
      %5481 = vmatpush2.msra.mxu0 0.0
      %5482 = vmatprep.subr.mxu0 0.0
      %5483 = vmatpush2.msra.mxu0 0.0
      %5484 = vmatprep.subr.mxu0 0.0
      %5485 = vmatpush2.msra.mxu0 0.0
      %5486 = vmatprep.subr.mxu0 0.0
      %5487 = vmatpush2.msra.mxu0 0.0
      %5488 = vmatprep.mubr.f32.mxu0 0.0
      %5489 = vmatmul.mubr.f32.gmra.mxu0 %v5422
      %v5490 = vpop.f32.mrf.mxu0
      %v5491 = vadd.f32 0.0, %v5490
      %v5492 = vpop.f32.mrf.mxu0
      %5493 = vdwg.mxu0
      %5494 = vrot.lane.b32.xlu0 %v504, 80
      %v5495 = vpop.permute.xlu0 %5494
      %v5498 = vsel %vm1157, %v5186, 0
      %5500 = vmatprep.subr.mxu0 0.0
      %5501 = vmatpush1.msra.mxu0 0.0
      %5502 = vmatprep.subr.mxu0 0.0
      %5503 = vmatpush1.msra.mxu0 0.0
      %5504 = vmatprep.subr.mxu0 0.0
      %5505 = vmatpush1.msra.mxu0 0.0
      %5506 = vmatprep.subr.mxu0 0.0
      %5507 = vmatpush1.msra.mxu0 0.0
      %5508 = vmatprep.subr.mxu0 0.0
      %5509 = vmatpush1.msra.mxu0 0.0
      %5510 = vmatprep.subr.mxu0 0.0
      %5511 = vmatpush1.msra.mxu0 0.0
      %5512 = vmatprep.subr.mxu0 0.0
      %5513 = vmatpush1.msra.mxu0 0.0
      %5514 = vmatprep.subr.mxu0 0.0
      %5515 = vmatpush1.msra.mxu0 0.0
      %5516 = vmatprep.subr.mxu0 0.0
      %5517 = vmatpush1.msra.mxu0 0.0
      %5518 = vmatprep.subr.mxu0 0.0
      %5519 = vmatpush1.msra.mxu0 0.0
      %5520 = vmatprep.subr.mxu0 0.0
      %5521 = vmatpush1.msra.mxu0 0.0
      %5522 = vmatprep.subr.mxu0 0.0
      %5523 = vmatpush1.msra.mxu0 0.0
      %5524 = vmatprep.subr.mxu0 0.0
      %5525 = vmatpush1.msra.mxu0 0.0
      %5526 = vmatprep.subr.mxu0 0.0
      %5527 = vmatpush1.msra.mxu0 0.0
      %5528 = vmatprep.subr.mxu0 0.0
      %5529 = vmatpush1.msra.mxu0 0.0
      %5530 = vmatprep.subr.mxu0 0.0
      %5531 = vmatpush1.msra.mxu0 %v5495
      %5532 = vmatprep.subr.mxu0 0.0
      %5533 = vmatpush2.msra.mxu0 0.0
      %5534 = vmatprep.subr.mxu0 0.0
      %5535 = vmatpush2.msra.mxu0 0.0
      %5536 = vmatprep.subr.mxu0 0.0
      %5537 = vmatpush2.msra.mxu0 0.0
      %5538 = vmatprep.subr.mxu0 0.0
      %5539 = vmatpush2.msra.mxu0 0.0
      %5540 = vmatprep.subr.mxu0 0.0
      %5541 = vmatpush2.msra.mxu0 0.0
      %5542 = vmatprep.subr.mxu0 0.0
      %5543 = vmatpush2.msra.mxu0 0.0
      %5544 = vmatprep.subr.mxu0 0.0
      %5545 = vmatpush2.msra.mxu0 0.0
      %5546 = vmatprep.subr.mxu0 0.0
      %5547 = vmatpush2.msra.mxu0 0.0
      %5548 = vmatprep.subr.mxu0 0.0
      %5549 = vmatpush2.msra.mxu0 0.0
      %5550 = vmatprep.subr.mxu0 0.0
      %5551 = vmatpush2.msra.mxu0 0.0
      %5552 = vmatprep.subr.mxu0 0.0
      %5553 = vmatpush2.msra.mxu0 0.0
      %5554 = vmatprep.subr.mxu0 0.0
      %5555 = vmatpush2.msra.mxu0 0.0
      %5556 = vmatprep.subr.mxu0 0.0
      %5557 = vmatpush2.msra.mxu0 0.0
      %5558 = vmatprep.subr.mxu0 0.0
      %5559 = vmatpush2.msra.mxu0 0.0
      %5560 = vmatprep.subr.mxu0 0.0
      %5561 = vmatpush2.msra.mxu0 0.0
      %5562 = vmatprep.subr.mxu0 0.0
      %5563 = vmatpush2.msra.mxu0 0.0
      %5564 = vmatprep.mubr.f32.mxu0 0.0
      %5565 = vmatmul.mubr.f32.gmra.mxu0 %v5498
      %v5566 = vpop.f32.mrf.mxu0
      %v5567 = vadd.f32 0.0, %v5566
      %v5568 = vpop.f32.mrf.mxu0
      %5569 = vdwg.mxu0
      %5570 = vrot.lane.b32.xlu0 %v510, 80
      %v5571 = vpop.permute.xlu0 %5570
      %v5574 = vsel %vm1157, %v5187, 0
      %5576 = vmatprep.subr.mxu0 0.0
      %5577 = vmatpush1.msra.mxu0 0.0
      %5578 = vmatprep.subr.mxu0 0.0
      %5579 = vmatpush1.msra.mxu0 0.0
      %5580 = vmatprep.subr.mxu0 0.0
      %5581 = vmatpush1.msra.mxu0 0.0
      %5582 = vmatprep.subr.mxu0 0.0
      %5583 = vmatpush1.msra.mxu0 0.0
      %5584 = vmatprep.subr.mxu0 0.0
      %5585 = vmatpush1.msra.mxu0 0.0
      %5586 = vmatprep.subr.mxu0 0.0
      %5587 = vmatpush1.msra.mxu0 0.0
      %5588 = vmatprep.subr.mxu0 0.0
      %5589 = vmatpush1.msra.mxu0 0.0
      %5590 = vmatprep.subr.mxu0 0.0
      %5591 = vmatpush1.msra.mxu0 0.0
      %5592 = vmatprep.subr.mxu0 0.0
      %5593 = vmatpush1.msra.mxu0 0.0
      %5594 = vmatprep.subr.mxu0 0.0
      %5595 = vmatpush1.msra.mxu0 0.0
      %5596 = vmatprep.subr.mxu0 0.0
      %5597 = vmatpush1.msra.mxu0 0.0
      %5598 = vmatprep.subr.mxu0 0.0
      %5599 = vmatpush1.msra.mxu0 0.0
      %5600 = vmatprep.subr.mxu0 0.0
      %5601 = vmatpush1.msra.mxu0 0.0
      %5602 = vmatprep.subr.mxu0 0.0
      %5603 = vmatpush1.msra.mxu0 0.0
      %5604 = vmatprep.subr.mxu0 0.0
      %5605 = vmatpush1.msra.mxu0 0.0
      %5606 = vmatprep.subr.mxu0 0.0
      %5607 = vmatpush1.msra.mxu0 %v5571
      %5608 = vmatprep.subr.mxu0 0.0
      %5609 = vmatpush2.msra.mxu0 0.0
      %5610 = vmatprep.subr.mxu0 0.0
      %5611 = vmatpush2.msra.mxu0 0.0
      %5612 = vmatprep.subr.mxu0 0.0
      %5613 = vmatpush2.msra.mxu0 0.0
      %5614 = vmatprep.subr.mxu0 0.0
      %5615 = vmatpush2.msra.mxu0 0.0
      %5616 = vmatprep.subr.mxu0 0.0
      %5617 = vmatpush2.msra.mxu0 0.0
      %5618 = vmatprep.subr.mxu0 0.0
      %5619 = vmatpush2.msra.mxu0 0.0
      %5620 = vmatprep.subr.mxu0 0.0
      %5621 = vmatpush2.msra.mxu0 0.0
      %5622 = vmatprep.subr.mxu0 0.0
      %5623 = vmatpush2.msra.mxu0 0.0
      %5624 = vmatprep.subr.mxu0 0.0
      %5625 = vmatpush2.msra.mxu0 0.0
      %5626 = vmatprep.subr.mxu0 0.0
      %5627 = vmatpush2.msra.mxu0 0.0
      %5628 = vmatprep.subr.mxu0 0.0
      %5629 = vmatpush2.msra.mxu0 0.0
      %5630 = vmatprep.subr.mxu0 0.0
      %5631 = vmatpush2.msra.mxu0 0.0
      %5632 = vmatprep.subr.mxu0 0.0
      %5633 = vmatpush2.msra.mxu0 0.0
      %5634 = vmatprep.subr.mxu0 0.0
      %5635 = vmatpush2.msra.mxu0 0.0
      %5636 = vmatprep.subr.mxu0 0.0
      %5637 = vmatpush2.msra.mxu0 0.0
      %5638 = vmatprep.subr.mxu0 0.0
      %5639 = vmatpush2.msra.mxu0 0.0
      %5640 = vmatprep.mubr.f32.mxu0 0.0
      %5641 = vmatmul.mubr.f32.gmra.mxu0 %v5574
      %v5642 = vpop.f32.mrf.mxu0
      %v5643 = vadd.f32 0.0, %v5642
      %v5644 = vpop.f32.mrf.mxu0
      %5645 = vdwg.mxu0
      %5646 = vrot.lane.b32.xlu0 %v516, 80
      %v5647 = vpop.permute.xlu0 %5646
      %v5650 = vsel %vm1157, %v5188, 0
      %5652 = vmatprep.subr.mxu0 0.0
      %5653 = vmatpush1.msra.mxu0 0.0
      %5654 = vmatprep.subr.mxu0 0.0
      %5655 = vmatpush1.msra.mxu0 0.0
      %5656 = vmatprep.subr.mxu0 0.0
      %5657 = vmatpush1.msra.mxu0 0.0
      %5658 = vmatprep.subr.mxu0 0.0
      %5659 = vmatpush1.msra.mxu0 0.0
      %5660 = vmatprep.subr.mxu0 0.0
      %5661 = vmatpush1.msra.mxu0 0.0
      %5662 = vmatprep.subr.mxu0 0.0
      %5663 = vmatpush1.msra.mxu0 0.0
      %5664 = vmatprep.subr.mxu0 0.0
      %5665 = vmatpush1.msra.mxu0 0.0
      %5666 = vmatprep.subr.mxu0 0.0
      %5667 = vmatpush1.msra.mxu0 0.0
      %5668 = vmatprep.subr.mxu0 0.0
      %5669 = vmatpush1.msra.mxu0 0.0
      %5670 = vmatprep.subr.mxu0 0.0
      %5671 = vmatpush1.msra.mxu0 0.0
      %5672 = vmatprep.subr.mxu0 0.0
      %5673 = vmatpush1.msra.mxu0 0.0
      %5674 = vmatprep.subr.mxu0 0.0
      %5675 = vmatpush1.msra.mxu0 0.0
      %5676 = vmatprep.subr.mxu0 0.0
      %5677 = vmatpush1.msra.mxu0 0.0
      %5678 = vmatprep.subr.mxu0 0.0
      %5679 = vmatpush1.msra.mxu0 0.0
      %5680 = vmatprep.subr.mxu0 0.0
      %5681 = vmatpush1.msra.mxu0 0.0
      %5682 = vmatprep.subr.mxu0 0.0
      %5683 = vmatpush1.msra.mxu0 %v5647
      %5684 = vmatprep.subr.mxu0 0.0
      %5685 = vmatpush2.msra.mxu0 0.0
      %5686 = vmatprep.subr.mxu0 0.0
      %5687 = vmatpush2.msra.mxu0 0.0
      %5688 = vmatprep.subr.mxu0 0.0
      %5689 = vmatpush2.msra.mxu0 0.0
      %5690 = vmatprep.subr.mxu0 0.0
      %5691 = vmatpush2.msra.mxu0 0.0
      %5692 = vmatprep.subr.mxu0 0.0
      %5693 = vmatpush2.msra.mxu0 0.0
      %5694 = vmatprep.subr.mxu0 0.0
      %5695 = vmatpush2.msra.mxu0 0.0
      %5696 = vmatprep.subr.mxu0 0.0
      %5697 = vmatpush2.msra.mxu0 0.0
      %5698 = vmatprep.subr.mxu0 0.0
      %5699 = vmatpush2.msra.mxu0 0.0
      %5700 = vmatprep.subr.mxu0 0.0
      %5701 = vmatpush2.msra.mxu0 0.0
      %5702 = vmatprep.subr.mxu0 0.0
      %5703 = vmatpush2.msra.mxu0 0.0
      %5704 = vmatprep.subr.mxu0 0.0
      %5705 = vmatpush2.msra.mxu0 0.0
      %5706 = vmatprep.subr.mxu0 0.0
      %5707 = vmatpush2.msra.mxu0 0.0
      %5708 = vmatprep.subr.mxu0 0.0
      %5709 = vmatpush2.msra.mxu0 0.0
      %5710 = vmatprep.subr.mxu0 0.0
      %5711 = vmatpush2.msra.mxu0 0.0
      %5712 = vmatprep.subr.mxu0 0.0
      %5713 = vmatpush2.msra.mxu0 0.0
      %5714 = vmatprep.subr.mxu0 0.0
      %5715 = vmatpush2.msra.mxu0 0.0
      %5716 = vmatprep.mubr.f32.mxu0 0.0
      %5717 = vmatmul.mubr.f32.gmra.mxu0 %v5650
      %v5718 = vpop.f32.mrf.mxu0
      %v5719 = vadd.f32 0.0, %v5718
      %v5720 = vpop.f32.mrf.mxu0
      %5721 = vdwg.mxu0
      %5722 = vrot.lane.b32.xlu0 %v522, 80
      %v5723 = vpop.permute.xlu0 %5722
      %v5726 = vsel %vm1157, %v5189, 0
      %5728 = vmatprep.subr.mxu0 0.0
      %5729 = vmatpush1.msra.mxu0 0.0
      %5730 = vmatprep.subr.mxu0 0.0
      %5731 = vmatpush1.msra.mxu0 0.0
      %5732 = vmatprep.subr.mxu0 0.0
      %5733 = vmatpush1.msra.mxu0 0.0
      %5734 = vmatprep.subr.mxu0 0.0
      %5735 = vmatpush1.msra.mxu0 0.0
      %5736 = vmatprep.subr.mxu0 0.0
      %5737 = vmatpush1.msra.mxu0 0.0
      %5738 = vmatprep.subr.mxu0 0.0
      %5739 = vmatpush1.msra.mxu0 0.0
      %5740 = vmatprep.subr.mxu0 0.0
      %5741 = vmatpush1.msra.mxu0 0.0
      %5742 = vmatprep.subr.mxu0 0.0
      %5743 = vmatpush1.msra.mxu0 0.0
      %5744 = vmatprep.subr.mxu0 0.0
      %5745 = vmatpush1.msra.mxu0 0.0
      %5746 = vmatprep.subr.mxu0 0.0
      %5747 = vmatpush1.msra.mxu0 0.0
      %5748 = vmatprep.subr.mxu0 0.0
      %5749 = vmatpush1.msra.mxu0 0.0
      %5750 = vmatprep.subr.mxu0 0.0
      %5751 = vmatpush1.msra.mxu0 0.0
      %5752 = vmatprep.subr.mxu0 0.0
      %5753 = vmatpush1.msra.mxu0 0.0
      %5754 = vmatprep.subr.mxu0 0.0
      %5755 = vmatpush1.msra.mxu0 0.0
      %5756 = vmatprep.subr.mxu0 0.0
      %5757 = vmatpush1.msra.mxu0 0.0
      %5758 = vmatprep.subr.mxu0 0.0
      %5759 = vmatpush1.msra.mxu0 %v5723
      %5760 = vmatprep.subr.mxu0 0.0
      %5761 = vmatpush2.msra.mxu0 0.0
      %5762 = vmatprep.subr.mxu0 0.0
      %5763 = vmatpush2.msra.mxu0 0.0
      %5764 = vmatprep.subr.mxu0 0.0
      %5765 = vmatpush2.msra.mxu0 0.0
      %5766 = vmatprep.subr.mxu0 0.0
      %5767 = vmatpush2.msra.mxu0 0.0
      %5768 = vmatprep.subr.mxu0 0.0
      %5769 = vmatpush2.msra.mxu0 0.0
      %5770 = vmatprep.subr.mxu0 0.0
      %5771 = vmatpush2.msra.mxu0 0.0
      %5772 = vmatprep.subr.mxu0 0.0
      %5773 = vmatpush2.msra.mxu0 0.0
      %5774 = vmatprep.subr.mxu0 0.0
      %5775 = vmatpush2.msra.mxu0 0.0
      %5776 = vmatprep.subr.mxu0 0.0
      %5777 = vmatpush2.msra.mxu0 0.0
      %5778 = vmatprep.subr.mxu0 0.0
      %5779 = vmatpush2.msra.mxu0 0.0
      %5780 = vmatprep.subr.mxu0 0.0
      %5781 = vmatpush2.msra.mxu0 0.0
      %5782 = vmatprep.subr.mxu0 0.0
      %5783 = vmatpush2.msra.mxu0 0.0
      %5784 = vmatprep.subr.mxu0 0.0
      %5785 = vmatpush2.msra.mxu0 0.0
      %5786 = vmatprep.subr.mxu0 0.0
      %5787 = vmatpush2.msra.mxu0 0.0
      %5788 = vmatprep.subr.mxu0 0.0
      %5789 = vmatpush2.msra.mxu0 0.0
      %5790 = vmatprep.subr.mxu0 0.0
      %5791 = vmatpush2.msra.mxu0 0.0
      %5792 = vmatprep.mubr.f32.mxu0 0.0
      %5793 = vmatmul.mubr.f32.gmra.mxu0 %v5726
      %v5794 = vpop.f32.mrf.mxu0
      %v5795 = vadd.f32 0.0, %v5794
      %v5796 = vpop.f32.mrf.mxu0
      %5797 = vdwg.mxu0
      %5806 = vrot.lane.b32.xlu0 %v2616, 16
      %v5807 = vpop.permute.xlu0 %5806
      %5808 = vrot.lane.b32.xlu0 %v2693, 16
      %v5809 = vpop.permute.xlu0 %5808
      %5810 = vrot.lane.b32.xlu0 %v2770, 16
      %v5811 = vpop.permute.xlu0 %5810
      %5812 = vrot.lane.b32.xlu0 %v2847, 16
      %v5813 = vpop.permute.xlu0 %5812
      %5814 = vrot.lane.b32.xlu0 %v2924, 16
      %v5815 = vpop.permute.xlu0 %5814
      %5816 = vrot.lane.b32.xlu0 %v3001, 16
      %v5817 = vpop.permute.xlu0 %5816
      %5818 = vrot.lane.b32.xlu0 %v3078, 16
      %v5819 = vpop.permute.xlu0 %5818
      %5820 = vrot.lane.b32.xlu0 %v3155, 16
      %v5821 = vpop.permute.xlu0 %5820
      %5838 = vrot.lane.b32.xlu0 %v3943, 32
      %v5839 = vpop.permute.xlu0 %5838
      %5840 = vrot.lane.b32.xlu0 %v4019, 32
      %v5841 = vpop.permute.xlu0 %5840
      %5842 = vrot.lane.b32.xlu0 %v4095, 32
      %v5843 = vpop.permute.xlu0 %5842
      %5844 = vrot.lane.b32.xlu0 %v4171, 32
      %v5845 = vpop.permute.xlu0 %5844
      %5846 = vrot.lane.b32.xlu0 %v4247, 32
      %v5847 = vpop.permute.xlu0 %5846
      %5848 = vrot.lane.b32.xlu0 %v4323, 32
      %v5849 = vpop.permute.xlu0 %5848
      %5850 = vrot.lane.b32.xlu0 %v4399, 32
      %v5851 = vpop.permute.xlu0 %5850
      %5852 = vrot.lane.b32.xlu0 %v4475, 32
      %v5853 = vpop.permute.xlu0 %5852
      %5870 = vrot.lane.b32.xlu0 %v5263, 48
      %v5871 = vpop.permute.xlu0 %5870
      %5872 = vrot.lane.b32.xlu0 %v5339, 48
      %v5873 = vpop.permute.xlu0 %5872
      %5874 = vrot.lane.b32.xlu0 %v5415, 48
      %v5875 = vpop.permute.xlu0 %5874
      %5876 = vrot.lane.b32.xlu0 %v5491, 48
      %v5877 = vpop.permute.xlu0 %5876
      %5878 = vrot.lane.b32.xlu0 %v5567, 48
      %v5879 = vpop.permute.xlu0 %5878
      %5880 = vrot.lane.b32.xlu0 %v5643, 48
      %v5881 = vpop.permute.xlu0 %5880
      %5882 = vrot.lane.b32.xlu0 %v5719, 48
      %v5883 = vpop.permute.xlu0 %5882
      %5884 = vrot.lane.b32.xlu0 %v5795, 48
      %v5885 = vpop.permute.xlu0 %5884
      %v5894 = vsel %vm535, %v1316, %v5807
      %v5895 = vsel %vm535, %v1389, %v5809
      %v5896 = vsel %vm535, %v1462, %v5811
      %v5897 = vsel %vm535, %v1535, %v5813
      %v5898 = vsel %vm535, %v1608, %v5815
      %v5899 = vsel %vm535, %v1681, %v5817
      %v5900 = vsel %vm535, %v1754, %v5819
      %v5901 = vsel %vm535, %v1827, %v5821
      %vm5902 = vcmask 261120
      %v5903 = vsel %vm5902, %v5894, %v5839
      %v5904 = vsel %vm5902, %v5895, %v5841
      %v5905 = vsel %vm5902, %v5896, %v5843
      %v5906 = vsel %vm5902, %v5897, %v5845
      %v5907 = vsel %vm5902, %v5898, %v5847
      %v5908 = vsel %vm5902, %v5899, %v5849
      %v5909 = vsel %vm5902, %v5900, %v5851
      %v5910 = vsel %vm5902, %v5901, %v5853
      %vm5911 = vcmask 392192
      %v5912 = vsel %vm5911, %v5903, %v5871
      %v5913 = vsel %vm5911, %v5904, %v5873
      %v5914 = vsel %vm5911, %v5905, %v5875
      %v5915 = vsel %vm5911, %v5906, %v5877
      %v5916 = vsel %vm5911, %v5907, %v5879
      %v5917 = vsel %vm5911, %v5908, %v5881
      %v5918 = vsel %vm5911, %v5909, %v5883
      %v5919 = vsel %vm5911, %v5910, %v5885
      %v5920 = vld [vmem:[%s3] sm:$0xff]
      %v5921 = vld [vmem:[%s3 + $0x8] sm:$0xff]
      %v5922 = vld [vmem:[%s3 + $0x10] sm:$0xff]
      %v5923 = vld [vmem:[%s3 + $0x18] sm:$0xff]
      %v5924 = vld [vmem:[%s3 + $0x20] sm:$0xff]
      %v5925 = vld [vmem:[%s3 + $0x28] sm:$0xff]
      %v5926 = vld [vmem:[%s3 + $0x30] sm:$0xff]
      %v5927 = vld [vmem:[%s3 + $0x38] sm:$0xff]
      %v5929 = vsel %vm298, %v5912, 0
      %v5932 = vsel %vm298, %v5913, 0
      %v5935 = vsel %vm298, %v5914, 0
      %v5938 = vsel %vm298, %v5915, 0
      %v5941 = vsel %vm298, %v5916, 0
      %v5944 = vsel %vm298, %v5917, 0
      %v5947 = vsel %vm298, %v5918, 0
      %v5950 = vsel %vm298, %v5919, 0
      %5952 = vmatprep.subr.mxu0 0.0
      %5953 = vmatpush1.msra.mxu0 0.0
      %5954 = vmatprep.subr.mxu0 0.0
      %5955 = vmatpush1.msra.mxu0 0.0
      %5956 = vmatprep.subr.mxu0 0.0
      %5957 = vmatpush1.msra.mxu0 0.0
      %5958 = vmatprep.subr.mxu0 0.0
      %5959 = vmatpush1.msra.mxu0 0.0
      %5960 = vmatprep.subr.mxu0 0.0
      %5961 = vmatpush1.msra.mxu0 0.0
      %5962 = vmatprep.subr.mxu0 0.0
      %5963 = vmatpush1.msra.mxu0 0.0
      %5964 = vmatprep.subr.mxu0 0.0
      %5965 = vmatpush1.msra.mxu0 0.0
      %5966 = vmatprep.subr.mxu0 0.0
      %5967 = vmatpush1.msra.mxu0 0.0
      %5968 = vmatprep.subr.mxu0 0.0
      %5969 = vmatpush1.msra.mxu0 %v5927
      %5970 = vmatprep.subr.mxu0 0.0
      %5971 = vmatpush1.msra.mxu0 %v5926
      %5972 = vmatprep.subr.mxu0 0.0
      %5973 = vmatpush1.msra.mxu0 %v5925
      %5974 = vmatprep.subr.mxu0 0.0
      %5975 = vmatpush1.msra.mxu0 %v5924
      %5976 = vmatprep.subr.mxu0 0.0
      %5977 = vmatpush1.msra.mxu0 %v5923
      %5978 = vmatprep.subr.mxu0 0.0
      %5979 = vmatpush1.msra.mxu0 %v5922
      %5980 = vmatprep.subr.mxu0 0.0
      %5981 = vmatpush1.msra.mxu0 %v5921
      %5982 = vmatprep.subr.mxu0 0.0
      %5983 = vmatpush1.msra.mxu0 %v5920
      %5984 = vmatprep.subr.mxu0 0.0
      %5985 = vmatpush2.msra.mxu0 0.0
      %5986 = vmatprep.subr.mxu0 0.0
      %5987 = vmatpush2.msra.mxu0 0.0
      %5988 = vmatprep.subr.mxu0 0.0
      %5989 = vmatpush2.msra.mxu0 0.0
      %5990 = vmatprep.subr.mxu0 0.0
      %5991 = vmatpush2.msra.mxu0 0.0
      %5992 = vmatprep.subr.mxu0 0.0
      %5993 = vmatpush2.msra.mxu0 0.0
      %5994 = vmatprep.subr.mxu0 0.0
      %5995 = vmatpush2.msra.mxu0 0.0
      %5996 = vmatprep.subr.mxu0 0.0
      %5997 = vmatpush2.msra.mxu0 0.0
      %5998 = vmatprep.subr.mxu0 0.0
      %5999 = vmatpush2.msra.mxu0 0.0
      %6000 = vmatprep.subr.mxu0 0.0
      %6001 = vmatpush2.msra.mxu0 0.0
      %6002 = vmatprep.subr.mxu0 0.0
      %6003 = vmatpush2.msra.mxu0 0.0
      %6004 = vmatprep.subr.mxu0 0.0
      %6005 = vmatpush2.msra.mxu0 0.0
      %6006 = vmatprep.subr.mxu0 0.0
      %6007 = vmatpush2.msra.mxu0 0.0
      %6008 = vmatprep.subr.mxu0 0.0
      %6009 = vmatpush2.msra.mxu0 0.0
      %6010 = vmatprep.subr.mxu0 0.0
      %6011 = vmatpush2.msra.mxu0 0.0
      %6012 = vmatprep.subr.mxu0 0.0
      %6013 = vmatpush2.msra.mxu0 0.0
      %6014 = vmatprep.subr.mxu0 0.0
      %6015 = vmatpush2.msra.mxu0 0.0
      %6016 = vmatprep.mubr.f32.mxu0 0.0
      %6017 = vmatmul.mubr.f32.gmra.mxu0 %v5929
      %v6018 = vpop.f32.mrf.mxu0
      %v6019 = vadd.f32 0.0, %v6018
      %v6020 = vpop.f32.mrf.mxu0
      %6021 = vmatprep.mubr.f32.mxu0 0.0
      %6022 = vmatmul.mubr.f32.gmra.mxu0 %v5932
      %v6023 = vpop.f32.mrf.mxu0
      %v6024 = vadd.f32 0.0, %v6023
      %v6025 = vpop.f32.mrf.mxu0
      %6026 = vmatprep.mubr.f32.mxu0 0.0
      %6027 = vmatmul.mubr.f32.gmra.mxu0 %v5935
      %v6028 = vpop.f32.mrf.mxu0
      %v6029 = vadd.f32 0.0, %v6028
      %v6030 = vpop.f32.mrf.mxu0
      %6031 = vmatprep.mubr.f32.mxu0 0.0
      %6032 = vmatmul.mubr.f32.gmra.mxu0 %v5938
      %v6033 = vpop.f32.mrf.mxu0
      %v6034 = vadd.f32 0.0, %v6033
      %v6035 = vpop.f32.mrf.mxu0
      %6036 = vmatprep.mubr.f32.mxu0 0.0
      %6037 = vmatmul.mubr.f32.gmra.mxu0 %v5941
      %v6038 = vpop.f32.mrf.mxu0
      %v6039 = vadd.f32 0.0, %v6038
      %v6040 = vpop.f32.mrf.mxu0
      %6041 = vmatprep.mubr.f32.mxu0 0.0
      %6042 = vmatmul.mubr.f32.gmra.mxu0 %v5944
      %v6043 = vpop.f32.mrf.mxu0
      %v6044 = vadd.f32 0.0, %v6043
      %v6045 = vpop.f32.mrf.mxu0
      %6046 = vmatprep.mubr.f32.mxu0 0.0
      %6047 = vmatmul.mubr.f32.gmra.mxu0 %v5947
      %v6048 = vpop.f32.mrf.mxu0
      %v6049 = vadd.f32 0.0, %v6048
      %v6050 = vpop.f32.mrf.mxu0
      %6051 = vmatprep.mubr.f32.mxu0 0.0
      %6052 = vmatmul.mubr.f32.gmra.mxu0 %v5950
      %v6053 = vpop.f32.mrf.mxu0
      %v6054 = vadd.f32 0.0, %v6053
      %v6055 = vpop.f32.mrf.mxu0
      %6056 = vdwg.mxu0
      %v6057 = vadd.f32 %v282, %v6019
      %v6058 = vadd.f32 %v283, %v6024
      %v6059 = vadd.f32 %v284, %v6029
      %v6060 = vadd.f32 %v285, %v6034
      %v6061 = vadd.f32 %v286, %v6039
      %v6062 = vadd.f32 %v287, %v6044
      %v6063 = vadd.f32 %v288, %v6049
      %v6064 = vadd.f32 %v289, %v6054
      %v6065 = vmul.f32 %v6057, %v6057
      %v6066 = vmul.f32 %v6058, %v6058
      %v6067 = vmul.f32 %v6059, %v6059
      %v6068 = vmul.f32 %v6060, %v6060
      %v6069 = vmul.f32 %v6061, %v6061
      %v6070 = vmul.f32 %v6062, %v6062
      %v6071 = vmul.f32 %v6063, %v6063
      %v6072 = vmul.f32 %v6064, %v6064
      %v6073 = vsel %vm298, %v6065, 0.0
      %6074 = vadd.xlane.f32.xlu0 %v6073
      %v6075 = vpop.xlane.xlu0 %6074
      %v6076 = vsel %vm298, %v6066, 0.0
      %6077 = vadd.xlane.f32.xlu0 %v6076
      %v6078 = vpop.xlane.xlu0 %6077
      %v6079 = vsel %vm298, %v6067, 0.0
      %6080 = vadd.xlane.f32.xlu0 %v6079
      %v6081 = vpop.xlane.xlu0 %6080
      %v6082 = vsel %vm298, %v6068, 0.0
      %6083 = vadd.xlane.f32.xlu0 %v6082
      %v6084 = vpop.xlane.xlu0 %6083
      %v6085 = vsel %vm298, %v6069, 0.0
      %6086 = vadd.xlane.f32.xlu0 %v6085
      %v6087 = vpop.xlane.xlu0 %6086
      %v6088 = vsel %vm298, %v6070, 0.0
      %6089 = vadd.xlane.f32.xlu0 %v6088
      %v6090 = vpop.xlane.xlu0 %6089
      %v6091 = vsel %vm298, %v6071, 0.0
      %6092 = vadd.xlane.f32.xlu0 %v6091
      %v6093 = vpop.xlane.xlu0 %6092
      %v6094 = vsel %vm298, %v6072, 0.0
      %6095 = vadd.xlane.f32.xlu0 %v6094
      %v6096 = vpop.xlane.xlu0 %6095
      %v6097 = vmul.f32 %v6075, %v323
      %v6098 = vmul.f32 %v6078, %v323
      %v6099 = vmul.f32 %v6081, %v323
      %v6100 = vmul.f32 %v6084, %v323
      %v6101 = vmul.f32 %v6087, %v323
      %v6102 = vmul.f32 %v6090, %v323
      %v6103 = vmul.f32 %v6093, %v323
      %v6104 = vmul.f32 %v6096, %v323
      %v6105 = vadd.f32 %v6097, 1e-05
      %v6106 = vadd.f32 %v6098, 1e-05
      %v6107 = vadd.f32 %v6099, 1e-05
      %v6108 = vadd.f32 %v6100, 1e-05
      %v6109 = vadd.f32 %v6101, 1e-05
      %v6110 = vadd.f32 %v6102, 1e-05
      %v6111 = vadd.f32 %v6103, 1e-05
      %v6112 = vadd.f32 %v6104, 1e-05
      %v6113 = vrsqrt.pop %v6105
      %v6114 = vrsqrt.pop %v6106
      %v6115 = vrsqrt.pop %v6107
      %v6116 = vrsqrt.pop %v6108
      %v6117 = vrsqrt.pop %v6109
      %v6118 = vrsqrt.pop %v6110
      %v6119 = vrsqrt.pop %v6111
      %v6120 = vrsqrt.pop %v6112
      %v6121 = vmul.f32 %v6057, %v6113
      %v6122 = vmul.f32 %v6058, %v6114
      %v6123 = vmul.f32 %v6059, %v6115
      %v6124 = vmul.f32 %v6060, %v6116
      %v6125 = vmul.f32 %v6061, %v6117
      %v6126 = vmul.f32 %v6062, %v6118
      %v6127 = vmul.f32 %v6063, %v6119
      %v6128 = vmul.f32 %v6064, %v6120
      %v6129 = vld [vmem:[%s4] sm:$0x1]
      %v6131 = vlaneseq
      %v6132 = vshrl.u32 %v6131, 7
      %v6133 = vsub.s32 0, %v6132
      %v6134 = vrot.slane %v6129, %v6133
      %v6136 = vmul.f32 %v6121, %v6134
      %v6137 = vmul.f32 %v6122, %v6134
      %v6138 = vmul.f32 %v6123, %v6134
      %v6139 = vmul.f32 %v6124, %v6134
      %v6140 = vmul.f32 %v6125, %v6134
      %v6141 = vmul.f32 %v6126, %v6134
      %v6142 = vmul.f32 %v6127, %v6134
      %v6143 = vmul.f32 %v6128, %v6134
      %v6144 = vld [vmem:[%s5] sm:$0xff]
      %v6145 = vld [vmem:[%s5 + $0x8] sm:$0xff]
      %v6146 = vld [vmem:[%s5 + $0x10] sm:$0xff]
      %v6147 = vld [vmem:[%s5 + $0x18] sm:$0xff]
      %v6148 = vld [vmem:[%s5 + $0x20] sm:$0xff]
      %v6149 = vld [vmem:[%s5 + $0x28] sm:$0xff]
      %v6150 = vld [vmem:[%s5 + $0x30] sm:$0xff]
      %v6151 = vld [vmem:[%s5 + $0x38] sm:$0xff]
      %v6152 = vld [vmem:[%s5 + $0x40] sm:$0xff]
      %v6153 = vld [vmem:[%s5 + $0x48] sm:$0xff]
      %v6154 = vld [vmem:[%s5 + $0x50] sm:$0xff]
      %v6155 = vld [vmem:[%s5 + $0x58] sm:$0xff]
      %v6156 = vld [vmem:[%s5 + $0x60] sm:$0xff]
      %v6157 = vld [vmem:[%s5 + $0x68] sm:$0xff]
      %v6158 = vld [vmem:[%s5 + $0x70] sm:$0xff]
      %v6159 = vld [vmem:[%s5 + $0x78] sm:$0xff]
      %v6161 = vsel %vm298, %v6136, 0
      %v6164 = vsel %vm298, %v6137, 0
      %v6167 = vsel %vm298, %v6138, 0
      %v6170 = vsel %vm298, %v6139, 0
      %v6173 = vsel %vm298, %v6140, 0
      %v6176 = vsel %vm298, %v6141, 0
      %v6179 = vsel %vm298, %v6142, 0
      %v6182 = vsel %vm298, %v6143, 0
      %6184 = vmatprep.subr.mxu0 0.0
      %6185 = vmatpush1.msra.mxu0 0.0
      %6186 = vmatprep.subr.mxu0 0.0
      %6187 = vmatpush1.msra.mxu0 0.0
      %6188 = vmatprep.subr.mxu0 0.0
      %6189 = vmatpush1.msra.mxu0 0.0
      %6190 = vmatprep.subr.mxu0 0.0
      %6191 = vmatpush1.msra.mxu0 0.0
      %6192 = vmatprep.subr.mxu0 0.0
      %6193 = vmatpush1.msra.mxu0 0.0
      %6194 = vmatprep.subr.mxu0 0.0
      %6195 = vmatpush1.msra.mxu0 0.0
      %6196 = vmatprep.subr.mxu0 0.0
      %6197 = vmatpush1.msra.mxu0 0.0
      %6198 = vmatprep.subr.mxu0 0.0
      %6199 = vmatpush1.msra.mxu0 0.0
      %6200 = vmatprep.subr.mxu0 %v6159
      %6201 = vmatpush1.msra.mxu0 %v6158
      %6202 = vmatprep.subr.mxu0 %v6157
      %6203 = vmatpush1.msra.mxu0 %v6156
      %6204 = vmatprep.subr.mxu0 %v6155
      %6205 = vmatpush1.msra.mxu0 %v6154
      %6206 = vmatprep.subr.mxu0 %v6153
      %6207 = vmatpush1.msra.mxu0 %v6152
      %6208 = vmatprep.subr.mxu0 %v6151
      %6209 = vmatpush1.msra.mxu0 %v6150
      %6210 = vmatprep.subr.mxu0 %v6149
      %6211 = vmatpush1.msra.mxu0 %v6148
      %6212 = vmatprep.subr.mxu0 %v6147
      %6213 = vmatpush1.msra.mxu0 %v6146
      %6214 = vmatprep.subr.mxu0 %v6145
      %6215 = vmatpush1.msra.mxu0 %v6144
      %6216 = vmatprep.subr.mxu0 0.0
      %6217 = vmatpush2.msra.mxu0 0.0
      %6218 = vmatprep.subr.mxu0 0.0
      %6219 = vmatpush2.msra.mxu0 0.0
      %6220 = vmatprep.subr.mxu0 0.0
      %6221 = vmatpush2.msra.mxu0 0.0
      %6222 = vmatprep.subr.mxu0 0.0
      %6223 = vmatpush2.msra.mxu0 0.0
      %6224 = vmatprep.subr.mxu0 0.0
      %6225 = vmatpush2.msra.mxu0 0.0
      %6226 = vmatprep.subr.mxu0 0.0
      %6227 = vmatpush2.msra.mxu0 0.0
      %6228 = vmatprep.subr.mxu0 0.0
      %6229 = vmatpush2.msra.mxu0 0.0
      %6230 = vmatprep.subr.mxu0 0.0
      %6231 = vmatpush2.msra.mxu0 0.0
      %6232 = vmatprep.subr.mxu0 0.0
      %6233 = vmatpush2.msra.mxu0 0.0
      %6234 = vmatprep.subr.mxu0 0.0
      %6235 = vmatpush2.msra.mxu0 0.0
      %6236 = vmatprep.subr.mxu0 0.0
      %6237 = vmatpush2.msra.mxu0 0.0
      %6238 = vmatprep.subr.mxu0 0.0
      %6239 = vmatpush2.msra.mxu0 0.0
      %6240 = vmatprep.subr.mxu0 0.0
      %6241 = vmatpush2.msra.mxu0 0.0
      %6242 = vmatprep.subr.mxu0 0.0
      %6243 = vmatpush2.msra.mxu0 0.0
      %6244 = vmatprep.subr.mxu0 0.0
      %6245 = vmatpush2.msra.mxu0 0.0
      %6246 = vmatprep.subr.mxu0 0.0
      %6247 = vmatpush2.msra.mxu0 0.0
      %6248 = vmatprep.mubr.f32.mxu0 0.0
      %6249 = vmatmul.mubr.f32.gmra.mxu0 %v6161
      %v6250 = vpop.f32.mrf.mxu0
      %v6251 = vadd.f32 0.0, %v6250
      %v6252 = vpop.f32.mrf.mxu0
      %v6253 = vadd.f32 0.0, %v6252
      %6254 = vmatprep.mubr.f32.mxu0 0.0
      %6255 = vmatmul.mubr.f32.gmra.mxu0 %v6164
      %v6256 = vpop.f32.mrf.mxu0
      %v6257 = vadd.f32 0.0, %v6256
      %v6258 = vpop.f32.mrf.mxu0
      %v6259 = vadd.f32 0.0, %v6258
      %6260 = vmatprep.mubr.f32.mxu0 0.0
      %6261 = vmatmul.mubr.f32.gmra.mxu0 %v6167
      %v6262 = vpop.f32.mrf.mxu0
      %v6263 = vadd.f32 0.0, %v6262
      %v6264 = vpop.f32.mrf.mxu0
      %v6265 = vadd.f32 0.0, %v6264
      %6266 = vmatprep.mubr.f32.mxu0 0.0
      %6267 = vmatmul.mubr.f32.gmra.mxu0 %v6170
      %v6268 = vpop.f32.mrf.mxu0
      %v6269 = vadd.f32 0.0, %v6268
      %v6270 = vpop.f32.mrf.mxu0
      %v6271 = vadd.f32 0.0, %v6270
      %6272 = vmatprep.mubr.f32.mxu0 0.0
      %6273 = vmatmul.mubr.f32.gmra.mxu0 %v6173
      %v6274 = vpop.f32.mrf.mxu0
      %v6275 = vadd.f32 0.0, %v6274
      %v6276 = vpop.f32.mrf.mxu0
      %v6277 = vadd.f32 0.0, %v6276
      %6278 = vmatprep.mubr.f32.mxu0 0.0
      %6279 = vmatmul.mubr.f32.gmra.mxu0 %v6176
      %v6280 = vpop.f32.mrf.mxu0
      %v6281 = vadd.f32 0.0, %v6280
      %v6282 = vpop.f32.mrf.mxu0
      %v6283 = vadd.f32 0.0, %v6282
      %6284 = vmatprep.mubr.f32.mxu0 0.0
      %6285 = vmatmul.mubr.f32.gmra.mxu0 %v6179
      %v6286 = vpop.f32.mrf.mxu0
      %v6287 = vadd.f32 0.0, %v6286
      %v6288 = vpop.f32.mrf.mxu0
      %v6289 = vadd.f32 0.0, %v6288
      %6290 = vmatprep.mubr.f32.mxu0 0.0
      %6291 = vmatmul.mubr.f32.gmra.mxu0 %v6182
      %v6292 = vpop.f32.mrf.mxu0
      %v6293 = vadd.f32 0.0, %v6292
      %v6294 = vpop.f32.mrf.mxu0
      %v6295 = vadd.f32 0.0, %v6294
      %6296 = vdwg.mxu0
      %v6297 = vxor.u32 %v6253, 2147483648
      %v6298 = vxor.u32 %v6259, 2147483648
      %v6299 = vxor.u32 %v6265, 2147483648
      %v6300 = vxor.u32 %v6271, 2147483648
      %v6301 = vxor.u32 %v6277, 2147483648
      %v6302 = vxor.u32 %v6283, 2147483648
      %v6303 = vxor.u32 %v6289, 2147483648
      %v6304 = vxor.u32 %v6295, 2147483648
      %v6305 = vmul.f32 %v6297, 1.442695
      %v6306 = vpow.pop %v6305
      %v6307 = vmul.f32 %v6298, 1.442695
      %v6308 = vpow.pop %v6307
      %v6309 = vmul.f32 %v6299, 1.442695
      %v6310 = vpow.pop %v6309
      %v6311 = vmul.f32 %v6300, 1.442695
      %v6312 = vpow.pop %v6311
      %v6313 = vmul.f32 %v6301, 1.442695
      %v6314 = vpow.pop %v6313
      %v6315 = vmul.f32 %v6302, 1.442695
      %v6316 = vpow.pop %v6315
      %v6317 = vmul.f32 %v6303, 1.442695
      %v6318 = vpow.pop %v6317
      %v6319 = vmul.f32 %v6304, 1.442695
      %v6320 = vpow.pop %v6319
      %v6321 = vadd.f32 %v6306, 1.0
      %v6322 = vadd.f32 %v6308, 1.0
      %v6323 = vadd.f32 %v6310, 1.0
      %v6324 = vadd.f32 %v6312, 1.0
      %v6325 = vadd.f32 %v6314, 1.0
      %v6326 = vadd.f32 %v6316, 1.0
      %v6327 = vadd.f32 %v6318, 1.0
      %v6328 = vadd.f32 %v6320, 1.0
      %v6329 = vrcp.pop %v6321
      %v6330 = vmul.f32 1.0, %v6329
      %v6331 = vrcp.pop %v6322
      %v6332 = vmul.f32 1.0, %v6331
      %v6333 = vrcp.pop %v6323
      %v6334 = vmul.f32 1.0, %v6333
      %v6335 = vrcp.pop %v6324
      %v6336 = vmul.f32 1.0, %v6335
      %v6337 = vrcp.pop %v6325
      %v6338 = vmul.f32 1.0, %v6337
      %v6339 = vrcp.pop %v6326
      %v6340 = vmul.f32 1.0, %v6339
      %v6341 = vrcp.pop %v6327
      %v6342 = vmul.f32 1.0, %v6341
      %v6343 = vrcp.pop %v6328
      %v6344 = vmul.f32 1.0, %v6343
      %v6345 = vmul.f32 %v6253, %v6330
      %v6346 = vmul.f32 %v6259, %v6332
      %v6347 = vmul.f32 %v6265, %v6334
      %v6348 = vmul.f32 %v6271, %v6336
      %v6349 = vmul.f32 %v6277, %v6338
      %v6350 = vmul.f32 %v6283, %v6340
      %v6351 = vmul.f32 %v6289, %v6342
      %v6352 = vmul.f32 %v6295, %v6344
      %v6353 = vmul.f32 %v6251, %v6345
      %v6354 = vmul.f32 %v6257, %v6346
      %v6355 = vmul.f32 %v6263, %v6347
      %v6356 = vmul.f32 %v6269, %v6348
      %v6357 = vmul.f32 %v6275, %v6349
      %v6358 = vmul.f32 %v6281, %v6350
      %v6359 = vmul.f32 %v6287, %v6351
      %v6360 = vmul.f32 %v6293, %v6352
      %v6361 = vld [vmem:[%s6] sm:$0xff]
      %v6362 = vld [vmem:[%s6 + $0x8] sm:$0xff]
      %v6363 = vld [vmem:[%s6 + $0x10] sm:$0xff]
      %v6364 = vld [vmem:[%s6 + $0x18] sm:$0xff]
      %v6365 = vld [vmem:[%s6 + $0x20] sm:$0xff]
      %v6366 = vld [vmem:[%s6 + $0x28] sm:$0xff]
      %v6367 = vld [vmem:[%s6 + $0x30] sm:$0xff]
      %v6368 = vld [vmem:[%s6 + $0x38] sm:$0xff]
      %v6369 = vld [vmem:[%s6 + $0x40] sm:$0xff]
      %v6370 = vld [vmem:[%s6 + $0x48] sm:$0xff]
      %v6371 = vld [vmem:[%s6 + $0x50] sm:$0xff]
      %v6372 = vld [vmem:[%s6 + $0x58] sm:$0xff]
      %v6373 = vld [vmem:[%s6 + $0x60] sm:$0xff]
      %v6374 = vld [vmem:[%s6 + $0x68] sm:$0xff]
      %v6375 = vld [vmem:[%s6 + $0x70] sm:$0xff]
      %v6376 = vld [vmem:[%s6 + $0x78] sm:$0xff]
      %6377 = vmatprep.subr.mxu0 0.0
      %6378 = vmatpush1.msra.mxu0 %v6376
      %6379 = vmatprep.subr.mxu0 0.0
      %6380 = vmatpush1.msra.mxu0 %v6375
      %6381 = vmatprep.subr.mxu0 0.0
      %6382 = vmatpush1.msra.mxu0 %v6374
      %6383 = vmatprep.subr.mxu0 0.0
      %6384 = vmatpush1.msra.mxu0 %v6373
      %6385 = vmatprep.subr.mxu0 0.0
      %6386 = vmatpush1.msra.mxu0 %v6372
      %6387 = vmatprep.subr.mxu0 0.0
      %6388 = vmatpush1.msra.mxu0 %v6371
      %6389 = vmatprep.subr.mxu0 0.0
      %6390 = vmatpush1.msra.mxu0 %v6370
      %6391 = vmatprep.subr.mxu0 0.0
      %6392 = vmatpush1.msra.mxu0 %v6369
      %6393 = vmatprep.subr.mxu0 0.0
      %6394 = vmatpush1.msra.mxu0 %v6368
      %6395 = vmatprep.subr.mxu0 0.0
      %6396 = vmatpush1.msra.mxu0 %v6367
      %6397 = vmatprep.subr.mxu0 0.0
      %6398 = vmatpush1.msra.mxu0 %v6366
      %6399 = vmatprep.subr.mxu0 0.0
      %6400 = vmatpush1.msra.mxu0 %v6365
      %6401 = vmatprep.subr.mxu0 0.0
      %6402 = vmatpush1.msra.mxu0 %v6364
      %6403 = vmatprep.subr.mxu0 0.0
      %6404 = vmatpush1.msra.mxu0 %v6363
      %6405 = vmatprep.subr.mxu0 0.0
      %6406 = vmatpush1.msra.mxu0 %v6362
      %6407 = vmatprep.subr.mxu0 0.0
      %6408 = vmatpush1.msra.mxu0 %v6361
      %6409 = vmatprep.subr.mxu0 0.0
      %6410 = vmatpush2.msra.mxu0 0.0
      %6411 = vmatprep.subr.mxu0 0.0
      %6412 = vmatpush2.msra.mxu0 0.0
      %6413 = vmatprep.subr.mxu0 0.0
      %6414 = vmatpush2.msra.mxu0 0.0
      %6415 = vmatprep.subr.mxu0 0.0
      %6416 = vmatpush2.msra.mxu0 0.0
      %6417 = vmatprep.subr.mxu0 0.0
      %6418 = vmatpush2.msra.mxu0 0.0
      %6419 = vmatprep.subr.mxu0 0.0
      %6420 = vmatpush2.msra.mxu0 0.0
      %6421 = vmatprep.subr.mxu0 0.0
      %6422 = vmatpush2.msra.mxu0 0.0
      %6423 = vmatprep.subr.mxu0 0.0
      %6424 = vmatpush2.msra.mxu0 0.0
      %6425 = vmatprep.subr.mxu0 0.0
      %6426 = vmatpush2.msra.mxu0 0.0
      %6427 = vmatprep.subr.mxu0 0.0
      %6428 = vmatpush2.msra.mxu0 0.0
      %6429 = vmatprep.subr.mxu0 0.0
      %6430 = vmatpush2.msra.mxu0 0.0
      %6431 = vmatprep.subr.mxu0 0.0
      %6432 = vmatpush2.msra.mxu0 0.0
      %6433 = vmatprep.subr.mxu0 0.0
      %6434 = vmatpush2.msra.mxu0 0.0
      %6435 = vmatprep.subr.mxu0 0.0
      %6436 = vmatpush2.msra.mxu0 0.0
      %6437 = vmatprep.subr.mxu0 0.0
      %6438 = vmatpush2.msra.mxu0 0.0
      %6439 = vmatprep.subr.mxu0 0.0
      %6440 = vmatpush2.msra.mxu0 0.0
      %6441 = vmatprep.mubr.f32.mxu0 0.0
      %6442 = vmatmul.mubr.f32.gmra.mxu0 %v6353
      %v6443 = vpop.f32.mrf.mxu0
      %v6444 = vadd.f32 0.0, %v6443
      %v6445 = vpop.f32.mrf.mxu0
      %6446 = vmatprep.mubr.f32.mxu0 0.0
      %6447 = vmatmul.mubr.f32.gmra.mxu0 %v6354
      %v6448 = vpop.f32.mrf.mxu0
      %v6449 = vadd.f32 0.0, %v6448
      %v6450 = vpop.f32.mrf.mxu0
      %6451 = vmatprep.mubr.f32.mxu0 0.0
      %6452 = vmatmul.mubr.f32.gmra.mxu0 %v6355
      %v6453 = vpop.f32.mrf.mxu0
      %v6454 = vadd.f32 0.0, %v6453
      %v6455 = vpop.f32.mrf.mxu0
      %6456 = vmatprep.mubr.f32.mxu0 0.0
      %6457 = vmatmul.mubr.f32.gmra.mxu0 %v6356
      %v6458 = vpop.f32.mrf.mxu0
      %v6459 = vadd.f32 0.0, %v6458
      %v6460 = vpop.f32.mrf.mxu0
      %6461 = vmatprep.mubr.f32.mxu0 0.0
      %6462 = vmatmul.mubr.f32.gmra.mxu0 %v6357
      %v6463 = vpop.f32.mrf.mxu0
      %v6464 = vadd.f32 0.0, %v6463
      %v6465 = vpop.f32.mrf.mxu0
      %6466 = vmatprep.mubr.f32.mxu0 0.0
      %6467 = vmatmul.mubr.f32.gmra.mxu0 %v6358
      %v6468 = vpop.f32.mrf.mxu0
      %v6469 = vadd.f32 0.0, %v6468
      %v6470 = vpop.f32.mrf.mxu0
      %6471 = vmatprep.mubr.f32.mxu0 0.0
      %6472 = vmatmul.mubr.f32.gmra.mxu0 %v6359
      %v6473 = vpop.f32.mrf.mxu0
      %v6474 = vadd.f32 0.0, %v6473
      %v6475 = vpop.f32.mrf.mxu0
      %6476 = vmatprep.mubr.f32.mxu0 0.0
      %6477 = vmatmul.mubr.f32.gmra.mxu0 %v6360
      %v6478 = vpop.f32.mrf.mxu0
      %v6479 = vadd.f32 0.0, %v6478
      %v6480 = vpop.f32.mrf.mxu0
      %6481 = vdwg.mxu0
      %v6482 = vadd.f32 %v6057, %v6444
      %v6483 = vadd.f32 %v6058, %v6449
      %v6484 = vadd.f32 %v6059, %v6454
      %v6485 = vadd.f32 %v6060, %v6459
      %v6486 = vadd.f32 %v6061, %v6464
      %v6487 = vadd.f32 %v6062, %v6469
      %v6488 = vadd.f32 %v6063, %v6474
      %v6489 = vadd.f32 %v6064, %v6479
      %6490 = vst.msk [vmem:[%s280] sm:$0xff] %vm298, %v6482
      %6491 = vst.msk [vmem:[%s280 + $0x8] sm:$0xff] %vm298, %v6483
      %6492 = vst.msk [vmem:[%s280 + $0x10] sm:$0xff] %vm298, %v6484
      %6493 = vst.msk [vmem:[%s280 + $0x18] sm:$0xff] %vm298, %v6485
      %6494 = vst.msk [vmem:[%s280 + $0x20] sm:$0xff] %vm298, %v6486
      %6495 = vst.msk [vmem:[%s280 + $0x28] sm:$0xff] %vm298, %v6487
      %6496 = vst.msk [vmem:[%s280 + $0x30] sm:$0xff] %vm298, %v6488
      %6497 = vst.msk [vmem:[%s280 + $0x38] sm:$0xff] %vm298, %v6489
      %s6498 = smul.u32 8, %s18
      %p6499 = scmp.lt.s32.totalorder %s6498, 31
      %s6500 = scalar_select %p6499, %s6498, 31
      %s6501 = smul.addr %s6500, 8
      %s6502 = scalar_lea.vmem %s7, %s6501
      // Predicated region
      $region49: #{tpu_custom_call.1} parent=47 // pred_check
        %p6503 = pneg %p188
      $region50: #{tpu_custom_call.1} parent=47 // pred_check_branch
        %6505 = sbr.rel (%p6503) target = $region52
      $region51: #{tpu_custom_call.1} parent=47 // pred_region
        %s6506 = smul.u32 8, %s18
      $region52: #{tpu_custom_call.1} parent=47 // pred_fallthru
        _
    $region48: #{tpu_custom_call.1} parent=5 // pred_fallthru
      _
    %p6507 = scmp.le.s32.totalorder 2, %s13
    // Predicated region
    $region53: #{tpu_custom_call.1} parent=5 // pred_check
      %p6508 = pneg %p6507
    $region54: #{tpu_custom_call.1} parent=5 // pred_check_branch
      %6510 = sbr.rel (%p6508) target = $region56
    $region55: #{tpu_custom_call.1} parent=5 // pred_region
      %s6511 = ssub.s32 %s13, 2
      // Predicated region
      $region57: #{tpu_custom_call.1} parent=55 // pred_check
        %p6512 = pneg %p194
      $region58: #{tpu_custom_call.1} parent=55 // pred_check_branch
        %6514 = sbr.rel (%p6512) target = $region60
      $region59: #{tpu_custom_call.1} parent=55 // pred_region
        %s6515 = smul.u32 8, %s19
        %p6516 = scmp.lt.s32.totalorder %s6515, 31
        %s6517 = scalar_select %p6516, %s6515, 31
        %s6518 = smul.addr %s6517, 8
        %s6519 = scalar_lea.vmem %s7, %s6518
      $region60: #{tpu_custom_call.1} parent=55 // pred_fallthru
        _
    $region56: #{tpu_custom_call.1} parent=5 // pred_fallthru
      _
  $region6: #{tpu_custom_call.1} parent=0 // loop_footer
    %s17 = sadd.s32 1, %s13
  $region7: #{tpu_custom_call.1} parent=0 // loop_footer_branch
    %12 = sbr.rel target = $region3
  $region8: #{tpu_custom_call.1} parent=0 // loop_exit
    _

</llo_original>
